<compile_context>
chip_gen: v6e
topology: v6e:2x2x1
jax: 0.10.0
libtpu: 0.0.40
codegen_flags: <defaults>
</compile_context>

<pallas_src>
import functools
import numpy as np
import jax
import jax.numpy as jnp
from jax.experimental import pallas as pl
from jax.experimental.pallas import tpu as pltpu

COMPUTE_DTYPE = jnp.bfloat16


# ------------------------------ tiling helper --------------------------------

def _pick_tile(dim, target, align):
    """Largest tile <= target that divides `dim` and is `align`-aligned;
    falls back to the full dim (always a legal TPU block)."""
    if dim <= target:
        return dim
    t = (target // align) * align
    while t >= align:
        if dim % t == 0:
            return t
        t -= align
    return dim


# --------------------------- tiled matmul kernel ------------------------------

def _make_matmul_kernel(has_bias, has_res):
    def kernel(*refs):
        refs = list(refs)
        x_ref = refs.pop(0)
        w_ref = refs.pop(0)
        b_ref = refs.pop(0) if has_bias else None
        r_ref = refs.pop(0) if has_res else None
        o_ref, acc_ref = refs

        @pl.when(pl.program_id(2) == 0)
        def _():
            acc_ref[...] = jnp.zeros(acc_ref.shape, acc_ref.dtype)

        acc_ref[...] += jnp.dot(x_ref[...], w_ref[...],
                                preferred_element_type=jnp.float32)

        @pl.when(pl.program_id(2) == pl.num_programs(2) - 1)
        def _():
            out = acc_ref[...]
            if has_bias:
                out = out + b_ref[...].astype(jnp.float32)
            if has_res:
                out = out + r_ref[...].astype(jnp.float32)
            o_ref[...] = out.astype(o_ref.dtype)

    return kernel


def pallas_matmul(x, w_t, b=None, residual=None, out_dtype=None,
                  tm_target=256, tn_target=256, tk_target=512):
    """x: [..., K] @ w_t: [K, N] (pre-transposed bf16) [+ bias] [+ residual]."""
    lead = x.shape[:-1]
    K = x.shape[-1]
    N = w_t.shape[1]
    M = int(np.prod(lead))
    out_dtype = out_dtype or x.dtype

    tm = _pick_tile(M, tm_target, 8)
    tn = _pick_tile(N, tn_target, 128)
    tk = _pick_tile(K, tk_target, 128)
    grid = (M // tm, N // tn, K // tk)

    in_specs = [
        pl.BlockSpec((tm, tk), lambda i, j, k: (i, k)),
        pl.BlockSpec((tk, tn), lambda i, j, k: (k, j)),
    ]
    operands = [x.reshape(M, K), w_t]
    if b is not None:
        in_specs.append(pl.BlockSpec((1, tn), lambda i, j, k: (0, j)))
        operands.append(b.reshape(1, N))
    if residual is not None:
        in_specs.append(pl.BlockSpec((tm, tn), lambda i, j, k: (i, j)))
        operands.append(residual.reshape(M, N))

    out = pl.pallas_call(
        _make_matmul_kernel(b is not None, residual is not None),
        grid=grid,
        in_specs=in_specs,
        out_specs=pl.BlockSpec((tm, tn), lambda i, j, k: (i, j)),
        out_shape=jax.ShapeDtypeStruct((M, N), out_dtype),
        scratch_shapes=[pltpu.VMEM((tm, tn), jnp.float32)],
        compiler_params=pltpu.CompilerParams(
            dimension_semantics=("parallel", "parallel", "arbitrary")),
    )(*operands)
    return out.reshape(lead + (N,))


# ----------------------- fused norm + matmul kernel ---------------------------

def _make_norm_matmul_kernel(kind, has_bias, eps):
    is_layer = (kind == "layer")

    def kernel(*refs):
        refs = list(refs)
        x_ref = refs.pop(0)
        g_ref = refs.pop(0)
        nb_ref = refs.pop(0) if is_layer else None
        w_ref = refs.pop(0)
        b_ref = refs.pop(0) if has_bias else None
        o_ref = refs.pop(0)

        x = x_ref[...].astype(jnp.float32)
        if is_layer:
            mu = jnp.mean(x, axis=-1, keepdims=True)
            xc = x - mu
            var = jnp.mean(xc * xc, axis=-1, keepdims=True)
            y = xc * jax.lax.rsqrt(var + eps)
            y = y * g_ref[...].astype(jnp.float32) + nb_ref[...].astype(jnp.float32)
        else:  # Gemma RMSNorm with (1 + weight)
            var = jnp.mean(x * x, axis=-1, keepdims=True)
            y = x * jax.lax.rsqrt(var + eps)
            y = y * (1.0 + g_ref[...].astype(jnp.float32))

        acc = jnp.dot(y.astype(w_ref.dtype), w_ref[...],
                      preferred_element_type=jnp.float32)
        if has_bias:
            acc = acc + b_ref[...].astype(jnp.float32)
        o_ref[...] = acc.astype(o_ref.dtype)

    return kernel


def pallas_norm_matmul(x, norm_g, norm_b, w_t, b, *, eps, kind, out_dtype=None,
                       tm_target=256, tn_target=256):
    """Fused LayerNorm/RMSNorm + matmul.  K (= feature dim) is kept un-tiled so
    the norm statistics see the whole row; N is tiled (e.g. vocab for lm_head)."""
    lead = x.shape[:-1]
    K = x.shape[-1]
    N = w_t.shape[1]
    M = int(np.prod(lead))
    out_dtype = out_dtype or x.dtype

    tm = _pick_tile(M, tm_target, 8)
    tn = _pick_tile(N, tn_target, 128)
    grid = (M // tm, N // tn)

    in_specs = [
        pl.BlockSpec((tm, K), lambda i, j: (i, 0)),
        pl.BlockSpec((1, K), lambda i, j: (0, 0)),
    ]
    operands = [x.reshape(M, K), norm_g.reshape(1, K)]
    if kind == "layer":
        in_specs.append(pl.BlockSpec((1, K), lambda i, j: (0, 0)))
        operands.append(norm_b.reshape(1, K))
    in_specs.append(pl.BlockSpec((K, tn), lambda i, j: (0, j)))
    operands.append(w_t)
    if b is not None:
        in_specs.append(pl.BlockSpec((1, tn), lambda i, j: (0, j)))
        operands.append(b.reshape(1, N))

    out = pl.pallas_call(
        _make_norm_matmul_kernel(kind, b is not None, eps),
        grid=grid,
        in_specs=in_specs,
        out_specs=pl.BlockSpec((tm, tn), lambda i, j: (i, j)),
        out_shape=jax.ShapeDtypeStruct((M, N), out_dtype),
        compiler_params=pltpu.CompilerParams(
            dimension_semantics=("parallel", "parallel")),
    )(*operands)
    return out.reshape(lead + (N,))


# ------------------- fused LayerNorm + SigLIP MLP + residual -------------------

def _ln_siglip_mlp_kernel(x_ref, g_ref, nb_ref, w1_ref, b1_ref, w2_ref, b2_ref,
                          o_ref, acc_ref, *, eps):
    li = pl.program_id(1)

    @pl.when(li == 0)
    def _():
        acc_ref[...] = jnp.zeros(acc_ref.shape, acc_ref.dtype)

    x = x_ref[...].astype(jnp.float32)
    mu = jnp.mean(x, axis=-1, keepdims=True)
    xc = x - mu
    var = jnp.mean(xc * xc, axis=-1, keepdims=True)
    y = xc * jax.lax.rsqrt(var + eps)
    y = y * g_ref[...].astype(jnp.float32) + nb_ref[...].astype(jnp.float32)

    h = jnp.dot(y.astype(w1_ref.dtype), w1_ref[...],
                preferred_element_type=jnp.float32)
    h = jax.nn.gelu(h + b1_ref[...].astype(jnp.float32), approximate=True)
    acc_ref[...] += jnp.dot(h.astype(w2_ref.dtype), w2_ref[...],
                            preferred_element_type=jnp.float32)

    @pl.when(li == pl.num_programs(1) - 1)
    def _():
        out = acc_ref[...] + b2_ref[...].astype(jnp.float32) + x  # + residual (pre-LN x)
        o_ref[...] = out.astype(o_ref.dtype)


def pallas_ln_mlp(x, g, nb, w1_t, b1, w2_t, b2, *, eps,
                  tm_target=256, ti_target=512):
    lead = x.shape[:-1]
    E = x.shape[-1]
    I = w1_t.shape[1]
    M = int(np.prod(lead))
    tm = _pick_tile(M, tm_target, 8)
    ti = _pick_tile(I, ti_target, 128)
    grid = (M // tm, I // ti)

    out = pl.pallas_call(
        functools.partial(_ln_siglip_mlp_kernel, eps=eps),
        grid=grid,
        in_specs=[
            pl.BlockSpec((tm, E), lambda i, l: (i, 0)),
            pl.BlockSpec((1, E), lambda i, l: (0, 0)),
            pl.BlockSpec((1, E), lambda i, l: (0, 0)),
            pl.BlockSpec((E, ti), lambda i, l: (0, l)),
            pl.BlockSpec((1, ti), lambda i, l: (0, l)),
            pl.BlockSpec((ti, E), lambda i, l: (l, 0)),
            pl.BlockSpec((1, E), lambda i, l: (0, 0)),
        ],
        out_specs=pl.BlockSpec((tm, E), lambda i, l: (i, 0)),
        out_shape=jax.ShapeDtypeStruct((M, E), x.dtype),
        scratch_shapes=[pltpu.VMEM((tm, E), jnp.float32)],
        compiler_params=pltpu.CompilerParams(
            dimension_semantics=("parallel", "arbitrary")),
    )(x.reshape(M, E), g.reshape(1, E), nb.reshape(1, E),
      w1_t, b1.reshape(1, I), w2_t, b2.reshape(1, E))
    return out.reshape(lead + (E,))


# ------------------- fused RMSNorm + Gemma MLP + residual ----------------------

def _rms_gemma_mlp_kernel(x_ref, g_ref, wg_ref, wu_ref, wd_ref, o_ref, acc_ref,
                          *, eps):
    li = pl.program_id(1)

    @pl.when(li == 0)
    def _():
        acc_ref[...] = jnp.zeros(acc_ref.shape, acc_ref.dtype)

    x = x_ref[...].astype(jnp.float32)
    var = jnp.mean(x * x, axis=-1, keepdims=True)
    y = x * jax.lax.rsqrt(var + eps)
    y = (y * (1.0 + g_ref[...].astype(jnp.float32))).astype(wg_ref.dtype)

    gate = jnp.dot(y, wg_ref[...], preferred_element_type=jnp.float32)
    up = jnp.dot(y, wu_ref[...], preferred_element_type=jnp.float32)
    h = jax.nn.gelu(gate, approximate=True) * up
    acc_ref[...] += jnp.dot(h.astype(wd_ref.dtype), wd_ref[...],
                            preferred_element_type=jnp.float32)

    @pl.when(li == pl.num_programs(1) - 1)
    def _():
        o_ref[...] = (acc_ref[...] + x).astype(o_ref.dtype)  # + residual (pre-norm x)


def pallas_rms_mlp(x, g, wg_t, wu_t, wd_t, *, eps, tm_target=256, ti_target=512):
    lead = x.shape[:-1]
    E = x.shape[-1]
    I = wg_t.shape[1]
    M = int(np.prod(lead))
    tm = _pick_tile(M, tm_target, 8)
    ti = _pick_tile(I, ti_target, 128)
    grid = (M // tm, I // ti)

    out = pl.pallas_call(
        functools.partial(_rms_gemma_mlp_kernel, eps=eps),
        grid=grid,
        in_specs=[
            pl.BlockSpec((tm, E), lambda i, l: (i, 0)),
            pl.BlockSpec((1, E), lambda i, l: (0, 0)),
            pl.BlockSpec((E, ti), lambda i, l: (0, l)),
            pl.BlockSpec((E, ti), lambda i, l: (0, l)),
            pl.BlockSpec((ti, E), lambda i, l: (l, 0)),
        ],
        out_specs=pl.BlockSpec((tm, E), lambda i, l: (i, 0)),
        out_shape=jax.ShapeDtypeStruct((M, E), x.dtype),
        scratch_shapes=[pltpu.VMEM((tm, E), jnp.float32)],
        compiler_params=pltpu.CompilerParams(
            dimension_semantics=("parallel", "arbitrary")),
    )(x.reshape(M, E), g.reshape(1, E), wg_t, wu_t, wd_t)
    return out.reshape(lead + (E,))


# ----------------------- flash attention (GQA, no mask) ------------------------

def _make_flash_attn_kernel(num_heads, num_kv_heads, head_dim, scale):
    n_rep = num_heads // num_kv_heads

    def kernel(q_ref, k_ref, v_ref, o_ref, m_ref, l_ref, acc_ref):
        kv = pl.program_id(2)

        @pl.when(kv == 0)
        def _():
            m_ref[...] = jnp.full(m_ref.shape, -jnp.inf, m_ref.dtype)
            l_ref[...] = jnp.zeros(l_ref.shape, l_ref.dtype)
            acc_ref[...] = jnp.zeros(acc_ref.shape, acc_ref.dtype)

        # Fold the softmax scale into q once (cheaper than scaling the scores).
        q = (q_ref[...].astype(jnp.float32) * scale).astype(k_ref.dtype)
        k = k_ref[...]
        v = v_ref[...]

        for h in range(num_heads):        # static unroll; GQA via kv head index
            g = h // n_rep
            hs, he = h * head_dim, (h + 1) * head_dim
            gs, ge = g * head_dim, (g + 1) * head_dim
            qh = q[:, hs:he]
            kh = k[:, gs:ge]
            vh = v[:, gs:ge]
            s = jax.lax.dot_general(qh, kh, (((1,), (1,)), ((), ())),
                                    preferred_element_type=jnp.float32)
            m_prev = m_ref[:, h:h + 1]
            l_prev = l_ref[:, h:h + 1]
            m_new = jnp.maximum(m_prev, jnp.max(s, axis=-1, keepdims=True))
            alpha = jnp.exp(m_prev - m_new)
            p = jnp.exp(s - m_new)
            l_ref[:, h:h + 1] = alpha * l_prev + jnp.sum(p, axis=-1, keepdims=True)
            pv = jnp.dot(p.astype(vh.dtype), vh, preferred_element_type=jnp.float32)
            acc_ref[:, hs:he] = alpha * acc_ref[:, hs:he] + pv
            m_ref[:, h:h + 1] = m_new

        @pl.when(kv == pl.num_programs(2) - 1)
        def _():
            for h in range(num_heads):
                hs, he = h * head_dim, (h + 1) * head_dim
                inv = pl.reciprocal(l_ref[:, h:h + 1], approx=True)
                o_ref[:, hs:he] = (acc_ref[:, hs:he] * inv).astype(o_ref.dtype)

    return kernel


def pallas_flash_attention(q, k, v, *, num_heads, num_kv_heads, head_dim, scale,
                           tq_target=256, tk_target=256):
    """q: [B, Sq, H*Dh]; k, v: [B, Sk, Hkv*Dh].  Prefix-LM prefill: no mask."""
    B, Sq, QD = q.shape
    Sk, KD = k.shape[1], k.shape[2]
    tq = _pick_tile(Sq, tq_target, 8)
    tk = _pick_tile(Sk, tk_target, 8)
    grid = (B, Sq // tq, Sk // tk)

    return pl.pallas_call(
        _make_flash_attn_kernel(num_heads, num_kv_heads, head_dim, scale),
        grid=grid,
        in_specs=[
            pl.BlockSpec((None, tq, QD), lambda b, qi, kv: (b, qi, 0)),
            pl.BlockSpec((None, tk, KD), lambda b, qi, kv: (b, kv, 0)),
            pl.BlockSpec((None, tk, KD), lambda b, qi, kv: (b, kv, 0)),
        ],
        out_specs=pl.BlockSpec((None, tq, QD), lambda b, qi, kv: (b, qi, 0)),
        out_shape=jax.ShapeDtypeStruct((B, Sq, QD), q.dtype),
        scratch_shapes=[
            pltpu.VMEM((tq, num_heads), jnp.float32),
            pltpu.VMEM((tq, num_heads), jnp.float32),
            pltpu.VMEM((tq, QD), jnp.float32),
        ],
        compiler_params=pltpu.CompilerParams(
            dimension_semantics=("parallel", "parallel", "arbitrary")),
    )(q, k, v)


# -------------------- merge text/image + embedding scale -----------------------

def _merge_embed_kernel(emb_ref, img_ref, tmask_ref, imask_ref, o_ref, *,
                        img_scale, emb_scale):
    emb = emb_ref[...].astype(jnp.float32)
    img = img_ref[...].astype(jnp.float32) * img_scale
    t = tmask_ref[...] != 0
    im = imask_ref[...] != 0
    zero = jnp.zeros_like(emb)
    out = jnp.where(t, emb, zero) + jnp.where(im, img, zero)   # pad positions -> 0
    o_ref[...] = (out * emb_scale).astype(o_ref.dtype)


def pallas_merge_embed(inputs_embeds, aligned_img, text_mask, image_mask,
                       img_scale, emb_scale, tm_target=512):
    B, S, E = inputs_embeds.shape
    M = B * S
    tm = _pick_tile(M, tm_target, 8)
    out = pl.pallas_call(
        functools.partial(_merge_embed_kernel, img_scale=img_scale,
                          emb_scale=emb_scale),
        grid=(M // tm,),
        in_specs=[
            pl.BlockSpec((tm, E), lambda i: (i, 0)),
            pl.BlockSpec((tm, E), lambda i: (i, 0)),
            pl.BlockSpec((tm, 1), lambda i: (i, 0)),
            pl.BlockSpec((tm, 1), lambda i: (i, 0)),
        ],
        out_specs=pl.BlockSpec((tm, E), lambda i: (i, 0)),
        out_shape=jax.ShapeDtypeStruct((M, E), inputs_embeds.dtype),
        compiler_params=pltpu.CompilerParams(dimension_semantics=("parallel",)),
    )(inputs_embeds.reshape(M, E), aligned_img.reshape(M, E),
      text_mask.reshape(M, 1).astype(jnp.int32),
      image_mask.reshape(M, 1).astype(jnp.int32))
    return out.reshape(B, S, E)


# ------------------------------- config ---------------------------------------

class VisionConfig:
    hidden_size = 128
    intermediate_size = 256
    num_hidden_layers = 2
    num_attention_heads = 4
    num_channels = 3
    image_size = 16
    patch_size = 8
    layer_norm_eps = 1e-6
    projection_dim = 128


class TextConfig:
    hidden_size = 128
    intermediate_size = 256
    num_hidden_layers = 2
    num_attention_heads = 4
    num_key_value_heads = 2
    head_dim = 32
    vocab_size = 272
    rms_norm_eps = 1e-6
    rope_theta = 10000.0


class PaliGemmaConfig:
    vision_config = VisionConfig
    text_config = TextConfig
    vocab_size = 272
    hidden_size = 128          # == text hidden size (used for image scaling)
    image_token_index = 256
    pad_token_id = 0


# ----------------------------- parameter init ----------------------------------

def init_raw_params(key, cfg):
    """torch-layout ([out, in]) f32 parameters."""
    v, t = cfg.vision_config, cfg.text_config
    num_patches = (v.image_size // v.patch_size) ** 2
    keys = iter(jax.random.split(key, 512))

    def w(shape, scale=0.02):
        return scale * jax.random.normal(next(keys), shape, jnp.float32)

    vhid, vint = v.hidden_size, v.intermediate_size
    vision_layers = []
    for _ in range(v.num_hidden_layers):
        vision_layers.append(dict(
            ln1_g=jnp.ones((vhid,), jnp.float32), ln1_b=jnp.zeros((vhid,), jnp.float32),
            q_w=w((vhid, vhid)), q_b=w((vhid,)),
            k_w=w((vhid, vhid)), k_b=w((vhid,)),
            v_w=w((vhid, vhid)), v_b=w((vhid,)),
            o_w=w((vhid, vhid)), o_b=w((vhid,)),
            ln2_g=jnp.ones((vhid,), jnp.float32), ln2_b=jnp.zeros((vhid,), jnp.float32),
            fc1_w=w((vint, vhid)), fc1_b=w((vint,)),
            fc2_w=w((vhid, vint)), fc2_b=w((vhid,)),
        ))
    vision = dict(
        patch_w=w((vhid, v.num_channels, v.patch_size, v.patch_size)),
        patch_b=w((vhid,)),
        pos_embed=w((num_patches, vhid)),
        layers=vision_layers,
        post_g=jnp.ones((vhid,), jnp.float32),
        post_b=jnp.zeros((vhid,), jnp.float32),
    )
    proj = dict(w=w((v.projection_dim, vhid)), b=w((v.projection_dim,)))

    thid, tint = t.hidden_size, t.intermediate_size
    qdim = t.num_attention_heads * t.head_dim
    kvdim = t.num_key_value_heads * t.head_dim
    text_layers = []
    for _ in range(t.num_hidden_layers):
        text_layers.append(dict(
            in_norm=jnp.zeros((thid,), jnp.float32),
            q_w=w((qdim, thid)), k_w=w((kvdim, thid)), v_w=w((kvdim, thid)),
            o_w=w((thid, qdim)),
            post_norm=jnp.zeros((thid,), jnp.float32),
            gate_w=w((tint, thid)), up_w=w((tint, thid)), down_w=w((thid, tint)),
        ))
    text = dict(
        embed=w((t.vocab_size, thid)),
        layers=text_layers,
        final_norm=jnp.zeros((thid,), jnp.float32),
    )
    return dict(vision=vision, proj=proj, text=text)


def prepare_params(raw, cfg):
    """One-time weight prep: pre-transpose to [K, N], concatenate QKV, cast
    matmul operands to bf16 (f32 accumulation is done in-kernel).  Norm params
    and biases stay f32 (they are applied on the f32 accumulator)."""
    v = cfg.vision_config
    bf = lambda a: a.astype(COMPUTE_DTYPE)

    vision_layers = []
    for lyr in raw['vision']['layers']:
        qkv_w_t = jnp.concatenate([lyr['q_w'].T, lyr['k_w'].T, lyr['v_w'].T], axis=1)
        qkv_b = jnp.concatenate([lyr['q_b'], lyr['k_b'], lyr['v_b']], axis=0)
        vision_layers.append(dict(
            ln1_g=lyr['ln1_g'], ln1_b=lyr['ln1_b'],
            qkv_w_t=bf(qkv_w_t), qkv_b=qkv_b,
            o_w_t=bf(lyr['o_w'].T), o_b=lyr['o_b'],
            ln2_g=lyr['ln2_g'], ln2_b=lyr['ln2_b'],
            fc1_w_t=bf(lyr['fc1_w'].T), fc1_b=lyr['fc1_b'],
            fc2_w_t=bf(lyr['fc2_w'].T), fc2_b=lyr['fc2_b'],
        ))
    rv = raw['vision']
    cpp = v.num_channels * v.patch_size * v.patch_size
    vision = dict(
        patch_w_t=bf(rv['patch_w'].reshape(v.hidden_size, cpp).T),
        patch_b=rv['patch_b'],
        pos_embed=bf(rv['pos_embed']),
        layers=vision_layers,
        post_g=rv['post_g'], post_b=rv['post_b'],
    )
    proj = dict(w_t=bf(raw['proj']['w'].T), b=raw['proj']['b'])

    text_layers = []
    for lyr in raw['text']['layers']:
        qkv_w_t = jnp.concatenate([lyr['q_w'].T, lyr['k_w'].T, lyr['v_w'].T], axis=1)
        text_layers.append(dict(
            in_norm=lyr['in_norm'],
            qkv_w_t=bf(qkv_w_t),
            o_w_t=bf(lyr['o_w'].T),
            post_norm=lyr['post_norm'],
            gate_w_t=bf(lyr['gate_w'].T), up_w_t=bf(lyr['up_w'].T),
            down_w_t=bf(lyr['down_w'].T),
        ))
    rt = raw['text']
    text = dict(
        embed=bf(rt['embed']),          # bf16 lookup table
        lm_head_t=bf(rt['embed'].T),    # tied lm_head, pre-transposed [E, V]
        layers=text_layers,
        final_norm=rt['final_norm'],
    )
    return dict(vision=vision, proj=proj, text=text)


# ------------------------------ forward pass -----------------------------------

def siglip_vision_tower(vp, pixel_values, cfg):
    """Returns hidden states BEFORE the post-LN (post-LN is fused into the
    multimodal projector by the caller)."""
    v = cfg.vision_config
    B, C, H, W = pixel_values.shape
    p = v.patch_size
    nH, nW = H // p, W // p
    nP = nH * nW
    hid = v.hidden_size
    heads = v.num_attention_heads
    dh = hid // heads

    # Conv2d(patch, stride=patch) == per-patch matmul (patch in (C, kh, kw) order)
    patches = pixel_values.reshape(B, C, nH, p, nW, p)
    patches = patches.transpose(0, 2, 4, 1, 3, 5).reshape(B, nP, C * p * p)
    pos = jnp.broadcast_to(vp['pos_embed'][None], (B, nP, hid))
    x = pallas_matmul(patches, vp['patch_w_t'], b=vp['patch_b'], residual=pos)

    scale = dh ** -0.5
    for lyr in vp['layers']:
        # fused LayerNorm + QKV projection (single concatenated weight)
        qkv = pallas_norm_matmul(x, lyr['ln1_g'], lyr['ln1_b'],
                                 lyr['qkv_w_t'], lyr['qkv_b'],
                                 eps=v.layer_norm_eps, kind='layer')
        q = qkv[..., :hid]
        k = qkv[..., hid:2 * hid]
        vv = qkv[..., 2 * hid:]
        attn = pallas_flash_attention(q, k, vv, num_heads=heads,
                                      num_kv_heads=heads, head_dim=dh, scale=scale)
        x = pallas_matmul(attn, lyr['o_w_t'], b=lyr['o_b'], residual=x)
        # fused LayerNorm + MLP + residual
        x = pallas_ln_mlp(x, lyr['ln2_g'], lyr['ln2_b'],
                          lyr['fc1_w_t'], lyr['fc1_b'],
                          lyr['fc2_w_t'], lyr['fc2_b'], eps=v.layer_norm_eps)
    return x


def _apply_rope(x, cos, sin, n_heads, dh):
    # plain-JAX glue: memory-bound rotation on [B, S, H, Dh] (no transposes)
    B, S, _ = x.shape
    xf = x.reshape(B, S, n_heads, dh).astype(jnp.float32)
    half = dh // 2
    rot = jnp.concatenate([-xf[..., half:], xf[..., :half]], axis=-1)
    out = xf * cos + rot * sin
    return out.reshape(B, S, n_heads * dh).astype(x.dtype)


def gemma_forward(tp, x, position_ids, cfg):
    t = cfg.text_config
    heads, kvh, dh = t.num_attention_heads, t.num_key_value_heads, t.head_dim
    qdim, kvdim = heads * dh, kvh * dh
    B, S, _ = x.shape

    inv_freq = 1.0 / (t.rope_theta ** (jnp.arange(0, dh, 2, dtype=jnp.float32) / dh))
    freqs = position_ids[..., None].astype(jnp.float32) * inv_freq[None, None, :]
    emb = jnp.concatenate([freqs, freqs], axis=-1)   # [B, S, dh]
    cos = jnp.cos(emb)[:, :, None, :]                # [B, S, 1, dh]
    sin = jnp.sin(emb)[:, :, None, :]

    scale = dh ** -0.5
    for lyr in tp['layers']:
        # fused RMSNorm + QKV projection (single concatenated weight, no bias)
        qkv = pallas_norm_matmul(x, lyr['in_norm'], None, lyr['qkv_w_t'], None,
                                 eps=t.rms_norm_eps, kind='rms')
        q = qkv[..., :qdim]
        k = qkv[..., qdim:qdim + kvdim]
        v = qkv[..., qdim + kvdim:]
        q = _apply_rope(q, cos, sin, heads, dh)
        k = _apply_rope(k, cos, sin, kvh, dh)
        # flash attention; GQA handled in-kernel (no jnp.repeat of K/V)
        attn = pallas_flash_attention(q, k, v, num_heads=heads, num_kv_heads=kvh,
                                      head_dim=dh, scale=scale)
        x = pallas_matmul(attn, lyr['o_w_t'], residual=x)
        # fused RMSNorm + gate/up/down MLP + residual
        x = pallas_rms_mlp(x, lyr['post_norm'], lyr['gate_w_t'], lyr['up_w_t'],
                           lyr['down_w_t'], eps=t.rms_norm_eps)

    # fused final RMSNorm + tied lm_head (vocab-tiled, f32 logits out)
    logits = pallas_norm_matmul(x, tp['final_norm'], None, tp['lm_head_t'], None,
                                eps=t.rms_norm_eps, kind='rms',
                                out_dtype=jnp.float32)
    return logits


def paligemma_forward(params, input_ids, pixel_values, attention_mask, cfg):
    # TODO(synk): kv_cache decode path (q_len == 1) not implemented; prefill only.
    # 1. text token embeddings (gather = glue)
    inputs_embeds = jnp.take(params['text']['embed'], input_ids, axis=0)

    # 2. vision tower; post-LN fused into the multimodal projector
    vis = siglip_vision_tower(params['vision'],
                              pixel_values.astype(inputs_embeds.dtype), cfg)
    image_features = pallas_norm_matmul(
        vis, params['vision']['post_g'], params['vision']['post_b'],
        params['proj']['w_t'], params['proj']['b'],
        eps=cfg.vision_config.layer_norm_eps, kind='layer')

    # 3. merge text embeds with image features, fused with the 1/sqrt(hid) image
    #    scale and the sqrt(hid) Gemma embedding scale.
    pad_tok = cfg.pad_token_id if cfg.pad_token_id is not None else -1
    text_mask = (input_ids != cfg.image_token_index) & (input_ids != pad_tok)
    image_mask = input_ids == cfg.image_token_index
    # masked_scatter equivalent (each batch has exactly num_image_tokens image slots)
    src_idx = jnp.clip(jnp.cumsum(image_mask.astype(jnp.int32), axis=-1) - 1,
                       0, image_features.shape[1] - 1)
    aligned = jnp.take_along_axis(image_features, src_idx[..., None], axis=1)
    img_scale = 1.0 / (cfg.hidden_size ** 0.5)
    emb_scale = cfg.text_config.hidden_size ** 0.5
    final_embedding = pallas_merge_embed(inputs_embeds, aligned, text_mask,
                                         image_mask, img_scale, emb_scale)

    # prefix-LM prefill: causal mask is all zeros -> omitted from attention.
    cum = jnp.cumsum(attention_mask, axis=-1)
    position_ids = jnp.where(attention_mask == 0, 1, cum)

    # 4. language model
    return gemma_forward(params['text'], final_embedding, position_ids, cfg)


# ---------------------------------- main ---------------------------------------

if __name__ == "__main__":
    cfg = PaliGemmaConfig
    key = jax.random.PRNGKey(0)
    pkey, ikey, xkey = jax.random.split(key, 3)
    params = prepare_params(init_raw_params(pkey, cfg), cfg)

    B, S = 2, 8
    num_img = (cfg.vision_config.image_size // cfg.vision_config.patch_size) ** 2
    text_ids = jax.random.randint(ikey, (B, S - num_img), 2, cfg.image_token_index,
                                  dtype=jnp.int32)
    image_ids = jnp.full((B, num_img), cfg.image_token_index, jnp.int32)
    input_ids = jnp.concatenate([image_ids, text_ids], axis=1)
    pixel_values = jax.random.normal(
        xkey,
        (B, cfg.vision_config.num_channels,
         cfg.vision_config.image_size, cfg.vision_config.image_size),
        jnp.float32)
    attention_mask = jnp.ones((B, S), jnp.int32)
    assert bool(jnp.all(attention_mask == 1)), "The input cannot be padded"

    fwd = jax.jit(functools.partial(paligemma_forward, cfg=cfg))
    logits = fwd(params, input_ids, pixel_values, attention_mask)
    jax.block_until_ready(logits)

    assert logits.shape == (B, S, cfg.vocab_size), logits.shape
    assert bool(jnp.all(jnp.isfinite(logits)))
    print("KERNEL_OK")
</pallas_src>

<mosaic_0001>
module attributes {stable_mosaic.version = 11 : i64} {
  func.func @kernel(%arg0: i32, %arg1: i32, %arg2: memref<8x128xbf16, #tpu.memory_space<vmem>>, %arg3: memref<1x128xf32, #tpu.memory_space<vmem>>, %arg4: memref<1x128xf32, #tpu.memory_space<vmem>>, %arg5: memref<128x128xbf16, #tpu.memory_space<vmem>>, %arg6: memref<1x128xf32, #tpu.memory_space<vmem>>, %arg7: memref<8x128xbf16, #tpu.memory_space<vmem>>) attributes {dimension_semantics = [#tpu.dimension_semantics<parallel>, #tpu.dimension_semantics<parallel>], iteration_bounds = array<i64: 1, 3>, scalar_prefetch = 0 : i64, scratch_operands = 0 : i64, tpu.core_type = #tpu.core_type<tc>, window_params = [{transform_indices = @transform_0, window_bounds = array<i64: 8, 128>}, {pipeline_mode = #tpu.pipeline_mode<synchronous>, transform_indices = @transform_1, window_bounds = array<i64: 1, 128>}, {pipeline_mode = #tpu.pipeline_mode<synchronous>, transform_indices = @transform_2, window_bounds = array<i64: 1, 128>}, {transform_indices = @transform_3, window_bounds = array<i64: 128, 128>}, {transform_indices = @transform_4, window_bounds = array<i64: 1, 128>}, {transform_indices = @transform_5, window_bounds = array<i64: 8, 128>}]} {
    %c0 = arith.constant 0 : index
    %c0_0 = arith.constant 0 : index
    %0 = vector.load %arg2[%c0, %c0_0] : memref<8x128xbf16, #tpu.memory_space<vmem>>, vector<8x128xbf16>
    %1 = arith.extf %0 : vector<8x128xbf16> to vector<8x128xf32>
    %cst = arith.constant dense<0.000000e+00> : vector<8xf32>
    %2 = vector.multi_reduction <add>, %1, %cst [1] : vector<8x128xf32> to vector<8xf32>
    %3 = vector.shape_cast %2 : vector<8xf32> to vector<8x1xf32>
    %cst_1 = arith.constant 1.280000e+02 : f32
    %4 = vector.broadcast %cst_1 : f32 to vector<8x1xf32>
    %5 = arith.divf %3, %4 : vector<8x1xf32>
    %6 = vector.broadcast %5 : vector<8x1xf32> to vector<8x128xf32>
    %7 = arith.subf %1, %6 : vector<8x128xf32>
    %8 = arith.mulf %7, %7 : vector<8x128xf32>
    %cst_2 = arith.constant dense<0.000000e+00> : vector<8xf32>
    %9 = vector.multi_reduction <add>, %8, %cst_2 [1] : vector<8x128xf32> to vector<8xf32>
    %10 = vector.shape_cast %9 : vector<8xf32> to vector<8x1xf32>
    %cst_3 = arith.constant 1.280000e+02 : f32
    %11 = vector.broadcast %cst_3 : f32 to vector<8x1xf32>
    %12 = arith.divf %10, %11 : vector<8x1xf32>
    %cst_4 = arith.constant 9.99999997E-7 : f32
    %13 = vector.broadcast %cst_4 : f32 to vector<8x1xf32>
    %14 = arith.addf %12, %13 : vector<8x1xf32>
    %15 = math.rsqrt %14 : vector<8x1xf32>
    %16 = vector.broadcast %15 : vector<8x1xf32> to vector<8x128xf32>
    %17 = arith.mulf %7, %16 : vector<8x128xf32>
    %c0_5 = arith.constant 0 : index
    %c0_6 = arith.constant 0 : index
    %18 = vector.load %arg3[%c0_5, %c0_6] : memref<1x128xf32, #tpu.memory_space<vmem>>, vector<1x128xf32>
    %19 = vector.broadcast %18 : vector<1x128xf32> to vector<8x128xf32>
    %20 = arith.mulf %17, %19 : vector<8x128xf32>
    %c0_7 = arith.constant 0 : index
    %c0_8 = arith.constant 0 : index
    %21 = vector.load %arg4[%c0_7, %c0_8] : memref<1x128xf32, #tpu.memory_space<vmem>>, vector<1x128xf32>
    %22 = vector.broadcast %21 : vector<1x128xf32> to vector<8x128xf32>
    %23 = arith.addf %20, %22 : vector<8x128xf32>
    %24 = arith.truncf %23 : vector<8x128xf32> to vector<8x128xbf16>
    %c0_9 = arith.constant 0 : index
    %c0_10 = arith.constant 0 : index
    %25 = vector.load %arg5[%c0_9, %c0_10] : memref<128x128xbf16, #tpu.memory_space<vmem>>, vector<128x128xbf16>
    %cst_11 = arith.constant dense<0.000000e+00> : vector<8x128xf32>
    %26 = tpu.matmul %24, %25, %cst_11 {dimension_numbers = #tpu.dot_dimension_numbers<[1], [0], [0], [1], [0, 0, 1, 1], [], []>} : vector<8x128xbf16>, vector<128x128xbf16>, vector<8x128xf32> -> vector<8x128xf32>
    %c0_12 = arith.constant 0 : index
    %c0_13 = arith.constant 0 : index
    %27 = vector.load %arg6[%c0_12, %c0_13] : memref<1x128xf32, #tpu.memory_space<vmem>>, vector<1x128xf32>
    %28 = vector.broadcast %27 : vector<1x128xf32> to vector<8x128xf32>
    %29 = arith.addf %26, %28 : vector<8x128xf32>
    %30 = arith.truncf %29 : vector<8x128xf32> to vector<8x128xbf16>
    %c0_14 = arith.constant 0 : index
    %c0_15 = arith.constant 0 : index
    %31 = vector.load %arg7[%c0_14, %c0_15] : memref<8x128xbf16, #tpu.memory_space<vmem>>, vector<8x128xbf16>
    tpu.vector_store %arg7[%c0_14, %c0_15], %30 {strides = array<i32>} : memref<8x128xbf16, #tpu.memory_space<vmem>>, vector<8x128xbf16>,
    return
  }
  func.func @transform_0(%arg0: i32, %arg1: i32) -> (i32, i32) {
    %c0_i32 = arith.constant 0 : i32
    %c0_i32_0 = arith.constant 0 : i32
    return %arg0, %c0_i32 : i32, i32
  }
  func.func @transform_1(%arg0: i32, %arg1: i32) -> (i32, i32) {
    %c0_i32 = arith.constant 0 : i32
    %c0_i32_0 = arith.constant 0 : i32
    %c0_i32_1 = arith.constant 0 : i32
    return %c0_i32, %c0_i32_0 : i32, i32
  }
  func.func @transform_2(%arg0: i32, %arg1: i32) -> (i32, i32) {
    %c0_i32 = arith.constant 0 : i32
    %c0_i32_0 = arith.constant 0 : i32
    %c0_i32_1 = arith.constant 0 : i32
    return %c0_i32, %c0_i32_0 : i32, i32
  }
  func.func @transform_3(%arg0: i32, %arg1: i32) -> (i32, i32) {
    %c0_i32 = arith.constant 0 : i32
    %c0_i32_0 = arith.constant 0 : i32
    return %c0_i32, %arg1 : i32, i32
  }
  func.func @transform_4(%arg0: i32, %arg1: i32) -> (i32, i32) {
    %c0_i32 = arith.constant 0 : i32
    %c0_i32_0 = arith.constant 0 : i32
    return %c0_i32, %arg1 : i32, i32
  }
  func.func @transform_5(%arg0: i32, %arg1: i32) -> (i32, i32) {
    %c0_i32 = arith.constant 0 : i32
    return %arg0, %arg1 : i32, i32
  }
}

module attributes {stable_mosaic.version = 11 : i64} {
  func.func @kernel(%arg0: i32, %arg1: i32, %arg2: i32, %arg3: memref<8x192xbf16, #tpu.memory_space<vmem>>, %arg4: memref<192x128xbf16, #tpu.memory_space<vmem>>, %arg5: memref<1x128xf32, #tpu.memory_space<vmem>>, %arg6: memref<8x128xbf16, #tpu.memory_space<vmem>>, %arg7: memref<8x128xbf16, #tpu.memory_space<vmem>>, %arg8: memref<8x128xf32, #tpu.memory_space<vmem>>) attributes {dimension_semantics = [#tpu.dimension_semantics<parallel>, #tpu.dimension_semantics<parallel>, #tpu.dimension_semantics<arbitrary>], iteration_bounds = array<i64: 1, 1, 1>, scalar_prefetch = 0 : i64, scratch_operands = 1 : i64, tpu.core_type = #tpu.core_type<tc>, window_params = [{transform_indices = @transform_0, window_bounds = array<i64: 8, 192>}, {transform_indices = @transform_1, window_bounds = array<i64: 192, 128>}, {transform_indices = @transform_2, window_bounds = array<i64: 1, 128>}, {transform_indices = @transform_3, window_bounds = array<i64: 8, 128>}, {transform_indices = @transform_4, window_bounds = array<i64: 8, 128>}]} {
    %c0_i32 = arith.constant 0 : i32
    %0 = arith.cmpi eq, %arg2, %c0_i32 : i32
    %1 = arith.extui %0 : i1 to i32
    %c0_i32_0 = arith.constant 0 : i32
    %2 = arith.cmpi ne, %1, %c0_i32_0 : i32
    scf.if %2 {
      %cst_10 = arith.constant 0.000000e+00 : f32
      %12 = vector.broadcast %cst_10 : f32 to vector<8x128xf32>
      %c0_11 = arith.constant 0 : index
      %c0_12 = arith.constant 0 : index
      %13 = vector.load %arg8[%c0_11, %c0_12] : memref<8x128xf32, #tpu.memory_space<vmem>>, vector<8x128xf32>
      tpu.vector_store %arg8[%c0_11, %c0_12], %12 {strides = array<i32>} : memref<8x128xf32, #tpu.memory_space<vmem>>, vector<8x128xf32>,
    } else {
    }
    %c0 = arith.constant 0 : index
    %c0_1 = arith.constant 0 : index
    %3 = vector.load %arg8[%c0, %c0_1] : memref<8x128xf32, #tpu.memory_space<vmem>>, vector<8x128xf32>
    %c0_2 = arith.constant 0 : index
    %c0_3 = arith.constant 0 : index
    %4 = vector.load %arg3[%c0_2, %c0_3] : memref<8x192xbf16, #tpu.memory_space<vmem>>, vector<8x192xbf16>
    %c0_4 = arith.constant 0 : index
    %c0_5 = arith.constant 0 : index
    %5 = vector.load %arg4[%c0_4, %c0_5] : memref<192x128xbf16, #tpu.memory_space<vmem>>, vector<192x128xbf16>
    %cst = arith.constant dense<0.000000e+00> : vector<8x128xf32>
    %6 = tpu.matmul %4, %5, %cst {dimension_numbers = #tpu.dot_dimension_numbers<[1], [0], [0], [1], [0, 0, 1, 1], [], []>} : vector<8x192xbf16>, vector<192x128xbf16>, vector<8x128xf32> -> vector<8x128xf32>
    %7 = arith.addf %3, %6 : vector<8x128xf32>
    %c0_6 = arith.constant 0 : index
    %c0_7 = arith.constant 0 : index
    %8 = vector.load %arg8[%c0_6, %c0_7] : memref<8x128xf32, #tpu.memory_space<vmem>>, vector<8x128xf32>
    tpu.vector_store %arg8[%c0_6, %c0_7], %7 {strides = array<i32>} : memref<8x128xf32, #tpu.memory_space<vmem>>, vector<8x128xf32>,
    %c0_i32_8 = arith.constant 0 : i32
    %9 = arith.cmpi eq, %arg2, %c0_i32_8 : i32
    %10 = arith.extui %9 : i1 to i32
    %c0_i32_9 = arith.constant 0 : i32
    %11 = arith.cmpi ne, %10, %c0_i32_9 : i32
    scf.if %11 {
      %c0_10 = arith.constant 0 : index
      %c0_11 = arith.constant 0 : index
      %12 = vector.load %arg8[%c0_10, %c0_11] : memref<8x128xf32, #tpu.memory_space<vmem>>, vector<8x128xf32>
      %c0_12 = arith.constant 0 : index
      %c0_13 = arith.constant 0 : index
      %13 = vector.load %arg5[%c0_12, %c0_13] : memref<1x128xf32, #tpu.memory_space<vmem>>, vector<1x128xf32>
      %14 = vector.broadcast %13 : vector<1x128xf32> to vector<8x128xf32>
      %15 = arith.addf %12, %14 : vector<8x128xf32>
      %c0_14 = arith.constant 0 : index
      %c0_15 = arith.constant 0 : index
      %16 = vector.load %arg6[%c0_14, %c0_15] : memref<8x128xbf16, #tpu.memory_space<vmem>>, vector<8x128xbf16>
      %17 = arith.extf %16 : vector<8x128xbf16> to vector<8x128xf32>
      %18 = arith.addf %15, %17 : vector<8x128xf32>
      %19 = arith.truncf %18 : vector<8x128xf32> to vector<8x128xbf16>
      %c0_16 = arith.constant 0 : index
      %c0_17 = arith.constant 0 : index
      %20 = vector.load %arg7[%c0_16, %c0_17] : memref<8x128xbf16, #tpu.memory_space<vmem>>, vector<8x128xbf16>
      tpu.vector_store %arg7[%c0_16, %c0_17], %19 {strides = array<i32>} : memref<8x128xbf16, #tpu.memory_space<vmem>>, vector<8x128xbf16>,
    } else {
    }
    return
  }
  func.func @transform_0(%arg0: i32, %arg1: i32, %arg2: i32) -> (i32, i32) {
    %c0_i32 = arith.constant 0 : i32
    return %arg0, %arg2 : i32, i32
  }
  func.func @transform_1(%arg0: i32, %arg1: i32, %arg2: i32) -> (i32, i32) {
    %c0_i32 = arith.constant 0 : i32
    return %arg2, %arg1 : i32, i32
  }
  func.func @transform_2(%arg0: i32, %arg1: i32, %arg2: i32) -> (i32, i32) {
    %c0_i32 = arith.constant 0 : i32
    %c0_i32_0 = arith.constant 0 : i32
    return %c0_i32, %arg1 : i32, i32
  }
  func.func @transform_3(%arg0: i32, %arg1: i32, %arg2: i32) -> (i32, i32) {
    %c0_i32 = arith.constant 0 : i32
    return %arg0, %arg1 : i32, i32
  }
  func.func @transform_4(%arg0: i32, %arg1: i32, %arg2: i32) -> (i32, i32) {
    %c0_i32 = arith.constant 0 : i32
    return %arg0, %arg1 : i32, i32
  }
}

module attributes {stable_mosaic.version = 11 : i64} {
  func.func @kernel(%arg0: i32, %arg1: i32, %arg2: i32, %arg3: memref<1x4x128xbf16, #tpu.memory_space<vmem>>, %arg4: memref<1x4x128xbf16, #tpu.memory_space<vmem>>, %arg5: memref<1x4x128xbf16, #tpu.memory_space<vmem>>, %arg6: memref<1x4x128xbf16, #tpu.memory_space<vmem>>, %arg7: memref<4x4xf32, #tpu.memory_space<vmem>>, %arg8: memref<4x4xf32, #tpu.memory_space<vmem>>, %arg9: memref<4x128xf32, #tpu.memory_space<vmem>>) attributes {dimension_semantics = [#tpu.dimension_semantics<parallel>, #tpu.dimension_semantics<parallel>, #tpu.dimension_semantics<arbitrary>], iteration_bounds = array<i64: 2, 1, 1>, scalar_prefetch = 0 : i64, scratch_operands = 3 : i64, tpu.core_type = #tpu.core_type<tc>, window_params = [{transform_indices = @transform_0, window_bounds = array<i64: 1, 4, 128>}, {transform_indices = @transform_1, window_bounds = array<i64: 1, 4, 128>}, {transform_indices = @transform_2, window_bounds = array<i64: 1, 4, 128>}, {transform_indices = @transform_3, window_bounds = array<i64: 1, 4, 128>}]} {
    %c0_i32 = arith.constant 0 : i32
    %0 = arith.cmpi eq, %arg2, %c0_i32 : i32
    %1 = arith.extui %0 : i1 to i32
    %c0_i32_0 = arith.constant 0 : i32
    %2 = arith.cmpi ne, %1, %c0_i32_0 : i32
    scf.if %2 {
      %cst_69 = arith.constant 0xFF800000 : f32
      %124 = vector.broadcast %cst_69 : f32 to vector<4x4xf32>
      %c0_70 = arith.constant 0 : index
      %c0_71 = arith.constant 0 : index
      %125 = vector.load %arg7[%c0_70, %c0_71] : memref<4x4xf32, #tpu.memory_space<vmem>>, vector<4x4xf32>
      tpu.vector_store %arg7[%c0_70, %c0_71], %124 {strides = array<i32>} : memref<4x4xf32, #tpu.memory_space<vmem>>, vector<4x4xf32>,
      %cst_72 = arith.constant 0.000000e+00 : f32
      %126 = vector.broadcast %cst_72 : f32 to vector<4x4xf32>
      %c0_73 = arith.constant 0 : index
      %c0_74 = arith.constant 0 : index
      %127 = vector.load %arg8[%c0_73, %c0_74] : memref<4x4xf32, #tpu.memory_space<vmem>>, vector<4x4xf32>
      tpu.vector_store %arg8[%c0_73, %c0_74], %126 {strides = array<i32>} : memref<4x4xf32, #tpu.memory_space<vmem>>, vector<4x4xf32>,
      %cst_75 = arith.constant 0.000000e+00 : f32
      %128 = vector.broadcast %cst_75 : f32 to vector<4x128xf32>
      %c0_76 = arith.constant 0 : index
      %c0_77 = arith.constant 0 : index
      %129 = vector.load %arg9[%c0_76, %c0_77] : memref<4x128xf32, #tpu.memory_space<vmem>>, vector<4x128xf32>
      tpu.vector_store %arg9[%c0_76, %c0_77], %128 {strides = array<i32>} : memref<4x128xf32, #tpu.memory_space<vmem>>, vector<4x128xf32>,
    } else {
    }
    %c0 = arith.constant 0 : index
    %c0_1 = arith.constant 0 : index
    %c0_2 = arith.constant 0 : index
    %3 = vector.load %arg3[%c0, %c0_1, %c0_2] : memref<1x4x128xbf16, #tpu.memory_space<vmem>>, vector<1x4x128xbf16>
    %4 = vector.shape_cast %3 : vector<1x4x128xbf16> to vector<4x128xbf16>
    %5 = arith.extf %4 : vector<4x128xbf16> to vector<4x128xf32>
    %cst = arith.constant 0.176776692 : f32
    %6 = vector.broadcast %cst : f32 to vector<4x128xf32>
    %7 = arith.mulf %5, %6 : vector<4x128xf32>
    %8 = arith.truncf %7 : vector<4x128xf32> to vector<4x128xbf16>
    %c0_3 = arith.constant 0 : index
    %c0_4 = arith.constant 0 : index
    %c0_5 = arith.constant 0 : index
    %9 = vector.load %arg4[%c0_3, %c0_4, %c0_5] : memref<1x4x128xbf16, #tpu.memory_space<vmem>>, vector<1x4x128xbf16>
    %10 = vector.shape_cast %9 : vector<1x4x128xbf16> to vector<4x128xbf16>
    %c0_6 = arith.constant 0 : index
    %c0_7 = arith.constant 0 : index
    %c0_8 = arith.constant 0 : index
    %11 = vector.load %arg5[%c0_6, %c0_7, %c0_8] : memref<1x4x128xbf16, #tpu.memory_space<vmem>>, vector<1x4x128xbf16>
    %12 = vector.shape_cast %11 : vector<1x4x128xbf16> to vector<4x128xbf16>
    %13 = vector.extract_strided_slice %8 {offsets = [0, 0], sizes = [4, 32], strides = [1, 1]} : vector<4x128xbf16> to vector<4x32xbf16>
    %14 = vector.extract_strided_slice %10 {offsets = [0, 0], sizes = [4, 32], strides = [1, 1]} : vector<4x128xbf16> to vector<4x32xbf16>
    %15 = vector.extract_strided_slice %12 {offsets = [0, 0], sizes = [4, 32], strides = [1, 1]} : vector<4x128xbf16> to vector<4x32xbf16>
    %cst_9 = arith.constant dense<0.000000e+00> : vector<4x4xf32>
    %16 = tpu.matmul %13, %14, %cst_9 {dimension_numbers = #tpu.dot_dimension_numbers<[1], [1], [0], [0], [0, 0, 1, 0], [], []>} : vector<4x32xbf16>, vector<4x32xbf16>, vector<4x4xf32> -> vector<4x4xf32>
    %c0_10 = arith.constant 0 : index
    %c0_11 = arith.constant 0 : index
    %17 = vector.load %arg7[%c0_10, %c0_11] : memref<4x4xf32, #tpu.memory_space<vmem>>, vector<4x1xf32>
    %c0_12 = arith.constant 0 : index
    %c0_13 = arith.constant 0 : index
    %18 = vector.load %arg8[%c0_12, %c0_13] : memref<4x4xf32, #tpu.memory_space<vmem>>, vector<4x1xf32>
    %cst_14 = arith.constant dense<0xFF800000> : vector<4xf32>
    %19 = vector.multi_reduction <maximumf>, %16, %cst_14 [1] : vector<4x4xf32> to vector<4xf32>
    %20 = vector.shape_cast %19 : vector<4xf32> to vector<4x1xf32>
    %21 = arith.maximumf %17, %20 : vector<4x1xf32>
    %22 = arith.subf %17, %21 : vector<4x1xf32>
    %23 = math.exp %22 : vector<4x1xf32>
    %24 = vector.broadcast %21 : vector<4x1xf32> to vector<4x4xf32>
    %25 = arith.subf %16, %24 : vector<4x4xf32>
    %26 = math.exp %25 : vector<4x4xf32>
    %27 = arith.mulf %23, %18 : vector<4x1xf32>
    %cst_15 = arith.constant dense<0.000000e+00> : vector<4xf32>
    %28 = vector.multi_reduction <add>, %26, %cst_15 [1] : vector<4x4xf32> to vector<4xf32>
    %29 = vector.shape_cast %28 : vector<4xf32> to vector<4x1xf32>
    %30 = arith.addf %27, %29 : vector<4x1xf32>
    %c0_16 = arith.constant 0 : index
    %c0_17 = arith.constant 0 : index
    %31 = vector.load %arg8[%c0_16, %c0_17] : memref<4x4xf32, #tpu.memory_space<vmem>>, vector<4x1xf32>
    tpu.vector_store %arg8[%c0_16, %c0_17], %30 {strides = array<i32>} : memref<4x4xf32, #tpu.memory_space<vmem>>, vector<4x1xf32>,
    %32 = arith.truncf %26 : vector<4x4xf32> to vector<4x4xbf16>
    %cst_18 = arith.constant dense<0.000000e+00> : vector<4x32xf32>
    %33 = tpu.matmul %32, %15, %cst_18 {dimension_numbers = #tpu.dot_dimension_numbers<[1], [0], [0], [1], [0, 0, 1, 1], [], []>} : vector<4x4xbf16>, vector<4x32xbf16>, vector<4x32xf32> -> vector<4x32xf32>
    %c0_19 = arith.constant 0 : index
    %c0_20 = arith.constant 0 : index
    %34 = vector.load %arg9[%c0_19, %c0_20] : memref<4x128xf32, #tpu.memory_space<vmem>>, vector<4x32xf32>
    %35 = vector.broadcast %23 : vector<4x1xf32> to vector<4x32xf32>
    %36 = arith.mulf %35, %34 : vector<4x32xf32>
    %37 = arith.addf %36, %33 : vector<4x32xf32>
    %c0_21 = arith.constant 0 : index
    %c0_22 = arith.constant 0 : index
    %38 = vector.load %arg9[%c0_21, %c0_22] : memref<4x128xf32, #tpu.memory_space<vmem>>, vector<4x32xf32>
    tpu.vector_store %arg9[%c0_21, %c0_22], %37 {strides = array<i32>} : memref<4x128xf32, #tpu.memory_space<vmem>>, vector<4x32xf32>,
    %c0_23 = arith.constant 0 : index
    %c0_24 = arith.constant 0 : index
    %39 = vector.load %arg7[%c0_23, %c0_24] : memref<4x4xf32, #tpu.memory_space<vmem>>, vector<4x1xf32>
    tpu.vector_store %arg7[%c0_23, %c0_24], %21 {strides = array<i32>} : memref<4x4xf32, #tpu.memory_space<vmem>>, vector<4x1xf32>,
    %40 = vector.extract_strided_slice %8 {offsets = [0, 32], sizes = [4, 32], strides = [1, 1]} : vector<4x128xbf16> to vector<4x32xbf16>
    %41 = vector.extract_strided_slice %10 {offsets = [0, 32], sizes = [4, 32], strides = [1, 1]} : vector<4x128xbf16> to vector<4x32xbf16>
    %42 = vector.extract_strided_slice %12 {offsets = [0, 32], sizes = [4, 32], strides = [1, 1]} : vector<4x128xbf16> to vector<4x32xbf16>
    %cst_25 = arith.constant dense<0.000000e+00> : vector<4x4xf32>
    %43 = tpu.matmul %40, %41, %cst_25 {dimension_numbers = #tpu.dot_dimension_numbers<[1], [1], [0], [0], [0, 0, 1, 0], [], []>} : vector<4x32xbf16>, vector<4x32xbf16>, vector<4x4xf32> -> vector<4x4xf32>
    %c0_26 = arith.constant 0 : index
    %c1 = arith.constant 1 : index
    %44 = vector.load %arg7[%c0_26, %c1] : memref<4x4xf32, #tpu.memory_space<vmem>>, vector<4x1xf32>
    %c0_27 = arith.constant 0 : index
    %c1_28 = arith.constant 1 : index
    %45 = vector.load %arg8[%c0_27, %c1_28] : memref<4x4xf32, #tpu.memory_space<vmem>>, vector<4x1xf32>
    %cst_29 = arith.constant dense<0xFF800000> : vector<4xf32>
    %46 = vector.multi_reduction <maximumf>, %43, %cst_29 [1] : vector<4x4xf32> to vector<4xf32>
    %47 = vector.shape_cast %46 : vector<4xf32> to vector<4x1xf32>
    %48 = arith.maximumf %44, %47 : vector<4x1xf32>
    %49 = arith.subf %44, %48 : vector<4x1xf32>
    %50 = math.exp %49 : vector<4x1xf32>
    %51 = vector.broadcast %48 : vector<4x1xf32> to vector<4x4xf32>
    %52 = arith.subf %43, %51 : vector<4x4xf32>
    %53 = math.exp %52 : vector<4x4xf32>
    %54 = arith.mulf %50, %45 : vector<4x1xf32>
    %cst_30 = arith.constant dense<0.000000e+00> : vector<4xf32>
    %55 = vector.multi_reduction <add>, %53, %cst_30 [1] : vector<4x4xf32> to vector<4xf32>
    %56 = vector.shape_cast %55 : vector<4xf32> to vector<4x1xf32>
    %57 = arith.addf %54, %56 : vector<4x1xf32>
    %c0_31 = arith.constant 0 : index
    %c1_32 = arith.constant 1 : index
    %58 = vector.load %arg8[%c0_31, %c1_32] : memref<4x4xf32, #tpu.memory_space<vmem>>, vector<4x1xf32>
    tpu.vector_store %arg8[%c0_31, %c1_32], %57 {strides = array<i32>} : memref<4x4xf32, #tpu.memory_space<vmem>>, vector<4x1xf32>,
    %59 = arith.truncf %53 : vector<4x4xf32> to vector<4x4xbf16>
    %cst_33 = arith.constant dense<0.000000e+00> : vector<4x32xf32>
    %60 = tpu.matmul %59, %42, %cst_33 {dimension_numbers = #tpu.dot_dimension_numbers<[1], [0], [0], [1], [0, 0, 1, 1], [], []>} : vector<4x4xbf16>, vector<4x32xbf16>, vector<4x32xf32> -> vector<4x32xf32>
    %c0_34 = arith.constant 0 : index
    %c32 = arith.constant 32 : index
    %61 = vector.load %arg9[%c0_34, %c32] : memref<4x128xf32, #tpu.memory_space<vmem>>, vector<4x32xf32>
    %62 = vector.broadcast %50 : vector<4x1xf32> to vector<4x32xf32>
    %63 = arith.mulf %62, %61 : vector<4x32xf32>
    %64 = arith.addf %63, %60 : vector<4x32xf32>
    %c0_35 = arith.constant 0 : index
    %c32_36 = arith.constant 32 : index
    %65 = vector.load %arg9[%c0_35, %c32_36] : memref<4x128xf32, #tpu.memory_space<vmem>>, vector<4x32xf32>
    tpu.vector_store %arg9[%c0_35, %c32_36], %64 {strides = array<i32>} : memref<4x128xf32, #tpu.memory_space<vmem>>, vector<4x32xf32>,
    %c0_37 = arith.constant 0 : index
    %c1_38 = arith.constant 1 : index
    %66 = vector.load %arg7[%c0_37, %c1_38] : memref<4x4xf32, #tpu.memory_space<vmem>>, vector<4x1xf32>
    tpu.vector_store %arg7[%c0_37, %c1_38], %48 {strides = array<i32>} : memref<4x4xf32, #tpu.memory_space<vmem>>, vector<4x1xf32>,
    %67 = vector.extract_strided_slice %8 {offsets = [0, 64], sizes = [4, 32], strides = [1, 1]} : vector<4x128xbf16> to vector<4x32xbf16>
    %68 = vector.extract_strided_slice %10 {offsets = [0, 64], sizes = [4, 32], strides = [1, 1]} : vector<4x128xbf16> to vector<4x32xbf16>
    %69 = vector.extract_strided_slice %12 {offsets = [0, 64], sizes = [4, 32], strides = [1, 1]} : vector<4x128xbf16> to vector<4x32xbf16>
    %cst_39 = arith.constant dense<0.000000e+00> : vector<4x4xf32>
    %70 = tpu.matmul %67, %68, %cst_39 {dimension_numbers = #tpu.dot_dimension_numbers<[1], [1], [0], [0], [0, 0, 1, 0], [], []>} : vector<4x32xbf16>, vector<4x32xbf16>, vector<4x4xf32> -> vector<4x4xf32>
    %c0_40 = arith.constant 0 : index
    %c2 = arith.constant 2 : index
    %71 = vector.load %arg7[%c0_40, %c2] : memref<4x4xf32, #tpu.memory_space<vmem>>, vector<4x1xf32>
    %c0_41 = arith.constant 0 : index
    %c2_42 = arith.constant 2 : index
    %72 = vector.load %arg8[%c0_41, %c2_42] : memref<4x4xf32, #tpu.memory_space<vmem>>, vector<4x1xf32>
    %cst_43 = arith.constant dense<0xFF800000> : vector<4xf32>
    %73 = vector.multi_reduction <maximumf>, %70, %cst_43 [1] : vector<4x4xf32> to vector<4xf32>
    %74 = vector.shape_cast %73 : vector<4xf32> to vector<4x1xf32>
    %75 = arith.maximumf %71, %74 : vector<4x1xf32>
    %76 = arith.subf %71, %75 : vector<4x1xf32>
    %77 = math.exp %76 : vector<4x1xf32>
    %78 = vector.broadcast %75 : vector<4x1xf32> to vector<4x4xf32>
    %79 = arith.subf %70, %78 : vector<4x4xf32>
    %80 = math.exp %79 : vector<4x4xf32>
    %81 = arith.mulf %77, %72 : vector<4x1xf32>
    %cst_44 = arith.constant dense<0.000000e+00> : vector<4xf32>
    %82 = vector.multi_reduction <add>, %80, %cst_44 [1] : vector<4x4xf32> to vector<4xf32>
    %83 = vector.shape_cast %82 : vector<4xf32> to vector<4x1xf32>
    %84 = arith.addf %81, %83 : vector<4x1xf32>
    %c0_45 = arith.constant 0 : index
    %c2_46 = arith.constant 2 : index
    %85 = vector.load %arg8[%c0_45, %c2_46] : memref<4x4xf32, #tpu.memory_space<vmem>>, vector<4x1xf32>
    tpu.vector_store %arg8[%c0_45, %c2_46], %84 {strides = array<i32>} : memref<4x4xf32, #tpu.memory_space<vmem>>, vector<4x1xf32>,
    %86 = arith.truncf %80 : vector<4x4xf32> to vector<4x4xbf16>
    %cst_47 = arith.constant dense<0.000000e+00> : vector<4x32xf32>
    %87 = tpu.matmul %86, %69, %cst_47 {dimension_numbers = #tpu.dot_dimension_numbers<[1], [0], [0], [1], [0, 0, 1, 1], [], []>} : vector<4x4xbf16>, vector<4x32xbf16>, vector<4x32xf32> -> vector<4x32xf32>
    %c0_48 = arith.constant 0 : index
    %c64 = arith.constant 64 : index
    %88 = vector.load %arg9[%c0_48, %c64] : memref<4x128xf32, #tpu.memory_space<vmem>>, vector<4x32xf32>
    %89 = vector.broadcast %77 : vector<4x1xf32> to vector<4x32xf32>
    %90 = arith.mulf %89, %88 : vector<4x32xf32>
    %91 = arith.addf %90, %87 : vector<4x32xf32>
    %c0_49 = arith.constant 0 : index
    %c64_50 = arith.constant 64 : index
    %92 = vector.load %arg9[%c0_49, %c64_50] : memref<4x128xf32, #tpu.memory_space<vmem>>, vector<4x32xf32>
    tpu.vector_store %arg9[%c0_49, %c64_50], %91 {strides = array<i32>} : memref<4x128xf32, #tpu.memory_space<vmem>>, vector<4x32xf32>,
    %c0_51 = arith.constant 0 : index
    %c2_52 = arith.constant 2 : index
    %93 = vector.load %arg7[%c0_51, %c2_52] : memref<4x4xf32, #tpu.memory_space<vmem>>, vector<4x1xf32>
    tpu.vector_store %arg7[%c0_51, %c2_52], %75 {strides = array<i32>} : memref<4x4xf32, #tpu.memory_space<vmem>>, vector<4x1xf32>,
    %94 = vector.extract_strided_slice %8 {offsets = [0, 96], sizes = [4, 32], strides = [1, 1]} : vector<4x128xbf16> to vector<4x32xbf16>
    %95 = vector.extract_strided_slice %10 {offsets = [0, 96], sizes = [4, 32], strides = [1, 1]} : vector<4x128xbf16> to vector<4x32xbf16>
    %96 = vector.extract_strided_slice %12 {offsets = [0, 96], sizes = [4, 32], strides = [1, 1]} : vector<4x128xbf16> to vector<4x32xbf16>
    %cst_53 = arith.constant dense<0.000000e+00> : vector<4x4xf32>
    %97 = tpu.matmul %94, %95, %cst_53 {dimension_numbers = #tpu.dot_dimension_numbers<[1], [1], [0], [0], [0, 0, 1, 0], [], []>} : vector<4x32xbf16>, vector<4x32xbf16>, vector<4x4xf32> -> vector<4x4xf32>
    %c0_54 = arith.constant 0 : index
    %c3 = arith.constant 3 : index
    %98 = vector.load %arg7[%c0_54, %c3] : memref<4x4xf32, #tpu.memory_space<vmem>>, vector<4x1xf32>
    %c0_55 = arith.constant 0 : index
    %c3_56 = arith.constant 3 : index
    %99 = vector.load %arg8[%c0_55, %c3_56] : memref<4x4xf32, #tpu.memory_space<vmem>>, vector<4x1xf32>
    %cst_57 = arith.constant dense<0xFF800000> : vector<4xf32>
    %100 = vector.multi_reduction <maximumf>, %97, %cst_57 [1] : vector<4x4xf32> to vector<4xf32>
    %101 = vector.shape_cast %100 : vector<4xf32> to vector<4x1xf32>
    %102 = arith.maximumf %98, %101 : vector<4x1xf32>
    %103 = arith.subf %98, %102 : vector<4x1xf32>
    %104 = math.exp %103 : vector<4x1xf32>
    %105 = vector.broadcast %102 : vector<4x1xf32> to vector<4x4xf32>
    %106 = arith.subf %97, %105 : vector<4x4xf32>
    %107 = math.exp %106 : vector<4x4xf32>
    %108 = arith.mulf %104, %99 : vector<4x1xf32>
    %cst_58 = arith.constant dense<0.000000e+00> : vector<4xf32>
    %109 = vector.multi_reduction <add>, %107, %cst_58 [1] : vector<4x4xf32> to vector<4xf32>
    %110 = vector.shape_cast %109 : vector<4xf32> to vector<4x1xf32>
    %111 = arith.addf %108, %110 : vector<4x1xf32>
    %c0_59 = arith.constant 0 : index
    %c3_60 = arith.constant 3 : index
    %112 = vector.load %arg8[%c0_59, %c3_60] : memref<4x4xf32, #tpu.memory_space<vmem>>, vector<4x1xf32>
    tpu.vector_store %arg8[%c0_59, %c3_60], %111 {strides = array<i32>} : memref<4x4xf32, #tpu.memory_space<vmem>>, vector<4x1xf32>,
    %113 = arith.truncf %107 : vector<4x4xf32> to vector<4x4xbf16>
    %cst_61 = arith.constant dense<0.000000e+00> : vector<4x32xf32>
    %114 = tpu.matmul %113, %96, %cst_61 {dimension_numbers = #tpu.dot_dimension_numbers<[1], [0], [0], [1], [0, 0, 1, 1], [], []>} : vector<4x4xbf16>, vector<4x32xbf16>, vector<4x32xf32> -> vector<4x32xf32>
    %c0_62 = arith.constant 0 : index
    %c96 = arith.constant 96 : index
    %115 = vector.load %arg9[%c0_62, %c96] : memref<4x128xf32, #tpu.memory_space<vmem>>, vector<4x32xf32>
    %116 = vector.broadcast %104 : vector<4x1xf32> to vector<4x32xf32>
    %117 = arith.mulf %116, %115 : vector<4x32xf32>
    %118 = arith.addf %117, %114 : vector<4x32xf32>
    %c0_63 = arith.constant 0 : index
    %c96_64 = arith.constant 96 : index
    %119 = vector.load %arg9[%c0_63, %c96_64] : memref<4x128xf32, #tpu.memory_space<vmem>>, vector<4x32xf32>
    tpu.vector_store %arg9[%c0_63, %c96_64], %118 {strides = array<i32>} : memref<4x128xf32, #tpu.memory_space<vmem>>, vector<4x32xf32>,
    %c0_65 = arith.constant 0 : index
    %c3_66 = arith.constant 3 : index
    %120 = vector.load %arg7[%c0_65, %c3_66] : memref<4x4xf32, #tpu.memory_space<vmem>>, vector<4x1xf32>
    tpu.vector_store %arg7[%c0_65, %c3_66], %102 {strides = array<i32>} : memref<4x4xf32, #tpu.memory_space<vmem>>, vector<4x1xf32>,
    %c0_i32_67 = arith.constant 0 : i32
    %121 = arith.cmpi eq, %arg2, %c0_i32_67 : i32
    %122 = arith.extui %121 : i1 to i32
    %c0_i32_68 = arith.constant 0 : i32
    %123 = arith.cmpi ne, %122, %c0_i32_68 : i32
    scf.if %123 {
      %c0_69 = arith.constant 0 : index
      %c0_70 = arith.constant 0 : index
      %124 = vector.load %arg8[%c0_69, %c0_70] : memref<4x4xf32, #tpu.memory_space<vmem>>, vector<4x1xf32>
      %125 = tpu.reciprocal %124 {approx = true} : vector<4x1xf32> -> vector<4x1xf32>
      %c0_71 = arith.constant 0 : index
      %c0_72 = arith.constant 0 : index
      %126 = vector.load %arg9[%c0_71, %c0_72] : memref<4x128xf32, #tpu.memory_space<vmem>>, vector<4x32xf32>
      %127 = vector.broadcast %125 : vector<4x1xf32> to vector<4x32xf32>
      %128 = arith.mulf %126, %127 : vector<4x32xf32>
      %129 = arith.truncf %128 : vector<4x32xf32> to vector<4x32xbf16>
      %c0_73 = arith.constant 0 : index
      %c0_74 = arith.constant 0 : index
      %c0_75 = arith.constant 0 : index
      %130 = vector.load %arg6[%c0_73, %c0_74, %c0_75] : memref<1x4x128xbf16, #tpu.memory_space<vmem>>, vector<1x4x32xbf16>
      %131 = vector.shape_cast %130 : vector<1x4x32xbf16> to vector<4x32xbf16>
      %132 = vector.shape_cast %129 : vector<4x32xbf16> to vector<1x4x32xbf16>
      tpu.vector_store %arg6[%c0_73, %c0_74, %c0_75], %132 {strides = array<i32>} : memref<1x4x128xbf16, #tpu.memory_space<vmem>>, vector<1x4x32xbf16>,
      %c0_76 = arith.constant 0 : index
      %c1_77 = arith.constant 1 : index
      %133 = vector.load %arg8[%c0_76, %c1_77] : memref<4x4xf32, #tpu.memory_space<vmem>>, vector<4x1xf32>
      %134 = tpu.reciprocal %133 {approx = true} : vector<4x1xf32> -> vector<4x1xf32>
      %c0_78 = arith.constant 0 : index
      %c32_79 = arith.constant 32 : index
      %135 = vector.load %arg9[%c0_78, %c32_79] : memref<4x128xf32, #tpu.memory_space<vmem>>, vector<4x32xf32>
      %136 = vector.broadcast %134 : vector<4x1xf32> to vector<4x32xf32>
      %137 = arith.mulf %135, %136 : vector<4x32xf32>
      %138 = arith.truncf %137 : vector<4x32xf32> to vector<4x32xbf16>
      %c0_80 = arith.constant 0 : index
      %c0_81 = arith.constant 0 : index
      %c32_82 = arith.constant 32 : index
      %139 = vector.load %arg6[%c0_80, %c0_81, %c32_82] : memref<1x4x128xbf16, #tpu.memory_space<vmem>>, vector<1x4x32xbf16>
      %140 = vector.shape_cast %139 : vector<1x4x32xbf16> to vector<4x32xbf16>
      %141 = vector.shape_cast %138 : vector<4x32xbf16> to vector<1x4x32xbf16>
      tpu.vector_store %arg6[%c0_80, %c0_81, %c32_82], %141 {strides = array<i32>} : memref<1x4x128xbf16, #tpu.memory_space<vmem>>, vector<1x4x32xbf16>,
      %c0_83 = arith.constant 0 : index
      %c2_84 = arith.constant 2 : index
      %142 = vector.load %arg8[%c0_83, %c2_84] : memref<4x4xf32, #tpu.memory_space<vmem>>, vector<4x1xf32>
      %143 = tpu.reciprocal %142 {approx = true} : vector<4x1xf32> -> vector<4x1xf32>
      %c0_85 = arith.constant 0 : index
      %c64_86 = arith.constant 64 : index
      %144 = vector.load %arg9[%c0_85, %c64_86] : memref<4x128xf32, #tpu.memory_space<vmem>>, vector<4x32xf32>
      %145 = vector.broadcast %143 : vector<4x1xf32> to vector<4x32xf32>
      %146 = arith.mulf %144, %145 : vector<4x32xf32>
      %147 = arith.truncf %146 : vector<4x32xf32> to vector<4x32xbf16>
      %c0_87 = arith.constant 0 : index
      %c0_88 = arith.constant 0 : index
      %c64_89 = arith.constant 64 : index
      %148 = vector.load %arg6[%c0_87, %c0_88, %c64_89] : memref<1x4x128xbf16, #tpu.memory_space<vmem>>, vector<1x4x32xbf16>
      %149 = vector.shape_cast %148 : vector<1x4x32xbf16> to vector<4x32xbf16>
      %150 = vector.shape_cast %147 : vector<4x32xbf16> to vector<1x4x32xbf16>
      tpu.vector_store %arg6[%c0_87, %c0_88, %c64_89], %150 {strides = array<i32>} : memref<1x4x128xbf16, #tpu.memory_space<vmem>>, vector<1x4x32xbf16>,
      %c0_90 = arith.constant 0 : index
      %c3_91 = arith.constant 3 : index
      %151 = vector.load %arg8[%c0_90, %c3_91] : memref<4x4xf32, #tpu.memory_space<vmem>>, vector<4x1xf32>
      %152 = tpu.reciprocal %151 {approx = true} : vector<4x1xf32> -> vector<4x1xf32>
      %c0_92 = arith.constant 0 : index
      %c96_93 = arith.constant 96 : index
      %153 = vector.load %arg9[%c0_92, %c96_93] : memref<4x128xf32, #tpu.memory_space<vmem>>, vector<4x32xf32>
      %154 = vector.broadcast %152 : vector<4x1xf32> to vector<4x32xf32>
      %155 = arith.mulf %153, %154 : vector<4x32xf32>
      %156 = arith.truncf %155 : vector<4x32xf32> to vector<4x32xbf16>
      %c0_94 = arith.constant 0 : index
      %c0_95 = arith.constant 0 : index
      %c96_96 = arith.constant 96 : index
      %157 = vector.load %arg6[%c0_94, %c0_95, %c96_96] : memref<1x4x128xbf16, #tpu.memory_space<vmem>>, vector<1x4x32xbf16>
      %158 = vector.shape_cast %157 : vector<1x4x32xbf16> to vector<4x32xbf16>
      %159 = vector.shape_cast %156 : vector<4x32xbf16> to vector<1x4x32xbf16>
      tpu.vector_store %arg6[%c0_94, %c0_95, %c96_96], %159 {strides = array<i32>} : memref<1x4x128xbf16, #tpu.memory_space<vmem>>, vector<1x4x32xbf16>,
    } else {
    }
    return
  }
  func.func @transform_0(%arg0: i32, %arg1: i32, %arg2: i32) -> (i32, i32, i32) {
    %c0_i32 = arith.constant 0 : i32
    %c0_i32_0 = arith.constant 0 : i32
    return %arg0, %arg1, %c0_i32 : i32, i32, i32
  }
  func.func @transform_1(%arg0: i32, %arg1: i32, %arg2: i32) -> (i32, i32, i32) {
    %c0_i32 = arith.constant 0 : i32
    %c0_i32_0 = arith.constant 0 : i32
    return %arg0, %arg2, %c0_i32 : i32, i32, i32
  }
  func.func @transform_2(%arg0: i32, %arg1: i32, %arg2: i32) -> (i32, i32, i32) {
    %c0_i32 = arith.constant 0 : i32
    %c0_i32_0 = arith.constant 0 : i32
    return %arg0, %arg2, %c0_i32 : i32, i32, i32
  }
  func.func @transform_3(%arg0: i32, %arg1: i32, %arg2: i32) -> (i32, i32, i32) {
    %c0_i32 = arith.constant 0 : i32
    %c0_i32_0 = arith.constant 0 : i32
    return %arg0, %arg1, %c0_i32 : i32, i32, i32
  }
}

module attributes {stable_mosaic.version = 11 : i64} {
  func.func @kernel(%arg0: i32, %arg1: i32, %arg2: i32, %arg3: memref<8x128xbf16, #tpu.memory_space<vmem>>, %arg4: memref<128x128xbf16, #tpu.memory_space<vmem>>, %arg5: memref<1x128xf32, #tpu.memory_space<vmem>>, %arg6: memref<8x128xbf16, #tpu.memory_space<vmem>>, %arg7: memref<8x128xbf16, #tpu.memory_space<vmem>>, %arg8: memref<8x128xf32, #tpu.memory_space<vmem>>) attributes {dimension_semantics = [#tpu.dimension_semantics<parallel>, #tpu.dimension_semantics<parallel>, #tpu.dimension_semantics<arbitrary>], iteration_bounds = array<i64: 1, 1, 1>, scalar_prefetch = 0 : i64, scratch_operands = 1 : i64, tpu.core_type = #tpu.core_type<tc>, window_params = [{transform_indices = @transform_0, window_bounds = array<i64: 8, 128>}, {transform_indices = @transform_1, window_bounds = array<i64: 128, 128>}, {transform_indices = @transform_2, window_bounds = array<i64: 1, 128>}, {transform_indices = @transform_3, window_bounds = array<i64: 8, 128>}, {transform_indices = @transform_4, window_bounds = array<i64: 8, 128>}]} {
    %c0_i32 = arith.constant 0 : i32
    %0 = arith.cmpi eq, %arg2, %c0_i32 : i32
    %1 = arith.extui %0 : i1 to i32
    %c0_i32_0 = arith.constant 0 : i32
    %2 = arith.cmpi ne, %1, %c0_i32_0 : i32
    scf.if %2 {
      %cst_10 = arith.constant 0.000000e+00 : f32
      %12 = vector.broadcast %cst_10 : f32 to vector<8x128xf32>
      %c0_11 = arith.constant 0 : index
      %c0_12 = arith.constant 0 : index
      %13 = vector.load %arg8[%c0_11, %c0_12] : memref<8x128xf32, #tpu.memory_space<vmem>>, vector<8x128xf32>
      tpu.vector_store %arg8[%c0_11, %c0_12], %12 {strides = array<i32>} : memref<8x128xf32, #tpu.memory_space<vmem>>, vector<8x128xf32>,
    } else {
    }
    %c0 = arith.constant 0 : index
    %c0_1 = arith.constant 0 : index
    %3 = vector.load %arg8[%c0, %c0_1] : memref<8x128xf32, #tpu.memory_space<vmem>>, vector<8x128xf32>
    %c0_2 = arith.constant 0 : index
    %c0_3 = arith.constant 0 : index
    %4 = vector.load %arg3[%c0_2, %c0_3] : memref<8x128xbf16, #tpu.memory_space<vmem>>, vector<8x128xbf16>
    %c0_4 = arith.constant 0 : index
    %c0_5 = arith.constant 0 : index
    %5 = vector.load %arg4[%c0_4, %c0_5] : memref<128x128xbf16, #tpu.memory_space<vmem>>, vector<128x128xbf16>
    %cst = arith.constant dense<0.000000e+00> : vector<8x128xf32>
    %6 = tpu.matmul %4, %5, %cst {dimension_numbers = #tpu.dot_dimension_numbers<[1], [0], [0], [1], [0, 0, 1, 1], [], []>} : vector<8x128xbf16>, vector<128x128xbf16>, vector<8x128xf32> -> vector<8x128xf32>
    %7 = arith.addf %3, %6 : vector<8x128xf32>
    %c0_6 = arith.constant 0 : index
    %c0_7 = arith.constant 0 : index
    %8 = vector.load %arg8[%c0_6, %c0_7] : memref<8x128xf32, #tpu.memory_space<vmem>>, vector<8x128xf32>
    tpu.vector_store %arg8[%c0_6, %c0_7], %7 {strides = array<i32>} : memref<8x128xf32, #tpu.memory_space<vmem>>, vector<8x128xf32>,
    %c0_i32_8 = arith.constant 0 : i32
    %9 = arith.cmpi eq, %arg2, %c0_i32_8 : i32
    %10 = arith.extui %9 : i1 to i32
    %c0_i32_9 = arith.constant 0 : i32
    %11 = arith.cmpi ne, %10, %c0_i32_9 : i32
    scf.if %11 {
      %c0_10 = arith.constant 0 : index
      %c0_11 = arith.constant 0 : index
      %12 = vector.load %arg8[%c0_10, %c0_11] : memref<8x128xf32, #tpu.memory_space<vmem>>, vector<8x128xf32>
      %c0_12 = arith.constant 0 : index
      %c0_13 = arith.constant 0 : index
      %13 = vector.load %arg5[%c0_12, %c0_13] : memref<1x128xf32, #tpu.memory_space<vmem>>, vector<1x128xf32>
      %14 = vector.broadcast %13 : vector<1x128xf32> to vector<8x128xf32>
      %15 = arith.addf %12, %14 : vector<8x128xf32>
      %c0_14 = arith.constant 0 : index
      %c0_15 = arith.constant 0 : index
      %16 = vector.load %arg6[%c0_14, %c0_15] : memref<8x128xbf16, #tpu.memory_space<vmem>>, vector<8x128xbf16>
      %17 = arith.extf %16 : vector<8x128xbf16> to vector<8x128xf32>
      %18 = arith.addf %15, %17 : vector<8x128xf32>
      %19 = arith.truncf %18 : vector<8x128xf32> to vector<8x128xbf16>
      %c0_16 = arith.constant 0 : index
      %c0_17 = arith.constant 0 : index
      %20 = vector.load %arg7[%c0_16, %c0_17] : memref<8x128xbf16, #tpu.memory_space<vmem>>, vector<8x128xbf16>
      tpu.vector_store %arg7[%c0_16, %c0_17], %19 {strides = array<i32>} : memref<8x128xbf16, #tpu.memory_space<vmem>>, vector<8x128xbf16>,
    } else {
    }
    return
  }
  func.func @transform_0(%arg0: i32, %arg1: i32, %arg2: i32) -> (i32, i32) {
    %c0_i32 = arith.constant 0 : i32
    return %arg0, %arg2 : i32, i32
  }
  func.func @transform_1(%arg0: i32, %arg1: i32, %arg2: i32) -> (i32, i32) {
    %c0_i32 = arith.constant 0 : i32
    return %arg2, %arg1 : i32, i32
  }
  func.func @transform_2(%arg0: i32, %arg1: i32, %arg2: i32) -> (i32, i32) {
    %c0_i32 = arith.constant 0 : i32
    %c0_i32_0 = arith.constant 0 : i32
    return %c0_i32, %arg1 : i32, i32
  }
  func.func @transform_3(%arg0: i32, %arg1: i32, %arg2: i32) -> (i32, i32) {
    %c0_i32 = arith.constant 0 : i32
    return %arg0, %arg1 : i32, i32
  }
  func.func @transform_4(%arg0: i32, %arg1: i32, %arg2: i32) -> (i32, i32) {
    %c0_i32 = arith.constant 0 : i32
    return %arg0, %arg1 : i32, i32
  }
}

module attributes {stable_mosaic.version = 11 : i64} {
  func.func @_ln_siglip_mlp_kernel(%arg0: i32, %arg1: i32, %arg2: memref<8x128xbf16, #tpu.memory_space<vmem>>, %arg3: memref<1x128xf32, #tpu.memory_space<vmem>>, %arg4: memref<1x128xf32, #tpu.memory_space<vmem>>, %arg5: memref<128x256xbf16, #tpu.memory_space<vmem>>, %arg6: memref<1x256xf32, #tpu.memory_space<vmem>>, %arg7: memref<256x128xbf16, #tpu.memory_space<vmem>>, %arg8: memref<1x128xf32, #tpu.memory_space<vmem>>, %arg9: memref<8x128xbf16, #tpu.memory_space<vmem>>, %arg10: memref<8x128xf32, #tpu.memory_space<vmem>>) attributes {dimension_semantics = [#tpu.dimension_semantics<parallel>, #tpu.dimension_semantics<arbitrary>], iteration_bounds = array<i64: 1, 1>, scalar_prefetch = 0 : i64, scratch_operands = 1 : i64, tpu.core_type = #tpu.core_type<tc>, window_params = [{transform_indices = @transform_0, window_bounds = array<i64: 8, 128>}, {pipeline_mode = #tpu.pipeline_mode<synchronous>, transform_indices = @transform_1, window_bounds = array<i64: 1, 128>}, {pipeline_mode = #tpu.pipeline_mode<synchronous>, transform_indices = @transform_2, window_bounds = array<i64: 1, 128>}, {transform_indices = @transform_3, window_bounds = array<i64: 128, 256>}, {transform_indices = @transform_4, window_bounds = array<i64: 1, 256>}, {transform_indices = @transform_5, window_bounds = array<i64: 256, 128>}, {pipeline_mode = #tpu.pipeline_mode<synchronous>, transform_indices = @transform_6, window_bounds = array<i64: 1, 128>}, {transform_indices = @transform_7, window_bounds = array<i64: 8, 128>}]} {
    %c0_i32 = arith.constant 0 : i32
    %0 = arith.cmpi eq, %arg1, %c0_i32 : i32
    %1 = arith.extui %0 : i1 to i32
    %c0_i32_0 = arith.constant 0 : i32
    %2 = arith.cmpi ne, %1, %c0_i32_0 : i32
    scf.if %2 {
      %cst_28 = arith.constant 0.000000e+00 : f32
      %55 = vector.broadcast %cst_28 : f32 to vector<8x128xf32>
      %c0_29 = arith.constant 0 : index
      %c0_30 = arith.constant 0 : index
      %56 = vector.load %arg10[%c0_29, %c0_30] : memref<8x128xf32, #tpu.memory_space<vmem>>, vector<8x128xf32>
      tpu.vector_store %arg10[%c0_29, %c0_30], %55 {strides = array<i32>} : memref<8x128xf32, #tpu.memory_space<vmem>>, vector<8x128xf32>,
    } else {
    }
    %c0 = arith.constant 0 : index
    %c0_1 = arith.constant 0 : index
    %3 = vector.load %arg2[%c0, %c0_1] : memref<8x128xbf16, #tpu.memory_space<vmem>>, vector<8x128xbf16>
    %4 = arith.extf %3 : vector<8x128xbf16> to vector<8x128xf32>
    %cst = arith.constant dense<0.000000e+00> : vector<8xf32>
    %5 = vector.multi_reduction <add>, %4, %cst [1] : vector<8x128xf32> to vector<8xf32>
    %6 = vector.shape_cast %5 : vector<8xf32> to vector<8x1xf32>
    %cst_2 = arith.constant 1.280000e+02 : f32
    %7 = vector.broadcast %cst_2 : f32 to vector<8x1xf32>
    %8 = arith.divf %6, %7 : vector<8x1xf32>
    %9 = vector.broadcast %8 : vector<8x1xf32> to vector<8x128xf32>
    %10 = arith.subf %4, %9 : vector<8x128xf32>
    %11 = arith.mulf %10, %10 : vector<8x128xf32>
    %cst_3 = arith.constant dense<0.000000e+00> : vector<8xf32>
    %12 = vector.multi_reduction <add>, %11, %cst_3 [1] : vector<8x128xf32> to vector<8xf32>
    %13 = vector.shape_cast %12 : vector<8xf32> to vector<8x1xf32>
    %cst_4 = arith.constant 1.280000e+02 : f32
    %14 = vector.broadcast %cst_4 : f32 to vector<8x1xf32>
    %15 = arith.divf %13, %14 : vector<8x1xf32>
    %cst_5 = arith.constant 9.99999997E-7 : f32
    %16 = vector.broadcast %cst_5 : f32 to vector<8x1xf32>
    %17 = arith.addf %15, %16 : vector<8x1xf32>
    %18 = math.rsqrt %17 : vector<8x1xf32>
    %19 = vector.broadcast %18 : vector<8x1xf32> to vector<8x128xf32>
    %20 = arith.mulf %10, %19 : vector<8x128xf32>
    %c0_6 = arith.constant 0 : index
    %c0_7 = arith.constant 0 : index
    %21 = vector.load %arg3[%c0_6, %c0_7] : memref<1x128xf32, #tpu.memory_space<vmem>>, vector<1x128xf32>
    %22 = vector.broadcast %21 : vector<1x128xf32> to vector<8x128xf32>
    %23 = arith.mulf %20, %22 : vector<8x128xf32>
    %c0_8 = arith.constant 0 : index
    %c0_9 = arith.constant 0 : index
    %24 = vector.load %arg4[%c0_8, %c0_9] : memref<1x128xf32, #tpu.memory_space<vmem>>, vector<1x128xf32>
    %25 = vector.broadcast %24 : vector<1x128xf32> to vector<8x128xf32>
    %26 = arith.addf %23, %25 : vector<8x128xf32>
    %27 = arith.truncf %26 : vector<8x128xf32> to vector<8x128xbf16>
    %c0_10 = arith.constant 0 : index
    %c0_11 = arith.constant 0 : index
    %28 = vector.load %arg5[%c0_10, %c0_11] : memref<128x256xbf16, #tpu.memory_space<vmem>>, vector<128x256xbf16>
    %cst_12 = arith.constant dense<0.000000e+00> : vector<8x256xf32>
    %29 = tpu.matmul %27, %28, %cst_12 {dimension_numbers = #tpu.dot_dimension_numbers<[1], [0], [0], [1], [0, 0, 1, 1], [], []>} : vector<8x128xbf16>, vector<128x256xbf16>, vector<8x256xf32> -> vector<8x256xf32>
    %c0_13 = arith.constant 0 : index
    %c0_14 = arith.constant 0 : index
    %30 = vector.load %arg6[%c0_13, %c0_14] : memref<1x256xf32, #tpu.memory_space<vmem>>, vector<1x256xf32>
    %31 = vector.broadcast %30 : vector<1x256xf32> to vector<8x256xf32>
    %32 = arith.addf %29, %31 : vector<8x256xf32>
    %33 = arith.mulf %32, %32 : vector<8x256xf32>
    %34 = arith.mulf %32, %33 : vector<8x256xf32>
    %cst_15 = arith.constant 4.471500e-02 : f32
    %35 = vector.broadcast %cst_15 : f32 to vector<8x256xf32>
    %36 = arith.mulf %35, %34 : vector<8x256xf32>
    %37 = arith.addf %32, %36 : vector<8x256xf32>
    %cst_16 = arith.constant 0.797884583 : f32
    %38 = vector.broadcast %cst_16 : f32 to vector<8x256xf32>
    %39 = arith.mulf %38, %37 : vector<8x256xf32>
    %40 = math.tanh %39 : vector<8x256xf32>
    %cst_17 = arith.constant 1.000000e+00 : f32
    %41 = vector.broadcast %cst_17 : f32 to vector<8x256xf32>
    %42 = arith.addf %41, %40 : vector<8x256xf32>
    %cst_18 = arith.constant 5.000000e-01 : f32
    %43 = vector.broadcast %cst_18 : f32 to vector<8x256xf32>
    %44 = arith.mulf %43, %42 : vector<8x256xf32>
    %45 = arith.mulf %32, %44 : vector<8x256xf32>
    %c0_19 = arith.constant 0 : index
    %c0_20 = arith.constant 0 : index
    %46 = vector.load %arg10[%c0_19, %c0_20] : memref<8x128xf32, #tpu.memory_space<vmem>>, vector<8x128xf32>
    %47 = arith.truncf %45 : vector<8x256xf32> to vector<8x256xbf16>
    %c0_21 = arith.constant 0 : index
    %c0_22 = arith.constant 0 : index
    %48 = vector.load %arg7[%c0_21, %c0_22] : memref<256x128xbf16, #tpu.memory_space<vmem>>, vector<256x128xbf16>
    %cst_23 = arith.constant dense<0.000000e+00> : vector<8x128xf32>
    %49 = tpu.matmul %47, %48, %cst_23 {dimension_numbers = #tpu.dot_dimension_numbers<[1], [0], [0], [1], [0, 0, 1, 1], [], []>} : vector<8x256xbf16>, vector<256x128xbf16>, vector<8x128xf32> -> vector<8x128xf32>
    %50 = arith.addf %46, %49 : vector<8x128xf32>
    %c0_24 = arith.constant 0 : index
    %c0_25 = arith.constant 0 : index
    %51 = vector.load %arg10[%c0_24, %c0_25] : memref<8x128xf32, #tpu.memory_space<vmem>>, vector<8x128xf32>
    tpu.vector_store %arg10[%c0_24, %c0_25], %50 {strides = array<i32>} : memref<8x128xf32, #tpu.memory_space<vmem>>, vector<8x128xf32>,
    %c0_i32_26 = arith.constant 0 : i32
    %52 = arith.cmpi eq, %arg1, %c0_i32_26 : i32
    %53 = arith.extui %52 : i1 to i32
    %c0_i32_27 = arith.constant 0 : i32
    %54 = arith.cmpi ne, %53, %c0_i32_27 : i32
    scf.if %54 {
      %c0_28 = arith.constant 0 : index
      %c0_29 = arith.constant 0 : index
      %55 = vector.load %arg10[%c0_28, %c0_29] : memref<8x128xf32, #tpu.memory_space<vmem>>, vector<8x128xf32>
      %c0_30 = arith.constant 0 : index
      %c0_31 = arith.constant 0 : index
      %56 = vector.load %arg8[%c0_30, %c0_31] : memref<1x128xf32, #tpu.memory_space<vmem>>, vector<1x128xf32>
      %57 = vector.broadcast %56 : vector<1x128xf32> to vector<8x128xf32>
      %58 = arith.addf %55, %57 : vector<8x128xf32>
      %59 = arith.addf %58, %4 : vector<8x128xf32>
      %60 = arith.truncf %59 : vector<8x128xf32> to vector<8x128xbf16>
      %c0_32 = arith.constant 0 : index
      %c0_33 = arith.constant 0 : index
      %61 = vector.load %arg9[%c0_32, %c0_33] : memref<8x128xbf16, #tpu.memory_space<vmem>>, vector<8x128xbf16>
      tpu.vector_store %arg9[%c0_32, %c0_33], %60 {strides = array<i32>} : memref<8x128xbf16, #tpu.memory_space<vmem>>, vector<8x128xbf16>,
    } else {
    }
    return
  }
  func.func @transform_0(%arg0: i32, %arg1: i32) -> (i32, i32) {
    %c0_i32 = arith.constant 0 : i32
    %c0_i32_0 = arith.constant 0 : i32
    return %arg0, %c0_i32 : i32, i32
  }
  func.func @transform_1(%arg0: i32, %arg1: i32) -> (i32, i32) {
    %c0_i32 = arith.constant 0 : i32
    %c0_i32_0 = arith.constant 0 : i32
    %c0_i32_1 = arith.constant 0 : i32
    return %c0_i32, %c0_i32_0 : i32, i32
  }
  func.func @transform_2(%arg0: i32, %arg1: i32) -> (i32, i32) {
    %c0_i32 = arith.constant 0 : i32
    %c0_i32_0 = arith.constant 0 : i32
    %c0_i32_1 = arith.constant 0 : i32
    return %c0_i32, %c0_i32_0 : i32, i32
  }
  func.func @transform_3(%arg0: i32, %arg1: i32) -> (i32, i32) {
    %c0_i32 = arith.constant 0 : i32
    %c0_i32_0 = arith.constant 0 : i32
    return %c0_i32, %arg1 : i32, i32
  }
  func.func @transform_4(%arg0: i32, %arg1: i32) -> (i32, i32) {
    %c0_i32 = arith.constant 0 : i32
    %c0_i32_0 = arith.constant 0 : i32
    return %c0_i32, %arg1 : i32, i32
  }
  func.func @transform_5(%arg0: i32, %arg1: i32) -> (i32, i32) {
    %c0_i32 = arith.constant 0 : i32
    %c0_i32_0 = arith.constant 0 : i32
    return %arg1, %c0_i32 : i32, i32
  }
  func.func @transform_6(%arg0: i32, %arg1: i32) -> (i32, i32) {
    %c0_i32 = arith.constant 0 : i32
    %c0_i32_0 = arith.constant 0 : i32
    %c0_i32_1 = arith.constant 0 : i32
    return %c0_i32, %c0_i32_0 : i32, i32
  }
  func.func @transform_7(%arg0: i32, %arg1: i32) -> (i32, i32) {
    %c0_i32 = arith.constant 0 : i32
    %c0_i32_0 = arith.constant 0 : i32
    return %arg0, %c0_i32 : i32, i32
  }
}

module attributes {stable_mosaic.version = 11 : i64} {
  func.func @kernel(%arg0: i32, %arg1: i32, %arg2: memref<8x128xbf16, #tpu.memory_space<vmem>>, %arg3: memref<1x128xf32, #tpu.memory_space<vmem>>, %arg4: memref<1x128xf32, #tpu.memory_space<vmem>>, %arg5: memref<128x128xbf16, #tpu.memory_space<vmem>>, %arg6: memref<1x128xf32, #tpu.memory_space<vmem>>, %arg7: memref<8x128xbf16, #tpu.memory_space<vmem>>) attributes {dimension_semantics = [#tpu.dimension_semantics<parallel>, #tpu.dimension_semantics<parallel>], iteration_bounds = array<i64: 1, 1>, scalar_prefetch = 0 : i64, scratch_operands = 0 : i64, tpu.core_type = #tpu.core_type<tc>, window_params = [{transform_indices = @transform_0, window_bounds = array<i64: 8, 128>}, {pipeline_mode = #tpu.pipeline_mode<synchronous>, transform_indices = @transform_1, window_bounds = array<i64: 1, 128>}, {pipeline_mode = #tpu.pipeline_mode<synchronous>, transform_indices = @transform_2, window_bounds = array<i64: 1, 128>}, {transform_indices = @transform_3, window_bounds = array<i64: 128, 128>}, {transform_indices = @transform_4, window_bounds = array<i64: 1, 128>}, {transform_indices = @transform_5, window_bounds = array<i64: 8, 128>}]} {
    %c0 = arith.constant 0 : index
    %c0_0 = arith.constant 0 : index
    %0 = vector.load %arg2[%c0, %c0_0] : memref<8x128xbf16, #tpu.memory_space<vmem>>, vector<8x128xbf16>
    %1 = arith.extf %0 : vector<8x128xbf16> to vector<8x128xf32>
    %cst = arith.constant dense<0.000000e+00> : vector<8xf32>
    %2 = vector.multi_reduction <add>, %1, %cst [1] : vector<8x128xf32> to vector<8xf32>
    %3 = vector.shape_cast %2 : vector<8xf32> to vector<8x1xf32>
    %cst_1 = arith.constant 1.280000e+02 : f32
    %4 = vector.broadcast %cst_1 : f32 to vector<8x1xf32>
    %5 = arith.divf %3, %4 : vector<8x1xf32>
    %6 = vector.broadcast %5 : vector<8x1xf32> to vector<8x128xf32>
    %7 = arith.subf %1, %6 : vector<8x128xf32>
    %8 = arith.mulf %7, %7 : vector<8x128xf32>
    %cst_2 = arith.constant dense<0.000000e+00> : vector<8xf32>
    %9 = vector.multi_reduction <add>, %8, %cst_2 [1] : vector<8x128xf32> to vector<8xf32>
    %10 = vector.shape_cast %9 : vector<8xf32> to vector<8x1xf32>
    %cst_3 = arith.constant 1.280000e+02 : f32
    %11 = vector.broadcast %cst_3 : f32 to vector<8x1xf32>
    %12 = arith.divf %10, %11 : vector<8x1xf32>
    %cst_4 = arith.constant 9.99999997E-7 : f32
    %13 = vector.broadcast %cst_4 : f32 to vector<8x1xf32>
    %14 = arith.addf %12, %13 : vector<8x1xf32>
    %15 = math.rsqrt %14 : vector<8x1xf32>
    %16 = vector.broadcast %15 : vector<8x1xf32> to vector<8x128xf32>
    %17 = arith.mulf %7, %16 : vector<8x128xf32>
    %c0_5 = arith.constant 0 : index
    %c0_6 = arith.constant 0 : index
    %18 = vector.load %arg3[%c0_5, %c0_6] : memref<1x128xf32, #tpu.memory_space<vmem>>, vector<1x128xf32>
    %19 = vector.broadcast %18 : vector<1x128xf32> to vector<8x128xf32>
    %20 = arith.mulf %17, %19 : vector<8x128xf32>
    %c0_7 = arith.constant 0 : index
    %c0_8 = arith.constant 0 : index
    %21 = vector.load %arg4[%c0_7, %c0_8] : memref<1x128xf32, #tpu.memory_space<vmem>>, vector<1x128xf32>
    %22 = vector.broadcast %21 : vector<1x128xf32> to vector<8x128xf32>
    %23 = arith.addf %20, %22 : vector<8x128xf32>
    %24 = arith.truncf %23 : vector<8x128xf32> to vector<8x128xbf16>
    %c0_9 = arith.constant 0 : index
    %c0_10 = arith.constant 0 : index
    %25 = vector.load %arg5[%c0_9, %c0_10] : memref<128x128xbf16, #tpu.memory_space<vmem>>, vector<128x128xbf16>
    %cst_11 = arith.constant dense<0.000000e+00> : vector<8x128xf32>
    %26 = tpu.matmul %24, %25, %cst_11 {dimension_numbers = #tpu.dot_dimension_numbers<[1], [0], [0], [1], [0, 0, 1, 1], [], []>} : vector<8x128xbf16>, vector<128x128xbf16>, vector<8x128xf32> -> vector<8x128xf32>
    %c0_12 = arith.constant 0 : index
    %c0_13 = arith.constant 0 : index
    %27 = vector.load %arg6[%c0_12, %c0_13] : memref<1x128xf32, #tpu.memory_space<vmem>>, vector<1x128xf32>
    %28 = vector.broadcast %27 : vector<1x128xf32> to vector<8x128xf32>
    %29 = arith.addf %26, %28 : vector<8x128xf32>
    %30 = arith.truncf %29 : vector<8x128xf32> to vector<8x128xbf16>
    %c0_14 = arith.constant 0 : index
    %c0_15 = arith.constant 0 : index
    %31 = vector.load %arg7[%c0_14, %c0_15] : memref<8x128xbf16, #tpu.memory_space<vmem>>, vector<8x128xbf16>
    tpu.vector_store %arg7[%c0_14, %c0_15], %30 {strides = array<i32>} : memref<8x128xbf16, #tpu.memory_space<vmem>>, vector<8x128xbf16>,
    return
  }
  func.func @transform_0(%arg0: i32, %arg1: i32) -> (i32, i32) {
    %c0_i32 = arith.constant 0 : i32
    %c0_i32_0 = arith.constant 0 : i32
    return %arg0, %c0_i32 : i32, i32
  }
  func.func @transform_1(%arg0: i32, %arg1: i32) -> (i32, i32) {
    %c0_i32 = arith.constant 0 : i32
    %c0_i32_0 = arith.constant 0 : i32
    %c0_i32_1 = arith.constant 0 : i32
    return %c0_i32, %c0_i32_0 : i32, i32
  }
  func.func @transform_2(%arg0: i32, %arg1: i32) -> (i32, i32) {
    %c0_i32 = arith.constant 0 : i32
    %c0_i32_0 = arith.constant 0 : i32
    %c0_i32_1 = arith.constant 0 : i32
    return %c0_i32, %c0_i32_0 : i32, i32
  }
  func.func @transform_3(%arg0: i32, %arg1: i32) -> (i32, i32) {
    %c0_i32 = arith.constant 0 : i32
    %c0_i32_0 = arith.constant 0 : i32
    return %c0_i32, %arg1 : i32, i32
  }
  func.func @transform_4(%arg0: i32, %arg1: i32) -> (i32, i32) {
    %c0_i32 = arith.constant 0 : i32
    %c0_i32_0 = arith.constant 0 : i32
    return %c0_i32, %arg1 : i32, i32
  }
  func.func @transform_5(%arg0: i32, %arg1: i32) -> (i32, i32) {
    %c0_i32 = arith.constant 0 : i32
    return %arg0, %arg1 : i32, i32
  }
}

module attributes {stable_mosaic.version = 11 : i64} {
  func.func @_merge_embed_kernel(%arg0: i32, %arg1: memref<16x128xbf16, #tpu.memory_space<vmem>>, %arg2: memref<16x128xbf16, #tpu.memory_space<vmem>>, %arg3: memref<16x1xi32, #tpu.memory_space<vmem>>, %arg4: memref<16x1xi32, #tpu.memory_space<vmem>>, %arg5: memref<16x128xbf16, #tpu.memory_space<vmem>>) attributes {dimension_semantics = [#tpu.dimension_semantics<parallel>], iteration_bounds = array<i64: 1>, scalar_prefetch = 0 : i64, scratch_operands = 0 : i64, tpu.core_type = #tpu.core_type<tc>, window_params = [{transform_indices = @transform_0, window_bounds = array<i64: 16, 128>}, {transform_indices = @transform_1, window_bounds = array<i64: 16, 128>}, {transform_indices = @transform_2, window_bounds = array<i64: 16, 1>}, {transform_indices = @transform_3, window_bounds = array<i64: 16, 1>}, {transform_indices = @transform_4, window_bounds = array<i64: 16, 128>}]} {
    %c0 = arith.constant 0 : index
    %c0_0 = arith.constant 0 : index
    %0 = vector.load %arg1[%c0, %c0_0] : memref<16x128xbf16, #tpu.memory_space<vmem>>, vector<16x128xbf16>
    %1 = arith.extf %0 : vector<16x128xbf16> to vector<16x128xf32>
    %c0_1 = arith.constant 0 : index
    %c0_2 = arith.constant 0 : index
    %2 = vector.load %arg2[%c0_1, %c0_2] : memref<16x128xbf16, #tpu.memory_space<vmem>>, vector<16x128xbf16>
    %3 = arith.extf %2 : vector<16x128xbf16> to vector<16x128xf32>
    %cst = arith.constant 0.0883883461 : f32
    %4 = vector.broadcast %cst : f32 to vector<16x128xf32>
    %5 = arith.mulf %3, %4 : vector<16x128xf32>
    %c0_3 = arith.constant 0 : index
    %c0_4 = arith.constant 0 : index
    %6 = vector.load %arg3[%c0_3, %c0_4] : memref<16x1xi32, #tpu.memory_space<vmem>>, vector<16x1xi32>
    %c0_i32 = arith.constant 0 : i32
    %7 = vector.broadcast %c0_i32 : i32 to vector<16x1xi32>
    %8 = arith.cmpi ne, %6, %7 : vector<16x1xi32>
    %c0_5 = arith.constant 0 : index
    %c0_6 = arith.constant 0 : index
    %9 = vector.load %arg4[%c0_5, %c0_6] : memref<16x1xi32, #tpu.memory_space<vmem>>, vector<16x1xi32>
    %c0_i32_7 = arith.constant 0 : i32
    %10 = vector.broadcast %c0_i32_7 : i32 to vector<16x1xi32>
    %11 = arith.cmpi ne, %9, %10 : vector<16x1xi32>
    %cst_8 = arith.constant 0.000000e+00 : f32
    %12 = vector.broadcast %cst_8 : f32 to vector<16x128xf32>
    %13 = vector.shape_cast %8 : vector<16x1xi1> to vector<16x1xi1>
    %14 = vector.broadcast %13 : vector<16x1xi1> to vector<16x128xi1>
    %15 = arith.select %14, %1, %12 : vector<16x128xi1>, vector<16x128xf32>
    %16 = vector.shape_cast %11 : vector<16x1xi1> to vector<16x1xi1>
    %17 = vector.broadcast %16 : vector<16x1xi1> to vector<16x128xi1>
    %18 = arith.select %17, %5, %12 : vector<16x128xi1>, vector<16x128xf32>
    %19 = arith.addf %15, %18 : vector<16x128xf32>
    %cst_9 = arith.constant 11.3137083 : f32
    %20 = vector.broadcast %cst_9 : f32 to vector<16x128xf32>
    %21 = arith.mulf %19, %20 : vector<16x128xf32>
    %22 = arith.truncf %21 : vector<16x128xf32> to vector<16x128xbf16>
    %c0_10 = arith.constant 0 : index
    %c0_11 = arith.constant 0 : index
    %23 = vector.load %arg5[%c0_10, %c0_11] : memref<16x128xbf16, #tpu.memory_space<vmem>>, vector<16x128xbf16>
    tpu.vector_store %arg5[%c0_10, %c0_11], %22 {strides = array<i32>} : memref<16x128xbf16, #tpu.memory_space<vmem>>, vector<16x128xbf16>,
    return
  }
  func.func @transform_0(%arg0: i32) -> (i32, i32) {
    %c0_i32 = arith.constant 0 : i32
    %c0_i32_0 = arith.constant 0 : i32
    return %arg0, %c0_i32 : i32, i32
  }
  func.func @transform_1(%arg0: i32) -> (i32, i32) {
    %c0_i32 = arith.constant 0 : i32
    %c0_i32_0 = arith.constant 0 : i32
    return %arg0, %c0_i32 : i32, i32
  }
  func.func @transform_2(%arg0: i32) -> (i32, i32) {
    %c0_i32 = arith.constant 0 : i32
    %c0_i32_0 = arith.constant 0 : i32
    return %arg0, %c0_i32 : i32, i32
  }
  func.func @transform_3(%arg0: i32) -> (i32, i32) {
    %c0_i32 = arith.constant 0 : i32
    %c0_i32_0 = arith.constant 0 : i32
    return %arg0, %c0_i32 : i32, i32
  }
  func.func @transform_4(%arg0: i32) -> (i32, i32) {
    %c0_i32 = arith.constant 0 : i32
    %c0_i32_0 = arith.constant 0 : i32
    return %arg0, %c0_i32 : i32, i32
  }
}

module attributes {stable_mosaic.version = 11 : i64} {
  func.func @kernel(%arg0: i32, %arg1: i32, %arg2: memref<16x128xbf16, #tpu.memory_space<vmem>>, %arg3: memref<1x128xf32, #tpu.memory_space<vmem>>, %arg4: memref<128x256xbf16, #tpu.memory_space<vmem>>, %arg5: memref<16x256xbf16, #tpu.memory_space<vmem>>) attributes {dimension_semantics = [#tpu.dimension_semantics<parallel>, #tpu.dimension_semantics<parallel>], iteration_bounds = array<i64: 1, 1>, scalar_prefetch = 0 : i64, scratch_operands = 0 : i64, tpu.core_type = #tpu.core_type<tc>, window_params = [{transform_indices = @transform_0, window_bounds = array<i64: 16, 128>}, {pipeline_mode = #tpu.pipeline_mode<synchronous>, transform_indices = @transform_1, window_bounds = array<i64: 1, 128>}, {transform_indices = @transform_2, window_bounds = array<i64: 128, 256>}, {transform_indices = @transform_3, window_bounds = array<i64: 16, 256>}]} {
    %c0 = arith.constant 0 : index
    %c0_0 = arith.constant 0 : index
    %0 = vector.load %arg2[%c0, %c0_0] : memref<16x128xbf16, #tpu.memory_space<vmem>>, vector<16x128xbf16>
    %1 = arith.extf %0 : vector<16x128xbf16> to vector<16x128xf32>
    %2 = arith.mulf %1, %1 : vector<16x128xf32>
    %cst = arith.constant dense<0.000000e+00> : vector<16xf32>
    %3 = vector.multi_reduction <add>, %2, %cst [1] : vector<16x128xf32> to vector<16xf32>
    %4 = vector.shape_cast %3 : vector<16xf32> to vector<16x1xf32>
    %cst_1 = arith.constant 1.280000e+02 : f32
    %5 = vector.broadcast %cst_1 : f32 to vector<16x1xf32>
    %6 = arith.divf %4, %5 : vector<16x1xf32>
    %cst_2 = arith.constant 9.99999997E-7 : f32
    %7 = vector.broadcast %cst_2 : f32 to vector<16x1xf32>
    %8 = arith.addf %6, %7 : vector<16x1xf32>
    %9 = math.rsqrt %8 : vector<16x1xf32>
    %10 = vector.broadcast %9 : vector<16x1xf32> to vector<16x128xf32>
    %11 = arith.mulf %1, %10 : vector<16x128xf32>
    %c0_3 = arith.constant 0 : index
    %c0_4 = arith.constant 0 : index
    %12 = vector.load %arg3[%c0_3, %c0_4] : memref<1x128xf32, #tpu.memory_space<vmem>>, vector<1x128xf32>
    %cst_5 = arith.constant 1.000000e+00 : f32
    %13 = vector.broadcast %cst_5 : f32 to vector<1x128xf32>
    %14 = arith.addf %13, %12 : vector<1x128xf32>
    %15 = vector.broadcast %14 : vector<1x128xf32> to vector<16x128xf32>
    %16 = arith.mulf %11, %15 : vector<16x128xf32>
    %17 = arith.truncf %16 : vector<16x128xf32> to vector<16x128xbf16>
    %c0_6 = arith.constant 0 : index
    %c0_7 = arith.constant 0 : index
    %18 = vector.load %arg4[%c0_6, %c0_7] : memref<128x256xbf16, #tpu.memory_space<vmem>>, vector<128x256xbf16>
    %cst_8 = arith.constant dense<0.000000e+00> : vector<16x256xf32>
    %19 = tpu.matmul %17, %18, %cst_8 {dimension_numbers = #tpu.dot_dimension_numbers<[1], [0], [0], [1], [0, 0, 1, 1], [], []>} : vector<16x128xbf16>, vector<128x256xbf16>, vector<16x256xf32> -> vector<16x256xf32>
    %20 = arith.truncf %19 : vector<16x256xf32> to vector<16x256xbf16>
    %c0_9 = arith.constant 0 : index
    %c0_10 = arith.constant 0 : index
    %21 = vector.load %arg5[%c0_9, %c0_10] : memref<16x256xbf16, #tpu.memory_space<vmem>>, vector<16x256xbf16>
    tpu.vector_store %arg5[%c0_9, %c0_10], %20 {strides = array<i32>} : memref<16x256xbf16, #tpu.memory_space<vmem>>, vector<16x256xbf16>,
    return
  }
  func.func @transform_0(%arg0: i32, %arg1: i32) -> (i32, i32) {
    %c0_i32 = arith.constant 0 : i32
    %c0_i32_0 = arith.constant 0 : i32
    return %arg0, %c0_i32 : i32, i32
  }
  func.func @transform_1(%arg0: i32, %arg1: i32) -> (i32, i32) {
    %c0_i32 = arith.constant 0 : i32
    %c0_i32_0 = arith.constant 0 : i32
    %c0_i32_1 = arith.constant 0 : i32
    return %c0_i32, %c0_i32_0 : i32, i32
  }
  func.func @transform_2(%arg0: i32, %arg1: i32) -> (i32, i32) {
    %c0_i32 = arith.constant 0 : i32
    %c0_i32_0 = arith.constant 0 : i32
    return %c0_i32, %arg1 : i32, i32
  }
  func.func @transform_3(%arg0: i32, %arg1: i32) -> (i32, i32) {
    %c0_i32 = arith.constant 0 : i32
    return %arg0, %arg1 : i32, i32
  }
}

module attributes {stable_mosaic.version = 11 : i64} {
  func.func @kernel(%arg0: i32, %arg1: i32, %arg2: i32, %arg3: memref<16x128xbf16, #tpu.memory_space<vmem>>, %arg4: memref<128x128xbf16, #tpu.memory_space<vmem>>, %arg5: memref<16x128xbf16, #tpu.memory_space<vmem>>, %arg6: memref<16x128xbf16, #tpu.memory_space<vmem>>, %arg7: memref<16x128xf32, #tpu.memory_space<vmem>>) attributes {dimension_semantics = [#tpu.dimension_semantics<parallel>, #tpu.dimension_semantics<parallel>, #tpu.dimension_semantics<arbitrary>], iteration_bounds = array<i64: 1, 1, 1>, scalar_prefetch = 0 : i64, scratch_operands = 1 : i64, tpu.core_type = #tpu.core_type<tc>, window_params = [{transform_indices = @transform_0, window_bounds = array<i64: 16, 128>}, {transform_indices = @transform_1, window_bounds = array<i64: 128, 128>}, {transform_indices = @transform_2, window_bounds = array<i64: 16, 128>}, {transform_indices = @transform_3, window_bounds = array<i64: 16, 128>}]} {
    %c0_i32 = arith.constant 0 : i32
    %0 = arith.cmpi eq, %arg2, %c0_i32 : i32
    %1 = arith.extui %0 : i1 to i32
    %c0_i32_0 = arith.constant 0 : i32
    %2 = arith.cmpi ne, %1, %c0_i32_0 : i32
    scf.if %2 {
      %cst_10 = arith.constant 0.000000e+00 : f32
      %12 = vector.broadcast %cst_10 : f32 to vector<16x128xf32>
      %c0_11 = arith.constant 0 : index
      %c0_12 = arith.constant 0 : index
      %13 = vector.load %arg7[%c0_11, %c0_12] : memref<16x128xf32, #tpu.memory_space<vmem>>, vector<16x128xf32>
      tpu.vector_store %arg7[%c0_11, %c0_12], %12 {strides = array<i32>} : memref<16x128xf32, #tpu.memory_space<vmem>>, vector<16x128xf32>,
    } else {
    }
    %c0 = arith.constant 0 : index
    %c0_1 = arith.constant 0 : index
    %3 = vector.load %arg7[%c0, %c0_1] : memref<16x128xf32, #tpu.memory_space<vmem>>, vector<16x128xf32>
    %c0_2 = arith.constant 0 : index
    %c0_3 = arith.constant 0 : index
    %4 = vector.load %arg3[%c0_2, %c0_3] : memref<16x128xbf16, #tpu.memory_space<vmem>>, vector<16x128xbf16>
    %c0_4 = arith.constant 0 : index
    %c0_5 = arith.constant 0 : index
    %5 = vector.load %arg4[%c0_4, %c0_5] : memref<128x128xbf16, #tpu.memory_space<vmem>>, vector<128x128xbf16>
    %cst = arith.constant dense<0.000000e+00> : vector<16x128xf32>
    %6 = tpu.matmul %4, %5, %cst {dimension_numbers = #tpu.dot_dimension_numbers<[1], [0], [0], [1], [0, 0, 1, 1], [], []>} : vector<16x128xbf16>, vector<128x128xbf16>, vector<16x128xf32> -> vector<16x128xf32>
    %7 = arith.addf %3, %6 : vector<16x128xf32>
    %c0_6 = arith.constant 0 : index
    %c0_7 = arith.constant 0 : index
    %8 = vector.load %arg7[%c0_6, %c0_7] : memref<16x128xf32, #tpu.memory_space<vmem>>, vector<16x128xf32>
    tpu.vector_store %arg7[%c0_6, %c0_7], %7 {strides = array<i32>} : memref<16x128xf32, #tpu.memory_space<vmem>>, vector<16x128xf32>,
    %c0_i32_8 = arith.constant 0 : i32
    %9 = arith.cmpi eq, %arg2, %c0_i32_8 : i32
    %10 = arith.extui %9 : i1 to i32
    %c0_i32_9 = arith.constant 0 : i32
    %11 = arith.cmpi ne, %10, %c0_i32_9 : i32
    scf.if %11 {
      %c0_10 = arith.constant 0 : index
      %c0_11 = arith.constant 0 : index
      %12 = vector.load %arg7[%c0_10, %c0_11] : memref<16x128xf32, #tpu.memory_space<vmem>>, vector<16x128xf32>
      %c0_12 = arith.constant 0 : index
      %c0_13 = arith.constant 0 : index
      %13 = vector.load %arg5[%c0_12, %c0_13] : memref<16x128xbf16, #tpu.memory_space<vmem>>, vector<16x128xbf16>
      %14 = arith.extf %13 : vector<16x128xbf16> to vector<16x128xf32>
      %15 = arith.addf %12, %14 : vector<16x128xf32>
      %16 = arith.truncf %15 : vector<16x128xf32> to vector<16x128xbf16>
      %c0_14 = arith.constant 0 : index
      %c0_15 = arith.constant 0 : index
      %17 = vector.load %arg6[%c0_14, %c0_15] : memref<16x128xbf16, #tpu.memory_space<vmem>>, vector<16x128xbf16>
      tpu.vector_store %arg6[%c0_14, %c0_15], %16 {strides = array<i32>} : memref<16x128xbf16, #tpu.memory_space<vmem>>, vector<16x128xbf16>,
    } else {
    }
    return
  }
  func.func @transform_0(%arg0: i32, %arg1: i32, %arg2: i32) -> (i32, i32) {
    %c0_i32 = arith.constant 0 : i32
    return %arg0, %arg2 : i32, i32
  }
  func.func @transform_1(%arg0: i32, %arg1: i32, %arg2: i32) -> (i32, i32) {
    %c0_i32 = arith.constant 0 : i32
    return %arg2, %arg1 : i32, i32
  }
  func.func @transform_2(%arg0: i32, %arg1: i32, %arg2: i32) -> (i32, i32) {
    %c0_i32 = arith.constant 0 : i32
    return %arg0, %arg1 : i32, i32
  }
  func.func @transform_3(%arg0: i32, %arg1: i32, %arg2: i32) -> (i32, i32) {
    %c0_i32 = arith.constant 0 : i32
    return %arg0, %arg1 : i32, i32
  }
}

module attributes {stable_mosaic.version = 11 : i64} {
  func.func @_rms_gemma_mlp_kernel(%arg0: i32, %arg1: i32, %arg2: memref<16x128xbf16, #tpu.memory_space<vmem>>, %arg3: memref<1x128xf32, #tpu.memory_space<vmem>>, %arg4: memref<128x256xbf16, #tpu.memory_space<vmem>>, %arg5: memref<128x256xbf16, #tpu.memory_space<vmem>>, %arg6: memref<256x128xbf16, #tpu.memory_space<vmem>>, %arg7: memref<16x128xbf16, #tpu.memory_space<vmem>>, %arg8: memref<16x128xf32, #tpu.memory_space<vmem>>) attributes {dimension_semantics = [#tpu.dimension_semantics<parallel>, #tpu.dimension_semantics<arbitrary>], iteration_bounds = array<i64: 1, 1>, scalar_prefetch = 0 : i64, scratch_operands = 1 : i64, tpu.core_type = #tpu.core_type<tc>, window_params = [{transform_indices = @transform_0, window_bounds = array<i64: 16, 128>}, {pipeline_mode = #tpu.pipeline_mode<synchronous>, transform_indices = @transform_1, window_bounds = array<i64: 1, 128>}, {transform_indices = @transform_2, window_bounds = array<i64: 128, 256>}, {transform_indices = @transform_3, window_bounds = array<i64: 128, 256>}, {transform_indices = @transform_4, window_bounds = array<i64: 256, 128>}, {transform_indices = @transform_5, window_bounds = array<i64: 16, 128>}]} {
    %c0_i32 = arith.constant 0 : i32
    %0 = arith.cmpi eq, %arg1, %c0_i32 : i32
    %1 = arith.extui %0 : i1 to i32
    %c0_i32_0 = arith.constant 0 : i32
    %2 = arith.cmpi ne, %1, %c0_i32_0 : i32
    scf.if %2 {
      %cst_26 = arith.constant 0.000000e+00 : f32
      %48 = vector.broadcast %cst_26 : f32 to vector<16x128xf32>
      %c0_27 = arith.constant 0 : index
      %c0_28 = arith.constant 0 : index
      %49 = vector.load %arg8[%c0_27, %c0_28] : memref<16x128xf32, #tpu.memory_space<vmem>>, vector<16x128xf32>
      tpu.vector_store %arg8[%c0_27, %c0_28], %48 {strides = array<i32>} : memref<16x128xf32, #tpu.memory_space<vmem>>, vector<16x128xf32>,
    } else {
    }
    %c0 = arith.constant 0 : index
    %c0_1 = arith.constant 0 : index
    %3 = vector.load %arg2[%c0, %c0_1] : memref<16x128xbf16, #tpu.memory_space<vmem>>, vector<16x128xbf16>
    %4 = arith.extf %3 : vector<16x128xbf16> to vector<16x128xf32>
    %5 = arith.mulf %4, %4 : vector<16x128xf32>
    %cst = arith.constant dense<0.000000e+00> : vector<16xf32>
    %6 = vector.multi_reduction <add>, %5, %cst [1] : vector<16x128xf32> to vector<16xf32>
    %7 = vector.shape_cast %6 : vector<16xf32> to vector<16x1xf32>
    %cst_2 = arith.constant 1.280000e+02 : f32
    %8 = vector.broadcast %cst_2 : f32 to vector<16x1xf32>
    %9 = arith.divf %7, %8 : vector<16x1xf32>
    %cst_3 = arith.constant 9.99999997E-7 : f32
    %10 = vector.broadcast %cst_3 : f32 to vector<16x1xf32>
    %11 = arith.addf %9, %10 : vector<16x1xf32>
    %12 = math.rsqrt %11 : vector<16x1xf32>
    %13 = vector.broadcast %12 : vector<16x1xf32> to vector<16x128xf32>
    %14 = arith.mulf %4, %13 : vector<16x128xf32>
    %c0_4 = arith.constant 0 : index
    %c0_5 = arith.constant 0 : index
    %15 = vector.load %arg3[%c0_4, %c0_5] : memref<1x128xf32, #tpu.memory_space<vmem>>, vector<1x128xf32>
    %cst_6 = arith.constant 1.000000e+00 : f32
    %16 = vector.broadcast %cst_6 : f32 to vector<1x128xf32>
    %17 = arith.addf %16, %15 : vector<1x128xf32>
    %18 = vector.broadcast %17 : vector<1x128xf32> to vector<16x128xf32>
    %19 = arith.mulf %14, %18 : vector<16x128xf32>
    %20 = arith.truncf %19 : vector<16x128xf32> to vector<16x128xbf16>
    %c0_7 = arith.constant 0 : index
    %c0_8 = arith.constant 0 : index
    %21 = vector.load %arg4[%c0_7, %c0_8] : memref<128x256xbf16, #tpu.memory_space<vmem>>, vector<128x256xbf16>
    %cst_9 = arith.constant dense<0.000000e+00> : vector<16x256xf32>
    %22 = tpu.matmul %20, %21, %cst_9 {dimension_numbers = #tpu.dot_dimension_numbers<[1], [0], [0], [1], [0, 0, 1, 1], [], []>} : vector<16x128xbf16>, vector<128x256xbf16>, vector<16x256xf32> -> vector<16x256xf32>
    %c0_10 = arith.constant 0 : index
    %c0_11 = arith.constant 0 : index
    %23 = vector.load %arg5[%c0_10, %c0_11] : memref<128x256xbf16, #tpu.memory_space<vmem>>, vector<128x256xbf16>
    %cst_12 = arith.constant dense<0.000000e+00> : vector<16x256xf32>
    %24 = tpu.matmul %20, %23, %cst_12 {dimension_numbers = #tpu.dot_dimension_numbers<[1], [0], [0], [1], [0, 0, 1, 1], [], []>} : vector<16x128xbf16>, vector<128x256xbf16>, vector<16x256xf32> -> vector<16x256xf32>
    %25 = arith.mulf %22, %22 : vector<16x256xf32>
    %26 = arith.mulf %22, %25 : vector<16x256xf32>
    %cst_13 = arith.constant 4.471500e-02 : f32
    %27 = vector.broadcast %cst_13 : f32 to vector<16x256xf32>
    %28 = arith.mulf %27, %26 : vector<16x256xf32>
    %29 = arith.addf %22, %28 : vector<16x256xf32>
    %cst_14 = arith.constant 0.797884583 : f32
    %30 = vector.broadcast %cst_14 : f32 to vector<16x256xf32>
    %31 = arith.mulf %30, %29 : vector<16x256xf32>
    %32 = math.tanh %31 : vector<16x256xf32>
    %cst_15 = arith.constant 1.000000e+00 : f32
    %33 = vector.broadcast %cst_15 : f32 to vector<16x256xf32>
    %34 = arith.addf %33, %32 : vector<16x256xf32>
    %cst_16 = arith.constant 5.000000e-01 : f32
    %35 = vector.broadcast %cst_16 : f32 to vector<16x256xf32>
    %36 = arith.mulf %35, %34 : vector<16x256xf32>
    %37 = arith.mulf %22, %36 : vector<16x256xf32>
    %38 = arith.mulf %37, %24 : vector<16x256xf32>
    %c0_17 = arith.constant 0 : index
    %c0_18 = arith.constant 0 : index
    %39 = vector.load %arg8[%c0_17, %c0_18] : memref<16x128xf32, #tpu.memory_space<vmem>>, vector<16x128xf32>
    %40 = arith.truncf %38 : vector<16x256xf32> to vector<16x256xbf16>
    %c0_19 = arith.constant 0 : index
    %c0_20 = arith.constant 0 : index
    %41 = vector.load %arg6[%c0_19, %c0_20] : memref<256x128xbf16, #tpu.memory_space<vmem>>, vector<256x128xbf16>
    %cst_21 = arith.constant dense<0.000000e+00> : vector<16x128xf32>
    %42 = tpu.matmul %40, %41, %cst_21 {dimension_numbers = #tpu.dot_dimension_numbers<[1], [0], [0], [1], [0, 0, 1, 1], [], []>} : vector<16x256xbf16>, vector<256x128xbf16>, vector<16x128xf32> -> vector<16x128xf32>
    %43 = arith.addf %39, %42 : vector<16x128xf32>
    %c0_22 = arith.constant 0 : index
    %c0_23 = arith.constant 0 : index
    %44 = vector.load %arg8[%c0_22, %c0_23] : memref<16x128xf32, #tpu.memory_space<vmem>>, vector<16x128xf32>
    tpu.vector_store %arg8[%c0_22, %c0_23], %43 {strides = array<i32>} : memref<16x128xf32, #tpu.memory_space<vmem>>, vector<16x128xf32>,
    %c0_i32_24 = arith.constant 0 : i32
    %45 = arith.cmpi eq, %arg1, %c0_i32_24 : i32
    %46 = arith.extui %45 : i1 to i32
    %c0_i32_25 = arith.constant 0 : i32
    %47 = arith.cmpi ne, %46, %c0_i32_25 : i32
    scf.if %47 {
      %c0_26 = arith.constant 0 : index
      %c0_27 = arith.constant 0 : index
      %48 = vector.load %arg8[%c0_26, %c0_27] : memref<16x128xf32, #tpu.memory_space<vmem>>, vector<16x128xf32>
      %49 = arith.addf %48, %4 : vector<16x128xf32>
      %50 = arith.truncf %49 : vector<16x128xf32> to vector<16x128xbf16>
      %c0_28 = arith.constant 0 : index
      %c0_29 = arith.constant 0 : index
      %51 = vector.load %arg7[%c0_28, %c0_29] : memref<16x128xbf16, #tpu.memory_space<vmem>>, vector<16x128xbf16>
      tpu.vector_store %arg7[%c0_28, %c0_29], %50 {strides = array<i32>} : memref<16x128xbf16, #tpu.memory_space<vmem>>, vector<16x128xbf16>,
    } else {
    }
    return
  }
  func.func @transform_0(%arg0: i32, %arg1: i32) -> (i32, i32) {
    %c0_i32 = arith.constant 0 : i32
    %c0_i32_0 = arith.constant 0 : i32
    return %arg0, %c0_i32 : i32, i32
  }
  func.func @transform_1(%arg0: i32, %arg1: i32) -> (i32, i32) {
    %c0_i32 = arith.constant 0 : i32
    %c0_i32_0 = arith.constant 0 : i32
    %c0_i32_1 = arith.constant 0 : i32
    return %c0_i32, %c0_i32_0 : i32, i32
  }
  func.func @transform_2(%arg0: i32, %arg1: i32) -> (i32, i32) {
    %c0_i32 = arith.constant 0 : i32
    %c0_i32_0 = arith.constant 0 : i32
    return %c0_i32, %arg1 : i32, i32
  }
  func.func @transform_3(%arg0: i32, %arg1: i32) -> (i32, i32) {
    %c0_i32 = arith.constant 0 : i32
    %c0_i32_0 = arith.constant 0 : i32
    return %c0_i32, %arg1 : i32, i32
  }
  func.func @transform_4(%arg0: i32, %arg1: i32) -> (i32, i32) {
    %c0_i32 = arith.constant 0 : i32
    %c0_i32_0 = arith.constant 0 : i32
    return %arg1, %c0_i32 : i32, i32
  }
  func.func @transform_5(%arg0: i32, %arg1: i32) -> (i32, i32) {
    %c0_i32 = arith.constant 0 : i32
    %c0_i32_0 = arith.constant 0 : i32
    return %arg0, %c0_i32 : i32, i32
  }
}

module attributes {stable_mosaic.version = 11 : i64} {
  func.func @kernel(%arg0: i32, %arg1: i32, %arg2: i32, %arg3: memref<1x8x128xbf16, #tpu.memory_space<vmem>>, %arg4: memref<1x8x64xbf16, #tpu.memory_space<vmem>>, %arg5: memref<1x8x64xbf16, #tpu.memory_space<vmem>>, %arg6: memref<1x8x128xbf16, #tpu.memory_space<vmem>>, %arg7: memref<8x4xf32, #tpu.memory_space<vmem>>, %arg8: memref<8x4xf32, #tpu.memory_space<vmem>>, %arg9: memref<8x128xf32, #tpu.memory_space<vmem>>) attributes {dimension_semantics = [#tpu.dimension_semantics<parallel>, #tpu.dimension_semantics<parallel>, #tpu.dimension_semantics<arbitrary>], iteration_bounds = array<i64: 2, 1, 1>, scalar_prefetch = 0 : i64, scratch_operands = 3 : i64, tpu.core_type = #tpu.core_type<tc>, window_params = [{transform_indices = @transform_0, window_bounds = array<i64: 1, 8, 128>}, {transform_indices = @transform_1, window_bounds = array<i64: 1, 8, 64>}, {transform_indices = @transform_2, window_bounds = array<i64: 1, 8, 64>}, {transform_indices = @transform_3, window_bounds = array<i64: 1, 8, 128>}]} {
    %c0_i32 = arith.constant 0 : i32
    %0 = arith.cmpi eq, %arg2, %c0_i32 : i32
    %1 = arith.extui %0 : i1 to i32
    %c0_i32_0 = arith.constant 0 : i32
    %2 = arith.cmpi ne, %1, %c0_i32_0 : i32
    scf.if %2 {
      %cst_69 = arith.constant 0xFF800000 : f32
      %124 = vector.broadcast %cst_69 : f32 to vector<8x4xf32>
      %c0_70 = arith.constant 0 : index
      %c0_71 = arith.constant 0 : index
      %125 = vector.load %arg7[%c0_70, %c0_71] : memref<8x4xf32, #tpu.memory_space<vmem>>, vector<8x4xf32>
      tpu.vector_store %arg7[%c0_70, %c0_71], %124 {strides = array<i32>} : memref<8x4xf32, #tpu.memory_space<vmem>>, vector<8x4xf32>,
      %cst_72 = arith.constant 0.000000e+00 : f32
      %126 = vector.broadcast %cst_72 : f32 to vector<8x4xf32>
      %c0_73 = arith.constant 0 : index
      %c0_74 = arith.constant 0 : index
      %127 = vector.load %arg8[%c0_73, %c0_74] : memref<8x4xf32, #tpu.memory_space<vmem>>, vector<8x4xf32>
      tpu.vector_store %arg8[%c0_73, %c0_74], %126 {strides = array<i32>} : memref<8x4xf32, #tpu.memory_space<vmem>>, vector<8x4xf32>,
      %cst_75 = arith.constant 0.000000e+00 : f32
      %128 = vector.broadcast %cst_75 : f32 to vector<8x128xf32>
      %c0_76 = arith.constant 0 : index
      %c0_77 = arith.constant 0 : index
      %129 = vector.load %arg9[%c0_76, %c0_77] : memref<8x128xf32, #tpu.memory_space<vmem>>, vector<8x128xf32>
      tpu.vector_store %arg9[%c0_76, %c0_77], %128 {strides = array<i32>} : memref<8x128xf32, #tpu.memory_space<vmem>>, vector<8x128xf32>,
    } else {
    }
    %c0 = arith.constant 0 : index
    %c0_1 = arith.constant 0 : index
    %c0_2 = arith.constant 0 : index
    %3 = vector.load %arg3[%c0, %c0_1, %c0_2] : memref<1x8x128xbf16, #tpu.memory_space<vmem>>, vector<1x8x128xbf16>
    %4 = vector.shape_cast %3 : vector<1x8x128xbf16> to vector<8x128xbf16>
    %5 = arith.extf %4 : vector<8x128xbf16> to vector<8x128xf32>
    %cst = arith.constant 0.176776692 : f32
    %6 = vector.broadcast %cst : f32 to vector<8x128xf32>
    %7 = arith.mulf %5, %6 : vector<8x128xf32>
    %8 = arith.truncf %7 : vector<8x128xf32> to vector<8x128xbf16>
    %c0_3 = arith.constant 0 : index
    %c0_4 = arith.constant 0 : index
    %c0_5 = arith.constant 0 : index
    %9 = vector.load %arg4[%c0_3, %c0_4, %c0_5] : memref<1x8x64xbf16, #tpu.memory_space<vmem>>, vector<1x8x64xbf16>
    %10 = vector.shape_cast %9 : vector<1x8x64xbf16> to vector<8x64xbf16>
    %c0_6 = arith.constant 0 : index
    %c0_7 = arith.constant 0 : index
    %c0_8 = arith.constant 0 : index
    %11 = vector.load %arg5[%c0_6, %c0_7, %c0_8] : memref<1x8x64xbf16, #tpu.memory_space<vmem>>, vector<1x8x64xbf16>
    %12 = vector.shape_cast %11 : vector<1x8x64xbf16> to vector<8x64xbf16>
    %13 = vector.extract_strided_slice %8 {offsets = [0, 0], sizes = [8, 32], strides = [1, 1]} : vector<8x128xbf16> to vector<8x32xbf16>
    %14 = vector.extract_strided_slice %10 {offsets = [0, 0], sizes = [8, 32], strides = [1, 1]} : vector<8x64xbf16> to vector<8x32xbf16>
    %15 = vector.extract_strided_slice %12 {offsets = [0, 0], sizes = [8, 32], strides = [1, 1]} : vector<8x64xbf16> to vector<8x32xbf16>
    %cst_9 = arith.constant dense<0.000000e+00> : vector<8x8xf32>
    %16 = tpu.matmul %13, %14, %cst_9 {dimension_numbers = #tpu.dot_dimension_numbers<[1], [1], [0], [0], [0, 0, 1, 0], [], []>} : vector<8x32xbf16>, vector<8x32xbf16>, vector<8x8xf32> -> vector<8x8xf32>
    %c0_10 = arith.constant 0 : index
    %c0_11 = arith.constant 0 : index
    %17 = vector.load %arg7[%c0_10, %c0_11] : memref<8x4xf32, #tpu.memory_space<vmem>>, vector<8x1xf32>
    %c0_12 = arith.constant 0 : index
    %c0_13 = arith.constant 0 : index
    %18 = vector.load %arg8[%c0_12, %c0_13] : memref<8x4xf32, #tpu.memory_space<vmem>>, vector<8x1xf32>
    %cst_14 = arith.constant dense<0xFF800000> : vector<8xf32>
    %19 = vector.multi_reduction <maximumf>, %16, %cst_14 [1] : vector<8x8xf32> to vector<8xf32>
    %20 = vector.shape_cast %19 : vector<8xf32> to vector<8x1xf32>
    %21 = arith.maximumf %17, %20 : vector<8x1xf32>
    %22 = arith.subf %17, %21 : vector<8x1xf32>
    %23 = math.exp %22 : vector<8x1xf32>
    %24 = vector.broadcast %21 : vector<8x1xf32> to vector<8x8xf32>
    %25 = arith.subf %16, %24 : vector<8x8xf32>
    %26 = math.exp %25 : vector<8x8xf32>
    %27 = arith.mulf %23, %18 : vector<8x1xf32>
    %cst_15 = arith.constant dense<0.000000e+00> : vector<8xf32>
    %28 = vector.multi_reduction <add>, %26, %cst_15 [1] : vector<8x8xf32> to vector<8xf32>
    %29 = vector.shape_cast %28 : vector<8xf32> to vector<8x1xf32>
    %30 = arith.addf %27, %29 : vector<8x1xf32>
    %c0_16 = arith.constant 0 : index
    %c0_17 = arith.constant 0 : index
    %31 = vector.load %arg8[%c0_16, %c0_17] : memref<8x4xf32, #tpu.memory_space<vmem>>, vector<8x1xf32>
    tpu.vector_store %arg8[%c0_16, %c0_17], %30 {strides = array<i32>} : memref<8x4xf32, #tpu.memory_space<vmem>>, vector<8x1xf32>,
    %32 = arith.truncf %26 : vector<8x8xf32> to vector<8x8xbf16>
    %cst_18 = arith.constant dense<0.000000e+00> : vector<8x32xf32>
    %33 = tpu.matmul %32, %15, %cst_18 {dimension_numbers = #tpu.dot_dimension_numbers<[1], [0], [0], [1], [0, 0, 1, 1], [], []>} : vector<8x8xbf16>, vector<8x32xbf16>, vector<8x32xf32> -> vector<8x32xf32>
    %c0_19 = arith.constant 0 : index
    %c0_20 = arith.constant 0 : index
    %34 = vector.load %arg9[%c0_19, %c0_20] : memref<8x128xf32, #tpu.memory_space<vmem>>, vector<8x32xf32>
    %35 = vector.broadcast %23 : vector<8x1xf32> to vector<8x32xf32>
    %36 = arith.mulf %35, %34 : vector<8x32xf32>
    %37 = arith.addf %36, %33 : vector<8x32xf32>
    %c0_21 = arith.constant 0 : index
    %c0_22 = arith.constant 0 : index
    %38 = vector.load %arg9[%c0_21, %c0_22] : memref<8x128xf32, #tpu.memory_space<vmem>>, vector<8x32xf32>
    tpu.vector_store %arg9[%c0_21, %c0_22], %37 {strides = array<i32>} : memref<8x128xf32, #tpu.memory_space<vmem>>, vector<8x32xf32>,
    %c0_23 = arith.constant 0 : index
    %c0_24 = arith.constant 0 : index
    %39 = vector.load %arg7[%c0_23, %c0_24] : memref<8x4xf32, #tpu.memory_space<vmem>>, vector<8x1xf32>
    tpu.vector_store %arg7[%c0_23, %c0_24], %21 {strides = array<i32>} : memref<8x4xf32, #tpu.memory_space<vmem>>, vector<8x1xf32>,
    %40 = vector.extract_strided_slice %8 {offsets = [0, 32], sizes = [8, 32], strides = [1, 1]} : vector<8x128xbf16> to vector<8x32xbf16>
    %41 = vector.extract_strided_slice %10 {offsets = [0, 0], sizes = [8, 32], strides = [1, 1]} : vector<8x64xbf16> to vector<8x32xbf16>
    %42 = vector.extract_strided_slice %12 {offsets = [0, 0], sizes = [8, 32], strides = [1, 1]} : vector<8x64xbf16> to vector<8x32xbf16>
    %cst_25 = arith.constant dense<0.000000e+00> : vector<8x8xf32>
    %43 = tpu.matmul %40, %41, %cst_25 {dimension_numbers = #tpu.dot_dimension_numbers<[1], [1], [0], [0], [0, 0, 1, 0], [], []>} : vector<8x32xbf16>, vector<8x32xbf16>, vector<8x8xf32> -> vector<8x8xf32>
    %c0_26 = arith.constant 0 : index
    %c1 = arith.constant 1 : index
    %44 = vector.load %arg7[%c0_26, %c1] : memref<8x4xf32, #tpu.memory_space<vmem>>, vector<8x1xf32>
    %c0_27 = arith.constant 0 : index
    %c1_28 = arith.constant 1 : index
    %45 = vector.load %arg8[%c0_27, %c1_28] : memref<8x4xf32, #tpu.memory_space<vmem>>, vector<8x1xf32>
    %cst_29 = arith.constant dense<0xFF800000> : vector<8xf32>
    %46 = vector.multi_reduction <maximumf>, %43, %cst_29 [1] : vector<8x8xf32> to vector<8xf32>
    %47 = vector.shape_cast %46 : vector<8xf32> to vector<8x1xf32>
    %48 = arith.maximumf %44, %47 : vector<8x1xf32>
    %49 = arith.subf %44, %48 : vector<8x1xf32>
    %50 = math.exp %49 : vector<8x1xf32>
    %51 = vector.broadcast %48 : vector<8x1xf32> to vector<8x8xf32>
    %52 = arith.subf %43, %51 : vector<8x8xf32>
    %53 = math.exp %52 : vector<8x8xf32>
    %54 = arith.mulf %50, %45 : vector<8x1xf32>
    %cst_30 = arith.constant dense<0.000000e+00> : vector<8xf32>
    %55 = vector.multi_reduction <add>, %53, %cst_30 [1] : vector<8x8xf32> to vector<8xf32>
    %56 = vector.shape_cast %55 : vector<8xf32> to vector<8x1xf32>
    %57 = arith.addf %54, %56 : vector<8x1xf32>
    %c0_31 = arith.constant 0 : index
    %c1_32 = arith.constant 1 : index
    %58 = vector.load %arg8[%c0_31, %c1_32] : memref<8x4xf32, #tpu.memory_space<vmem>>, vector<8x1xf32>
    tpu.vector_store %arg8[%c0_31, %c1_32], %57 {strides = array<i32>} : memref<8x4xf32, #tpu.memory_space<vmem>>, vector<8x1xf32>,
    %59 = arith.truncf %53 : vector<8x8xf32> to vector<8x8xbf16>
    %cst_33 = arith.constant dense<0.000000e+00> : vector<8x32xf32>
    %60 = tpu.matmul %59, %42, %cst_33 {dimension_numbers = #tpu.dot_dimension_numbers<[1], [0], [0], [1], [0, 0, 1, 1], [], []>} : vector<8x8xbf16>, vector<8x32xbf16>, vector<8x32xf32> -> vector<8x32xf32>
    %c0_34 = arith.constant 0 : index
    %c32 = arith.constant 32 : index
    %61 = vector.load %arg9[%c0_34, %c32] : memref<8x128xf32, #tpu.memory_space<vmem>>, vector<8x32xf32>
    %62 = vector.broadcast %50 : vector<8x1xf32> to vector<8x32xf32>
    %63 = arith.mulf %62, %61 : vector<8x32xf32>
    %64 = arith.addf %63, %60 : vector<8x32xf32>
    %c0_35 = arith.constant 0 : index
    %c32_36 = arith.constant 32 : index
    %65 = vector.load %arg9[%c0_35, %c32_36] : memref<8x128xf32, #tpu.memory_space<vmem>>, vector<8x32xf32>
    tpu.vector_store %arg9[%c0_35, %c32_36], %64 {strides = array<i32>} : memref<8x128xf32, #tpu.memory_space<vmem>>, vector<8x32xf32>,
    %c0_37 = arith.constant 0 : index
    %c1_38 = arith.constant 1 : index
    %66 = vector.load %arg7[%c0_37, %c1_38] : memref<8x4xf32, #tpu.memory_space<vmem>>, vector<8x1xf32>
    tpu.vector_store %arg7[%c0_37, %c1_38], %48 {strides = array<i32>} : memref<8x4xf32, #tpu.memory_space<vmem>>, vector<8x1xf32>,
    %67 = vector.extract_strided_slice %8 {offsets = [0, 64], sizes = [8, 32], strides = [1, 1]} : vector<8x128xbf16> to vector<8x32xbf16>
    %68 = vector.extract_strided_slice %10 {offsets = [0, 32], sizes = [8, 32], strides = [1, 1]} : vector<8x64xbf16> to vector<8x32xbf16>
    %69 = vector.extract_strided_slice %12 {offsets = [0, 32], sizes = [8, 32], strides = [1, 1]} : vector<8x64xbf16> to vector<8x32xbf16>
    %cst_39 = arith.constant dense<0.000000e+00> : vector<8x8xf32>
    %70 = tpu.matmul %67, %68, %cst_39 {dimension_numbers = #tpu.dot_dimension_numbers<[1], [1], [0], [0], [0, 0, 1, 0], [], []>} : vector<8x32xbf16>, vector<8x32xbf16>, vector<8x8xf32> -> vector<8x8xf32>
    %c0_40 = arith.constant 0 : index
    %c2 = arith.constant 2 : index
    %71 = vector.load %arg7[%c0_40, %c2] : memref<8x4xf32, #tpu.memory_space<vmem>>, vector<8x1xf32>
    %c0_41 = arith.constant 0 : index
    %c2_42 = arith.constant 2 : index
    %72 = vector.load %arg8[%c0_41, %c2_42] : memref<8x4xf32, #tpu.memory_space<vmem>>, vector<8x1xf32>
    %cst_43 = arith.constant dense<0xFF800000> : vector<8xf32>
    %73 = vector.multi_reduction <maximumf>, %70, %cst_43 [1] : vector<8x8xf32> to vector<8xf32>
    %74 = vector.shape_cast %73 : vector<8xf32> to vector<8x1xf32>
    %75 = arith.maximumf %71, %74 : vector<8x1xf32>
    %76 = arith.subf %71, %75 : vector<8x1xf32>
    %77 = math.exp %76 : vector<8x1xf32>
    %78 = vector.broadcast %75 : vector<8x1xf32> to vector<8x8xf32>
    %79 = arith.subf %70, %78 : vector<8x8xf32>
    %80 = math.exp %79 : vector<8x8xf32>
    %81 = arith.mulf %77, %72 : vector<8x1xf32>
    %cst_44 = arith.constant dense<0.000000e+00> : vector<8xf32>
    %82 = vector.multi_reduction <add>, %80, %cst_44 [1] : vector<8x8xf32> to vector<8xf32>
    %83 = vector.shape_cast %82 : vector<8xf32> to vector<8x1xf32>
    %84 = arith.addf %81, %83 : vector<8x1xf32>
    %c0_45 = arith.constant 0 : index
    %c2_46 = arith.constant 2 : index
    %85 = vector.load %arg8[%c0_45, %c2_46] : memref<8x4xf32, #tpu.memory_space<vmem>>, vector<8x1xf32>
    tpu.vector_store %arg8[%c0_45, %c2_46], %84 {strides = array<i32>} : memref<8x4xf32, #tpu.memory_space<vmem>>, vector<8x1xf32>,
    %86 = arith.truncf %80 : vector<8x8xf32> to vector<8x8xbf16>
    %cst_47 = arith.constant dense<0.000000e+00> : vector<8x32xf32>
    %87 = tpu.matmul %86, %69, %cst_47 {dimension_numbers = #tpu.dot_dimension_numbers<[1], [0], [0], [1], [0, 0, 1, 1], [], []>} : vector<8x8xbf16>, vector<8x32xbf16>, vector<8x32xf32> -> vector<8x32xf32>
    %c0_48 = arith.constant 0 : index
    %c64 = arith.constant 64 : index
    %88 = vector.load %arg9[%c0_48, %c64] : memref<8x128xf32, #tpu.memory_space<vmem>>, vector<8x32xf32>
    %89 = vector.broadcast %77 : vector<8x1xf32> to vector<8x32xf32>
    %90 = arith.mulf %89, %88 : vector<8x32xf32>
    %91 = arith.addf %90, %87 : vector<8x32xf32>
    %c0_49 = arith.constant 0 : index
    %c64_50 = arith.constant 64 : index
    %92 = vector.load %arg9[%c0_49, %c64_50] : memref<8x128xf32, #tpu.memory_space<vmem>>, vector<8x32xf32>
    tpu.vector_store %arg9[%c0_49, %c64_50], %91 {strides = array<i32>} : memref<8x128xf32, #tpu.memory_space<vmem>>, vector<8x32xf32>,
    %c0_51 = arith.constant 0 : index
    %c2_52 = arith.constant 2 : index
    %93 = vector.load %arg7[%c0_51, %c2_52] : memref<8x4xf32, #tpu.memory_space<vmem>>, vector<8x1xf32>
    tpu.vector_store %arg7[%c0_51, %c2_52], %75 {strides = array<i32>} : memref<8x4xf32, #tpu.memory_space<vmem>>, vector<8x1xf32>,
    %94 = vector.extract_strided_slice %8 {offsets = [0, 96], sizes = [8, 32], strides = [1, 1]} : vector<8x128xbf16> to vector<8x32xbf16>
    %95 = vector.extract_strided_slice %10 {offsets = [0, 32], sizes = [8, 32], strides = [1, 1]} : vector<8x64xbf16> to vector<8x32xbf16>
    %96 = vector.extract_strided_slice %12 {offsets = [0, 32], sizes = [8, 32], strides = [1, 1]} : vector<8x64xbf16> to vector<8x32xbf16>
    %cst_53 = arith.constant dense<0.000000e+00> : vector<8x8xf32>
    %97 = tpu.matmul %94, %95, %cst_53 {dimension_numbers = #tpu.dot_dimension_numbers<[1], [1], [0], [0], [0, 0, 1, 0], [], []>} : vector<8x32xbf16>, vector<8x32xbf16>, vector<8x8xf32> -> vector<8x8xf32>
    %c0_54 = arith.constant 0 : index
    %c3 = arith.constant 3 : index
    %98 = vector.load %arg7[%c0_54, %c3] : memref<8x4xf32, #tpu.memory_space<vmem>>, vector<8x1xf32>
    %c0_55 = arith.constant 0 : index
    %c3_56 = arith.constant 3 : index
    %99 = vector.load %arg8[%c0_55, %c3_56] : memref<8x4xf32, #tpu.memory_space<vmem>>, vector<8x1xf32>
    %cst_57 = arith.constant dense<0xFF800000> : vector<8xf32>
    %100 = vector.multi_reduction <maximumf>, %97, %cst_57 [1] : vector<8x8xf32> to vector<8xf32>
    %101 = vector.shape_cast %100 : vector<8xf32> to vector<8x1xf32>
    %102 = arith.maximumf %98, %101 : vector<8x1xf32>
    %103 = arith.subf %98, %102 : vector<8x1xf32>
    %104 = math.exp %103 : vector<8x1xf32>
    %105 = vector.broadcast %102 : vector<8x1xf32> to vector<8x8xf32>
    %106 = arith.subf %97, %105 : vector<8x8xf32>
    %107 = math.exp %106 : vector<8x8xf32>
    %108 = arith.mulf %104, %99 : vector<8x1xf32>
    %cst_58 = arith.constant dense<0.000000e+00> : vector<8xf32>
    %109 = vector.multi_reduction <add>, %107, %cst_58 [1] : vector<8x8xf32> to vector<8xf32>
    %110 = vector.shape_cast %109 : vector<8xf32> to vector<8x1xf32>
    %111 = arith.addf %108, %110 : vector<8x1xf32>
    %c0_59 = arith.constant 0 : index
    %c3_60 = arith.constant 3 : index
    %112 = vector.load %arg8[%c0_59, %c3_60] : memref<8x4xf32, #tpu.memory_space<vmem>>, vector<8x1xf32>
    tpu.vector_store %arg8[%c0_59, %c3_60], %111 {strides = array<i32>} : memref<8x4xf32, #tpu.memory_space<vmem>>, vector<8x1xf32>,
    %113 = arith.truncf %107 : vector<8x8xf32> to vector<8x8xbf16>
    %cst_61 = arith.constant dense<0.000000e+00> : vector<8x32xf32>
    %114 = tpu.matmul %113, %96, %cst_61 {dimension_numbers = #tpu.dot_dimension_numbers<[1], [0], [0], [1], [0, 0, 1, 1], [], []>} : vector<8x8xbf16>, vector<8x32xbf16>, vector<8x32xf32> -> vector<8x32xf32>
    %c0_62 = arith.constant 0 : index
    %c96 = arith.constant 96 : index
    %115 = vector.load %arg9[%c0_62, %c96] : memref<8x128xf32, #tpu.memory_space<vmem>>, vector<8x32xf32>
    %116 = vector.broadcast %104 : vector<8x1xf32> to vector<8x32xf32>
    %117 = arith.mulf %116, %115 : vector<8x32xf32>
    %118 = arith.addf %117, %114 : vector<8x32xf32>
    %c0_63 = arith.constant 0 : index
    %c96_64 = arith.constant 96 : index
    %119 = vector.load %arg9[%c0_63, %c96_64] : memref<8x128xf32, #tpu.memory_space<vmem>>, vector<8x32xf32>
    tpu.vector_store %arg9[%c0_63, %c96_64], %118 {strides = array<i32>} : memref<8x128xf32, #tpu.memory_space<vmem>>, vector<8x32xf32>,
    %c0_65 = arith.constant 0 : index
    %c3_66 = arith.constant 3 : index
    %120 = vector.load %arg7[%c0_65, %c3_66] : memref<8x4xf32, #tpu.memory_space<vmem>>, vector<8x1xf32>
    tpu.vector_store %arg7[%c0_65, %c3_66], %102 {strides = array<i32>} : memref<8x4xf32, #tpu.memory_space<vmem>>, vector<8x1xf32>,
    %c0_i32_67 = arith.constant 0 : i32
    %121 = arith.cmpi eq, %arg2, %c0_i32_67 : i32
    %122 = arith.extui %121 : i1 to i32
    %c0_i32_68 = arith.constant 0 : i32
    %123 = arith.cmpi ne, %122, %c0_i32_68 : i32
    scf.if %123 {
      %c0_69 = arith.constant 0 : index
      %c0_70 = arith.constant 0 : index
      %124 = vector.load %arg8[%c0_69, %c0_70] : memref<8x4xf32, #tpu.memory_space<vmem>>, vector<8x1xf32>
      %125 = tpu.reciprocal %124 {approx = true} : vector<8x1xf32> -> vector<8x1xf32>
      %c0_71 = arith.constant 0 : index
      %c0_72 = arith.constant 0 : index
      %126 = vector.load %arg9[%c0_71, %c0_72] : memref<8x128xf32, #tpu.memory_space<vmem>>, vector<8x32xf32>
      %127 = vector.broadcast %125 : vector<8x1xf32> to vector<8x32xf32>
      %128 = arith.mulf %126, %127 : vector<8x32xf32>
      %129 = arith.truncf %128 : vector<8x32xf32> to vector<8x32xbf16>
      %c0_73 = arith.constant 0 : index
      %c0_74 = arith.constant 0 : index
      %c0_75 = arith.constant 0 : index
      %130 = vector.load %arg6[%c0_73, %c0_74, %c0_75] : memref<1x8x128xbf16, #tpu.memory_space<vmem>>, vector<1x8x32xbf16>
      %131 = vector.shape_cast %130 : vector<1x8x32xbf16> to vector<8x32xbf16>
      %132 = vector.shape_cast %129 : vector<8x32xbf16> to vector<1x8x32xbf16>
      tpu.vector_store %arg6[%c0_73, %c0_74, %c0_75], %132 {strides = array<i32>} : memref<1x8x128xbf16, #tpu.memory_space<vmem>>, vector<1x8x32xbf16>,
      %c0_76 = arith.constant 0 : index
      %c1_77 = arith.constant 1 : index
      %133 = vector.load %arg8[%c0_76, %c1_77] : memref<8x4xf32, #tpu.memory_space<vmem>>, vector<8x1xf32>
      %134 = tpu.reciprocal %133 {approx = true} : vector<8x1xf32> -> vector<8x1xf32>
      %c0_78 = arith.constant 0 : index
      %c32_79 = arith.constant 32 : index
      %135 = vector.load %arg9[%c0_78, %c32_79] : memref<8x128xf32, #tpu.memory_space<vmem>>, vector<8x32xf32>
      %136 = vector.broadcast %134 : vector<8x1xf32> to vector<8x32xf32>
      %137 = arith.mulf %135, %136 : vector<8x32xf32>
      %138 = arith.truncf %137 : vector<8x32xf32> to vector<8x32xbf16>
      %c0_80 = arith.constant 0 : index
      %c0_81 = arith.constant 0 : index
      %c32_82 = arith.constant 32 : index
      %139 = vector.load %arg6[%c0_80, %c0_81, %c32_82] : memref<1x8x128xbf16, #tpu.memory_space<vmem>>, vector<1x8x32xbf16>
      %140 = vector.shape_cast %139 : vector<1x8x32xbf16> to vector<8x32xbf16>
      %141 = vector.shape_cast %138 : vector<8x32xbf16> to vector<1x8x32xbf16>
      tpu.vector_store %arg6[%c0_80, %c0_81, %c32_82], %141 {strides = array<i32>} : memref<1x8x128xbf16, #tpu.memory_space<vmem>>, vector<1x8x32xbf16>,
      %c0_83 = arith.constant 0 : index
      %c2_84 = arith.constant 2 : index
      %142 = vector.load %arg8[%c0_83, %c2_84] : memref<8x4xf32, #tpu.memory_space<vmem>>, vector<8x1xf32>
      %143 = tpu.reciprocal %142 {approx = true} : vector<8x1xf32> -> vector<8x1xf32>
      %c0_85 = arith.constant 0 : index
      %c64_86 = arith.constant 64 : index
      %144 = vector.load %arg9[%c0_85, %c64_86] : memref<8x128xf32, #tpu.memory_space<vmem>>, vector<8x32xf32>
      %145 = vector.broadcast %143 : vector<8x1xf32> to vector<8x32xf32>
      %146 = arith.mulf %144, %145 : vector<8x32xf32>
      %147 = arith.truncf %146 : vector<8x32xf32> to vector<8x32xbf16>
      %c0_87 = arith.constant 0 : index
      %c0_88 = arith.constant 0 : index
      %c64_89 = arith.constant 64 : index
      %148 = vector.load %arg6[%c0_87, %c0_88, %c64_89] : memref<1x8x128xbf16, #tpu.memory_space<vmem>>, vector<1x8x32xbf16>
      %149 = vector.shape_cast %148 : vector<1x8x32xbf16> to vector<8x32xbf16>
      %150 = vector.shape_cast %147 : vector<8x32xbf16> to vector<1x8x32xbf16>
      tpu.vector_store %arg6[%c0_87, %c0_88, %c64_89], %150 {strides = array<i32>} : memref<1x8x128xbf16, #tpu.memory_space<vmem>>, vector<1x8x32xbf16>,
      %c0_90 = arith.constant 0 : index
      %c3_91 = arith.constant 3 : index
      %151 = vector.load %arg8[%c0_90, %c3_91] : memref<8x4xf32, #tpu.memory_space<vmem>>, vector<8x1xf32>
      %152 = tpu.reciprocal %151 {approx = true} : vector<8x1xf32> -> vector<8x1xf32>
      %c0_92 = arith.constant 0 : index
      %c96_93 = arith.constant 96 : index
      %153 = vector.load %arg9[%c0_92, %c96_93] : memref<8x128xf32, #tpu.memory_space<vmem>>, vector<8x32xf32>
      %154 = vector.broadcast %152 : vector<8x1xf32> to vector<8x32xf32>
      %155 = arith.mulf %153, %154 : vector<8x32xf32>
      %156 = arith.truncf %155 : vector<8x32xf32> to vector<8x32xbf16>
      %c0_94 = arith.constant 0 : index
      %c0_95 = arith.constant 0 : index
      %c96_96 = arith.constant 96 : index
      %157 = vector.load %arg6[%c0_94, %c0_95, %c96_96] : memref<1x8x128xbf16, #tpu.memory_space<vmem>>, vector<1x8x32xbf16>
      %158 = vector.shape_cast %157 : vector<1x8x32xbf16> to vector<8x32xbf16>
      %159 = vector.shape_cast %156 : vector<8x32xbf16> to vector<1x8x32xbf16>
      tpu.vector_store %arg6[%c0_94, %c0_95, %c96_96], %159 {strides = array<i32>} : memref<1x8x128xbf16, #tpu.memory_space<vmem>>, vector<1x8x32xbf16>,
    } else {
    }
    return
  }
  func.func @transform_0(%arg0: i32, %arg1: i32, %arg2: i32) -> (i32, i32, i32) {
    %c0_i32 = arith.constant 0 : i32
    %c0_i32_0 = arith.constant 0 : i32
    return %arg0, %arg1, %c0_i32 : i32, i32, i32
  }
  func.func @transform_1(%arg0: i32, %arg1: i32, %arg2: i32) -> (i32, i32, i32) {
    %c0_i32 = arith.constant 0 : i32
    %c0_i32_0 = arith.constant 0 : i32
    return %arg0, %arg2, %c0_i32 : i32, i32, i32
  }
  func.func @transform_2(%arg0: i32, %arg1: i32, %arg2: i32) -> (i32, i32, i32) {
    %c0_i32 = arith.constant 0 : i32
    %c0_i32_0 = arith.constant 0 : i32
    return %arg0, %arg2, %c0_i32 : i32, i32, i32
  }
  func.func @transform_3(%arg0: i32, %arg1: i32, %arg2: i32) -> (i32, i32, i32) {
    %c0_i32 = arith.constant 0 : i32
    %c0_i32_0 = arith.constant 0 : i32
    return %arg0, %arg1, %c0_i32 : i32, i32, i32
  }
}

module attributes {stable_mosaic.version = 11 : i64} {
  func.func @kernel(%arg0: i32, %arg1: i32, %arg2: memref<16x128xbf16, #tpu.memory_space<vmem>>, %arg3: memref<1x128xf32, #tpu.memory_space<vmem>>, %arg4: memref<128x272xbf16, #tpu.memory_space<vmem>>, %arg5: memref<16x272xf32, #tpu.memory_space<vmem>>) attributes {dimension_semantics = [#tpu.dimension_semantics<parallel>, #tpu.dimension_semantics<parallel>], iteration_bounds = array<i64: 1, 1>, scalar_prefetch = 0 : i64, scratch_operands = 0 : i64, tpu.core_type = #tpu.core_type<tc>, window_params = [{transform_indices = @transform_0, window_bounds = array<i64: 16, 128>}, {pipeline_mode = #tpu.pipeline_mode<synchronous>, transform_indices = @transform_1, window_bounds = array<i64: 1, 128>}, {transform_indices = @transform_2, window_bounds = array<i64: 128, 272>}, {transform_indices = @transform_3, window_bounds = array<i64: 16, 272>}]} {
    %c0 = arith.constant 0 : index
    %c0_0 = arith.constant 0 : index
    %0 = vector.load %arg2[%c0, %c0_0] : memref<16x128xbf16, #tpu.memory_space<vmem>>, vector<16x128xbf16>
    %1 = arith.extf %0 : vector<16x128xbf16> to vector<16x128xf32>
    %2 = arith.mulf %1, %1 : vector<16x128xf32>
    %cst = arith.constant dense<0.000000e+00> : vector<16xf32>
    %3 = vector.multi_reduction <add>, %2, %cst [1] : vector<16x128xf32> to vector<16xf32>
    %4 = vector.shape_cast %3 : vector<16xf32> to vector<16x1xf32>
    %cst_1 = arith.constant 1.280000e+02 : f32
    %5 = vector.broadcast %cst_1 : f32 to vector<16x1xf32>
    %6 = arith.divf %4, %5 : vector<16x1xf32>
    %cst_2 = arith.constant 9.99999997E-7 : f32
    %7 = vector.broadcast %cst_2 : f32 to vector<16x1xf32>
    %8 = arith.addf %6, %7 : vector<16x1xf32>
    %9 = math.rsqrt %8 : vector<16x1xf32>
    %10 = vector.broadcast %9 : vector<16x1xf32> to vector<16x128xf32>
    %11 = arith.mulf %1, %10 : vector<16x128xf32>
    %c0_3 = arith.constant 0 : index
    %c0_4 = arith.constant 0 : index
    %12 = vector.load %arg3[%c0_3, %c0_4] : memref<1x128xf32, #tpu.memory_space<vmem>>, vector<1x128xf32>
    %cst_5 = arith.constant 1.000000e+00 : f32
    %13 = vector.broadcast %cst_5 : f32 to vector<1x128xf32>
    %14 = arith.addf %13, %12 : vector<1x128xf32>
    %15 = vector.broadcast %14 : vector<1x128xf32> to vector<16x128xf32>
    %16 = arith.mulf %11, %15 : vector<16x128xf32>
    %17 = arith.truncf %16 : vector<16x128xf32> to vector<16x128xbf16>
    %c0_6 = arith.constant 0 : index
    %c0_7 = arith.constant 0 : index
    %18 = vector.load %arg4[%c0_6, %c0_7] : memref<128x272xbf16, #tpu.memory_space<vmem>>, vector<128x272xbf16>
    %cst_8 = arith.constant dense<0.000000e+00> : vector<16x272xf32>
    %19 = tpu.matmul %17, %18, %cst_8 {dimension_numbers = #tpu.dot_dimension_numbers<[1], [0], [0], [1], [0, 0, 1, 1], [], []>} : vector<16x128xbf16>, vector<128x272xbf16>, vector<16x272xf32> -> vector<16x272xf32>
    %c0_9 = arith.constant 0 : index
    %c0_10 = arith.constant 0 : index
    %20 = vector.load %arg5[%c0_9, %c0_10] : memref<16x272xf32, #tpu.memory_space<vmem>>, vector<16x272xf32>
    tpu.vector_store %arg5[%c0_9, %c0_10], %19 {strides = array<i32>} : memref<16x272xf32, #tpu.memory_space<vmem>>, vector<16x272xf32>,
    return
  }
  func.func @transform_0(%arg0: i32, %arg1: i32) -> (i32, i32) {
    %c0_i32 = arith.constant 0 : i32
    %c0_i32_0 = arith.constant 0 : i32
    return %arg0, %c0_i32 : i32, i32
  }
  func.func @transform_1(%arg0: i32, %arg1: i32) -> (i32, i32) {
    %c0_i32 = arith.constant 0 : i32
    %c0_i32_0 = arith.constant 0 : i32
    %c0_i32_1 = arith.constant 0 : i32
    return %c0_i32, %c0_i32_0 : i32, i32
  }
  func.func @transform_2(%arg0: i32, %arg1: i32) -> (i32, i32) {
    %c0_i32 = arith.constant 0 : i32
    %c0_i32_0 = arith.constant 0 : i32
    return %c0_i32, %arg1 : i32, i32
  }
  func.func @transform_3(%arg0: i32, %arg1: i32) -> (i32, i32) {
    %c0_i32 = arith.constant 0 : i32
    return %arg0, %arg1 : i32, i32
  }
}

</mosaic_0001>

<llo_original>
// kernel: paligemma_forward.23
$region0: #{paligemma_forward.23}
  #allocation0 [shape = 'u32[]', space=smem, size = 0x4, offset = 0x4, fixed_abs, tag = 'smem constant byte address 0x4 - core index']
  #allocation1 [shape = 'u32[144,128]{1,0:T(1,128)}', space=vmem, size = 0x12000, scoped, tag = 'internal scratch']
  #allocation2 [shape = 'f32[8,128]{1,0:T(8,128)}', space=vmem, size = 0x1000, scoped, tag = 'scratch operand']
  %s0 = inlined_call_operand.vmem [shape: bf16[8,128], index: 0, kind: input, shape index: {}]
  %s1 = inlined_call_operand.vmem [shape: bf16[128,128], index: 1, kind: input, shape index: {}]
  %s2 = inlined_call_operand.vmem [shape: f32[1,128], index: 2, kind: input, shape index: {}]
  %s3 = inlined_call_operand.vmem [shape: bf16[8,128], index: 3, kind: input, shape index: {}]
  %s4 = inlined_call_operand.vmem [shape: bf16[8,128], index: 4, kind: output, shape index: {}]
  %s5 = sld [smem:[#allocation0]]
  $region34: #{paligemma_forward.23} parent=0
    _
  %s7 = ssub.s32 1, %s5
  %s8 = scalar_select 0, %s7, %s5
  // Predicated region
  $region2: #{paligemma_forward.23} parent=0 // pred_check
    _
  $region3: #{paligemma_forward.23} parent=0 // pred_check_branch
    %10 = sbr.rel (0) target = $region5
  $region4: #{paligemma_forward.23} parent=0 // pred_region
    _
  $region5: #{paligemma_forward.23} parent=0 // pred_fallthru
    _
  // Predicated region
  $region6: #{paligemma_forward.23} parent=0 // pred_check
    _
  $region7: #{paligemma_forward.23} parent=0 // pred_check_branch
    %12 = sbr.rel (0) target = $region9
  $region8: #{paligemma_forward.23} parent=0 // pred_region
    _
  $region9: #{paligemma_forward.23} parent=0 // pred_fallthru
    _
  // Predicated region
  $region10: #{paligemma_forward.23} parent=0 // pred_check
    _
  $region11: #{paligemma_forward.23} parent=0 // pred_check_branch
    %14 = sbr.rel (0) target = $region13
  $region12: #{paligemma_forward.23} parent=0 // pred_region
    _
  $region13: #{paligemma_forward.23} parent=0 // pred_fallthru
    _
  // Predicated region
  $region14: #{paligemma_forward.23} parent=0 // pred_check
    _
  $region15: #{paligemma_forward.23} parent=0 // pred_check_branch
    %16 = sbr.rel (0) target = $region17
  $region16: #{paligemma_forward.23} parent=0 // pred_region
    _
  $region17: #{paligemma_forward.23} parent=0 // pred_fallthru
    _
  %p18 = scmp.eq.s32.totalorder 0, 0
  // Predicated region
  $region18: #{paligemma_forward.23} parent=0 // pred_check
    %p19 = pneg %p18
  $region19: #{paligemma_forward.23} parent=0 // pred_check_branch
    %21 = sbr.rel (%p19) target = $region21
  $region20: #{paligemma_forward.23} parent=0 // pred_region
    %22 = vst [vmem:[#allocation2] sm:$0xff] 0.0
  $region21: #{paligemma_forward.23} parent=0 // pred_fallthru
    _
  %v23 = vld [vmem:[#allocation2] sm:$0xff]
  %v24 = vld [vmem:[%s0] sm:$0xf]
  %v25 = vld [vmem:[%s1] sm:$0xf]
  %v26 = vld [vmem:[%s1 + $0x4] sm:$0xf]
  %v27 = vld [vmem:[%s1 + $0x8] sm:$0xf]
  %v28 = vld [vmem:[%s1 + $0xc] sm:$0xf]
  %v29 = vld [vmem:[%s1 + $0x10] sm:$0xf]
  %v30 = vld [vmem:[%s1 + $0x14] sm:$0xf]
  %v31 = vld [vmem:[%s1 + $0x18] sm:$0xf]
  %v32 = vld [vmem:[%s1 + $0x1c] sm:$0xf]
  %v33 = vld [vmem:[%s1 + $0x20] sm:$0xf]
  %v34 = vld [vmem:[%s1 + $0x24] sm:$0xf]
  %v35 = vld [vmem:[%s1 + $0x28] sm:$0xf]
  %v36 = vld [vmem:[%s1 + $0x2c] sm:$0xf]
  %v37 = vld [vmem:[%s1 + $0x30] sm:$0xf]
  %v38 = vld [vmem:[%s1 + $0x34] sm:$0xf]
  %v39 = vld [vmem:[%s1 + $0x38] sm:$0xf]
  %v40 = vld [vmem:[%s1 + $0x3c] sm:$0xf]
  %v57 = vunpack.c.l.b16 %v25
  %v58 = vunpack.c.l.b16 %v26
  %v59 = vunpack.c.l.b16 %v27
  %v60 = vunpack.c.l.b16 %v28
  %v61 = vunpack.c.l.b16 %v29
  %v62 = vunpack.c.l.b16 %v30
  %v63 = vunpack.c.l.b16 %v31
  %v64 = vunpack.c.l.b16 %v32
  %v65 = vunpack.c.l.b16 %v33
  %v66 = vunpack.c.l.b16 %v34
  %v67 = vunpack.c.l.b16 %v35
  %v68 = vunpack.c.l.b16 %v36
  %v69 = vunpack.c.l.b16 %v37
  %v70 = vunpack.c.l.b16 %v38
  %v71 = vunpack.c.l.b16 %v39
  %v72 = vunpack.c.l.b16 %v40
  %v73 = vpack.c.b16 %v58, %v57
  %v74 = vpack.c.b16 %v60, %v59
  %v75 = vpack.c.b16 %v62, %v61
  %v76 = vpack.c.b16 %v64, %v63
  %v77 = vpack.c.b16 %v66, %v65
  %v78 = vpack.c.b16 %v68, %v67
  %v79 = vpack.c.b16 %v70, %v69
  %v80 = vpack.c.b16 %v72, %v71
  %89 = vmatprep.subr.bf16.mxu0 0
  %90 = vmatpush1.bf16.msra.mxu0 %v80
  %91 = vmatprep.subr.bf16.mxu0 0
  %92 = vmatpush1.bf16.msra.mxu0 %v79
  %93 = vmatprep.subr.bf16.mxu0 0
  %94 = vmatpush1.bf16.msra.mxu0 %v78
  %95 = vmatprep.subr.bf16.mxu0 0
  %96 = vmatpush1.bf16.msra.mxu0 %v77
  %97 = vmatprep.subr.bf16.mxu0 0
  %98 = vmatpush1.bf16.msra.mxu0 %v76
  %99 = vmatprep.subr.bf16.mxu0 0
  %100 = vmatpush1.bf16.msra.mxu0 %v75
  %101 = vmatprep.subr.bf16.mxu0 0
  %102 = vmatpush1.bf16.msra.mxu0 %v74
  %103 = vmatprep.subr.bf16.mxu0 0
  %104 = vmatpush1.bf16.msra.mxu0 %v73
  %105 = vmatprep.subr.bf16.mxu0 0
  %106 = vmatpush2.bf16.msra.mxu0 0
  %107 = vmatprep.subr.bf16.mxu0 0
  %108 = vmatpush2.bf16.msra.mxu0 0
  %109 = vmatprep.subr.bf16.mxu0 0
  %110 = vmatpush2.bf16.msra.mxu0 0
  %111 = vmatprep.subr.bf16.mxu0 0
  %112 = vmatpush2.bf16.msra.mxu0 0
  %113 = vmatprep.subr.bf16.mxu0 0
  %114 = vmatpush2.bf16.msra.mxu0 0
  %115 = vmatprep.subr.bf16.mxu0 0
  %116 = vmatpush2.bf16.msra.mxu0 0
  %117 = vmatprep.subr.bf16.mxu0 0
  %118 = vmatpush2.bf16.msra.mxu0 0
  %119 = vmatprep.subr.bf16.mxu0 0
  %120 = vmatpush2.bf16.msra.mxu0 0
  %121 = vmatprep.mubr.bf16.mxu0 0
  %122 = vmatmul.mubr.bf16.gmra.mxu0 %v24
  %v123 = vpop.f32.mrf.mxu0
  %v124 = vadd.f32 0.0, %v123
  %v125 = vpop.f32.mrf.mxu0
  %v126 = vpop.f32.mrf.mxu0
  %v127 = vpop.f32.mrf.mxu0
  %128 = vdwg.mxu0
  %v129 = vadd.f32 %v23, %v124
  %130 = vst [vmem:[#allocation2] sm:$0xff] %v129
  // Predicated region
  $region22: #{paligemma_forward.23} parent=0 // pred_check
    %p131 = pneg %p18
  $region23: #{paligemma_forward.23} parent=0 // pred_check_branch
    %133 = sbr.rel (%p131) target = $region25
  $region24: #{paligemma_forward.23} parent=0 // pred_region
    %v134 = vld [vmem:[#allocation2] sm:$0xff]
    %v135 = vld [vmem:[%s2] sm:$0x1]
    %v137 = vlaneseq
    %v138 = vshrl.u32 %v137, 7
    %v139 = vsub.s32 0, %v138
    %v140 = vrot.slane %v135, %v139
    %v142 = vadd.f32 %v134, %v140
    %v143 = vld [vmem:[%s3] sm:$0xf]
    %v144 = vunpack.c.l.bf16 %v143
    %v145 = vadd.f32 %v142, %v144
    %v146 = vpack.c.bf16 %v145, %v145
    %147 = vst [vmem:[%s4] sm:$0xf] %v146
  $region25: #{paligemma_forward.23} parent=0 // pred_fallthru
    _
  // Predicated region
  $region26: #{paligemma_forward.23} parent=0 // pred_check
    _
  $region27: #{paligemma_forward.23} parent=0 // pred_check_branch
    %149 = sbr.rel (0) target = $region29
  $region28: #{paligemma_forward.23} parent=0 // pred_region
    _
  $region29: #{paligemma_forward.23} parent=0 // pred_fallthru
    _
  // Predicated region
  $region30: #{paligemma_forward.23} parent=0 // pred_check
    _
  $region31: #{paligemma_forward.23} parent=0 // pred_check_branch
    %151 = sbr.rel (0) target = $region33
  $region32: #{paligemma_forward.23} parent=0 // pred_region
    _
  $region33: #{paligemma_forward.23} parent=0 // pred_fallthru
    _

// kernel: paligemma_forward.20
$region0: #{paligemma_forward.20}
  #allocation0 [shape = 'u32[]', space=smem, size = 0x4, offset = 0x4, fixed_abs, tag = 'smem constant byte address 0x4 - core index']
  #allocation1 [shape = 'u32[144,128]{1,0:T(1,128)}', space=vmem, size = 0x12000, scoped, tag = 'internal scratch']
  #allocation2 [shape = 'f32[8,128]{1,0:T(8,128)}', space=vmem, size = 0x1000, scoped, tag = 'scratch operand']
  %s0 = inlined_call_operand.vmem [shape: bf16[8,192], index: 0, kind: input, shape index: {}]
  %s1 = inlined_call_operand.vmem [shape: bf16[192,128], index: 1, kind: input, shape index: {}]
  %s2 = inlined_call_operand.vmem [shape: f32[1,128], index: 2, kind: input, shape index: {}]
  %s3 = inlined_call_operand.vmem [shape: bf16[8,128], index: 3, kind: input, shape index: {}]
  %s4 = inlined_call_operand.vmem [shape: bf16[8,128], index: 4, kind: output, shape index: {}]
  %s5 = sld [smem:[#allocation0]]
  $region34: #{paligemma_forward.20} parent=0
    _
  %s7 = ssub.s32 1, %s5
  %s8 = scalar_select 0, %s7, %s5
  // Predicated region
  $region2: #{paligemma_forward.20} parent=0 // pred_check
    _
  $region3: #{paligemma_forward.20} parent=0 // pred_check_branch
    %10 = sbr.rel (0) target = $region5
  $region4: #{paligemma_forward.20} parent=0 // pred_region
    _
  $region5: #{paligemma_forward.20} parent=0 // pred_fallthru
    _
  // Predicated region
  $region6: #{paligemma_forward.20} parent=0 // pred_check
    _
  $region7: #{paligemma_forward.20} parent=0 // pred_check_branch
    %12 = sbr.rel (0) target = $region9
  $region8: #{paligemma_forward.20} parent=0 // pred_region
    _
  $region9: #{paligemma_forward.20} parent=0 // pred_fallthru
    _
  // Predicated region
  $region10: #{paligemma_forward.20} parent=0 // pred_check
    _
  $region11: #{paligemma_forward.20} parent=0 // pred_check_branch
    %14 = sbr.rel (0) target = $region13
  $region12: #{paligemma_forward.20} parent=0 // pred_region
    _
  $region13: #{paligemma_forward.20} parent=0 // pred_fallthru
    _
  // Predicated region
  $region14: #{paligemma_forward.20} parent=0 // pred_check
    _
  $region15: #{paligemma_forward.20} parent=0 // pred_check_branch
    %16 = sbr.rel (0) target = $region17
  $region16: #{paligemma_forward.20} parent=0 // pred_region
    _
  $region17: #{paligemma_forward.20} parent=0 // pred_fallthru
    _
  %p18 = scmp.eq.s32.totalorder 0, 0
  // Predicated region
  $region18: #{paligemma_forward.20} parent=0 // pred_check
    %p19 = pneg %p18
  $region19: #{paligemma_forward.20} parent=0 // pred_check_branch
    %21 = sbr.rel (%p19) target = $region21
  $region20: #{paligemma_forward.20} parent=0 // pred_region
    %22 = vst [vmem:[#allocation2] sm:$0xff] 0.0
  $region21: #{paligemma_forward.20} parent=0 // pred_fallthru
    _
  %v23 = vld [vmem:[#allocation2] sm:$0xff]
  %v24 = vld [vmem:[%s0] sm:$0xff]
  %v25 = vld [vmem:[%s1] sm:$0xf]
  %v26 = vld [vmem:[%s1 + $0x4] sm:$0xf]
  %v27 = vld [vmem:[%s1 + $0x8] sm:$0xf]
  %v28 = vld [vmem:[%s1 + $0xc] sm:$0xf]
  %v29 = vld [vmem:[%s1 + $0x10] sm:$0xf]
  %v30 = vld [vmem:[%s1 + $0x14] sm:$0xf]
  %v31 = vld [vmem:[%s1 + $0x18] sm:$0xf]
  %v32 = vld [vmem:[%s1 + $0x1c] sm:$0xf]
  %v33 = vld [vmem:[%s1 + $0x20] sm:$0xf]
  %v34 = vld [vmem:[%s1 + $0x24] sm:$0xf]
  %v35 = vld [vmem:[%s1 + $0x28] sm:$0xf]
  %v36 = vld [vmem:[%s1 + $0x2c] sm:$0xf]
  %v37 = vld [vmem:[%s1 + $0x30] sm:$0xf]
  %v38 = vld [vmem:[%s1 + $0x34] sm:$0xf]
  %v39 = vld [vmem:[%s1 + $0x38] sm:$0xf]
  %v40 = vld [vmem:[%s1 + $0x3c] sm:$0xf]
  %v41 = vld [vmem:[%s1 + $0x40] sm:$0xf]
  %v42 = vld [vmem:[%s1 + $0x44] sm:$0xf]
  %v43 = vld [vmem:[%s1 + $0x48] sm:$0xf]
  %v44 = vld [vmem:[%s1 + $0x4c] sm:$0xf]
  %v45 = vld [vmem:[%s1 + $0x50] sm:$0xf]
  %v46 = vld [vmem:[%s1 + $0x54] sm:$0xf]
  %v47 = vld [vmem:[%s1 + $0x58] sm:$0xf]
  %v48 = vld [vmem:[%s1 + $0x5c] sm:$0xf]
  %v50 = vunpack.c.l.b16 %v24
  %v51 = vunpack.c.h.b16 %v24
  %v52 = vpack.c.b16 %v50, %v50
  %v53 = vpack.c.b16 %v51, %v51
  %v79 = vunpack.c.l.b16 %v25
  %v80 = vunpack.c.l.b16 %v26
  %v81 = vunpack.c.l.b16 %v27
  %v82 = vunpack.c.l.b16 %v28
  %v83 = vunpack.c.l.b16 %v29
  %v84 = vunpack.c.l.b16 %v30
  %v85 = vunpack.c.l.b16 %v31
  %v86 = vunpack.c.l.b16 %v32
  %v87 = vunpack.c.l.b16 %v33
  %v88 = vunpack.c.l.b16 %v34
  %v89 = vunpack.c.l.b16 %v35
  %v90 = vunpack.c.l.b16 %v36
  %v91 = vunpack.c.l.b16 %v37
  %v92 = vunpack.c.l.b16 %v38
  %v93 = vunpack.c.l.b16 %v39
  %v94 = vunpack.c.l.b16 %v40
  %v95 = vunpack.c.l.b16 %v41
  %v96 = vunpack.c.l.b16 %v42
  %v97 = vunpack.c.l.b16 %v43
  %v98 = vunpack.c.l.b16 %v44
  %v99 = vunpack.c.l.b16 %v45
  %v100 = vunpack.c.l.b16 %v46
  %v101 = vunpack.c.l.b16 %v47
  %v102 = vunpack.c.l.b16 %v48
  %v103 = vpack.c.b16 %v80, %v79
  %v104 = vpack.c.b16 %v82, %v81
  %v105 = vpack.c.b16 %v84, %v83
  %v106 = vpack.c.b16 %v86, %v85
  %v107 = vpack.c.b16 %v88, %v87
  %v108 = vpack.c.b16 %v90, %v89
  %v109 = vpack.c.b16 %v92, %v91
  %v110 = vpack.c.b16 %v94, %v93
  %v111 = vpack.c.b16 %v96, %v95
  %v112 = vpack.c.b16 %v98, %v97
  %v113 = vpack.c.b16 %v100, %v99
  %v114 = vpack.c.b16 %v102, %v101
  %vm127 = vcmask 523264
  %v129 = vsel %vm127, %v53, 0
  %131 = vmatprep.subr.bf16.mxu0 0
  %132 = vmatpush1.bf16.msra.mxu0 %v110
  %133 = vmatprep.subr.bf16.mxu0 0
  %134 = vmatpush1.bf16.msra.mxu0 %v109
  %135 = vmatprep.subr.bf16.mxu0 0
  %136 = vmatpush1.bf16.msra.mxu0 %v108
  %137 = vmatprep.subr.bf16.mxu0 0
  %138 = vmatpush1.bf16.msra.mxu0 %v107
  %139 = vmatprep.subr.bf16.mxu0 0
  %140 = vmatpush1.bf16.msra.mxu0 %v106
  %141 = vmatprep.subr.bf16.mxu0 0
  %142 = vmatpush1.bf16.msra.mxu0 %v105
  %143 = vmatprep.subr.bf16.mxu0 0
  %144 = vmatpush1.bf16.msra.mxu0 %v104
  %145 = vmatprep.subr.bf16.mxu0 0
  %146 = vmatpush1.bf16.msra.mxu0 %v103
  %147 = vmatprep.subr.bf16.mxu0 0
  %148 = vmatpush2.bf16.msra.mxu0 0
  %149 = vmatprep.subr.bf16.mxu0 0
  %150 = vmatpush2.bf16.msra.mxu0 0
  %151 = vmatprep.subr.bf16.mxu0 0
  %152 = vmatpush2.bf16.msra.mxu0 0
  %153 = vmatprep.subr.bf16.mxu0 0
  %154 = vmatpush2.bf16.msra.mxu0 0
  %155 = vmatprep.subr.bf16.mxu0 0
  %156 = vmatpush2.bf16.msra.mxu0 %v114
  %157 = vmatprep.subr.bf16.mxu0 0
  %158 = vmatpush2.bf16.msra.mxu0 %v113
  %159 = vmatprep.subr.bf16.mxu0 0
  %160 = vmatpush2.bf16.msra.mxu0 %v112
  %161 = vmatprep.subr.bf16.mxu0 0
  %162 = vmatpush2.bf16.msra.mxu0 %v111
  %163 = vmatprep.mubr.bf16.mxu0 %v129
  %164 = vmatmul.mubr.bf16.gmra.mxu0 %v52
  %v165 = vpop.f32.mrf.mxu0
  %v166 = vadd.f32 0.0, %v165
  %v167 = vpop.f32.mrf.mxu0
  %v168 = vpop.f32.mrf.mxu0
  %v169 = vpop.f32.mrf.mxu0
  %170 = vdwg.mxu0
  %v171 = vadd.f32 %v23, %v166
  %172 = vst [vmem:[#allocation2] sm:$0xff] %v171
  // Predicated region
  $region22: #{paligemma_forward.20} parent=0 // pred_check
    %p173 = pneg %p18
  $region23: #{paligemma_forward.20} parent=0 // pred_check_branch
    %175 = sbr.rel (%p173) target = $region25
  $region24: #{paligemma_forward.20} parent=0 // pred_region
    %v176 = vld [vmem:[#allocation2] sm:$0xff]
    %v177 = vld [vmem:[%s2] sm:$0x1]
    %v179 = vlaneseq
    %v180 = vshrl.u32 %v179, 7
    %v181 = vsub.s32 0, %v180
    %v182 = vrot.slane %v177, %v181
    %v184 = vadd.f32 %v176, %v182
    %v185 = vld [vmem:[%s3] sm:$0xf]
    %v186 = vunpack.c.l.bf16 %v185
    %v187 = vadd.f32 %v184, %v186
    %v188 = vpack.c.bf16 %v187, %v187
    %189 = vst [vmem:[%s4] sm:$0xf] %v188
  $region25: #{paligemma_forward.20} parent=0 // pred_fallthru
    _
  // Predicated region
  $region26: #{paligemma_forward.20} parent=0 // pred_check
    _
  $region27: #{paligemma_forward.20} parent=0 // pred_check_branch
    %191 = sbr.rel (0) target = $region29
  $region28: #{paligemma_forward.20} parent=0 // pred_region
    _
  $region29: #{paligemma_forward.20} parent=0 // pred_fallthru
    _
  // Predicated region
  $region30: #{paligemma_forward.20} parent=0 // pred_check
    _
  $region31: #{paligemma_forward.20} parent=0 // pred_check_branch
    %193 = sbr.rel (0) target = $region33
  $region32: #{paligemma_forward.20} parent=0 // pred_region
    _
  $region33: #{paligemma_forward.20} parent=0 // pred_fallthru
    _

// kernel: paligemma_forward.21
$region0: #{paligemma_forward.21}
  #allocation0 [shape = 'u32[]', space=smem, size = 0x4, offset = 0x4, fixed_abs, tag = 'smem constant byte address 0x4 - core index']
  #allocation1 [shape = 'u32[144,128]{1,0:T(1,128)}', space=vmem, size = 0x12000, scoped, tag = 'internal scratch']
  %s0 = inlined_call_operand.vmem [shape: bf16[8,128], index: 0, kind: input, shape index: {}]
  %s1 = inlined_call_operand.vmem [shape: f32[1,128], index: 1, kind: input, shape index: {}]
  %s2 = inlined_call_operand.vmem [shape: f32[1,128], index: 2, kind: input, shape index: {}]
  %s3 = inlined_call_operand.vmem [shape: bf16[128,384], index: 3, kind: input, shape index: {}]
  %s4 = inlined_call_operand.vmem [shape: f32[1,384], index: 4, kind: input, shape index: {}]
  %s5 = inlined_call_operand.vmem [shape: bf16[8,384], index: 5, kind: output, shape index: {}]
  %s6 = sld [smem:[#allocation0]]
  $region94: #{paligemma_forward.21} parent=0
    _
  %s8 = ssub.s32 1, %s6
  %s9 = scalar_select 0, %s8, %s6
  $region1: #{paligemma_forward.21} parent=0
    #allocation2 [shape = 'u8[65536]{0}', space=vmem, size = 0x10000, scoped, tag = 'input window, operand 3']
    loop: start=0, step=1, limit=5
    $region2: #{paligemma_forward.21} parent=1 // loop_pre_header
      _
    $region3: #{paligemma_forward.21} parent=1 // loop_header
      %s11 = sphi 0, %s15
      %p12 = scmp.ge.s32.totalorder %s11, 5
      %s18 = sphi 0, %s30
      %s19 = sphi 0, %s26
      %s20 = sphi 0, %s18
      %s21 = sphi 0, %s19
      %s22 = sphi 0, %s20
      %s23 = sphi 0, %s21
      %s33 = sphi 0, %s35
      %s36 = sphi 0, %s33
      %s37 = sphi 0, %s36
      %s53 = sphi 0, %s37
      %s57 = sphi 0, %s57
      %s59 = sphi 0, %s57
      %s60 = sphi 0, %s59
      %s74 = sphi 0, %s60
      %s78 = sphi 0, %s78
      %s80 = sphi 0, %s78
      %s81 = sphi 0, %s80
      %s95 = sphi 0, %s81
      %s101 = sphi 0, %s103
      %s104 = sphi 0, %s101
      %s105 = sphi 0, %s104
      %s121 = sphi 0, %s105
      %s127 = sphi 0, %s129
      %s130 = sphi 0, %s127
      %s131 = sphi 0, %s130
      %s147 = sphi 0, %s131
      %s155 = sphi 0, %s157
      %s158 = sphi 0, %s155
      %s159 = sphi 0, %s158
      %s175 = sphi 0, %s159
    $region4: #{paligemma_forward.21} parent=1 // loop_header_branch
      %14 = sbr.rel (%p12) target = $region8
    $region5: #{paligemma_forward.21} parent=1 // loop_body
      %s16 = ssub.s32 %s11, 1
      %s17 = ssub.s32 %s11, 2
      %s24 = sadd.s32 1, %s19
      %p25 = scmp.ge.s32.totalorder %s24, 3
      %s26 = scalar_select %p25, 0, %s24
      %s27 = sadd.s32 1, %s18
      %s28 = scalar_select %p25, %s27, %s18
      %p29 = scmp.ge.s32.totalorder %s28, 1
      %s30 = scalar_select %p29, 0, %s28
      %s31 = ssub.s32 %s18, %s30
      %p32 = scmp.eq.s32.totalorder %s31, 0
      %s34 = sadd.s32 %s33, 1
      %s35 = scalar_select %p32, %s33, %s34
      %p38 = pneg %p32
      %p39 = scmp.eq.s32.totalorder %s11, 2
      %p40 = por %p38, %p39
      %p41 = scmp.ne.s32.totalorder %s33, %s36
      %p42 = scmp.eq.s32.totalorder %s11, 0
      %p43 = por %p41, %p42
      %p44 = scmp.ne.s32.totalorder %s33, %s36
      %p45 = scmp.eq.s32.totalorder %s16, 2
      %p46 = por %p44, %p45
      %p47 = scmp.ne.s32.totalorder %s36, %s37
      %p48 = scmp.eq.s32.totalorder %s16, 0
      %p49 = por %p47, %p48
      %p50 = scmp.ne.s32.totalorder %s36, %s37
      %p51 = scmp.eq.s32.totalorder %s17, 2
      %p52 = por %p50, %p51
      %p54 = scmp.ne.s32.totalorder %s37, %s53
      %p55 = scmp.eq.s32.totalorder %s17, 0
      %p56 = por %p54, %p55
      %s58 = sadd.s32 %s57, 1
      %p61 = scmp.eq.s32.totalorder %s11, 2
      %p62 = scmp.ne.s32.totalorder %s57, %s59
      %p63 = scmp.eq.s32.totalorder %s11, 0
      %p64 = por %p62, %p63
      %p65 = scmp.ne.s32.totalorder %s57, %s59
      %p66 = scmp.eq.s32.totalorder %s16, 2
      %p67 = por %p65, %p66
      %p68 = scmp.ne.s32.totalorder %s59, %s60
      %p69 = scmp.eq.s32.totalorder %s16, 0
      %p70 = por %p68, %p69
      %p71 = scmp.ne.s32.totalorder %s59, %s60
      %p72 = scmp.eq.s32.totalorder %s17, 2
      %p73 = por %p71, %p72
      %p75 = scmp.ne.s32.totalorder %s60, %s74
      %p76 = scmp.eq.s32.totalorder %s17, 0
      %p77 = por %p75, %p76
      %s79 = sadd.s32 %s78, 1
      %p82 = scmp.eq.s32.totalorder %s11, 2
      %p83 = scmp.ne.s32.totalorder %s78, %s80
      %p84 = scmp.eq.s32.totalorder %s11, 0
      %p85 = por %p83, %p84
      %p86 = scmp.ne.s32.totalorder %s78, %s80
      %p87 = scmp.eq.s32.totalorder %s16, 2
      %p88 = por %p86, %p87
      %p89 = scmp.ne.s32.totalorder %s80, %s81
      %p90 = scmp.eq.s32.totalorder %s16, 0
      %p91 = por %p89, %p90
      %p92 = scmp.ne.s32.totalorder %s80, %s81
      %p93 = scmp.eq.s32.totalorder %s17, 2
      %p94 = por %p92, %p93
      %p96 = scmp.ne.s32.totalorder %s81, %s95
      %p97 = scmp.eq.s32.totalorder %s17, 0
      %p98 = por %p96, %p97
      %s99 = ssub.s32 %s19, %s26
      %p100 = scmp.eq.s32.totalorder %s99, 0
      %s102 = sadd.s32 %s101, 1
      %s103 = scalar_select %p100, %s101, %s102
      %p106 = pneg %p100
      %p107 = scmp.eq.s32.totalorder %s11, 2
      %p108 = por %p106, %p107
      %p109 = scmp.ne.s32.totalorder %s101, %s104
      %p110 = scmp.eq.s32.totalorder %s11, 0
      %p111 = por %p109, %p110
      %p112 = scmp.ne.s32.totalorder %s101, %s104
      %p113 = scmp.eq.s32.totalorder %s16, 2
      %p114 = por %p112, %p113
      %p115 = scmp.ne.s32.totalorder %s104, %s105
      %p116 = scmp.eq.s32.totalorder %s16, 0
      %p117 = por %p115, %p116
      %p118 = scmp.ne.s32.totalorder %s104, %s105
      %p119 = scmp.eq.s32.totalorder %s17, 2
      %p120 = por %p118, %p119
      %p122 = scmp.ne.s32.totalorder %s105, %s121
      %p123 = scmp.eq.s32.totalorder %s17, 0
      %p124 = por %p122, %p123
      %s125 = ssub.s32 %s19, %s26
      %p126 = scmp.eq.s32.totalorder %s125, 0
      %s128 = sadd.s32 %s127, 1
      %s129 = scalar_select %p126, %s127, %s128
      %p132 = pneg %p126
      %p133 = scmp.eq.s32.totalorder %s11, 2
      %p134 = por %p132, %p133
      %p135 = scmp.ne.s32.totalorder %s127, %s130
      %p136 = scmp.eq.s32.totalorder %s11, 0
      %p137 = por %p135, %p136
      %p138 = scmp.ne.s32.totalorder %s127, %s130
      %p139 = scmp.eq.s32.totalorder %s16, 2
      %p140 = por %p138, %p139
      %p141 = scmp.ne.s32.totalorder %s130, %s131
      %p142 = scmp.eq.s32.totalorder %s16, 0
      %p143 = por %p141, %p142
      %p144 = scmp.ne.s32.totalorder %s130, %s131
      %p145 = scmp.eq.s32.totalorder %s17, 2
      %p146 = por %p144, %p145
      %p148 = scmp.ne.s32.totalorder %s131, %s147
      %p149 = scmp.eq.s32.totalorder %s17, 0
      %p150 = por %p148, %p149
      %s151 = ssub.s32 %s18, %s30
      %s152 = ssub.s32 %s19, %s26
      %s153 = sor.u32 %s151, %s152
      %p154 = scmp.eq.s32.totalorder %s153, 0
      %s156 = sadd.s32 %s155, 1
      %s157 = scalar_select %p154, %s155, %s156
      %p160 = pneg %p154
      %p161 = scmp.eq.s32.totalorder %s11, 2
      %p162 = por %p160, %p161
      %p163 = scmp.ne.s32.totalorder %s155, %s158
      %p164 = scmp.eq.s32.totalorder %s11, 0
      %p165 = por %p163, %p164
      %p166 = scmp.ne.s32.totalorder %s155, %s158
      %p167 = scmp.eq.s32.totalorder %s16, 2
      %p168 = por %p166, %p167
      %p169 = scmp.ne.s32.totalorder %s158, %s159
      %p170 = scmp.eq.s32.totalorder %s16, 0
      %p171 = por %p169, %p170
      %p172 = scmp.ne.s32.totalorder %s158, %s159
      %p173 = scmp.eq.s32.totalorder %s17, 2
      %p174 = por %p172, %p173
      %p176 = scmp.ne.s32.totalorder %s159, %s175
      %p177 = scmp.eq.s32.totalorder %s17, 0
      %p178 = por %p176, %p177
      %p179 = scmp.le.s32.totalorder 1, %s11
      %p180 = scmp.lt.s32.totalorder %s11, 4
      %p181 = pnand %p179, %p180
      %p182 = pneg %p181
      // Predicated region
      $region9: #{paligemma_forward.21} parent=5 // pred_check
        _
      $region10: #{paligemma_forward.21} parent=5 // pred_check_branch
        %184 = sbr.rel (%p181) target = $region12
      $region11: #{paligemma_forward.21} parent=5 // pred_region
        %s185 = ssub.s32 %s11, 1
        // Predicated region
        $region13: #{paligemma_forward.21} parent=11 // pred_check
          %p186 = pneg %p49
        $region14: #{paligemma_forward.21} parent=11 // pred_check_branch
          %188 = sbr.rel (%p186) target = $region16
        $region15: #{paligemma_forward.21} parent=11 // pred_region
          %p189 = scmp.lt.s32.totalorder %s20, 0
          %s190 = scalar_select %p189, %s20, 0
          %s191 = smul.addr %s190, 4
          %s192 = scalar_lea.vmem %s0, %s191
        $region16: #{paligemma_forward.21} parent=11 // pred_fallthru
          _
        // Predicated region
        $region17: #{paligemma_forward.21} parent=11 // pred_check
          %p193 = pneg %p70
        $region18: #{paligemma_forward.21} parent=11 // pred_check_branch
          %195 = sbr.rel (%p193) target = $region20
        $region19: #{paligemma_forward.21} parent=11 // pred_region
          _
        $region20: #{paligemma_forward.21} parent=11 // pred_fallthru
          _
        // Predicated region
        $region21: #{paligemma_forward.21} parent=11 // pred_check
          %p196 = pneg %p91
        $region22: #{paligemma_forward.21} parent=11 // pred_check_branch
          %198 = sbr.rel (%p196) target = $region24
        $region23: #{paligemma_forward.21} parent=11 // pred_region
          _
        $region24: #{paligemma_forward.21} parent=11 // pred_fallthru
          _
      $region12: #{paligemma_forward.21} parent=5 // pred_fallthru
        _
      %p199 = scmp.lt.s32.totalorder %s11, 3
      // Predicated region
      $region25: #{paligemma_forward.21} parent=5 // pred_check
        %p200 = pneg %p199
      $region26: #{paligemma_forward.21} parent=5 // pred_check_branch
        %202 = sbr.rel (%p200) target = $region28
      $region27: #{paligemma_forward.21} parent=5 // pred_region
        // Predicated region
        $region29: #{paligemma_forward.21} parent=27 // pred_check
          %p203 = pneg %p111
        $region30: #{paligemma_forward.21} parent=27 // pred_check_branch
          %205 = sbr.rel (%p203) target = $region32
        $region31: #{paligemma_forward.21} parent=27 // pred_region
          %s206 = sand.u32 %s101, 1
          %s207 = sand.u32 %s101, 1
          %s208 = smul.addr %s207, 64
          %s209 = scalar_lea.vmem [#allocation2], %s208
          %s210 = smul.addr %s19, 4
          %s211 = scalar_lea.vmem %s3, %s210
          // Predicated region
          $region33: #{paligemma_forward.21} parent=31 // pred_check
            _
          $region34: #{paligemma_forward.21} parent=31 // pred_check_branch
            %213 = sbr.rel (0) target = $region36
          $region35: #{paligemma_forward.21} parent=31 // pred_region
            // Predicated region
            $region37: #{paligemma_forward.21} parent=35 // pred_check
              _
            $region38: #{paligemma_forward.21} parent=35 // pred_check_branch
              %215 = sbr.rel target = $region40
            $region39: #{paligemma_forward.21} parent=35 // pred_region
              // Predicated region
              $region52: #{paligemma_forward.21} parent=39 // pred_check
                _
              $region53: #{paligemma_forward.21} parent=39 // pred_check_branch
                %261 = sbr.rel (0) target = $region55
              $region54: #{paligemma_forward.21} parent=39 // pred_region
                loop: start=0, step=1, limit=1
                $region56: #{paligemma_forward.21} parent=54 // loop_pre_header
                  _
                $region57: #{paligemma_forward.21} parent=54 // loop_header
                  %s263 = sphi 0, %s267
                  %p264 = scmp.ge.s32.totalorder %s263, 1
                  %s268 = sphi %s211, %s211
                  %s269 = sphi %s209, %s209
                $region58: #{paligemma_forward.21} parent=54 // loop_header_branch
                  %266 = sbr.rel (%p264) target = $region62
                $region59: #{paligemma_forward.21} parent=54 // loop_body
                  _
                $region60: #{paligemma_forward.21} parent=54 // loop_footer
                  %s267 = sadd.s32 1, %s263
                $region61: #{paligemma_forward.21} parent=54 // loop_footer_branch
                  %262 = sbr.rel target = $region57
                $region62: #{paligemma_forward.21} parent=54 // loop_exit
                  _
                %s271 = ssub.s32 16, 1
                loop: start=0, step=1, limit=1
                $region63: #{paligemma_forward.21} parent=54 // loop_pre_header
                  _
                $region64: #{paligemma_forward.21} parent=54 // loop_header
                  %s273 = sphi 0, %s277
                  %p274 = scmp.ge.s32.totalorder %s273, 1
                  %s278 = sphi %s211, %s211
                  %s279 = sphi %s209, %s209
                $region65: #{paligemma_forward.21} parent=54 // loop_header_branch
                  %276 = sbr.rel (%p274) target = $region69
                $region66: #{paligemma_forward.21} parent=54 // loop_body
                  %v280 = vld [vmem:[%s278] sm:%s271]
                  %281 = vst [vmem:[%s279] sm:%s271] %v280
                  %v282 = vld [vmem:[%s278 + $0xc] sm:%s271]
                  %283 = vst [vmem:[%s279 + $0x4] sm:%s271] %v282
                  %v284 = vld [vmem:[%s278 + $0x18] sm:%s271]
                  %285 = vst [vmem:[%s279 + $0x8] sm:%s271] %v284
                  %v286 = vld [vmem:[%s278 + $0x24] sm:%s271]
                  %287 = vst [vmem:[%s279 + $0xc] sm:%s271] %v286
                  %v288 = vld [vmem:[%s278 + $0x30] sm:%s271]
                  %289 = vst [vmem:[%s279 + $0x10] sm:%s271] %v288
                  %v290 = vld [vmem:[%s278 + $0x3c] sm:%s271]
                  %291 = vst [vmem:[%s279 + $0x14] sm:%s271] %v290
                  %v292 = vld [vmem:[%s278 + $0x48] sm:%s271]
                  %293 = vst [vmem:[%s279 + $0x18] sm:%s271] %v292
                  %v294 = vld [vmem:[%s278 + $0x54] sm:%s271]
                  %295 = vst [vmem:[%s279 + $0x1c] sm:%s271] %v294
                  %v296 = vld [vmem:[%s278 + $0x60] sm:%s271]
                  %297 = vst [vmem:[%s279 + $0x20] sm:%s271] %v296
                  %v298 = vld [vmem:[%s278 + $0x6c] sm:%s271]
                  %299 = vst [vmem:[%s279 + $0x24] sm:%s271] %v298
                  %v300 = vld [vmem:[%s278 + $0x78] sm:%s271]
                  %301 = vst [vmem:[%s279 + $0x28] sm:%s271] %v300
                  %v302 = vld [vmem:[%s278 + $0x84] sm:%s271]
                  %303 = vst [vmem:[%s279 + $0x2c] sm:%s271] %v302
                  %v304 = vld [vmem:[%s278 + $0x90] sm:%s271]
                  %305 = vst [vmem:[%s279 + $0x30] sm:%s271] %v304
                  %v306 = vld [vmem:[%s278 + $0x9c] sm:%s271]
                  %307 = vst [vmem:[%s279 + $0x34] sm:%s271] %v306
                  %v308 = vld [vmem:[%s278 + $0xa8] sm:%s271]
                  %309 = vst [vmem:[%s279 + $0x38] sm:%s271] %v308
                  %v310 = vld [vmem:[%s278 + $0xb4] sm:%s271]
                  %311 = vst [vmem:[%s279 + $0x3c] sm:%s271] %v310
                $region67: #{paligemma_forward.21} parent=54 // loop_footer
                  %s277 = sadd.s32 1, %s273
                $region68: #{paligemma_forward.21} parent=54 // loop_footer_branch
                  %272 = sbr.rel target = $region64
                $region69: #{paligemma_forward.21} parent=54 // loop_exit
                  _
              $region55: #{paligemma_forward.21} parent=39 // pred_fallthru
                _
            $region40: #{paligemma_forward.21} parent=35 // pred_fallthru
              _
            // Predicated region
            $region41: #{paligemma_forward.21} parent=35 // pred_check
              _
            $region42: #{paligemma_forward.21} parent=35 // pred_check_branch
              %217 = sbr.rel (0) target = $region44
            $region43: #{paligemma_forward.21} parent=35 // pred_region
              %s219 = ssub.s32 16, 1
              loop: start=0, step=1, limit=1
              $region45: #{paligemma_forward.21} parent=43 // loop_pre_header
                _
              $region46: #{paligemma_forward.21} parent=43 // loop_header
                %s221 = sphi 0, %s225
                %p222 = scmp.ge.s32.totalorder %s221, 1
                %s226 = sphi %s211, %s211
                %s227 = sphi %s209, %s209
              $region47: #{paligemma_forward.21} parent=43 // loop_header_branch
                %224 = sbr.rel (%p222) target = $region51
              $region48: #{paligemma_forward.21} parent=43 // loop_body
                %v228 = vld [vmem:[%s226] sm:%s219]
                %229 = vst [vmem:[%s227] sm:%s219] %v228
                %v230 = vld [vmem:[%s226 + $0xc] sm:%s219]
                %231 = vst [vmem:[%s227 + $0x4] sm:%s219] %v230
                %v232 = vld [vmem:[%s226 + $0x18] sm:%s219]
                %233 = vst [vmem:[%s227 + $0x8] sm:%s219] %v232
                %v234 = vld [vmem:[%s226 + $0x24] sm:%s219]
                %235 = vst [vmem:[%s227 + $0xc] sm:%s219] %v234
                %v236 = vld [vmem:[%s226 + $0x30] sm:%s219]
                %237 = vst [vmem:[%s227 + $0x10] sm:%s219] %v236
                %v238 = vld [vmem:[%s226 + $0x3c] sm:%s219]
                %239 = vst [vmem:[%s227 + $0x14] sm:%s219] %v238
                %v240 = vld [vmem:[%s226 + $0x48] sm:%s219]
                %241 = vst [vmem:[%s227 + $0x18] sm:%s219] %v240
                %v242 = vld [vmem:[%s226 + $0x54] sm:%s219]
                %243 = vst [vmem:[%s227 + $0x1c] sm:%s219] %v242
                %v244 = vld [vmem:[%s226 + $0x60] sm:%s219]
                %245 = vst [vmem:[%s227 + $0x20] sm:%s219] %v244
                %v246 = vld [vmem:[%s226 + $0x6c] sm:%s219]
                %247 = vst [vmem:[%s227 + $0x24] sm:%s219] %v246
                %v248 = vld [vmem:[%s226 + $0x78] sm:%s219]
                %249 = vst [vmem:[%s227 + $0x28] sm:%s219] %v248
                %v250 = vld [vmem:[%s226 + $0x84] sm:%s219]
                %251 = vst [vmem:[%s227 + $0x2c] sm:%s219] %v250
                %v252 = vld [vmem:[%s226 + $0x90] sm:%s219]
                %253 = vst [vmem:[%s227 + $0x30] sm:%s219] %v252
                %v254 = vld [vmem:[%s226 + $0x9c] sm:%s219]
                %255 = vst [vmem:[%s227 + $0x34] sm:%s219] %v254
                %v256 = vld [vmem:[%s226 + $0xa8] sm:%s219]
                %257 = vst [vmem:[%s227 + $0x38] sm:%s219] %v256
                %v258 = vld [vmem:[%s226 + $0xb4] sm:%s219]
                %259 = vst [vmem:[%s227 + $0x3c] sm:%s219] %v258
              $region49: #{paligemma_forward.21} parent=43 // loop_footer
                %s225 = sadd.s32 1, %s221
              $region50: #{paligemma_forward.21} parent=43 // loop_footer_branch
                %220 = sbr.rel target = $region46
              $region51: #{paligemma_forward.21} parent=43 // loop_exit
                _
            $region44: #{paligemma_forward.21} parent=35 // pred_fallthru
              _
          $region36: #{paligemma_forward.21} parent=31 // pred_fallthru
            _
          %312 = vnop
        $region32: #{paligemma_forward.21} parent=27 // pred_fallthru
          _
        // Predicated region
        $region70: #{paligemma_forward.21} parent=27 // pred_check
          %p313 = pneg %p137
        $region71: #{paligemma_forward.21} parent=27 // pred_check_branch
          %315 = sbr.rel (%p313) target = $region73
        $region72: #{paligemma_forward.21} parent=27 // pred_region
          %p316 = scmp.lt.s32.totalorder %s19, 2
          %s317 = scalar_select %p316, %s19, 2
          %s318 = scalar_lea.vmem %s4, %s317
        $region73: #{paligemma_forward.21} parent=27 // pred_fallthru
          _
      $region28: #{paligemma_forward.21} parent=5 // pred_fallthru
        _
      %p319 = scmp.le.s32.totalorder 1, %s11
      %p320 = scmp.lt.s32.totalorder %s11, 4
      %p321 = pnand %p319, %p320
      %p322 = pneg %p321
      // Predicated region
      $region74: #{paligemma_forward.21} parent=5 // pred_check
        _
      $region75: #{paligemma_forward.21} parent=5 // pred_check_branch
        %324 = sbr.rel (%p321) target = $region77
      $region76: #{paligemma_forward.21} parent=5 // pred_region
        %s325 = ssub.s32 %s11, 1
        %s326 = sand.u32 %s104, 1
        %s327 = sand.u32 %s104, 1
        %s328 = smul.addr %s327, 64
        %s329 = scalar_lea.vmem [#allocation2], %s328
        // Predicated region
        $region78: #{paligemma_forward.21} parent=76 // pred_check
          %p330 = pneg %p117
        $region79: #{paligemma_forward.21} parent=76 // pred_check_branch
          %332 = sbr.rel (%p330) target = $region81
        $region80: #{paligemma_forward.21} parent=76 // pred_region
          _
        $region81: #{paligemma_forward.21} parent=76 // pred_fallthru
          _
        %p333 = scmp.lt.s32.totalorder %s20, 0
        %s334 = scalar_select %p333, %s20, 0
        %s335 = smul.addr %s334, 4
        %s336 = scalar_lea.vmem %s0, %s335
        %p337 = pneg %p49
        %p338 = pneg %p46
        %p339 = pneg %p70
        %p340 = pneg %p67
        %p341 = pneg %p91
        %p342 = pneg %p88
        %s343 = sand.u32 %s104, 1
        %s344 = sand.u32 %s104, 1
        %s345 = smul.addr %s344, 64
        %s346 = scalar_lea.vmem [#allocation2], %s345
        %p347 = pneg %p117
        %p348 = pneg %p114
        %p349 = scmp.lt.s32.totalorder %s21, 2
        %s350 = scalar_select %p349, %s21, 2
        %s351 = scalar_lea.vmem %s4, %s350
        %p352 = pneg %p143
        %p353 = pneg %p140
        %p354 = pneg %p171
        %p355 = pneg %p168
        %p356 = scmp.lt.s32.totalorder %s20, 0
        %s357 = scalar_select %p356, %s20, 0
        %p358 = scmp.lt.s32.totalorder %s21, 2
        %s359 = scalar_select %p358, %s21, 2
        %s360 = smul.addr %s357, 3
        %s361 = sadd.s32 %s359, %s360
        %s362 = smul.addr %s361, 4
        %s363 = scalar_lea.vmem %s5, %s362
        %p364 = scmp.lt.s32.totalorder %s20, 0
        %s365 = scalar_select %p364, %s20, 0
        %s366 = smul.addr %s365, 4
        %s367 = scalar_lea.vmem %s0, %s366
        %p368 = scmp.lt.s32.totalorder %s21, 2
        %s369 = scalar_select %p368, %s21, 2
        %s370 = scalar_lea.vmem %s4, %s369
        %p371 = scmp.lt.s32.totalorder %s20, 0
        %s372 = scalar_select %p371, %s20, 0
        %p373 = scmp.lt.s32.totalorder %s21, 2
        %s374 = scalar_select %p373, %s21, 2
        %s375 = smul.addr %s372, 3
        %s376 = sadd.s32 %s374, %s375
        %s377 = smul.addr %s376, 4
        %s378 = scalar_lea.vmem %s5, %s377
        %v380 = vld [vmem:[%s367] sm:$0xf]
        %v381 = vunpack.c.l.bf16 %v380
        %382 = vadd.xlane.f32.xlu0 %v381
        %v383 = vpop.xlane.xlu0 %382
        %v384 = vrcp.pop 128.0
        %v385 = vmul.f32 %v383, %v384
        %v386 = vsub.f32 %v381, %v385
        %v387 = vmul.f32 %v386, %v386
        %388 = vadd.xlane.f32.xlu0 %v387
        %v389 = vpop.xlane.xlu0 %388
        %v390 = vmul.f32 %v389, %v384
        %v391 = vadd.f32 %v390, 1e-06
        %v392 = vrsqrt.pop %v391
        %v393 = vmul.f32 %v386, %v392
        %v394 = vld [vmem:[%s1] sm:$0x1]
        %v396 = vlaneseq
        %v397 = vshrl.u32 %v396, 7
        %v398 = vsub.s32 0, %v397
        %v399 = vrot.slane %v394, %v398
        %v401 = vmul.f32 %v393, %v399
        %v402 = vld [vmem:[%s2] sm:$0x1]
        %v404 = vlaneseq
        %v405 = vshrl.u32 %v404, 7
        %v406 = vsub.s32 0, %v405
        %v407 = vrot.slane %v402, %v406
        %v409 = vadd.f32 %v401, %v407
        %v410 = vpack.c.bf16 %v409, %v409
        %v411 = vld [vmem:[%s329] sm:$0xf]
        %v412 = vld [vmem:[%s329 + $0x4] sm:$0xf]
        %v413 = vld [vmem:[%s329 + $0x8] sm:$0xf]
        %v414 = vld [vmem:[%s329 + $0xc] sm:$0xf]
        %v415 = vld [vmem:[%s329 + $0x10] sm:$0xf]
        %v416 = vld [vmem:[%s329 + $0x14] sm:$0xf]
        %v417 = vld [vmem:[%s329 + $0x18] sm:$0xf]
        %v418 = vld [vmem:[%s329 + $0x1c] sm:$0xf]
        %v419 = vld [vmem:[%s329 + $0x20] sm:$0xf]
        %v420 = vld [vmem:[%s329 + $0x24] sm:$0xf]
        %v421 = vld [vmem:[%s329 + $0x28] sm:$0xf]
        %v422 = vld [vmem:[%s329 + $0x2c] sm:$0xf]
        %v423 = vld [vmem:[%s329 + $0x30] sm:$0xf]
        %v424 = vld [vmem:[%s329 + $0x34] sm:$0xf]
        %v425 = vld [vmem:[%s329 + $0x38] sm:$0xf]
        %v426 = vld [vmem:[%s329 + $0x3c] sm:$0xf]
        %v427 = vld [vmem:[%s370] sm:$0x1]
        %v429 = vlaneseq
        %v430 = vshrl.u32 %v429, 7
        %v431 = vsub.s32 0, %v430
        %v432 = vrot.slane %v427, %v431
        %v450 = vunpack.c.l.b16 %v411
        %v451 = vunpack.c.l.b16 %v412
        %v452 = vunpack.c.l.b16 %v413
        %v453 = vunpack.c.l.b16 %v414
        %v454 = vunpack.c.l.b16 %v415
        %v455 = vunpack.c.l.b16 %v416
        %v456 = vunpack.c.l.b16 %v417
        %v457 = vunpack.c.l.b16 %v418
        %v458 = vunpack.c.l.b16 %v419
        %v459 = vunpack.c.l.b16 %v420
        %v460 = vunpack.c.l.b16 %v421
        %v461 = vunpack.c.l.b16 %v422
        %v462 = vunpack.c.l.b16 %v423
        %v463 = vunpack.c.l.b16 %v424
        %v464 = vunpack.c.l.b16 %v425
        %v465 = vunpack.c.l.b16 %v426
        %v466 = vpack.c.b16 %v451, %v450
        %v467 = vpack.c.b16 %v453, %v452
        %v468 = vpack.c.b16 %v455, %v454
        %v469 = vpack.c.b16 %v457, %v456
        %v470 = vpack.c.b16 %v459, %v458
        %v471 = vpack.c.b16 %v461, %v460
        %v472 = vpack.c.b16 %v463, %v462
        %v473 = vpack.c.b16 %v465, %v464
        %482 = vmatprep.subr.bf16.mxu0 0
        %483 = vmatpush1.bf16.msra.mxu0 %v473
        %484 = vmatprep.subr.bf16.mxu0 0
        %485 = vmatpush1.bf16.msra.mxu0 %v472
        %486 = vmatprep.subr.bf16.mxu0 0
        %487 = vmatpush1.bf16.msra.mxu0 %v471
        %488 = vmatprep.subr.bf16.mxu0 0
        %489 = vmatpush1.bf16.msra.mxu0 %v470
        %490 = vmatprep.subr.bf16.mxu0 0
        %491 = vmatpush1.bf16.msra.mxu0 %v469
        %492 = vmatprep.subr.bf16.mxu0 0
        %493 = vmatpush1.bf16.msra.mxu0 %v468
        %494 = vmatprep.subr.bf16.mxu0 0
        %495 = vmatpush1.bf16.msra.mxu0 %v467
        %496 = vmatprep.subr.bf16.mxu0 0
        %497 = vmatpush1.bf16.msra.mxu0 %v466
        %498 = vmatprep.subr.bf16.mxu0 0
        %499 = vmatpush2.bf16.msra.mxu0 0
        %500 = vmatprep.subr.bf16.mxu0 0
        %501 = vmatpush2.bf16.msra.mxu0 0
        %502 = vmatprep.subr.bf16.mxu0 0
        %503 = vmatpush2.bf16.msra.mxu0 0
        %504 = vmatprep.subr.bf16.mxu0 0
        %505 = vmatpush2.bf16.msra.mxu0 0
        %506 = vmatprep.subr.bf16.mxu0 0
        %507 = vmatpush2.bf16.msra.mxu0 0
        %508 = vmatprep.subr.bf16.mxu0 0
        %509 = vmatpush2.bf16.msra.mxu0 0
        %510 = vmatprep.subr.bf16.mxu0 0
        %511 = vmatpush2.bf16.msra.mxu0 0
        %512 = vmatprep.subr.bf16.mxu0 0
        %513 = vmatpush2.bf16.msra.mxu0 0
        %514 = vmatprep.mubr.bf16.mxu0 0
        %515 = vmatmul.mubr.bf16.gmra.mxu0 %v410
        %v516 = vpop.f32.mrf.mxu0
        %v517 = vadd.f32 %v432, %v516
        %v518 = vpop.f32.mrf.mxu0
        %v519 = vpop.f32.mrf.mxu0
        %v520 = vpop.f32.mrf.mxu0
        %521 = vdwg.mxu0
        %v522 = vpack.c.bf16 %v517, %v517
        %523 = vst [vmem:[%s378] sm:$0xf] %v522
        %p524 = scmp.lt.s32.totalorder %s20, 0
        %s525 = scalar_select %p524, %s20, 0
        %p526 = scmp.lt.s32.totalorder %s21, 2
        %s527 = scalar_select %p526, %s21, 2
        %s528 = smul.addr %s525, 3
        %s529 = sadd.s32 %s527, %s528
        %s530 = smul.addr %s529, 4
        %s531 = scalar_lea.vmem %s5, %s530
        // Predicated region
        $region82: #{paligemma_forward.21} parent=76 // pred_check
          %p532 = pneg %p168
        $region83: #{paligemma_forward.21} parent=76 // pred_check_branch
          %534 = sbr.rel (%p532) target = $region85
        $region84: #{paligemma_forward.21} parent=76 // pred_region
          _
        $region85: #{paligemma_forward.21} parent=76 // pred_fallthru
          _
      $region77: #{paligemma_forward.21} parent=5 // pred_fallthru
        _
      %p535 = scmp.le.s32.totalorder 2, %s11
      // Predicated region
      $region86: #{paligemma_forward.21} parent=5 // pred_check
        %p536 = pneg %p535
      $region87: #{paligemma_forward.21} parent=5 // pred_check_branch
        %538 = sbr.rel (%p536) target = $region89
      $region88: #{paligemma_forward.21} parent=5 // pred_region
        %s539 = ssub.s32 %s11, 2
        // Predicated region
        $region90: #{paligemma_forward.21} parent=88 // pred_check
          %p540 = pneg %p174
        $region91: #{paligemma_forward.21} parent=88 // pred_check_branch
          %542 = sbr.rel (%p540) target = $region93
        $region92: #{paligemma_forward.21} parent=88 // pred_region
          %p543 = scmp.lt.s32.totalorder %s22, 0
          %s544 = scalar_select %p543, %s22, 0
          %p545 = scmp.lt.s32.totalorder %s23, 2
          %s546 = scalar_select %p545, %s23, 2
          %s547 = smul.addr %s544, 3
          %s548 = sadd.s32 %s546, %s547
          %s549 = smul.addr %s548, 4
          %s550 = scalar_lea.vmem %s5, %s549
        $region93: #{paligemma_forward.21} parent=88 // pred_fallthru
          _
      $region89: #{paligemma_forward.21} parent=5 // pred_fallthru
        _
    $region6: #{paligemma_forward.21} parent=1 // loop_footer
      %s15 = sadd.s32 1, %s11
    $region7: #{paligemma_forward.21} parent=1 // loop_footer_branch
      %10 = sbr.rel target = $region3
    $region8: #{paligemma_forward.21} parent=1 // loop_exit
      _

// kernel: paligemma_forward.22
$region0: #{paligemma_forward.22}
  #allocation0 [shape = 'u32[]', space=smem, size = 0x4, offset = 0x4, fixed_abs, tag = 'smem constant byte address 0x4 - core index']
  #allocation1 [shape = 'u32[144,128]{1,0:T(1,128)}', space=vmem, size = 0x12000, scoped, tag = 'internal scratch']
  #allocation2 [shape = 'f32[4,4]{1,0:T(4,128)}', space=vmem, size = 0x800, scoped, tag = 'scratch operand']
  #allocation3 [shape = 'f32[4,4]{1,0:T(4,128)}', space=vmem, size = 0x800, scoped, tag = 'scratch operand']
  #allocation4 [shape = 'f32[4,128]{1,0:T(4,128)}', space=vmem, size = 0x800, scoped, tag = 'scratch operand']
  %s0 = inlined_call_operand.vmem [shape: bf16[2,4,128], index: 0, kind: input, shape index: {}]
  %s1 = inlined_call_operand.vmem [shape: bf16[2,4,128], index: 1, kind: input, shape index: {}]
  %s2 = inlined_call_operand.vmem [shape: bf16[2,4,128], index: 2, kind: input, shape index: {}]
  %s3 = inlined_call_operand.vmem [shape: bf16[2,4,128], index: 3, kind: output, shape index: {}]
  %s4 = sld [smem:[#allocation0]]
  $region53: #{paligemma_forward.22} parent=0
    _
  %s6 = ssub.s32 1, %s4
  %s7 = scalar_select 0, %s6, %s4
  loop: start=0, step=1, limit=4
  $region2: #{paligemma_forward.22} parent=0 // loop_pre_header
    _
  $region3: #{paligemma_forward.22} parent=0 // loop_header
    %s9 = sphi 0, %s13
    %p10 = scmp.ge.s32.totalorder %s9, 4
    %s16 = sphi 0, %s35
    %s17 = sphi 0, %s31
    %s18 = sphi 0, %s27
    %s19 = sphi 0, %s16
    %s20 = sphi 0, %s17
    %s21 = sphi 0, %s18
    %s22 = sphi 0, %s19
    %s23 = sphi 0, %s20
    %s24 = sphi 0, %s21
    %s40 = sphi 0, %s42
    %s43 = sphi 0, %s40
    %s44 = sphi 0, %s43
    %s60 = sphi 0, %s44
    %s68 = sphi 0, %s70
    %s71 = sphi 0, %s68
    %s72 = sphi 0, %s71
    %s88 = sphi 0, %s72
    %s96 = sphi 0, %s98
    %s99 = sphi 0, %s96
    %s100 = sphi 0, %s99
    %s116 = sphi 0, %s100
    %s124 = sphi 0, %s126
    %s127 = sphi 0, %s124
    %s128 = sphi 0, %s127
    %s144 = sphi 0, %s128
  $region4: #{paligemma_forward.22} parent=0 // loop_header_branch
    %12 = sbr.rel (%p10) target = $region8
  $region5: #{paligemma_forward.22} parent=0 // loop_body
    %s14 = ssub.s32 %s9, 1
    %s15 = ssub.s32 %s9, 2
    %s25 = sadd.s32 1, %s18
    %p26 = scmp.ge.s32.totalorder %s25, 1
    %s27 = scalar_select %p26, 0, %s25
    %s28 = sadd.s32 1, %s17
    %s29 = scalar_select %p26, %s28, %s17
    %p30 = scmp.ge.s32.totalorder %s29, 1
    %s31 = scalar_select %p30, 0, %s29
    %s32 = sadd.s32 1, %s16
    %s33 = scalar_select %p30, %s32, %s16
    %p34 = scmp.ge.s32.totalorder %s33, 2
    %s35 = scalar_select %p34, 0, %s33
    %s36 = ssub.s32 %s16, %s35
    %s37 = ssub.s32 %s17, %s31
    %s38 = sor.u32 %s36, %s37
    %p39 = scmp.eq.s32.totalorder %s38, 0
    %s41 = sadd.s32 %s40, 1
    %s42 = scalar_select %p39, %s40, %s41
    %p45 = pneg %p39
    %p46 = scmp.eq.s32.totalorder %s9, 1
    %p47 = por %p45, %p46
    %p48 = scmp.ne.s32.totalorder %s40, %s43
    %p49 = scmp.eq.s32.totalorder %s9, 0
    %p50 = por %p48, %p49
    %p51 = scmp.ne.s32.totalorder %s40, %s43
    %p52 = scmp.eq.s32.totalorder %s14, 1
    %p53 = por %p51, %p52
    %p54 = scmp.ne.s32.totalorder %s43, %s44
    %p55 = scmp.eq.s32.totalorder %s14, 0
    %p56 = por %p54, %p55
    %p57 = scmp.ne.s32.totalorder %s43, %s44
    %p58 = scmp.eq.s32.totalorder %s15, 1
    %p59 = por %p57, %p58
    %p61 = scmp.ne.s32.totalorder %s44, %s60
    %p62 = scmp.eq.s32.totalorder %s15, 0
    %p63 = por %p61, %p62
    %s64 = ssub.s32 %s16, %s35
    %s65 = ssub.s32 %s18, %s27
    %s66 = sor.u32 %s64, %s65
    %p67 = scmp.eq.s32.totalorder %s66, 0
    %s69 = sadd.s32 %s68, 1
    %s70 = scalar_select %p67, %s68, %s69
    %p73 = pneg %p67
    %p74 = scmp.eq.s32.totalorder %s9, 1
    %p75 = por %p73, %p74
    %p76 = scmp.ne.s32.totalorder %s68, %s71
    %p77 = scmp.eq.s32.totalorder %s9, 0
    %p78 = por %p76, %p77
    %p79 = scmp.ne.s32.totalorder %s68, %s71
    %p80 = scmp.eq.s32.totalorder %s14, 1
    %p81 = por %p79, %p80
    %p82 = scmp.ne.s32.totalorder %s71, %s72
    %p83 = scmp.eq.s32.totalorder %s14, 0
    %p84 = por %p82, %p83
    %p85 = scmp.ne.s32.totalorder %s71, %s72
    %p86 = scmp.eq.s32.totalorder %s15, 1
    %p87 = por %p85, %p86
    %p89 = scmp.ne.s32.totalorder %s72, %s88
    %p90 = scmp.eq.s32.totalorder %s15, 0
    %p91 = por %p89, %p90
    %s92 = ssub.s32 %s16, %s35
    %s93 = ssub.s32 %s18, %s27
    %s94 = sor.u32 %s92, %s93
    %p95 = scmp.eq.s32.totalorder %s94, 0
    %s97 = sadd.s32 %s96, 1
    %s98 = scalar_select %p95, %s96, %s97
    %p101 = pneg %p95
    %p102 = scmp.eq.s32.totalorder %s9, 1
    %p103 = por %p101, %p102
    %p104 = scmp.ne.s32.totalorder %s96, %s99
    %p105 = scmp.eq.s32.totalorder %s9, 0
    %p106 = por %p104, %p105
    %p107 = scmp.ne.s32.totalorder %s96, %s99
    %p108 = scmp.eq.s32.totalorder %s14, 1
    %p109 = por %p107, %p108
    %p110 = scmp.ne.s32.totalorder %s99, %s100
    %p111 = scmp.eq.s32.totalorder %s14, 0
    %p112 = por %p110, %p111
    %p113 = scmp.ne.s32.totalorder %s99, %s100
    %p114 = scmp.eq.s32.totalorder %s15, 1
    %p115 = por %p113, %p114
    %p117 = scmp.ne.s32.totalorder %s100, %s116
    %p118 = scmp.eq.s32.totalorder %s15, 0
    %p119 = por %p117, %p118
    %s120 = ssub.s32 %s16, %s35
    %s121 = ssub.s32 %s17, %s31
    %s122 = sor.u32 %s120, %s121
    %p123 = scmp.eq.s32.totalorder %s122, 0
    %s125 = sadd.s32 %s124, 1
    %s126 = scalar_select %p123, %s124, %s125
    %p129 = pneg %p123
    %p130 = scmp.eq.s32.totalorder %s9, 1
    %p131 = por %p129, %p130
    %p132 = scmp.ne.s32.totalorder %s124, %s127
    %p133 = scmp.eq.s32.totalorder %s9, 0
    %p134 = por %p132, %p133
    %p135 = scmp.ne.s32.totalorder %s124, %s127
    %p136 = scmp.eq.s32.totalorder %s14, 1
    %p137 = por %p135, %p136
    %p138 = scmp.ne.s32.totalorder %s127, %s128
    %p139 = scmp.eq.s32.totalorder %s14, 0
    %p140 = por %p138, %p139
    %p141 = scmp.ne.s32.totalorder %s127, %s128
    %p142 = scmp.eq.s32.totalorder %s15, 1
    %p143 = por %p141, %p142
    %p145 = scmp.ne.s32.totalorder %s128, %s144
    %p146 = scmp.eq.s32.totalorder %s15, 0
    %p147 = por %p145, %p146
    %p148 = scmp.le.s32.totalorder 1, %s9
    %p149 = scmp.lt.s32.totalorder %s9, 3
    %p150 = pnand %p148, %p149
    %p151 = pneg %p150
    // Predicated region
    $region9: #{paligemma_forward.22} parent=5 // pred_check
      _
    $region10: #{paligemma_forward.22} parent=5 // pred_check_branch
      %153 = sbr.rel (%p150) target = $region12
    $region11: #{paligemma_forward.22} parent=5 // pred_region
      %s154 = ssub.s32 %s9, 1
    $region12: #{paligemma_forward.22} parent=5 // pred_fallthru
      _
    %p155 = scmp.lt.s32.totalorder %s9, 2
    // Predicated region
    $region13: #{paligemma_forward.22} parent=5 // pred_check
      %p156 = pneg %p155
    $region14: #{paligemma_forward.22} parent=5 // pred_check_branch
      %158 = sbr.rel (%p156) target = $region16
    $region15: #{paligemma_forward.22} parent=5 // pred_region
      // Predicated region
      $region17: #{paligemma_forward.22} parent=15 // pred_check
        %p159 = pneg %p50
      $region18: #{paligemma_forward.22} parent=15 // pred_check_branch
        %161 = sbr.rel (%p159) target = $region20
      $region19: #{paligemma_forward.22} parent=15 // pred_region
        %p162 = scmp.lt.s32.totalorder %s16, 1
        %s163 = scalar_select %p162, %s16, 1
        %p164 = scmp.lt.s32.totalorder %s17, 0
        %s165 = scalar_select %p164, %s17, 0
        %s166 = sadd.s32 %s165, %s163
        %s167 = smul.addr %s166, 2
        %s168 = scalar_lea.vmem %s0, %s167
      $region20: #{paligemma_forward.22} parent=15 // pred_fallthru
        _
      // Predicated region
      $region21: #{paligemma_forward.22} parent=15 // pred_check
        %p169 = pneg %p78
      $region22: #{paligemma_forward.22} parent=15 // pred_check_branch
        %171 = sbr.rel (%p169) target = $region24
      $region23: #{paligemma_forward.22} parent=15 // pred_region
        %p172 = scmp.lt.s32.totalorder %s16, 1
        %s173 = scalar_select %p172, %s16, 1
        %p174 = scmp.lt.s32.totalorder %s18, 0
        %s175 = scalar_select %p174, %s18, 0
        %s176 = sadd.s32 %s175, %s173
        %s177 = smul.addr %s176, 2
        %s178 = scalar_lea.vmem %s1, %s177
      $region24: #{paligemma_forward.22} parent=15 // pred_fallthru
        _
      // Predicated region
      $region25: #{paligemma_forward.22} parent=15 // pred_check
        %p179 = pneg %p106
      $region26: #{paligemma_forward.22} parent=15 // pred_check_branch
        %181 = sbr.rel (%p179) target = $region28
      $region27: #{paligemma_forward.22} parent=15 // pred_region
        %p182 = scmp.lt.s32.totalorder %s16, 1
        %s183 = scalar_select %p182, %s16, 1
        %p184 = scmp.lt.s32.totalorder %s18, 0
        %s185 = scalar_select %p184, %s18, 0
        %s186 = sadd.s32 %s185, %s183
        %s187 = smul.addr %s186, 2
        %s188 = scalar_lea.vmem %s2, %s187
      $region28: #{paligemma_forward.22} parent=15 // pred_fallthru
        _
    $region16: #{paligemma_forward.22} parent=5 // pred_fallthru
      _
    %p189 = scmp.le.s32.totalorder 1, %s9
    %p190 = scmp.lt.s32.totalorder %s9, 3
    %p191 = pnand %p189, %p190
    %p192 = pneg %p191
    // Predicated region
    $region29: #{paligemma_forward.22} parent=5 // pred_check
      _
    $region30: #{paligemma_forward.22} parent=5 // pred_check_branch
      %194 = sbr.rel (%p191) target = $region32
    $region31: #{paligemma_forward.22} parent=5 // pred_region
      %s195 = ssub.s32 %s9, 1
      %p196 = scmp.lt.s32.totalorder %s19, 1
      %s197 = scalar_select %p196, %s19, 1
      %p198 = scmp.lt.s32.totalorder %s20, 0
      %s199 = scalar_select %p198, %s20, 0
      %s200 = sadd.s32 %s199, %s197
      %s201 = smul.addr %s200, 2
      %s202 = scalar_lea.vmem %s0, %s201
      %p203 = pneg %p56
      %p204 = pneg %p53
      %p205 = scmp.lt.s32.totalorder %s19, 1
      %s206 = scalar_select %p205, %s19, 1
      %p207 = scmp.lt.s32.totalorder %s21, 0
      %s208 = scalar_select %p207, %s21, 0
      %s209 = sadd.s32 %s208, %s206
      %s210 = smul.addr %s209, 2
      %s211 = scalar_lea.vmem %s1, %s210
      %p212 = pneg %p84
      %p213 = pneg %p81
      %p214 = scmp.lt.s32.totalorder %s19, 1
      %s215 = scalar_select %p214, %s19, 1
      %p216 = scmp.lt.s32.totalorder %s21, 0
      %s217 = scalar_select %p216, %s21, 0
      %s218 = sadd.s32 %s217, %s215
      %s219 = smul.addr %s218, 2
      %s220 = scalar_lea.vmem %s2, %s219
      %p221 = pneg %p112
      %p222 = pneg %p109
      %p223 = pneg %p140
      %p224 = pneg %p137
      %p225 = scmp.lt.s32.totalorder %s19, 1
      %s226 = scalar_select %p225, %s19, 1
      %p227 = scmp.lt.s32.totalorder %s20, 0
      %s228 = scalar_select %p227, %s20, 0
      %s229 = sadd.s32 %s228, %s226
      %s230 = smul.addr %s229, 2
      %s231 = scalar_lea.vmem %s3, %s230
      %p232 = scmp.lt.s32.totalorder %s19, 1
      %s233 = scalar_select %p232, %s19, 1
      %p234 = scmp.lt.s32.totalorder %s20, 0
      %s235 = scalar_select %p234, %s20, 0
      %s236 = sadd.s32 %s235, %s233
      %s237 = smul.addr %s236, 2
      %s238 = scalar_lea.vmem %s0, %s237
      %p239 = scmp.lt.s32.totalorder %s19, 1
      %s240 = scalar_select %p239, %s19, 1
      %p241 = scmp.lt.s32.totalorder %s21, 0
      %s242 = scalar_select %p241, %s21, 0
      %s243 = sadd.s32 %s242, %s240
      %s244 = smul.addr %s243, 2
      %s245 = scalar_lea.vmem %s1, %s244
      %p246 = scmp.lt.s32.totalorder %s19, 1
      %s247 = scalar_select %p246, %s19, 1
      %p248 = scmp.lt.s32.totalorder %s21, 0
      %s249 = scalar_select %p248, %s21, 0
      %s250 = sadd.s32 %s249, %s247
      %s251 = smul.addr %s250, 2
      %s252 = scalar_lea.vmem %s2, %s251
      %p253 = scmp.lt.s32.totalorder %s19, 1
      %s254 = scalar_select %p253, %s19, 1
      %p255 = scmp.lt.s32.totalorder %s20, 0
      %s256 = scalar_select %p255, %s20, 0
      %s257 = sadd.s32 %s256, %s254
      %s258 = smul.addr %s257, 2
      %s259 = scalar_lea.vmem %s3, %s258
      %p261 = scmp.eq.s32.totalorder %s21, 0
      // Predicated region
      $region33: #{paligemma_forward.22} parent=31 // pred_check
        %p262 = pneg %p261
      $region34: #{paligemma_forward.22} parent=31 // pred_check_branch
        %264 = sbr.rel (%p262) target = $region36
      $region35: #{paligemma_forward.22} parent=31 // pred_region
        %vm265 = vcmask 27648
        %266 = vst.msk [vmem:[#allocation2] sm:$0xf] %vm265, -inf
        %267 = vst.msk [vmem:[#allocation3] sm:$0xf] %vm265, 0.0
        %268 = vst [vmem:[#allocation4] sm:$0xf] 0.0
      $region36: #{paligemma_forward.22} parent=31 // pred_fallthru
        _
      %v269 = vld [vmem:[%s238] sm:$0x3]
      %v270 = vunpack.c.l.bf16 %v269
      %v271 = vmul.f32 %v270, 0.17677669
      %v272 = vpack.c.bf16 %v271, %v271
      %v273 = vld [vmem:[%s245] sm:$0x3]
      %v274 = vld [vmem:[%s252] sm:$0x3]
      %vm275 = vcmask 261120
      %v277 = vsel %vm275, %v272, 0
      %v280 = vsel %vm275, %v273, 0
      %282 = vmatprep.subr.bf16.mxu0 0
      %283 = vmatpush1.bf16.xpose.msra.mxu0 0
      %284 = vmatprep.subr.bf16.mxu0 0
      %285 = vmatpush1.bf16.xpose.msra.mxu0 0
      %286 = vmatprep.subr.bf16.mxu0 0
      %287 = vmatpush1.bf16.xpose.msra.mxu0 0
      %288 = vmatprep.subr.bf16.mxu0 0
      %289 = vmatpush1.bf16.xpose.msra.mxu0 0
      %290 = vmatprep.subr.bf16.mxu0 0
      %291 = vmatpush1.bf16.xpose.msra.mxu0 0
      %292 = vmatprep.subr.bf16.mxu0 0
      %293 = vmatpush1.bf16.xpose.msra.mxu0 0
      %294 = vmatprep.subr.bf16.mxu0 0
      %295 = vmatpush1.bf16.xpose.msra.mxu0 0
      %296 = vmatprep.subr.bf16.mxu0 0
      %297 = vmatpush1.bf16.xpose.msra.mxu0 %v280
      %298 = vmatprep.subr.bf16.mxu0 0
      %299 = vmatpush2.bf16.xpose.msra.mxu0 0
      %300 = vmatprep.subr.bf16.mxu0 0
      %301 = vmatpush2.bf16.xpose.msra.mxu0 0
      %302 = vmatprep.subr.bf16.mxu0 0
      %303 = vmatpush2.bf16.xpose.msra.mxu0 0
      %304 = vmatprep.subr.bf16.mxu0 0
      %305 = vmatpush2.bf16.xpose.msra.mxu0 0
      %306 = vmatprep.subr.bf16.mxu0 0
      %307 = vmatpush2.bf16.xpose.msra.mxu0 0
      %308 = vmatprep.subr.bf16.mxu0 0
      %309 = vmatpush2.bf16.xpose.msra.mxu0 0
      %310 = vmatprep.subr.bf16.mxu0 0
      %311 = vmatpush2.bf16.xpose.msra.mxu0 0
      %312 = vmatprep.subr.bf16.mxu0 0
      %313 = vmatpush2.bf16.xpose.msra.mxu0 0
      %314 = vmatprep.mubr.bf16.mxu0 0
      %315 = vmatmul.mubr.bf16.gmra.mxu0 %v277
      %v316 = vpop.f32.mrf.mxu0
      %v317 = vadd.f32 0.0, %v316
      %v318 = vpop.f32.mrf.mxu0
      %v319 = vpop.f32.mrf.mxu0
      %v320 = vpop.f32.mrf.mxu0
      %321 = vdwg.mxu0
      %v322 = vld [vmem:[#allocation2] sm:$0xf]
      %v323 = vld [vmem:[#allocation3] sm:$0xf]
      %vm324 = vcmask 27648
      %v325 = vsel %vm324, %v317, -inf
      %326 = vmax.xlane.f32.xlu0 %v325
      %v327 = vpop.xlane.xlu0 %326
      %v328 = vmax.f32 %v322, %v327
      %v329 = vsub.f32 %v322, %v328
      %v330 = vmul.f32 %v329, 1.442695
      %v331 = vpow.pop %v330
      %333 = vset.pattern.permute.xlu0 0
      %334 = vperm.xlu0 %333, %v328
      %v335 = vpop.permute.xlu0 %334
      %v337 = vsub.f32 %v317, %v335
      %v338 = vmul.f32 %v337, 1.442695
      %v339 = vpow.pop %v338
      %v340 = vmul.f32 %v331, %v323
      %v341 = vsel %vm324, %v339, 0.0
      %342 = vadd.xlane.f32.xlu0 %v341
      %v343 = vpop.xlane.xlu0 %342
      %v344 = vadd.f32 %v340, %v343
      %vm345 = vcmask 3072
      %346 = vst.msk [vmem:[#allocation3] sm:$0xf] %vm345, %v344
      %v347 = vpack.c.bf16 %v339, %v339
      %vm348 = vcmask 31744
      %v350 = vsel %vm348, %v347, 0
      %vm352 = vcmask 1041408
      %v354 = vsel %vm352, %v274, 0
      %356 = vmatprep.subr.bf16.mxu0 0
      %357 = vmatpush1.bf16.msra.mxu0 0
      %358 = vmatprep.subr.bf16.mxu0 0
      %359 = vmatpush1.bf16.msra.mxu0 0
      %360 = vmatprep.subr.bf16.mxu0 0
      %361 = vmatpush1.bf16.msra.mxu0 0
      %362 = vmatprep.subr.bf16.mxu0 0
      %363 = vmatpush1.bf16.msra.mxu0 0
      %364 = vmatprep.subr.bf16.mxu0 0
      %365 = vmatpush1.bf16.msra.mxu0 0
      %366 = vmatprep.subr.bf16.mxu0 0
      %367 = vmatpush1.bf16.msra.mxu0 0
      %368 = vmatprep.subr.bf16.mxu0 0
      %369 = vmatpush1.bf16.msra.mxu0 0
      %370 = vmatprep.subr.bf16.mxu0 0
      %371 = vmatpush1.bf16.msra.mxu0 %v354
      %372 = vmatprep.subr.bf16.mxu0 0
      %373 = vmatpush2.bf16.msra.mxu0 0
      %374 = vmatprep.subr.bf16.mxu0 0
      %375 = vmatpush2.bf16.msra.mxu0 0
      %376 = vmatprep.subr.bf16.mxu0 0
      %377 = vmatpush2.bf16.msra.mxu0 0
      %378 = vmatprep.subr.bf16.mxu0 0
      %379 = vmatpush2.bf16.msra.mxu0 0
      %380 = vmatprep.subr.bf16.mxu0 0
      %381 = vmatpush2.bf16.msra.mxu0 0
      %382 = vmatprep.subr.bf16.mxu0 0
      %383 = vmatpush2.bf16.msra.mxu0 0
      %384 = vmatprep.subr.bf16.mxu0 0
      %385 = vmatpush2.bf16.msra.mxu0 0
      %386 = vmatprep.subr.bf16.mxu0 0
      %387 = vmatpush2.bf16.msra.mxu0 0
      %388 = vmatprep.mubr.bf16.mxu0 0
      %389 = vmatmul.mubr.bf16.gmra.mxu0 %v350
      %v390 = vpop.f32.mrf.mxu0
      %v391 = vadd.f32 0.0, %v390
      %v392 = vpop.f32.mrf.mxu0
      %v393 = vpop.f32.mrf.mxu0
      %v394 = vpop.f32.mrf.mxu0
      %395 = vdwg.mxu0
      %v396 = vld [vmem:[#allocation4] sm:$0xf]
      %398 = vset.pattern.permute.xlu0 0
      %399 = vperm.xlu0 %398, %v331
      %v400 = vpop.permute.xlu0 %399
      %v402 = vmul.f32 %v400, %v396
      %v403 = vadd.f32 %v402, %v391
      %vm404 = vcmask 257024
      %405 = vst.msk [vmem:[#allocation4] sm:$0xf] %vm404, %v403
      %406 = vst.msk [vmem:[#allocation2] sm:$0xf] %vm345, %v328
      %408 = vrot.lane.b32.xlu0 %v272, 96
      %v409 = vpop.permute.xlu0 %408
      %v412 = vunpack.c.l.s4 1983009808
      %v413 = vunpack.c.0.s8 %v412
      %v414 = vlaneseq
      %v415 = vshrl.u32 %v414, 7
      %v416 = vsub.s32 %v413, %v415
      %v417 = vrot.slane %v273, %v416
      %418 = vrot.lane.b32.xlu0 %v417, 96
      %v419 = vpop.permute.xlu0 %418
      %v421 = vsel %vm275, %v409, 0
      %v424 = vsel %vm275, %v419, 0
      %426 = vmatprep.subr.bf16.mxu0 0
      %427 = vmatpush1.bf16.xpose.msra.mxu0 0
      %428 = vmatprep.subr.bf16.mxu0 0
      %429 = vmatpush1.bf16.xpose.msra.mxu0 0
      %430 = vmatprep.subr.bf16.mxu0 0
      %431 = vmatpush1.bf16.xpose.msra.mxu0 0
      %432 = vmatprep.subr.bf16.mxu0 0
      %433 = vmatpush1.bf16.xpose.msra.mxu0 0
      %434 = vmatprep.subr.bf16.mxu0 0
      %435 = vmatpush1.bf16.xpose.msra.mxu0 0
      %436 = vmatprep.subr.bf16.mxu0 0
      %437 = vmatpush1.bf16.xpose.msra.mxu0 0
      %438 = vmatprep.subr.bf16.mxu0 0
      %439 = vmatpush1.bf16.xpose.msra.mxu0 0
      %440 = vmatprep.subr.bf16.mxu0 0
      %441 = vmatpush1.bf16.xpose.msra.mxu0 %v424
      %442 = vmatprep.subr.bf16.mxu0 0
      %443 = vmatpush2.bf16.xpose.msra.mxu0 0
      %444 = vmatprep.subr.bf16.mxu0 0
      %445 = vmatpush2.bf16.xpose.msra.mxu0 0
      %446 = vmatprep.subr.bf16.mxu0 0
      %447 = vmatpush2.bf16.xpose.msra.mxu0 0
      %448 = vmatprep.subr.bf16.mxu0 0
      %449 = vmatpush2.bf16.xpose.msra.mxu0 0
      %450 = vmatprep.subr.bf16.mxu0 0
      %451 = vmatpush2.bf16.xpose.msra.mxu0 0
      %452 = vmatprep.subr.bf16.mxu0 0
      %453 = vmatpush2.bf16.xpose.msra.mxu0 0
      %454 = vmatprep.subr.bf16.mxu0 0
      %455 = vmatpush2.bf16.xpose.msra.mxu0 0
      %456 = vmatprep.subr.bf16.mxu0 0
      %457 = vmatpush2.bf16.xpose.msra.mxu0 0
      %458 = vmatprep.mubr.bf16.mxu0 0
      %459 = vmatmul.mubr.bf16.gmra.mxu0 %v421
      %v460 = vpop.f32.mrf.mxu0
      %v461 = vadd.f32 0.0, %v460
      %v462 = vpop.f32.mrf.mxu0
      %v463 = vpop.f32.mrf.mxu0
      %v464 = vpop.f32.mrf.mxu0
      %465 = vdwg.mxu0
      %v466 = vld [vmem:[#allocation2] sm:$0xf]
      %v467 = vld [vmem:[#allocation3] sm:$0xf]
      %v468 = vsel %vm324, %v461, -inf
      %469 = vmax.xlane.f32.xlu0 %v468
      %v470 = vpop.xlane.xlu0 %469
      %v471 = vmax.f32 %v466, %v470
      %v472 = vsub.f32 %v466, %v471
      %v473 = vmul.f32 %v472, 1.442695
      %v474 = vpow.pop %v473
      %476 = vset.pattern.permute.xlu0 1
      %477 = vperm.xlu0 %476, %v471
      %v478 = vpop.permute.xlu0 %477
      %v480 = vsub.f32 %v461, %v478
      %v481 = vmul.f32 %v480, 1.442695
      %v482 = vpow.pop %v481
      %v483 = vmul.f32 %v474, %v467
      %v484 = vsel %vm324, %v482, 0.0
      %485 = vadd.xlane.f32.xlu0 %v484
      %v486 = vpop.xlane.xlu0 %485
      %v487 = vadd.f32 %v483, %v486
      %vm488 = vcmask 11272
      %489 = vst.msk [vmem:[#allocation3] sm:$0xf] %vm488, %v487
      %v490 = vpack.c.bf16 %v482, %v482
      %v493 = vunpack.c.l.s4 1983009808
      %v494 = vunpack.c.0.s8 %v493
      %v495 = vlaneseq
      %v496 = vshrl.u32 %v495, 7
      %v497 = vsub.s32 %v494, %v496
      %v498 = vrot.slane %v274, %v497
      %499 = vrot.lane.b32.xlu0 %v498, 96
      %v500 = vpop.permute.xlu0 %499
      %v502 = vsel %vm348, %v490, 0
      %v505 = vsel %vm352, %v500, 0
      %507 = vmatprep.subr.bf16.mxu0 0
      %508 = vmatpush1.bf16.msra.mxu0 0
      %509 = vmatprep.subr.bf16.mxu0 0
      %510 = vmatpush1.bf16.msra.mxu0 0
      %511 = vmatprep.subr.bf16.mxu0 0
      %512 = vmatpush1.bf16.msra.mxu0 0
      %513 = vmatprep.subr.bf16.mxu0 0
      %514 = vmatpush1.bf16.msra.mxu0 0
      %515 = vmatprep.subr.bf16.mxu0 0
      %516 = vmatpush1.bf16.msra.mxu0 0
      %517 = vmatprep.subr.bf16.mxu0 0
      %518 = vmatpush1.bf16.msra.mxu0 0
      %519 = vmatprep.subr.bf16.mxu0 0
      %520 = vmatpush1.bf16.msra.mxu0 0
      %521 = vmatprep.subr.bf16.mxu0 0
      %522 = vmatpush1.bf16.msra.mxu0 %v505
      %523 = vmatprep.subr.bf16.mxu0 0
      %524 = vmatpush2.bf16.msra.mxu0 0
      %525 = vmatprep.subr.bf16.mxu0 0
      %526 = vmatpush2.bf16.msra.mxu0 0
      %527 = vmatprep.subr.bf16.mxu0 0
      %528 = vmatpush2.bf16.msra.mxu0 0
      %529 = vmatprep.subr.bf16.mxu0 0
      %530 = vmatpush2.bf16.msra.mxu0 0
      %531 = vmatprep.subr.bf16.mxu0 0
      %532 = vmatpush2.bf16.msra.mxu0 0
      %533 = vmatprep.subr.bf16.mxu0 0
      %534 = vmatpush2.bf16.msra.mxu0 0
      %535 = vmatprep.subr.bf16.mxu0 0
      %536 = vmatpush2.bf16.msra.mxu0 0
      %537 = vmatprep.subr.bf16.mxu0 0
      %538 = vmatpush2.bf16.msra.mxu0 0
      %539 = vmatprep.mubr.bf16.mxu0 0
      %540 = vmatmul.mubr.bf16.gmra.mxu0 %v502
      %v541 = vpop.f32.mrf.mxu0
      %v542 = vadd.f32 0.0, %v541
      %v543 = vpop.f32.mrf.mxu0
      %v544 = vpop.f32.mrf.mxu0
      %v545 = vpop.f32.mrf.mxu0
      %546 = vdwg.mxu0
      %v547 = vld [vmem:[#allocation4] sm:$0xf]
      %549 = vset.pattern.permute.xlu0 1
      %550 = vperm.xlu0 %549, %v474
      %v551 = vpop.permute.xlu0 %550
      %v553 = vmul.f32 %v551, %v547
      %555 = vrot.lane.b32.xlu0 %v542, 32
      %v556 = vpop.permute.xlu0 %555
      %v558 = vadd.f32 %v553, %v556
      %vm559 = vcmask 519424
      %560 = vst.msk [vmem:[#allocation4] sm:$0xf] %vm559, %v558
      %561 = vst.msk [vmem:[#allocation2] sm:$0xf] %vm488, %v471
      %562 = vrot.lane.b32.xlu0 %v272, 64
      %v563 = vpop.permute.xlu0 %562
      %564 = vrot.lane.b32.xlu0 %v417, 64
      %v565 = vpop.permute.xlu0 %564
      %v567 = vsel %vm275, %v563, 0
      %v570 = vsel %vm275, %v565, 0
      %572 = vmatprep.subr.bf16.mxu0 0
      %573 = vmatpush1.bf16.xpose.msra.mxu0 0
      %574 = vmatprep.subr.bf16.mxu0 0
      %575 = vmatpush1.bf16.xpose.msra.mxu0 0
      %576 = vmatprep.subr.bf16.mxu0 0
      %577 = vmatpush1.bf16.xpose.msra.mxu0 0
      %578 = vmatprep.subr.bf16.mxu0 0
      %579 = vmatpush1.bf16.xpose.msra.mxu0 0
      %580 = vmatprep.subr.bf16.mxu0 0
      %581 = vmatpush1.bf16.xpose.msra.mxu0 0
      %582 = vmatprep.subr.bf16.mxu0 0
      %583 = vmatpush1.bf16.xpose.msra.mxu0 0
      %584 = vmatprep.subr.bf16.mxu0 0
      %585 = vmatpush1.bf16.xpose.msra.mxu0 0
      %586 = vmatprep.subr.bf16.mxu0 0
      %587 = vmatpush1.bf16.xpose.msra.mxu0 %v570
      %588 = vmatprep.subr.bf16.mxu0 0
      %589 = vmatpush2.bf16.xpose.msra.mxu0 0
      %590 = vmatprep.subr.bf16.mxu0 0
      %591 = vmatpush2.bf16.xpose.msra.mxu0 0
      %592 = vmatprep.subr.bf16.mxu0 0
      %593 = vmatpush2.bf16.xpose.msra.mxu0 0
      %594 = vmatprep.subr.bf16.mxu0 0
      %595 = vmatpush2.bf16.xpose.msra.mxu0 0
      %596 = vmatprep.subr.bf16.mxu0 0
      %597 = vmatpush2.bf16.xpose.msra.mxu0 0
      %598 = vmatprep.subr.bf16.mxu0 0
      %599 = vmatpush2.bf16.xpose.msra.mxu0 0
      %600 = vmatprep.subr.bf16.mxu0 0
      %601 = vmatpush2.bf16.xpose.msra.mxu0 0
      %602 = vmatprep.subr.bf16.mxu0 0
      %603 = vmatpush2.bf16.xpose.msra.mxu0 0
      %604 = vmatprep.mubr.bf16.mxu0 0
      %605 = vmatmul.mubr.bf16.gmra.mxu0 %v567
      %v606 = vpop.f32.mrf.mxu0
      %v607 = vadd.f32 0.0, %v606
      %v608 = vpop.f32.mrf.mxu0
      %v609 = vpop.f32.mrf.mxu0
      %v610 = vpop.f32.mrf.mxu0
      %611 = vdwg.mxu0
      %v612 = vld [vmem:[#allocation2] sm:$0xf]
      %v613 = vld [vmem:[#allocation3] sm:$0xf]
      %v614 = vsel %vm324, %v607, -inf
      %615 = vmax.xlane.f32.xlu0 %v614
      %v616 = vpop.xlane.xlu0 %615
      %v617 = vmax.f32 %v612, %v616
      %v618 = vsub.f32 %v612, %v617
      %v619 = vmul.f32 %v618, 1.442695
      %v620 = vpow.pop %v619
      %622 = vset.pattern.permute.xlu0 2
      %623 = vperm.xlu0 %622, %v617
      %v624 = vpop.permute.xlu0 %623
      %v626 = vsub.f32 %v607, %v624
      %v627 = vmul.f32 %v626, 1.442695
      %v628 = vpow.pop %v627
      %v629 = vmul.f32 %v620, %v613
      %v630 = vsel %vm324, %v628, 0.0
      %631 = vadd.xlane.f32.xlu0 %v630
      %v632 = vpop.xlane.xlu0 %631
      %v633 = vadd.f32 %v629, %v632
      %vm634 = vcmask 19472
      %635 = vst.msk [vmem:[#allocation3] sm:$0xf] %vm634, %v633
      %v636 = vpack.c.bf16 %v628, %v628
      %637 = vrot.lane.b32.xlu0 %v498, 64
      %v638 = vpop.permute.xlu0 %637
      %v640 = vsel %vm348, %v636, 0
      %v643 = vsel %vm352, %v638, 0
      %645 = vmatprep.subr.bf16.mxu0 0
      %646 = vmatpush1.bf16.msra.mxu0 0
      %647 = vmatprep.subr.bf16.mxu0 0
      %648 = vmatpush1.bf16.msra.mxu0 0
      %649 = vmatprep.subr.bf16.mxu0 0
      %650 = vmatpush1.bf16.msra.mxu0 0
      %651 = vmatprep.subr.bf16.mxu0 0
      %652 = vmatpush1.bf16.msra.mxu0 0
      %653 = vmatprep.subr.bf16.mxu0 0
      %654 = vmatpush1.bf16.msra.mxu0 0
      %655 = vmatprep.subr.bf16.mxu0 0
      %656 = vmatpush1.bf16.msra.mxu0 0
      %657 = vmatprep.subr.bf16.mxu0 0
      %658 = vmatpush1.bf16.msra.mxu0 0
      %659 = vmatprep.subr.bf16.mxu0 0
      %660 = vmatpush1.bf16.msra.mxu0 %v643
      %661 = vmatprep.subr.bf16.mxu0 0
      %662 = vmatpush2.bf16.msra.mxu0 0
      %663 = vmatprep.subr.bf16.mxu0 0
      %664 = vmatpush2.bf16.msra.mxu0 0
      %665 = vmatprep.subr.bf16.mxu0 0
      %666 = vmatpush2.bf16.msra.mxu0 0
      %667 = vmatprep.subr.bf16.mxu0 0
      %668 = vmatpush2.bf16.msra.mxu0 0
      %669 = vmatprep.subr.bf16.mxu0 0
      %670 = vmatpush2.bf16.msra.mxu0 0
      %671 = vmatprep.subr.bf16.mxu0 0
      %672 = vmatpush2.bf16.msra.mxu0 0
      %673 = vmatprep.subr.bf16.mxu0 0
      %674 = vmatpush2.bf16.msra.mxu0 0
      %675 = vmatprep.subr.bf16.mxu0 0
      %676 = vmatpush2.bf16.msra.mxu0 0
      %677 = vmatprep.mubr.bf16.mxu0 0
      %678 = vmatmul.mubr.bf16.gmra.mxu0 %v640
      %v679 = vpop.f32.mrf.mxu0
      %v680 = vadd.f32 0.0, %v679
      %v681 = vpop.f32.mrf.mxu0
      %v682 = vpop.f32.mrf.mxu0
      %v683 = vpop.f32.mrf.mxu0
      %684 = vdwg.mxu0
      %v685 = vld [vmem:[#allocation4] sm:$0xf]
      %687 = vset.pattern.permute.xlu0 2
      %688 = vperm.xlu0 %687, %v620
      %v689 = vpop.permute.xlu0 %688
      %v691 = vmul.f32 %v689, %v685
      %693 = vrot.lane.b32.xlu0 %v680, 64
      %v694 = vpop.permute.xlu0 %693
      %v696 = vadd.f32 %v691, %v694
      %vm697 = vcmask 781824
      %698 = vst.msk [vmem:[#allocation4] sm:$0xf] %vm697, %v696
      %699 = vst.msk [vmem:[#allocation2] sm:$0xf] %vm634, %v617
      %700 = vrot.lane.b32.xlu0 %v272, 32
      %v701 = vpop.permute.xlu0 %700
      %702 = vrot.lane.b32.xlu0 %v417, 32
      %v703 = vpop.permute.xlu0 %702
      %v705 = vsel %vm275, %v701, 0
      %v708 = vsel %vm275, %v703, 0
      %710 = vmatprep.subr.bf16.mxu0 0
      %711 = vmatpush1.bf16.xpose.msra.mxu0 0
      %712 = vmatprep.subr.bf16.mxu0 0
      %713 = vmatpush1.bf16.xpose.msra.mxu0 0
      %714 = vmatprep.subr.bf16.mxu0 0
      %715 = vmatpush1.bf16.xpose.msra.mxu0 0
      %716 = vmatprep.subr.bf16.mxu0 0
      %717 = vmatpush1.bf16.xpose.msra.mxu0 0
      %718 = vmatprep.subr.bf16.mxu0 0
      %719 = vmatpush1.bf16.xpose.msra.mxu0 0
      %720 = vmatprep.subr.bf16.mxu0 0
      %721 = vmatpush1.bf16.xpose.msra.mxu0 0
      %722 = vmatprep.subr.bf16.mxu0 0
      %723 = vmatpush1.bf16.xpose.msra.mxu0 0
      %724 = vmatprep.subr.bf16.mxu0 0
      %725 = vmatpush1.bf16.xpose.msra.mxu0 %v708
      %726 = vmatprep.subr.bf16.mxu0 0
      %727 = vmatpush2.bf16.xpose.msra.mxu0 0
      %728 = vmatprep.subr.bf16.mxu0 0
      %729 = vmatpush2.bf16.xpose.msra.mxu0 0
      %730 = vmatprep.subr.bf16.mxu0 0
      %731 = vmatpush2.bf16.xpose.msra.mxu0 0
      %732 = vmatprep.subr.bf16.mxu0 0
      %733 = vmatpush2.bf16.xpose.msra.mxu0 0
      %734 = vmatprep.subr.bf16.mxu0 0
      %735 = vmatpush2.bf16.xpose.msra.mxu0 0
      %736 = vmatprep.subr.bf16.mxu0 0
      %737 = vmatpush2.bf16.xpose.msra.mxu0 0
      %738 = vmatprep.subr.bf16.mxu0 0
      %739 = vmatpush2.bf16.xpose.msra.mxu0 0
      %740 = vmatprep.subr.bf16.mxu0 0
      %741 = vmatpush2.bf16.xpose.msra.mxu0 0
      %742 = vmatprep.mubr.bf16.mxu0 0
      %743 = vmatmul.mubr.bf16.gmra.mxu0 %v705
      %v744 = vpop.f32.mrf.mxu0
      %v745 = vadd.f32 0.0, %v744
      %v746 = vpop.f32.mrf.mxu0
      %v747 = vpop.f32.mrf.mxu0
      %v748 = vpop.f32.mrf.mxu0
      %749 = vdwg.mxu0
      %v750 = vld [vmem:[#allocation2] sm:$0xf]
      %v751 = vld [vmem:[#allocation3] sm:$0xf]
      %v752 = vsel %vm324, %v745, -inf
      %753 = vmax.xlane.f32.xlu0 %v752
      %v754 = vpop.xlane.xlu0 %753
      %v755 = vmax.f32 %v750, %v754
      %v756 = vsub.f32 %v750, %v755
      %v757 = vmul.f32 %v756, 1.442695
      %v758 = vpow.pop %v757
      %760 = vset.pattern.permute.xlu0 3
      %761 = vperm.xlu0 %760, %v755
      %v762 = vpop.permute.xlu0 %761
      %v764 = vsub.f32 %v745, %v762
      %v765 = vmul.f32 %v764, 1.442695
      %v766 = vpow.pop %v765
      %v767 = vmul.f32 %v758, %v751
      %v768 = vsel %vm324, %v766, 0.0
      %769 = vadd.xlane.f32.xlu0 %v768
      %v770 = vpop.xlane.xlu0 %769
      %v771 = vadd.f32 %v767, %v770
      %vm772 = vcmask 27672
      %773 = vst.msk [vmem:[#allocation3] sm:$0xf] %vm772, %v771
      %v774 = vpack.c.bf16 %v766, %v766
      %775 = vrot.lane.b32.xlu0 %v498, 32
      %v776 = vpop.permute.xlu0 %775
      %v778 = vsel %vm348, %v774, 0
      %v781 = vsel %vm352, %v776, 0
      %783 = vmatprep.subr.bf16.mxu0 0
      %784 = vmatpush1.bf16.msra.mxu0 0
      %785 = vmatprep.subr.bf16.mxu0 0
      %786 = vmatpush1.bf16.msra.mxu0 0
      %787 = vmatprep.subr.bf16.mxu0 0
      %788 = vmatpush1.bf16.msra.mxu0 0
      %789 = vmatprep.subr.bf16.mxu0 0
      %790 = vmatpush1.bf16.msra.mxu0 0
      %791 = vmatprep.subr.bf16.mxu0 0
      %792 = vmatpush1.bf16.msra.mxu0 0
      %793 = vmatprep.subr.bf16.mxu0 0
      %794 = vmatpush1.bf16.msra.mxu0 0
      %795 = vmatprep.subr.bf16.mxu0 0
      %796 = vmatpush1.bf16.msra.mxu0 0
      %797 = vmatprep.subr.bf16.mxu0 0
      %798 = vmatpush1.bf16.msra.mxu0 %v781
      %799 = vmatprep.subr.bf16.mxu0 0
      %800 = vmatpush2.bf16.msra.mxu0 0
      %801 = vmatprep.subr.bf16.mxu0 0
      %802 = vmatpush2.bf16.msra.mxu0 0
      %803 = vmatprep.subr.bf16.mxu0 0
      %804 = vmatpush2.bf16.msra.mxu0 0
      %805 = vmatprep.subr.bf16.mxu0 0
      %806 = vmatpush2.bf16.msra.mxu0 0
      %807 = vmatprep.subr.bf16.mxu0 0
      %808 = vmatpush2.bf16.msra.mxu0 0
      %809 = vmatprep.subr.bf16.mxu0 0
      %810 = vmatpush2.bf16.msra.mxu0 0
      %811 = vmatprep.subr.bf16.mxu0 0
      %812 = vmatpush2.bf16.msra.mxu0 0
      %813 = vmatprep.subr.bf16.mxu0 0
      %814 = vmatpush2.bf16.msra.mxu0 0
      %815 = vmatprep.mubr.bf16.mxu0 0
      %816 = vmatmul.mubr.bf16.gmra.mxu0 %v778
      %v817 = vpop.f32.mrf.mxu0
      %v818 = vadd.f32 0.0, %v817
      %v819 = vpop.f32.mrf.mxu0
      %v820 = vpop.f32.mrf.mxu0
      %v821 = vpop.f32.mrf.mxu0
      %822 = vdwg.mxu0
      %v823 = vld [vmem:[#allocation4] sm:$0xf]
      %825 = vset.pattern.permute.xlu0 3
      %826 = vperm.xlu0 %825, %v758
      %v827 = vpop.permute.xlu0 %826
      %v829 = vmul.f32 %v827, %v823
      %831 = vrot.lane.b32.xlu0 %v818, 96
      %v832 = vpop.permute.xlu0 %831
      %v834 = vadd.f32 %v829, %v832
      %vm835 = vcmask 1044224
      %836 = vst.msk [vmem:[#allocation4] sm:$0xf] %vm835, %v834
      %837 = vst.msk [vmem:[#allocation2] sm:$0xf] %vm772, %v755
      // Predicated region
      $region37: #{paligemma_forward.22} parent=31 // pred_check
        %p838 = pneg %p261
      $region38: #{paligemma_forward.22} parent=31 // pred_check_branch
        %840 = sbr.rel (%p838) target = $region40
      $region39: #{paligemma_forward.22} parent=31 // pred_region
        %v841 = vld [vmem:[#allocation3] sm:$0xf]
        %v842 = vrcp.pop %v841
        %v843 = vld [vmem:[#allocation4] sm:$0xf]
        %845 = vset.pattern.permute.xlu0 0
        %846 = vperm.xlu0 %845, %v842
        %v847 = vpop.permute.xlu0 %846
        %v849 = vmul.f32 %v843, %v847
        %v850 = vpack.c.bf16 %v849, %v849
        %vm851 = vcmask 254976
        %852 = vst.msk [vmem:[%s259] sm:$0x3] %vm851, %v850
        %v853 = vld [vmem:[#allocation3] sm:$0xf]
        %v854 = vrcp.pop %v853
        %v855 = vld [vmem:[#allocation4] sm:$0xf]
        %857 = vset.pattern.permute.xlu0 1
        %858 = vperm.xlu0 %857, %v854
        %v859 = vpop.permute.xlu0 %858
        %v861 = vmul.f32 %v855, %v859
        %v862 = vpack.c.bf16 %v861, %v861
        %vm863 = vcmask 517376
        %864 = vst.msk [vmem:[%s259] sm:$0x3] %vm863, %v862
        %v865 = vld [vmem:[#allocation3] sm:$0xf]
        %v866 = vrcp.pop %v865
        %v867 = vld [vmem:[#allocation4] sm:$0xf]
        %869 = vset.pattern.permute.xlu0 2
        %870 = vperm.xlu0 %869, %v866
        %v871 = vpop.permute.xlu0 %870
        %v873 = vmul.f32 %v867, %v871
        %v874 = vpack.c.bf16 %v873, %v873
        %vm875 = vcmask 779776
        %876 = vst.msk [vmem:[%s259] sm:$0x3] %vm875, %v874
        %v877 = vld [vmem:[#allocation3] sm:$0xf]
        %v878 = vrcp.pop %v877
        %v879 = vld [vmem:[#allocation4] sm:$0xf]
        %881 = vset.pattern.permute.xlu0 3
        %882 = vperm.xlu0 %881, %v878
        %v883 = vpop.permute.xlu0 %882
        %v885 = vmul.f32 %v879, %v883
        %v886 = vpack.c.bf16 %v885, %v885
        %vm887 = vcmask 1042176
        %888 = vst.msk [vmem:[%s259] sm:$0x3] %vm887, %v886
      $region40: #{paligemma_forward.22} parent=31 // pred_fallthru
        _
      %p889 = scmp.lt.s32.totalorder %s19, 1
      %s890 = scalar_select %p889, %s19, 1
      %p891 = scmp.lt.s32.totalorder %s20, 0
      %s892 = scalar_select %p891, %s20, 0
      %s893 = sadd.s32 %s892, %s890
      %s894 = smul.addr %s893, 2
      %s895 = scalar_lea.vmem %s3, %s894
      // Predicated region
      $region41: #{paligemma_forward.22} parent=31 // pred_check
        %p896 = pneg %p137
      $region42: #{paligemma_forward.22} parent=31 // pred_check_branch
        %898 = sbr.rel (%p896) target = $region44
      $region43: #{paligemma_forward.22} parent=31 // pred_region
        _
      $region44: #{paligemma_forward.22} parent=31 // pred_fallthru
        _
    $region32: #{paligemma_forward.22} parent=5 // pred_fallthru
      _
    %p899 = scmp.le.s32.totalorder 2, %s9
    // Predicated region
    $region45: #{paligemma_forward.22} parent=5 // pred_check
      %p900 = pneg %p899
    $region46: #{paligemma_forward.22} parent=5 // pred_check_branch
      %902 = sbr.rel (%p900) target = $region48
    $region47: #{paligemma_forward.22} parent=5 // pred_region
      %s903 = ssub.s32 %s9, 2
      // Predicated region
      $region49: #{paligemma_forward.22} parent=47 // pred_check
        %p904 = pneg %p143
      $region50: #{paligemma_forward.22} parent=47 // pred_check_branch
        %906 = sbr.rel (%p904) target = $region52
      $region51: #{paligemma_forward.22} parent=47 // pred_region
        %p907 = scmp.lt.s32.totalorder %s22, 1
        %s908 = scalar_select %p907, %s22, 1
        %p909 = scmp.lt.s32.totalorder %s23, 0
        %s910 = scalar_select %p909, %s23, 0
        %s911 = sadd.s32 %s910, %s908
        %s912 = smul.addr %s911, 2
        %s913 = scalar_lea.vmem %s3, %s912
      $region52: #{paligemma_forward.22} parent=47 // pred_fallthru
        _
    $region48: #{paligemma_forward.22} parent=5 // pred_fallthru
      _
  $region6: #{paligemma_forward.22} parent=0 // loop_footer
    %s13 = sadd.s32 1, %s9
  $region7: #{paligemma_forward.22} parent=0 // loop_footer_branch
    %8 = sbr.rel target = $region3
  $region8: #{paligemma_forward.22} parent=0 // loop_exit
    _

// kernel: paligemma_forward.29
$region0: #{paligemma_forward.29}
  #allocation0 [shape = 'u32[]', space=smem, size = 0x4, offset = 0x4, fixed_abs, tag = 'smem constant byte address 0x4 - core index']
  #allocation1 [shape = 'u32[144,128]{1,0:T(1,128)}', space=vmem, size = 0x12000, scoped, tag = 'internal scratch']
  %s0 = inlined_call_operand.vmem [shape: bf16[8,128], index: 0, kind: input, shape index: {}]
  %s1 = inlined_call_operand.vmem [shape: f32[1,128], index: 1, kind: input, shape index: {}]
  %s2 = inlined_call_operand.vmem [shape: f32[1,128], index: 2, kind: input, shape index: {}]
  %s3 = inlined_call_operand.vmem [shape: bf16[128,128], index: 3, kind: input, shape index: {}]
  %s4 = inlined_call_operand.vmem [shape: f32[1,128], index: 4, kind: input, shape index: {}]
  %s5 = inlined_call_operand.vmem [shape: bf16[8,128], index: 5, kind: output, shape index: {}]
  %s6 = sld [smem:[#allocation0]]
  $region30: #{paligemma_forward.29} parent=0
    _
  %s8 = ssub.s32 1, %s6
  %s9 = scalar_select 0, %s8, %s6
  // Predicated region
  $region2: #{paligemma_forward.29} parent=0 // pred_check
    _
  $region3: #{paligemma_forward.29} parent=0 // pred_check_branch
    %11 = sbr.rel (0) target = $region5
  $region4: #{paligemma_forward.29} parent=0 // pred_region
    _
  $region5: #{paligemma_forward.29} parent=0 // pred_fallthru
    _
  // Predicated region
  $region6: #{paligemma_forward.29} parent=0 // pred_check
    _
  $region7: #{paligemma_forward.29} parent=0 // pred_check_branch
    %13 = sbr.rel (0) target = $region9
  $region8: #{paligemma_forward.29} parent=0 // pred_region
    _
  $region9: #{paligemma_forward.29} parent=0 // pred_fallthru
    _
  // Predicated region
  $region10: #{paligemma_forward.29} parent=0 // pred_check
    _
  $region11: #{paligemma_forward.29} parent=0 // pred_check_branch
    %15 = sbr.rel (0) target = $region13
  $region12: #{paligemma_forward.29} parent=0 // pred_region
    _
  $region13: #{paligemma_forward.29} parent=0 // pred_fallthru
    _
  // Predicated region
  $region14: #{paligemma_forward.29} parent=0 // pred_check
    _
  $region15: #{paligemma_forward.29} parent=0 // pred_check_branch
    %17 = sbr.rel (0) target = $region17
  $region16: #{paligemma_forward.29} parent=0 // pred_region
    _
  $region17: #{paligemma_forward.29} parent=0 // pred_fallthru
    _
  // Predicated region
  $region18: #{paligemma_forward.29} parent=0 // pred_check
    _
  $region19: #{paligemma_forward.29} parent=0 // pred_check_branch
    %19 = sbr.rel (0) target = $region21
  $region20: #{paligemma_forward.29} parent=0 // pred_region
    _
  $region21: #{paligemma_forward.29} parent=0 // pred_fallthru
    _
  %v21 = vld [vmem:[%s0] sm:$0xf]
  %v22 = vunpack.c.l.bf16 %v21
  %23 = vadd.xlane.f32.xlu0 %v22
  %v24 = vpop.xlane.xlu0 %23
  %v25 = vrcp.pop 128.0
  %v26 = vmul.f32 %v24, %v25
  %v27 = vsub.f32 %v22, %v26
  %v28 = vmul.f32 %v27, %v27
  %29 = vadd.xlane.f32.xlu0 %v28
  %v30 = vpop.xlane.xlu0 %29
  %v31 = vmul.f32 %v30, %v25
  %v32 = vadd.f32 %v31, 1e-06
  %v33 = vrsqrt.pop %v32
  %v34 = vmul.f32 %v27, %v33
  %v35 = vld [vmem:[%s1] sm:$0x1]
  %v37 = vlaneseq
  %v38 = vshrl.u32 %v37, 7
  %v39 = vsub.s32 0, %v38
  %v40 = vrot.slane %v35, %v39
  %v42 = vmul.f32 %v34, %v40
  %v43 = vld [vmem:[%s2] sm:$0x1]
  %v45 = vlaneseq
  %v46 = vshrl.u32 %v45, 7
  %v47 = vsub.s32 0, %v46
  %v48 = vrot.slane %v43, %v47
  %v50 = vadd.f32 %v42, %v48
  %v51 = vpack.c.bf16 %v50, %v50
  %v52 = vld [vmem:[%s3] sm:$0xf]
  %v53 = vld [vmem:[%s3 + $0x4] sm:$0xf]
  %v54 = vld [vmem:[%s3 + $0x8] sm:$0xf]
  %v55 = vld [vmem:[%s3 + $0xc] sm:$0xf]
  %v56 = vld [vmem:[%s3 + $0x10] sm:$0xf]
  %v57 = vld [vmem:[%s3 + $0x14] sm:$0xf]
  %v58 = vld [vmem:[%s3 + $0x18] sm:$0xf]
  %v59 = vld [vmem:[%s3 + $0x1c] sm:$0xf]
  %v60 = vld [vmem:[%s3 + $0x20] sm:$0xf]
  %v61 = vld [vmem:[%s3 + $0x24] sm:$0xf]
  %v62 = vld [vmem:[%s3 + $0x28] sm:$0xf]
  %v63 = vld [vmem:[%s3 + $0x2c] sm:$0xf]
  %v64 = vld [vmem:[%s3 + $0x30] sm:$0xf]
  %v65 = vld [vmem:[%s3 + $0x34] sm:$0xf]
  %v66 = vld [vmem:[%s3 + $0x38] sm:$0xf]
  %v67 = vld [vmem:[%s3 + $0x3c] sm:$0xf]
  %v68 = vld [vmem:[%s4] sm:$0x1]
  %v70 = vlaneseq
  %v71 = vshrl.u32 %v70, 7
  %v72 = vsub.s32 0, %v71
  %v73 = vrot.slane %v68, %v72
  %v91 = vunpack.c.l.b16 %v52
  %v92 = vunpack.c.l.b16 %v53
  %v93 = vunpack.c.l.b16 %v54
  %v94 = vunpack.c.l.b16 %v55
  %v95 = vunpack.c.l.b16 %v56
  %v96 = vunpack.c.l.b16 %v57
  %v97 = vunpack.c.l.b16 %v58
  %v98 = vunpack.c.l.b16 %v59
  %v99 = vunpack.c.l.b16 %v60
  %v100 = vunpack.c.l.b16 %v61
  %v101 = vunpack.c.l.b16 %v62
  %v102 = vunpack.c.l.b16 %v63
  %v103 = vunpack.c.l.b16 %v64
  %v104 = vunpack.c.l.b16 %v65
  %v105 = vunpack.c.l.b16 %v66
  %v106 = vunpack.c.l.b16 %v67
  %v107 = vpack.c.b16 %v92, %v91
  %v108 = vpack.c.b16 %v94, %v93
  %v109 = vpack.c.b16 %v96, %v95
  %v110 = vpack.c.b16 %v98, %v97
  %v111 = vpack.c.b16 %v100, %v99
  %v112 = vpack.c.b16 %v102, %v101
  %v113 = vpack.c.b16 %v104, %v103
  %v114 = vpack.c.b16 %v106, %v105
  %123 = vmatprep.subr.bf16.mxu0 0
  %124 = vmatpush1.bf16.msra.mxu0 %v114
  %125 = vmatprep.subr.bf16.mxu0 0
  %126 = vmatpush1.bf16.msra.mxu0 %v113
  %127 = vmatprep.subr.bf16.mxu0 0
  %128 = vmatpush1.bf16.msra.mxu0 %v112
  %129 = vmatprep.subr.bf16.mxu0 0
  %130 = vmatpush1.bf16.msra.mxu0 %v111
  %131 = vmatprep.subr.bf16.mxu0 0
  %132 = vmatpush1.bf16.msra.mxu0 %v110
  %133 = vmatprep.subr.bf16.mxu0 0
  %134 = vmatpush1.bf16.msra.mxu0 %v109
  %135 = vmatprep.subr.bf16.mxu0 0
  %136 = vmatpush1.bf16.msra.mxu0 %v108
  %137 = vmatprep.subr.bf16.mxu0 0
  %138 = vmatpush1.bf16.msra.mxu0 %v107
  %139 = vmatprep.subr.bf16.mxu0 0
  %140 = vmatpush2.bf16.msra.mxu0 0
  %141 = vmatprep.subr.bf16.mxu0 0
  %142 = vmatpush2.bf16.msra.mxu0 0
  %143 = vmatprep.subr.bf16.mxu0 0
  %144 = vmatpush2.bf16.msra.mxu0 0
  %145 = vmatprep.subr.bf16.mxu0 0
  %146 = vmatpush2.bf16.msra.mxu0 0
  %147 = vmatprep.subr.bf16.mxu0 0
  %148 = vmatpush2.bf16.msra.mxu0 0
  %149 = vmatprep.subr.bf16.mxu0 0
  %150 = vmatpush2.bf16.msra.mxu0 0
  %151 = vmatprep.subr.bf16.mxu0 0
  %152 = vmatpush2.bf16.msra.mxu0 0
  %153 = vmatprep.subr.bf16.mxu0 0
  %154 = vmatpush2.bf16.msra.mxu0 0
  %155 = vmatprep.mubr.bf16.mxu0 0
  %156 = vmatmul.mubr.bf16.gmra.mxu0 %v51
  %v157 = vpop.f32.mrf.mxu0
  %v158 = vadd.f32 %v73, %v157
  %v159 = vpop.f32.mrf.mxu0
  %v160 = vpop.f32.mrf.mxu0
  %v161 = vpop.f32.mrf.mxu0
  %162 = vdwg.mxu0
  %v163 = vpack.c.bf16 %v158, %v158
  %164 = vst [vmem:[%s5] sm:$0xf] %v163
  // Predicated region
  $region22: #{paligemma_forward.29} parent=0 // pred_check
    _
  $region23: #{paligemma_forward.29} parent=0 // pred_check_branch
    %166 = sbr.rel (0) target = $region25
  $region24: #{paligemma_forward.29} parent=0 // pred_region
    _
  $region25: #{paligemma_forward.29} parent=0 // pred_fallthru
    _
  // Predicated region
  $region26: #{paligemma_forward.29} parent=0 // pred_check
    _
  $region27: #{paligemma_forward.29} parent=0 // pred_check_branch
    %168 = sbr.rel (0) target = $region29
  $region28: #{paligemma_forward.29} parent=0 // pred_region
    _
  $region29: #{paligemma_forward.29} parent=0 // pred_fallthru
    _

// kernel: paligemma_forward.24
$region0: #{paligemma_forward.24}
  #allocation0 [shape = 'u32[]', space=smem, size = 0x4, offset = 0x4, fixed_abs, tag = 'smem constant byte address 0x4 - core index']
  #allocation1 [shape = 'u32[144,128]{1,0:T(1,128)}', space=vmem, size = 0x12000, scoped, tag = 'internal scratch']
  #allocation2 [shape = 'f32[8,128]{1,0:T(8,128)}', space=vmem, size = 0x1000, scoped, tag = 'scratch operand']
  %s0 = inlined_call_operand.vmem [shape: bf16[8,128], index: 0, kind: input, shape index: {}]
  %s1 = inlined_call_operand.vmem [shape: f32[1,128], index: 1, kind: input, shape index: {}]
  %s2 = inlined_call_operand.vmem [shape: f32[1,128], index: 2, kind: input, shape index: {}]
  %s3 = inlined_call_operand.vmem [shape: bf16[128,256], index: 3, kind: input, shape index: {}]
  %s4 = inlined_call_operand.vmem [shape: f32[1,256], index: 4, kind: input, shape index: {}]
  %s5 = inlined_call_operand.vmem [shape: bf16[256,128], index: 5, kind: input, shape index: {}]
  %s6 = inlined_call_operand.vmem [shape: f32[1,128], index: 6, kind: input, shape index: {}]
  %s7 = inlined_call_operand.vmem [shape: bf16[8,128], index: 7, kind: output, shape index: {}]
  %s8 = sld [smem:[#allocation0]]
  $region46: #{paligemma_forward.24} parent=0
    _
  %s10 = ssub.s32 1, %s8
  %s11 = scalar_select 0, %s10, %s8
  // Predicated region
  $region2: #{paligemma_forward.24} parent=0 // pred_check
    _
  $region3: #{paligemma_forward.24} parent=0 // pred_check_branch
    %13 = sbr.rel (0) target = $region5
  $region4: #{paligemma_forward.24} parent=0 // pred_region
    _
  $region5: #{paligemma_forward.24} parent=0 // pred_fallthru
    _
  // Predicated region
  $region6: #{paligemma_forward.24} parent=0 // pred_check
    _
  $region7: #{paligemma_forward.24} parent=0 // pred_check_branch
    %15 = sbr.rel (0) target = $region9
  $region8: #{paligemma_forward.24} parent=0 // pred_region
    _
  $region9: #{paligemma_forward.24} parent=0 // pred_fallthru
    _
  // Predicated region
  $region10: #{paligemma_forward.24} parent=0 // pred_check
    _
  $region11: #{paligemma_forward.24} parent=0 // pred_check_branch
    %17 = sbr.rel (0) target = $region13
  $region12: #{paligemma_forward.24} parent=0 // pred_region
    _
  $region13: #{paligemma_forward.24} parent=0 // pred_fallthru
    _
  // Predicated region
  $region14: #{paligemma_forward.24} parent=0 // pred_check
    _
  $region15: #{paligemma_forward.24} parent=0 // pred_check_branch
    %19 = sbr.rel (0) target = $region17
  $region16: #{paligemma_forward.24} parent=0 // pred_region
    _
  $region17: #{paligemma_forward.24} parent=0 // pred_fallthru
    _
  // Predicated region
  $region18: #{paligemma_forward.24} parent=0 // pred_check
    _
  $region19: #{paligemma_forward.24} parent=0 // pred_check_branch
    %21 = sbr.rel (0) target = $region21
  $region20: #{paligemma_forward.24} parent=0 // pred_region
    _
  $region21: #{paligemma_forward.24} parent=0 // pred_fallthru
    _
  // Predicated region
  $region22: #{paligemma_forward.24} parent=0 // pred_check
    _
  $region23: #{paligemma_forward.24} parent=0 // pred_check_branch
    %23 = sbr.rel (0) target = $region25
  $region24: #{paligemma_forward.24} parent=0 // pred_region
    _
  $region25: #{paligemma_forward.24} parent=0 // pred_fallthru
    _
  // Predicated region
  $region26: #{paligemma_forward.24} parent=0 // pred_check
    _
  $region27: #{paligemma_forward.24} parent=0 // pred_check_branch
    %25 = sbr.rel (0) target = $region29
  $region28: #{paligemma_forward.24} parent=0 // pred_region
    _
  $region29: #{paligemma_forward.24} parent=0 // pred_fallthru
    _
  %p27 = scmp.eq.s32.totalorder 0, 0
  // Predicated region
  $region30: #{paligemma_forward.24} parent=0 // pred_check
    %p28 = pneg %p27
  $region31: #{paligemma_forward.24} parent=0 // pred_check_branch
    %30 = sbr.rel (%p28) target = $region33
  $region32: #{paligemma_forward.24} parent=0 // pred_region
    %31 = vst [vmem:[#allocation2] sm:$0xff] 0.0
  $region33: #{paligemma_forward.24} parent=0 // pred_fallthru
    _
  %v32 = vld [vmem:[%s0] sm:$0xf]
  %v33 = vunpack.c.l.bf16 %v32
  %34 = vadd.xlane.f32.xlu0 %v33
  %v35 = vpop.xlane.xlu0 %34
  %v36 = vrcp.pop 128.0
  %v37 = vmul.f32 %v35, %v36
  %v38 = vsub.f32 %v33, %v37
  %v39 = vmul.f32 %v38, %v38
  %40 = vadd.xlane.f32.xlu0 %v39
  %v41 = vpop.xlane.xlu0 %40
  %v42 = vmul.f32 %v41, %v36
  %v43 = vadd.f32 %v42, 1e-06
  %v44 = vrsqrt.pop %v43
  %v45 = vmul.f32 %v38, %v44
  %v46 = vld [vmem:[%s1] sm:$0x1]
  %v48 = vlaneseq
  %v49 = vshrl.u32 %v48, 7
  %v50 = vsub.s32 0, %v49
  %v51 = vrot.slane %v46, %v50
  %v53 = vmul.f32 %v45, %v51
  %v54 = vld [vmem:[%s2] sm:$0x1]
  %v56 = vlaneseq
  %v57 = vshrl.u32 %v56, 7
  %v58 = vsub.s32 0, %v57
  %v59 = vrot.slane %v54, %v58
  %v61 = vadd.f32 %v53, %v59
  %v62 = vpack.c.bf16 %v61, %v61
  %v63 = vld [vmem:[%s3] sm:$0xff]
  %v64 = vld [vmem:[%s3 + $0x8] sm:$0xff]
  %v65 = vld [vmem:[%s3 + $0x10] sm:$0xff]
  %v66 = vld [vmem:[%s3 + $0x18] sm:$0xff]
  %v67 = vld [vmem:[%s3 + $0x20] sm:$0xff]
  %v68 = vld [vmem:[%s3 + $0x28] sm:$0xff]
  %v69 = vld [vmem:[%s3 + $0x30] sm:$0xff]
  %v70 = vld [vmem:[%s3 + $0x38] sm:$0xff]
  %v71 = vld [vmem:[%s3 + $0x40] sm:$0xff]
  %v72 = vld [vmem:[%s3 + $0x48] sm:$0xff]
  %v73 = vld [vmem:[%s3 + $0x50] sm:$0xff]
  %v74 = vld [vmem:[%s3 + $0x58] sm:$0xff]
  %v75 = vld [vmem:[%s3 + $0x60] sm:$0xff]
  %v76 = vld [vmem:[%s3 + $0x68] sm:$0xff]
  %v77 = vld [vmem:[%s3 + $0x70] sm:$0xff]
  %v78 = vld [vmem:[%s3 + $0x78] sm:$0xff]
  %v79 = vld [vmem:[%s4] sm:$0x3]
  %v81 = vlaneseq
  %v82 = vshrl.u32 %v81, 7
  %v83 = vsub.s32 0, %v82
  %v84 = vrot.slane %v79, %v83
  %v85 = vlaneseq
  %v86 = vshrl.u32 %v85, 7
  %v87 = vsub.s32 1, %v86
  %v88 = vrot.slane %v79, %v87
  %v107 = vunpack.c.l.b16 %v63
  %v108 = vunpack.c.h.b16 %v63
  %v109 = vunpack.c.l.b16 %v64
  %v110 = vunpack.c.h.b16 %v64
  %v111 = vunpack.c.l.b16 %v65
  %v112 = vunpack.c.h.b16 %v65
  %v113 = vunpack.c.l.b16 %v66
  %v114 = vunpack.c.h.b16 %v66
  %v115 = vunpack.c.l.b16 %v67
  %v116 = vunpack.c.h.b16 %v67
  %v117 = vunpack.c.l.b16 %v68
  %v118 = vunpack.c.h.b16 %v68
  %v119 = vunpack.c.l.b16 %v69
  %v120 = vunpack.c.h.b16 %v69
  %v121 = vunpack.c.l.b16 %v70
  %v122 = vunpack.c.h.b16 %v70
  %v123 = vunpack.c.l.b16 %v71
  %v124 = vunpack.c.h.b16 %v71
  %v125 = vunpack.c.l.b16 %v72
  %v126 = vunpack.c.h.b16 %v72
  %v127 = vunpack.c.l.b16 %v73
  %v128 = vunpack.c.h.b16 %v73
  %v129 = vunpack.c.l.b16 %v74
  %v130 = vunpack.c.h.b16 %v74
  %v131 = vunpack.c.l.b16 %v75
  %v132 = vunpack.c.h.b16 %v75
  %v133 = vunpack.c.l.b16 %v76
  %v134 = vunpack.c.h.b16 %v76
  %v135 = vunpack.c.l.b16 %v77
  %v136 = vunpack.c.h.b16 %v77
  %v137 = vunpack.c.l.b16 %v78
  %v138 = vunpack.c.h.b16 %v78
  %v139 = vpack.c.b16 %v109, %v107
  %v140 = vpack.c.b16 %v110, %v108
  %v141 = vpack.c.b16 %v113, %v111
  %v142 = vpack.c.b16 %v114, %v112
  %v143 = vpack.c.b16 %v117, %v115
  %v144 = vpack.c.b16 %v118, %v116
  %v145 = vpack.c.b16 %v121, %v119
  %v146 = vpack.c.b16 %v122, %v120
  %v147 = vpack.c.b16 %v125, %v123
  %v148 = vpack.c.b16 %v126, %v124
  %v149 = vpack.c.b16 %v129, %v127
  %v150 = vpack.c.b16 %v130, %v128
  %v151 = vpack.c.b16 %v133, %v131
  %v152 = vpack.c.b16 %v134, %v132
  %v153 = vpack.c.b16 %v137, %v135
  %v154 = vpack.c.b16 %v138, %v136
  %171 = vmatprep.subr.bf16.mxu0 %v154
  %172 = vmatpush1.bf16.msra.mxu0 %v153
  %173 = vmatprep.subr.bf16.mxu0 %v152
  %174 = vmatpush1.bf16.msra.mxu0 %v151
  %175 = vmatprep.subr.bf16.mxu0 %v150
  %176 = vmatpush1.bf16.msra.mxu0 %v149
  %177 = vmatprep.subr.bf16.mxu0 %v148
  %178 = vmatpush1.bf16.msra.mxu0 %v147
  %179 = vmatprep.subr.bf16.mxu0 %v146
  %180 = vmatpush1.bf16.msra.mxu0 %v145
  %181 = vmatprep.subr.bf16.mxu0 %v144
  %182 = vmatpush1.bf16.msra.mxu0 %v143
  %183 = vmatprep.subr.bf16.mxu0 %v142
  %184 = vmatpush1.bf16.msra.mxu0 %v141
  %185 = vmatprep.subr.bf16.mxu0 %v140
  %186 = vmatpush1.bf16.msra.mxu0 %v139
  %187 = vmatprep.subr.bf16.mxu0 0
  %188 = vmatpush2.bf16.msra.mxu0 0
  %189 = vmatprep.subr.bf16.mxu0 0
  %190 = vmatpush2.bf16.msra.mxu0 0
  %191 = vmatprep.subr.bf16.mxu0 0
  %192 = vmatpush2.bf16.msra.mxu0 0
  %193 = vmatprep.subr.bf16.mxu0 0
  %194 = vmatpush2.bf16.msra.mxu0 0
  %195 = vmatprep.subr.bf16.mxu0 0
  %196 = vmatpush2.bf16.msra.mxu0 0
  %197 = vmatprep.subr.bf16.mxu0 0
  %198 = vmatpush2.bf16.msra.mxu0 0
  %199 = vmatprep.subr.bf16.mxu0 0
  %200 = vmatpush2.bf16.msra.mxu0 0
  %201 = vmatprep.subr.bf16.mxu0 0
  %202 = vmatpush2.bf16.msra.mxu0 0
  %203 = vmatprep.mubr.bf16.mxu0 0
  %204 = vmatmul.mubr.bf16.gmra.mxu0 %v62
  %v205 = vpop.f32.mrf.mxu0
  %v206 = vadd.f32 %v84, %v205
  %v207 = vpop.f32.mrf.mxu0
  %v208 = vadd.f32 %v88, %v207
  %v209 = vpop.f32.mrf.mxu0
  %v210 = vpop.f32.mrf.mxu0
  %211 = vdwg.mxu0
  %v212 = vmul.f32 %v206, %v206
  %v213 = vmul.f32 %v208, %v208
  %v214 = vmul.f32 %v206, %v212
  %v215 = vmul.f32 %v208, %v213
  %v216 = vmul.f32 %v214, 0.044715
  %v217 = vmul.f32 %v215, 0.044715
  %v218 = vadd.f32 %v206, %v216
  %v219 = vadd.f32 %v208, %v217
  %v220 = vmul.f32 %v218, 0.7978846
  %v221 = vmul.f32 %v219, 0.7978846
  %v222 = vtanh.pop %v220
  %v223 = vtanh.pop %v221
  %v224 = vadd.f32 %v222, 1.0
  %v225 = vadd.f32 %v223, 1.0
  %v226 = vmul.f32 %v224, 0.5
  %v227 = vmul.f32 %v225, 0.5
  %v228 = vmul.f32 %v206, %v226
  %v229 = vmul.f32 %v208, %v227
  %v230 = vld [vmem:[#allocation2] sm:$0xff]
  %v231 = vpack.c.bf16 %v228, %v228
  %v232 = vpack.c.bf16 %v229, %v229
  %v233 = vld [vmem:[%s5] sm:$0xf]
  %v234 = vld [vmem:[%s5 + $0x4] sm:$0xf]
  %v235 = vld [vmem:[%s5 + $0x8] sm:$0xf]
  %v236 = vld [vmem:[%s5 + $0xc] sm:$0xf]
  %v237 = vld [vmem:[%s5 + $0x10] sm:$0xf]
  %v238 = vld [vmem:[%s5 + $0x14] sm:$0xf]
  %v239 = vld [vmem:[%s5 + $0x18] sm:$0xf]
  %v240 = vld [vmem:[%s5 + $0x1c] sm:$0xf]
  %v241 = vld [vmem:[%s5 + $0x20] sm:$0xf]
  %v242 = vld [vmem:[%s5 + $0x24] sm:$0xf]
  %v243 = vld [vmem:[%s5 + $0x28] sm:$0xf]
  %v244 = vld [vmem:[%s5 + $0x2c] sm:$0xf]
  %v245 = vld [vmem:[%s5 + $0x30] sm:$0xf]
  %v246 = vld [vmem:[%s5 + $0x34] sm:$0xf]
  %v247 = vld [vmem:[%s5 + $0x38] sm:$0xf]
  %v248 = vld [vmem:[%s5 + $0x3c] sm:$0xf]
  %v249 = vld [vmem:[%s5 + $0x40] sm:$0xf]
  %v250 = vld [vmem:[%s5 + $0x44] sm:$0xf]
  %v251 = vld [vmem:[%s5 + $0x48] sm:$0xf]
  %v252 = vld [vmem:[%s5 + $0x4c] sm:$0xf]
  %v253 = vld [vmem:[%s5 + $0x50] sm:$0xf]
  %v254 = vld [vmem:[%s5 + $0x54] sm:$0xf]
  %v255 = vld [vmem:[%s5 + $0x58] sm:$0xf]
  %v256 = vld [vmem:[%s5 + $0x5c] sm:$0xf]
  %v257 = vld [vmem:[%s5 + $0x60] sm:$0xf]
  %v258 = vld [vmem:[%s5 + $0x64] sm:$0xf]
  %v259 = vld [vmem:[%s5 + $0x68] sm:$0xf]
  %v260 = vld [vmem:[%s5 + $0x6c] sm:$0xf]
  %v261 = vld [vmem:[%s5 + $0x70] sm:$0xf]
  %v262 = vld [vmem:[%s5 + $0x74] sm:$0xf]
  %v263 = vld [vmem:[%s5 + $0x78] sm:$0xf]
  %v264 = vld [vmem:[%s5 + $0x7c] sm:$0xf]
  %v297 = vunpack.c.l.b16 %v233
  %v298 = vunpack.c.l.b16 %v234
  %v299 = vunpack.c.l.b16 %v235
  %v300 = vunpack.c.l.b16 %v236
  %v301 = vunpack.c.l.b16 %v237
  %v302 = vunpack.c.l.b16 %v238
  %v303 = vunpack.c.l.b16 %v239
  %v304 = vunpack.c.l.b16 %v240
  %v305 = vunpack.c.l.b16 %v241
  %v306 = vunpack.c.l.b16 %v242
  %v307 = vunpack.c.l.b16 %v243
  %v308 = vunpack.c.l.b16 %v244
  %v309 = vunpack.c.l.b16 %v245
  %v310 = vunpack.c.l.b16 %v246
  %v311 = vunpack.c.l.b16 %v247
  %v312 = vunpack.c.l.b16 %v248
  %v313 = vunpack.c.l.b16 %v249
  %v314 = vunpack.c.l.b16 %v250
  %v315 = vunpack.c.l.b16 %v251
  %v316 = vunpack.c.l.b16 %v252
  %v317 = vunpack.c.l.b16 %v253
  %v318 = vunpack.c.l.b16 %v254
  %v319 = vunpack.c.l.b16 %v255
  %v320 = vunpack.c.l.b16 %v256
  %v321 = vunpack.c.l.b16 %v257
  %v322 = vunpack.c.l.b16 %v258
  %v323 = vunpack.c.l.b16 %v259
  %v324 = vunpack.c.l.b16 %v260
  %v325 = vunpack.c.l.b16 %v261
  %v326 = vunpack.c.l.b16 %v262
  %v327 = vunpack.c.l.b16 %v263
  %v328 = vunpack.c.l.b16 %v264
  %v329 = vpack.c.b16 %v298, %v297
  %v330 = vpack.c.b16 %v300, %v299
  %v331 = vpack.c.b16 %v302, %v301
  %v332 = vpack.c.b16 %v304, %v303
  %v333 = vpack.c.b16 %v306, %v305
  %v334 = vpack.c.b16 %v308, %v307
  %v335 = vpack.c.b16 %v310, %v309
  %v336 = vpack.c.b16 %v312, %v311
  %v337 = vpack.c.b16 %v314, %v313
  %v338 = vpack.c.b16 %v316, %v315
  %v339 = vpack.c.b16 %v318, %v317
  %v340 = vpack.c.b16 %v320, %v319
  %v341 = vpack.c.b16 %v322, %v321
  %v342 = vpack.c.b16 %v324, %v323
  %v343 = vpack.c.b16 %v326, %v325
  %v344 = vpack.c.b16 %v328, %v327
  %361 = vmatprep.subr.bf16.mxu0 0
  %362 = vmatpush1.bf16.msra.mxu0 %v336
  %363 = vmatprep.subr.bf16.mxu0 0
  %364 = vmatpush1.bf16.msra.mxu0 %v335
  %365 = vmatprep.subr.bf16.mxu0 0
  %366 = vmatpush1.bf16.msra.mxu0 %v334
  %367 = vmatprep.subr.bf16.mxu0 0
  %368 = vmatpush1.bf16.msra.mxu0 %v333
  %369 = vmatprep.subr.bf16.mxu0 0
  %370 = vmatpush1.bf16.msra.mxu0 %v332
  %371 = vmatprep.subr.bf16.mxu0 0
  %372 = vmatpush1.bf16.msra.mxu0 %v331
  %373 = vmatprep.subr.bf16.mxu0 0
  %374 = vmatpush1.bf16.msra.mxu0 %v330
  %375 = vmatprep.subr.bf16.mxu0 0
  %376 = vmatpush1.bf16.msra.mxu0 %v329
  %377 = vmatprep.subr.bf16.mxu0 0
  %378 = vmatpush2.bf16.msra.mxu0 %v344
  %379 = vmatprep.subr.bf16.mxu0 0
  %380 = vmatpush2.bf16.msra.mxu0 %v343
  %381 = vmatprep.subr.bf16.mxu0 0
  %382 = vmatpush2.bf16.msra.mxu0 %v342
  %383 = vmatprep.subr.bf16.mxu0 0
  %384 = vmatpush2.bf16.msra.mxu0 %v341
  %385 = vmatprep.subr.bf16.mxu0 0
  %386 = vmatpush2.bf16.msra.mxu0 %v340
  %387 = vmatprep.subr.bf16.mxu0 0
  %388 = vmatpush2.bf16.msra.mxu0 %v339
  %389 = vmatprep.subr.bf16.mxu0 0
  %390 = vmatpush2.bf16.msra.mxu0 %v338
  %391 = vmatprep.subr.bf16.mxu0 0
  %392 = vmatpush2.bf16.msra.mxu0 %v337
  %393 = vmatprep.mubr.bf16.mxu0 %v232
  %394 = vmatmul.mubr.bf16.gmra.mxu0 %v231
  %v395 = vpop.f32.mrf.mxu0
  %v396 = vadd.f32 0.0, %v395
  %v397 = vpop.f32.mrf.mxu0
  %v398 = vpop.f32.mrf.mxu0
  %v399 = vpop.f32.mrf.mxu0
  %400 = vdwg.mxu0
  %v401 = vadd.f32 %v230, %v396
  %402 = vst [vmem:[#allocation2] sm:$0xff] %v401
  // Predicated region
  $region34: #{paligemma_forward.24} parent=0 // pred_check
    %p403 = pneg %p27
  $region35: #{paligemma_forward.24} parent=0 // pred_check_branch
    %405 = sbr.rel (%p403) target = $region37
  $region36: #{paligemma_forward.24} parent=0 // pred_region
    %v406 = vld [vmem:[#allocation2] sm:$0xff]
    %v407 = vld [vmem:[%s6] sm:$0x1]
    %v409 = vlaneseq
    %v410 = vshrl.u32 %v409, 7
    %v411 = vsub.s32 0, %v410
    %v412 = vrot.slane %v407, %v411
    %v414 = vadd.f32 %v406, %v412
    %v415 = vadd.f32 %v414, %v33
    %v416 = vpack.c.bf16 %v415, %v415
    %417 = vst [vmem:[%s7] sm:$0xf] %v416
  $region37: #{paligemma_forward.24} parent=0 // pred_fallthru
    _
  // Predicated region
  $region38: #{paligemma_forward.24} parent=0 // pred_check
    _
  $region39: #{paligemma_forward.24} parent=0 // pred_check_branch
    %419 = sbr.rel (0) target = $region41
  $region40: #{paligemma_forward.24} parent=0 // pred_region
    _
  $region41: #{paligemma_forward.24} parent=0 // pred_fallthru
    _
  // Predicated region
  $region42: #{paligemma_forward.24} parent=0 // pred_check
    _
  $region43: #{paligemma_forward.24} parent=0 // pred_check_branch
    %421 = sbr.rel (0) target = $region45
  $region44: #{paligemma_forward.24} parent=0 // pred_region
    _
  $region45: #{paligemma_forward.24} parent=0 // pred_fallthru
    _

// kernel: paligemma_forward.30
$region0: #{paligemma_forward.30}
  #allocation0 [shape = 'u32[]', space=smem, size = 0x4, offset = 0x4, fixed_abs, tag = 'smem constant byte address 0x4 - core index']
  #allocation1 [shape = 'u32[144,128]{1,0:T(1,128)}', space=vmem, size = 0x12000, scoped, tag = 'internal scratch']
  %s0 = inlined_call_operand.vmem [shape: bf16[16,128], index: 0, kind: input, shape index: {}]
  %s1 = inlined_call_operand.vmem [shape: bf16[16,128], index: 1, kind: input, shape index: {}]
  %s2 = inlined_call_operand.vmem [shape: s32[16,1], index: 2, kind: input, shape index: {}]
  %s3 = inlined_call_operand.vmem [shape: s32[16,1], index: 3, kind: input, shape index: {}]
  %s4 = inlined_call_operand.vmem [shape: bf16[16,128], index: 4, kind: output, shape index: {}]
  %s5 = sld [smem:[#allocation0]]
  $region26: #{paligemma_forward.30} parent=0
    _
  %s7 = ssub.s32 1, %s5
  %s8 = scalar_select 0, %s7, %s5
  // Predicated region
  $region2: #{paligemma_forward.30} parent=0 // pred_check
    _
  $region3: #{paligemma_forward.30} parent=0 // pred_check_branch
    %10 = sbr.rel (0) target = $region5
  $region4: #{paligemma_forward.30} parent=0 // pred_region
    _
  $region5: #{paligemma_forward.30} parent=0 // pred_fallthru
    _
  // Predicated region
  $region6: #{paligemma_forward.30} parent=0 // pred_check
    _
  $region7: #{paligemma_forward.30} parent=0 // pred_check_branch
    %12 = sbr.rel (0) target = $region9
  $region8: #{paligemma_forward.30} parent=0 // pred_region
    _
  $region9: #{paligemma_forward.30} parent=0 // pred_fallthru
    _
  // Predicated region
  $region10: #{paligemma_forward.30} parent=0 // pred_check
    _
  $region11: #{paligemma_forward.30} parent=0 // pred_check_branch
    %14 = sbr.rel (0) target = $region13
  $region12: #{paligemma_forward.30} parent=0 // pred_region
    _
  $region13: #{paligemma_forward.30} parent=0 // pred_fallthru
    _
  // Predicated region
  $region14: #{paligemma_forward.30} parent=0 // pred_check
    _
  $region15: #{paligemma_forward.30} parent=0 // pred_check_branch
    %16 = sbr.rel (0) target = $region17
  $region16: #{paligemma_forward.30} parent=0 // pred_region
    _
  $region17: #{paligemma_forward.30} parent=0 // pred_fallthru
    _
  %v17 = vld [vmem:[%s0] sm:$0xf]
  %v18 = vld [vmem:[%s0 + $0x4] sm:$0xf]
  %v19 = vunpack.c.l.bf16 %v17
  %v20 = vunpack.c.l.bf16 %v18
  %v21 = vld [vmem:[%s1] sm:$0xf]
  %v22 = vld [vmem:[%s1 + $0x4] sm:$0xf]
  %v23 = vunpack.c.l.bf16 %v21
  %v24 = vunpack.c.l.bf16 %v22
  %v25 = vmul.f32 %v23, 0.088388346
  %v26 = vmul.f32 %v24, 0.088388346
  %v27 = vld [vmem:[%s2] sm:$0xff]
  %v28 = vld [vmem:[%s2 + $0x8] sm:$0xff]
  %vm29 = vcmp.ne.s32.totalorder %v27, 0
  %vm30 = vcmp.ne.s32.totalorder %v28, 0
  %v31 = vld [vmem:[%s3] sm:$0xff]
  %v32 = vld [vmem:[%s3 + $0x8] sm:$0xff]
  %vm33 = vcmp.ne.s32.totalorder %v31, 0
  %vm34 = vcmp.ne.s32.totalorder %v32, 0
  %v35 = vsel %vm29, 1, 0
  %v36 = vsel %vm30, 1, 0
  %37 = vset.pattern.permute.xlu0 0
  %38 = vperm.xlu0 %37, %v35
  %v39 = vpop.permute.xlu0 %38
  %40 = vset.pattern.permute.xlu0 0
  %41 = vperm.xlu0 %40, %v36
  %v42 = vpop.permute.xlu0 %41
  %vm43 = vcmp.eq.s32.totalorder %v39, 1
  %vm44 = vcmp.eq.s32.totalorder %v42, 1
  %v45 = vsel %vm43, %v19, 0.0
  %v46 = vsel %vm44, %v20, 0.0
  %v47 = vsel %vm33, 1, 0
  %v48 = vsel %vm34, 1, 0
  %49 = vset.pattern.permute.xlu0 0
  %50 = vperm.xlu0 %49, %v47
  %v51 = vpop.permute.xlu0 %50
  %52 = vset.pattern.permute.xlu0 0
  %53 = vperm.xlu0 %52, %v48
  %v54 = vpop.permute.xlu0 %53
  %vm55 = vcmp.eq.s32.totalorder %v51, 1
  %vm56 = vcmp.eq.s32.totalorder %v54, 1
  %v57 = vsel %vm55, %v25, 0.0
  %v58 = vsel %vm56, %v26, 0.0
  %v59 = vadd.f32 %v45, %v57
  %v60 = vadd.f32 %v46, %v58
  %v61 = vmul.f32 %v59, 11.313708
  %v62 = vmul.f32 %v60, 11.313708
  %v63 = vpack.c.bf16 %v62, %v61
  %v65 = vunpack.c.l.b16 %v63
  %v66 = vunpack.c.h.b16 %v63
  %v67 = vpack.c.b16 %v65, %v65
  %v68 = vpack.c.b16 %v66, %v66
  %71 = vst [vmem:[%s4] sm:$0xf] %v67
  %72 = vst [vmem:[%s4 + $0x4] sm:$0xf] %v68
  // Predicated region
  $region18: #{paligemma_forward.30} parent=0 // pred_check
    _
  $region19: #{paligemma_forward.30} parent=0 // pred_check_branch
    %74 = sbr.rel (0) target = $region21
  $region20: #{paligemma_forward.30} parent=0 // pred_region
    _
  $region21: #{paligemma_forward.30} parent=0 // pred_fallthru
    _
  // Predicated region
  $region22: #{paligemma_forward.30} parent=0 // pred_check
    _
  $region23: #{paligemma_forward.30} parent=0 // pred_check_branch
    %76 = sbr.rel (0) target = $region25
  $region24: #{paligemma_forward.30} parent=0 // pred_region
    _
  $region25: #{paligemma_forward.30} parent=0 // pred_fallthru
    _

// kernel: paligemma_forward.31
$region0: #{paligemma_forward.31}
  #allocation0 [shape = 'u32[]', space=smem, size = 0x4, offset = 0x4, fixed_abs, tag = 'smem constant byte address 0x4 - core index']
  #allocation1 [shape = 'u32[144,128]{1,0:T(1,128)}', space=vmem, size = 0x12000, scoped, tag = 'internal scratch']
  %s0 = inlined_call_operand.vmem [shape: bf16[16,128], index: 0, kind: input, shape index: {}]
  %s1 = inlined_call_operand.vmem [shape: f32[1,128], index: 1, kind: input, shape index: {}]
  %s2 = inlined_call_operand.vmem [shape: bf16[128,256], index: 2, kind: input, shape index: {}]
  %s3 = inlined_call_operand.vmem [shape: bf16[16,256], index: 3, kind: output, shape index: {}]
  %s4 = sld [smem:[#allocation0]]
  $region22: #{paligemma_forward.31} parent=0
    _
  %s6 = ssub.s32 1, %s4
  %s7 = scalar_select 0, %s6, %s4
  // Predicated region
  $region2: #{paligemma_forward.31} parent=0 // pred_check
    _
  $region3: #{paligemma_forward.31} parent=0 // pred_check_branch
    %9 = sbr.rel (0) target = $region5
  $region4: #{paligemma_forward.31} parent=0 // pred_region
    _
  $region5: #{paligemma_forward.31} parent=0 // pred_fallthru
    _
  // Predicated region
  $region6: #{paligemma_forward.31} parent=0 // pred_check
    _
  $region7: #{paligemma_forward.31} parent=0 // pred_check_branch
    %11 = sbr.rel (0) target = $region9
  $region8: #{paligemma_forward.31} parent=0 // pred_region
    _
  $region9: #{paligemma_forward.31} parent=0 // pred_fallthru
    _
  // Predicated region
  $region10: #{paligemma_forward.31} parent=0 // pred_check
    _
  $region11: #{paligemma_forward.31} parent=0 // pred_check_branch
    %13 = sbr.rel (0) target = $region13
  $region12: #{paligemma_forward.31} parent=0 // pred_region
    _
  $region13: #{paligemma_forward.31} parent=0 // pred_fallthru
    _
  %v15 = vld [vmem:[%s0] sm:$0xf]
  %v16 = vld [vmem:[%s0 + $0x4] sm:$0xf]
  %v17 = vunpack.c.l.bf16 %v15
  %v18 = vunpack.c.l.bf16 %v16
  %v19 = vmul.f32 %v17, %v17
  %v20 = vmul.f32 %v18, %v18
  %21 = vadd.xlane.f32.xlu0 %v19
  %v22 = vpop.xlane.xlu0 %21
  %23 = vadd.xlane.f32.xlu0 %v20
  %v24 = vpop.xlane.xlu0 %23
  %v25 = vrcp.pop 128.0
  %v26 = vmul.f32 %v22, %v25
  %v27 = vmul.f32 %v24, %v25
  %v28 = vadd.f32 %v26, 1e-06
  %v29 = vadd.f32 %v27, 1e-06
  %v30 = vrsqrt.pop %v28
  %v31 = vrsqrt.pop %v29
  %v32 = vmul.f32 %v17, %v30
  %v33 = vmul.f32 %v18, %v31
  %v34 = vld [vmem:[%s1] sm:$0x1]
  %v35 = vadd.f32 %v34, 1.0
  %v37 = vlaneseq
  %v38 = vshrl.u32 %v37, 7
  %v39 = vsub.s32 0, %v38
  %v40 = vrot.slane %v35, %v39
  %v42 = vmul.f32 %v32, %v40
  %v43 = vmul.f32 %v33, %v40
  %v44 = vpack.c.bf16 %v43, %v42
  %v45 = vld [vmem:[%s2] sm:$0xff]
  %v46 = vld [vmem:[%s2 + $0x8] sm:$0xff]
  %v47 = vld [vmem:[%s2 + $0x10] sm:$0xff]
  %v48 = vld [vmem:[%s2 + $0x18] sm:$0xff]
  %v49 = vld [vmem:[%s2 + $0x20] sm:$0xff]
  %v50 = vld [vmem:[%s2 + $0x28] sm:$0xff]
  %v51 = vld [vmem:[%s2 + $0x30] sm:$0xff]
  %v52 = vld [vmem:[%s2 + $0x38] sm:$0xff]
  %v53 = vld [vmem:[%s2 + $0x40] sm:$0xff]
  %v54 = vld [vmem:[%s2 + $0x48] sm:$0xff]
  %v55 = vld [vmem:[%s2 + $0x50] sm:$0xff]
  %v56 = vld [vmem:[%s2 + $0x58] sm:$0xff]
  %v57 = vld [vmem:[%s2 + $0x60] sm:$0xff]
  %v58 = vld [vmem:[%s2 + $0x68] sm:$0xff]
  %v59 = vld [vmem:[%s2 + $0x70] sm:$0xff]
  %v60 = vld [vmem:[%s2 + $0x78] sm:$0xff]
  %v77 = vunpack.c.l.b16 %v45
  %v78 = vunpack.c.h.b16 %v45
  %v79 = vunpack.c.l.b16 %v46
  %v80 = vunpack.c.h.b16 %v46
  %v81 = vunpack.c.l.b16 %v47
  %v82 = vunpack.c.h.b16 %v47
  %v83 = vunpack.c.l.b16 %v48
  %v84 = vunpack.c.h.b16 %v48
  %v85 = vunpack.c.l.b16 %v49
  %v86 = vunpack.c.h.b16 %v49
  %v87 = vunpack.c.l.b16 %v50
  %v88 = vunpack.c.h.b16 %v50
  %v89 = vunpack.c.l.b16 %v51
  %v90 = vunpack.c.h.b16 %v51
  %v91 = vunpack.c.l.b16 %v52
  %v92 = vunpack.c.h.b16 %v52
  %v93 = vunpack.c.l.b16 %v53
  %v94 = vunpack.c.h.b16 %v53
  %v95 = vunpack.c.l.b16 %v54
  %v96 = vunpack.c.h.b16 %v54
  %v97 = vunpack.c.l.b16 %v55
  %v98 = vunpack.c.h.b16 %v55
  %v99 = vunpack.c.l.b16 %v56
  %v100 = vunpack.c.h.b16 %v56
  %v101 = vunpack.c.l.b16 %v57
  %v102 = vunpack.c.h.b16 %v57
  %v103 = vunpack.c.l.b16 %v58
  %v104 = vunpack.c.h.b16 %v58
  %v105 = vunpack.c.l.b16 %v59
  %v106 = vunpack.c.h.b16 %v59
  %v107 = vunpack.c.l.b16 %v60
  %v108 = vunpack.c.h.b16 %v60
  %v109 = vpack.c.b16 %v79, %v77
  %v110 = vpack.c.b16 %v80, %v78
  %v111 = vpack.c.b16 %v83, %v81
  %v112 = vpack.c.b16 %v84, %v82
  %v113 = vpack.c.b16 %v87, %v85
  %v114 = vpack.c.b16 %v88, %v86
  %v115 = vpack.c.b16 %v91, %v89
  %v116 = vpack.c.b16 %v92, %v90
  %v117 = vpack.c.b16 %v95, %v93
  %v118 = vpack.c.b16 %v96, %v94
  %v119 = vpack.c.b16 %v99, %v97
  %v120 = vpack.c.b16 %v100, %v98
  %v121 = vpack.c.b16 %v103, %v101
  %v122 = vpack.c.b16 %v104, %v102
  %v123 = vpack.c.b16 %v107, %v105
  %v124 = vpack.c.b16 %v108, %v106
  %141 = vmatprep.subr.bf16.mxu0 %v124
  %142 = vmatpush1.bf16.msra.mxu0 %v123
  %143 = vmatprep.subr.bf16.mxu0 %v122
  %144 = vmatpush1.bf16.msra.mxu0 %v121
  %145 = vmatprep.subr.bf16.mxu0 %v120
  %146 = vmatpush1.bf16.msra.mxu0 %v119
  %147 = vmatprep.subr.bf16.mxu0 %v118
  %148 = vmatpush1.bf16.msra.mxu0 %v117
  %149 = vmatprep.subr.bf16.mxu0 %v116
  %150 = vmatpush1.bf16.msra.mxu0 %v115
  %151 = vmatprep.subr.bf16.mxu0 %v114
  %152 = vmatpush1.bf16.msra.mxu0 %v113
  %153 = vmatprep.subr.bf16.mxu0 %v112
  %154 = vmatpush1.bf16.msra.mxu0 %v111
  %155 = vmatprep.subr.bf16.mxu0 %v110
  %156 = vmatpush1.bf16.msra.mxu0 %v109
  %157 = vmatprep.subr.bf16.mxu0 0
  %158 = vmatpush2.bf16.msra.mxu0 0
  %159 = vmatprep.subr.bf16.mxu0 0
  %160 = vmatpush2.bf16.msra.mxu0 0
  %161 = vmatprep.subr.bf16.mxu0 0
  %162 = vmatpush2.bf16.msra.mxu0 0
  %163 = vmatprep.subr.bf16.mxu0 0
  %164 = vmatpush2.bf16.msra.mxu0 0
  %165 = vmatprep.subr.bf16.mxu0 0
  %166 = vmatpush2.bf16.msra.mxu0 0
  %167 = vmatprep.subr.bf16.mxu0 0
  %168 = vmatpush2.bf16.msra.mxu0 0
  %169 = vmatprep.subr.bf16.mxu0 0
  %170 = vmatpush2.bf16.msra.mxu0 0
  %171 = vmatprep.subr.bf16.mxu0 0
  %172 = vmatpush2.bf16.msra.mxu0 0
  %173 = vmatprep.mubr.bf16.mxu0 0
  %174 = vmatmul.mubr.bf16.gmra.mxu0 %v44
  %v175 = vpop.f32.mrf.mxu0
  %v176 = vadd.f32 0.0, %v175
  %v177 = vpop.f32.mrf.mxu0
  %v178 = vadd.f32 0.0, %v177
  %v179 = vpop.f32.mrf.mxu0
  %v180 = vadd.f32 0.0, %v179
  %v181 = vpop.f32.mrf.mxu0
  %v182 = vadd.f32 0.0, %v181
  %183 = vdwg.mxu0
  %v184 = vpack.c.bf16 %v180, %v176
  %v185 = vpack.c.bf16 %v182, %v178
  %v188 = vunpack.c.l.b16 %v184
  %v189 = vunpack.c.l.b16 %v185
  %v190 = vunpack.c.h.b16 %v184
  %v191 = vunpack.c.h.b16 %v185
  %v192 = vpack.c.b16 %v189, %v188
  %v193 = vpack.c.b16 %v191, %v190
  %196 = vst [vmem:[%s3] sm:$0xff] %v192
  %197 = vst [vmem:[%s3 + $0x8] sm:$0xff] %v193
  // Predicated region
  $region14: #{paligemma_forward.31} parent=0 // pred_check
    _
  $region15: #{paligemma_forward.31} parent=0 // pred_check_branch
    %199 = sbr.rel (0) target = $region17
  $region16: #{paligemma_forward.31} parent=0 // pred_region
    _
  $region17: #{paligemma_forward.31} parent=0 // pred_fallthru
    _
  // Predicated region
  $region18: #{paligemma_forward.31} parent=0 // pred_check
    _
  $region19: #{paligemma_forward.31} parent=0 // pred_check_branch
    %201 = sbr.rel (0) target = $region21
  $region20: #{paligemma_forward.31} parent=0 // pred_region
    _
  $region21: #{paligemma_forward.31} parent=0 // pred_fallthru
    _

// kernel: paligemma_forward.33
$region0: #{paligemma_forward.33}
  #allocation0 [shape = 'u32[]', space=smem, size = 0x4, offset = 0x4, fixed_abs, tag = 'smem constant byte address 0x4 - core index']
  #allocation1 [shape = 'u32[144,128]{1,0:T(1,128)}', space=vmem, size = 0x12000, scoped, tag = 'internal scratch']
  #allocation2 [shape = 'f32[16,128]{1,0:T(8,128)}', space=vmem, size = 0x2000, scoped, tag = 'scratch operand']
  %s0 = inlined_call_operand.vmem [shape: bf16[16,128], index: 0, kind: input, shape index: {}]
  %s1 = inlined_call_operand.vmem [shape: bf16[128,128], index: 1, kind: input, shape index: {}]
  %s2 = inlined_call_operand.vmem [shape: bf16[16,128], index: 2, kind: input, shape index: {}]
  %s3 = inlined_call_operand.vmem [shape: bf16[16,128], index: 3, kind: output, shape index: {}]
  %s4 = sld [smem:[#allocation0]]
  $region30: #{paligemma_forward.33} parent=0
    _
  %s6 = ssub.s32 1, %s4
  %s7 = scalar_select 0, %s6, %s4
  // Predicated region
  $region2: #{paligemma_forward.33} parent=0 // pred_check
    _
  $region3: #{paligemma_forward.33} parent=0 // pred_check_branch
    %9 = sbr.rel (0) target = $region5
  $region4: #{paligemma_forward.33} parent=0 // pred_region
    _
  $region5: #{paligemma_forward.33} parent=0 // pred_fallthru
    _
  // Predicated region
  $region6: #{paligemma_forward.33} parent=0 // pred_check
    _
  $region7: #{paligemma_forward.33} parent=0 // pred_check_branch
    %11 = sbr.rel (0) target = $region9
  $region8: #{paligemma_forward.33} parent=0 // pred_region
    _
  $region9: #{paligemma_forward.33} parent=0 // pred_fallthru
    _
  // Predicated region
  $region10: #{paligemma_forward.33} parent=0 // pred_check
    _
  $region11: #{paligemma_forward.33} parent=0 // pred_check_branch
    %13 = sbr.rel (0) target = $region13
  $region12: #{paligemma_forward.33} parent=0 // pred_region
    _
  $region13: #{paligemma_forward.33} parent=0 // pred_fallthru
    _
  %p15 = scmp.eq.s32.totalorder 0, 0
  // Predicated region
  $region14: #{paligemma_forward.33} parent=0 // pred_check
    %p16 = pneg %p15
  $region15: #{paligemma_forward.33} parent=0 // pred_check_branch
    %18 = sbr.rel (%p16) target = $region17
  $region16: #{paligemma_forward.33} parent=0 // pred_region
    %19 = vst [vmem:[#allocation2] sm:$0xff] 0.0
    %20 = vst [vmem:[#allocation2 + $0x8] sm:$0xff] 0.0
  $region17: #{paligemma_forward.33} parent=0 // pred_fallthru
    _
  %v21 = vld [vmem:[#allocation2] sm:$0xff]
  %v22 = vld [vmem:[#allocation2 + $0x8] sm:$0xff]
  %v23 = vld [vmem:[%s0] sm:$0xf]
  %v24 = vld [vmem:[%s0 + $0x4] sm:$0xf]
  %v25 = vld [vmem:[%s1] sm:$0xf]
  %v26 = vld [vmem:[%s1 + $0x4] sm:$0xf]
  %v27 = vld [vmem:[%s1 + $0x8] sm:$0xf]
  %v28 = vld [vmem:[%s1 + $0xc] sm:$0xf]
  %v29 = vld [vmem:[%s1 + $0x10] sm:$0xf]
  %v30 = vld [vmem:[%s1 + $0x14] sm:$0xf]
  %v31 = vld [vmem:[%s1 + $0x18] sm:$0xf]
  %v32 = vld [vmem:[%s1 + $0x1c] sm:$0xf]
  %v33 = vld [vmem:[%s1 + $0x20] sm:$0xf]
  %v34 = vld [vmem:[%s1 + $0x24] sm:$0xf]
  %v35 = vld [vmem:[%s1 + $0x28] sm:$0xf]
  %v36 = vld [vmem:[%s1 + $0x2c] sm:$0xf]
  %v37 = vld [vmem:[%s1 + $0x30] sm:$0xf]
  %v38 = vld [vmem:[%s1 + $0x34] sm:$0xf]
  %v39 = vld [vmem:[%s1 + $0x38] sm:$0xf]
  %v40 = vld [vmem:[%s1 + $0x3c] sm:$0xf]
  %v43 = vunpack.c.l.b16 %v23
  %v44 = vunpack.c.l.b16 %v24
  %v45 = vpack.c.b16 %v44, %v43
  %v63 = vunpack.c.l.b16 %v25
  %v64 = vunpack.c.l.b16 %v26
  %v65 = vunpack.c.l.b16 %v27
  %v66 = vunpack.c.l.b16 %v28
  %v67 = vunpack.c.l.b16 %v29
  %v68 = vunpack.c.l.b16 %v30
  %v69 = vunpack.c.l.b16 %v31
  %v70 = vunpack.c.l.b16 %v32
  %v71 = vunpack.c.l.b16 %v33
  %v72 = vunpack.c.l.b16 %v34
  %v73 = vunpack.c.l.b16 %v35
  %v74 = vunpack.c.l.b16 %v36
  %v75 = vunpack.c.l.b16 %v37
  %v76 = vunpack.c.l.b16 %v38
  %v77 = vunpack.c.l.b16 %v39
  %v78 = vunpack.c.l.b16 %v40
  %v79 = vpack.c.b16 %v64, %v63
  %v80 = vpack.c.b16 %v66, %v65
  %v81 = vpack.c.b16 %v68, %v67
  %v82 = vpack.c.b16 %v70, %v69
  %v83 = vpack.c.b16 %v72, %v71
  %v84 = vpack.c.b16 %v74, %v73
  %v85 = vpack.c.b16 %v76, %v75
  %v86 = vpack.c.b16 %v78, %v77
  %95 = vmatprep.subr.bf16.mxu0 0
  %96 = vmatpush1.bf16.msra.mxu0 %v86
  %97 = vmatprep.subr.bf16.mxu0 0
  %98 = vmatpush1.bf16.msra.mxu0 %v85
  %99 = vmatprep.subr.bf16.mxu0 0
  %100 = vmatpush1.bf16.msra.mxu0 %v84
  %101 = vmatprep.subr.bf16.mxu0 0
  %102 = vmatpush1.bf16.msra.mxu0 %v83
  %103 = vmatprep.subr.bf16.mxu0 0
  %104 = vmatpush1.bf16.msra.mxu0 %v82
  %105 = vmatprep.subr.bf16.mxu0 0
  %106 = vmatpush1.bf16.msra.mxu0 %v81
  %107 = vmatprep.subr.bf16.mxu0 0
  %108 = vmatpush1.bf16.msra.mxu0 %v80
  %109 = vmatprep.subr.bf16.mxu0 0
  %110 = vmatpush1.bf16.msra.mxu0 %v79
  %111 = vmatprep.subr.bf16.mxu0 0
  %112 = vmatpush2.bf16.msra.mxu0 0
  %113 = vmatprep.subr.bf16.mxu0 0
  %114 = vmatpush2.bf16.msra.mxu0 0
  %115 = vmatprep.subr.bf16.mxu0 0
  %116 = vmatpush2.bf16.msra.mxu0 0
  %117 = vmatprep.subr.bf16.mxu0 0
  %118 = vmatpush2.bf16.msra.mxu0 0
  %119 = vmatprep.subr.bf16.mxu0 0
  %120 = vmatpush2.bf16.msra.mxu0 0
  %121 = vmatprep.subr.bf16.mxu0 0
  %122 = vmatpush2.bf16.msra.mxu0 0
  %123 = vmatprep.subr.bf16.mxu0 0
  %124 = vmatpush2.bf16.msra.mxu0 0
  %125 = vmatprep.subr.bf16.mxu0 0
  %126 = vmatpush2.bf16.msra.mxu0 0
  %127 = vmatprep.mubr.bf16.mxu0 0
  %128 = vmatmul.mubr.bf16.gmra.mxu0 %v45
  %v129 = vpop.f32.mrf.mxu0
  %v130 = vadd.f32 0.0, %v129
  %v131 = vpop.f32.mrf.mxu0
  %v132 = vpop.f32.mrf.mxu0
  %v133 = vadd.f32 0.0, %v132
  %v134 = vpop.f32.mrf.mxu0
  %135 = vdwg.mxu0
  %v136 = vadd.f32 %v21, %v130
  %v137 = vadd.f32 %v22, %v133
  %138 = vst [vmem:[#allocation2] sm:$0xff] %v136
  %139 = vst [vmem:[#allocation2 + $0x8] sm:$0xff] %v137
  // Predicated region
  $region18: #{paligemma_forward.33} parent=0 // pred_check
    %p140 = pneg %p15
  $region19: #{paligemma_forward.33} parent=0 // pred_check_branch
    %142 = sbr.rel (%p140) target = $region21
  $region20: #{paligemma_forward.33} parent=0 // pred_region
    %v143 = vld [vmem:[#allocation2] sm:$0xff]
    %v144 = vld [vmem:[#allocation2 + $0x8] sm:$0xff]
    %v145 = vld [vmem:[%s2] sm:$0xf]
    %v146 = vld [vmem:[%s2 + $0x4] sm:$0xf]
    %v147 = vunpack.c.l.bf16 %v145
    %v148 = vunpack.c.l.bf16 %v146
    %v149 = vadd.f32 %v143, %v147
    %v150 = vadd.f32 %v144, %v148
    %v151 = vpack.c.bf16 %v150, %v149
    %v153 = vunpack.c.l.b16 %v151
    %v154 = vunpack.c.h.b16 %v151
    %v155 = vpack.c.b16 %v153, %v153
    %v156 = vpack.c.b16 %v154, %v154
    %159 = vst [vmem:[%s3] sm:$0xf] %v155
    %160 = vst [vmem:[%s3 + $0x4] sm:$0xf] %v156
  $region21: #{paligemma_forward.33} parent=0 // pred_fallthru
    _
  // Predicated region
  $region22: #{paligemma_forward.33} parent=0 // pred_check
    _
  $region23: #{paligemma_forward.33} parent=0 // pred_check_branch
    %162 = sbr.rel (0) target = $region25
  $region24: #{paligemma_forward.33} parent=0 // pred_region
    _
  $region25: #{paligemma_forward.33} parent=0 // pred_fallthru
    _
  // Predicated region
  $region26: #{paligemma_forward.33} parent=0 // pred_check
    _
  $region27: #{paligemma_forward.33} parent=0 // pred_check_branch
    %164 = sbr.rel (0) target = $region29
  $region28: #{paligemma_forward.33} parent=0 // pred_region
    _
  $region29: #{paligemma_forward.33} parent=0 // pred_fallthru
    _

// kernel: paligemma_forward.34
$region0: #{paligemma_forward.34}
  #allocation0 [shape = 'u32[]', space=smem, size = 0x4, offset = 0x4, fixed_abs, tag = 'smem constant byte address 0x4 - core index']
  #allocation1 [shape = 'u32[144,128]{1,0:T(1,128)}', space=vmem, size = 0x12000, scoped, tag = 'internal scratch']
  #allocation2 [shape = 'f32[16,128]{1,0:T(8,128)}', space=vmem, size = 0x2000, scoped, tag = 'scratch operand']
  %s0 = inlined_call_operand.vmem [shape: bf16[16,128], index: 0, kind: input, shape index: {}]
  %s1 = inlined_call_operand.vmem [shape: f32[1,128], index: 1, kind: input, shape index: {}]
  %s2 = inlined_call_operand.vmem [shape: bf16[128,256], index: 2, kind: input, shape index: {}]
  %s3 = inlined_call_operand.vmem [shape: bf16[128,256], index: 3, kind: input, shape index: {}]
  %s4 = inlined_call_operand.vmem [shape: bf16[256,128], index: 4, kind: input, shape index: {}]
  %s5 = inlined_call_operand.vmem [shape: bf16[16,128], index: 5, kind: output, shape index: {}]
  %s6 = sld [smem:[#allocation0]]
  $region38: #{paligemma_forward.34} parent=0
    _
  %s8 = ssub.s32 1, %s6
  %s9 = scalar_select 0, %s8, %s6
  // Predicated region
  $region2: #{paligemma_forward.34} parent=0 // pred_check
    _
  $region3: #{paligemma_forward.34} parent=0 // pred_check_branch
    %11 = sbr.rel (0) target = $region5
  $region4: #{paligemma_forward.34} parent=0 // pred_region
    _
  $region5: #{paligemma_forward.34} parent=0 // pred_fallthru
    _
  // Predicated region
  $region6: #{paligemma_forward.34} parent=0 // pred_check
    _
  $region7: #{paligemma_forward.34} parent=0 // pred_check_branch
    %13 = sbr.rel (0) target = $region9
  $region8: #{paligemma_forward.34} parent=0 // pred_region
    _
  $region9: #{paligemma_forward.34} parent=0 // pred_fallthru
    _
  // Predicated region
  $region10: #{paligemma_forward.34} parent=0 // pred_check
    _
  $region11: #{paligemma_forward.34} parent=0 // pred_check_branch
    %15 = sbr.rel (0) target = $region13
  $region12: #{paligemma_forward.34} parent=0 // pred_region
    _
  $region13: #{paligemma_forward.34} parent=0 // pred_fallthru
    _
  // Predicated region
  $region14: #{paligemma_forward.34} parent=0 // pred_check
    _
  $region15: #{paligemma_forward.34} parent=0 // pred_check_branch
    %17 = sbr.rel (0) target = $region17
  $region16: #{paligemma_forward.34} parent=0 // pred_region
    _
  $region17: #{paligemma_forward.34} parent=0 // pred_fallthru
    _
  // Predicated region
  $region18: #{paligemma_forward.34} parent=0 // pred_check
    _
  $region19: #{paligemma_forward.34} parent=0 // pred_check_branch
    %19 = sbr.rel (0) target = $region21
  $region20: #{paligemma_forward.34} parent=0 // pred_region
    _
  $region21: #{paligemma_forward.34} parent=0 // pred_fallthru
    _
  %p21 = scmp.eq.s32.totalorder 0, 0
  // Predicated region
  $region22: #{paligemma_forward.34} parent=0 // pred_check
    %p22 = pneg %p21
  $region23: #{paligemma_forward.34} parent=0 // pred_check_branch
    %24 = sbr.rel (%p22) target = $region25
  $region24: #{paligemma_forward.34} parent=0 // pred_region
    %25 = vst [vmem:[#allocation2] sm:$0xff] 0.0
    %26 = vst [vmem:[#allocation2 + $0x8] sm:$0xff] 0.0
  $region25: #{paligemma_forward.34} parent=0 // pred_fallthru
    _
  %v27 = vld [vmem:[%s0] sm:$0xf]
  %v28 = vld [vmem:[%s0 + $0x4] sm:$0xf]
  %v29 = vunpack.c.l.bf16 %v27
  %v30 = vunpack.c.l.bf16 %v28
  %v31 = vmul.f32 %v29, %v29
  %v32 = vmul.f32 %v30, %v30
  %33 = vadd.xlane.f32.xlu0 %v31
  %v34 = vpop.xlane.xlu0 %33
  %35 = vadd.xlane.f32.xlu0 %v32
  %v36 = vpop.xlane.xlu0 %35
  %v37 = vrcp.pop 128.0
  %v38 = vmul.f32 %v34, %v37
  %v39 = vmul.f32 %v36, %v37
  %v40 = vadd.f32 %v38, 1e-06
  %v41 = vadd.f32 %v39, 1e-06
  %v42 = vrsqrt.pop %v40
  %v43 = vrsqrt.pop %v41
  %v44 = vmul.f32 %v29, %v42
  %v45 = vmul.f32 %v30, %v43
  %v46 = vld [vmem:[%s1] sm:$0x1]
  %v47 = vadd.f32 %v46, 1.0
  %v49 = vlaneseq
  %v50 = vshrl.u32 %v49, 7
  %v51 = vsub.s32 0, %v50
  %v52 = vrot.slane %v47, %v51
  %v54 = vmul.f32 %v44, %v52
  %v55 = vmul.f32 %v45, %v52
  %v56 = vpack.c.bf16 %v55, %v54
  %v57 = vld [vmem:[%s2] sm:$0xff]
  %v58 = vld [vmem:[%s2 + $0x8] sm:$0xff]
  %v59 = vld [vmem:[%s2 + $0x10] sm:$0xff]
  %v60 = vld [vmem:[%s2 + $0x18] sm:$0xff]
  %v61 = vld [vmem:[%s2 + $0x20] sm:$0xff]
  %v62 = vld [vmem:[%s2 + $0x28] sm:$0xff]
  %v63 = vld [vmem:[%s2 + $0x30] sm:$0xff]
  %v64 = vld [vmem:[%s2 + $0x38] sm:$0xff]
  %v65 = vld [vmem:[%s2 + $0x40] sm:$0xff]
  %v66 = vld [vmem:[%s2 + $0x48] sm:$0xff]
  %v67 = vld [vmem:[%s2 + $0x50] sm:$0xff]
  %v68 = vld [vmem:[%s2 + $0x58] sm:$0xff]
  %v69 = vld [vmem:[%s2 + $0x60] sm:$0xff]
  %v70 = vld [vmem:[%s2 + $0x68] sm:$0xff]
  %v71 = vld [vmem:[%s2 + $0x70] sm:$0xff]
  %v72 = vld [vmem:[%s2 + $0x78] sm:$0xff]
  %v89 = vunpack.c.l.b16 %v57
  %v90 = vunpack.c.h.b16 %v57
  %v91 = vunpack.c.l.b16 %v58
  %v92 = vunpack.c.h.b16 %v58
  %v93 = vunpack.c.l.b16 %v59
  %v94 = vunpack.c.h.b16 %v59
  %v95 = vunpack.c.l.b16 %v60
  %v96 = vunpack.c.h.b16 %v60
  %v97 = vunpack.c.l.b16 %v61
  %v98 = vunpack.c.h.b16 %v61
  %v99 = vunpack.c.l.b16 %v62
  %v100 = vunpack.c.h.b16 %v62
  %v101 = vunpack.c.l.b16 %v63
  %v102 = vunpack.c.h.b16 %v63
  %v103 = vunpack.c.l.b16 %v64
  %v104 = vunpack.c.h.b16 %v64
  %v105 = vunpack.c.l.b16 %v65
  %v106 = vunpack.c.h.b16 %v65
  %v107 = vunpack.c.l.b16 %v66
  %v108 = vunpack.c.h.b16 %v66
  %v109 = vunpack.c.l.b16 %v67
  %v110 = vunpack.c.h.b16 %v67
  %v111 = vunpack.c.l.b16 %v68
  %v112 = vunpack.c.h.b16 %v68
  %v113 = vunpack.c.l.b16 %v69
  %v114 = vunpack.c.h.b16 %v69
  %v115 = vunpack.c.l.b16 %v70
  %v116 = vunpack.c.h.b16 %v70
  %v117 = vunpack.c.l.b16 %v71
  %v118 = vunpack.c.h.b16 %v71
  %v119 = vunpack.c.l.b16 %v72
  %v120 = vunpack.c.h.b16 %v72
  %v121 = vpack.c.b16 %v91, %v89
  %v122 = vpack.c.b16 %v92, %v90
  %v123 = vpack.c.b16 %v95, %v93
  %v124 = vpack.c.b16 %v96, %v94
  %v125 = vpack.c.b16 %v99, %v97
  %v126 = vpack.c.b16 %v100, %v98
  %v127 = vpack.c.b16 %v103, %v101
  %v128 = vpack.c.b16 %v104, %v102
  %v129 = vpack.c.b16 %v107, %v105
  %v130 = vpack.c.b16 %v108, %v106
  %v131 = vpack.c.b16 %v111, %v109
  %v132 = vpack.c.b16 %v112, %v110
  %v133 = vpack.c.b16 %v115, %v113
  %v134 = vpack.c.b16 %v116, %v114
  %v135 = vpack.c.b16 %v119, %v117
  %v136 = vpack.c.b16 %v120, %v118
  %153 = vmatprep.subr.bf16.mxu0 %v136
  %154 = vmatpush1.bf16.msra.mxu0 %v135
  %155 = vmatprep.subr.bf16.mxu0 %v134
  %156 = vmatpush1.bf16.msra.mxu0 %v133
  %157 = vmatprep.subr.bf16.mxu0 %v132
  %158 = vmatpush1.bf16.msra.mxu0 %v131
  %159 = vmatprep.subr.bf16.mxu0 %v130
  %160 = vmatpush1.bf16.msra.mxu0 %v129
  %161 = vmatprep.subr.bf16.mxu0 %v128
  %162 = vmatpush1.bf16.msra.mxu0 %v127
  %163 = vmatprep.subr.bf16.mxu0 %v126
  %164 = vmatpush1.bf16.msra.mxu0 %v125
  %165 = vmatprep.subr.bf16.mxu0 %v124
  %166 = vmatpush1.bf16.msra.mxu0 %v123
  %167 = vmatprep.subr.bf16.mxu0 %v122
  %168 = vmatpush1.bf16.msra.mxu0 %v121
  %169 = vmatprep.subr.bf16.mxu0 0
  %170 = vmatpush2.bf16.msra.mxu0 0
  %171 = vmatprep.subr.bf16.mxu0 0
  %172 = vmatpush2.bf16.msra.mxu0 0
  %173 = vmatprep.subr.bf16.mxu0 0
  %174 = vmatpush2.bf16.msra.mxu0 0
  %175 = vmatprep.subr.bf16.mxu0 0
  %176 = vmatpush2.bf16.msra.mxu0 0
  %177 = vmatprep.subr.bf16.mxu0 0
  %178 = vmatpush2.bf16.msra.mxu0 0
  %179 = vmatprep.subr.bf16.mxu0 0
  %180 = vmatpush2.bf16.msra.mxu0 0
  %181 = vmatprep.subr.bf16.mxu0 0
  %182 = vmatpush2.bf16.msra.mxu0 0
  %183 = vmatprep.subr.bf16.mxu0 0
  %184 = vmatpush2.bf16.msra.mxu0 0
  %185 = vmatprep.mubr.bf16.mxu0 0
  %186 = vmatmul.mubr.bf16.gmra.mxu0 %v56
  %v187 = vpop.f32.mrf.mxu0
  %v188 = vadd.f32 0.0, %v187
  %v189 = vpop.f32.mrf.mxu0
  %v190 = vadd.f32 0.0, %v189
  %v191 = vpop.f32.mrf.mxu0
  %v192 = vadd.f32 0.0, %v191
  %v193 = vpop.f32.mrf.mxu0
  %v194 = vadd.f32 0.0, %v193
  %195 = vdwg.mxu0
  %v196 = vld [vmem:[%s3] sm:$0xff]
  %v197 = vld [vmem:[%s3 + $0x8] sm:$0xff]
  %v198 = vld [vmem:[%s3 + $0x10] sm:$0xff]
  %v199 = vld [vmem:[%s3 + $0x18] sm:$0xff]
  %v200 = vld [vmem:[%s3 + $0x20] sm:$0xff]
  %v201 = vld [vmem:[%s3 + $0x28] sm:$0xff]
  %v202 = vld [vmem:[%s3 + $0x30] sm:$0xff]
  %v203 = vld [vmem:[%s3 + $0x38] sm:$0xff]
  %v204 = vld [vmem:[%s3 + $0x40] sm:$0xff]
  %v205 = vld [vmem:[%s3 + $0x48] sm:$0xff]
  %v206 = vld [vmem:[%s3 + $0x50] sm:$0xff]
  %v207 = vld [vmem:[%s3 + $0x58] sm:$0xff]
  %v208 = vld [vmem:[%s3 + $0x60] sm:$0xff]
  %v209 = vld [vmem:[%s3 + $0x68] sm:$0xff]
  %v210 = vld [vmem:[%s3 + $0x70] sm:$0xff]
  %v211 = vld [vmem:[%s3 + $0x78] sm:$0xff]
  %v228 = vunpack.c.l.b16 %v196
  %v229 = vunpack.c.h.b16 %v196
  %v230 = vunpack.c.l.b16 %v197
  %v231 = vunpack.c.h.b16 %v197
  %v232 = vunpack.c.l.b16 %v198
  %v233 = vunpack.c.h.b16 %v198
  %v234 = vunpack.c.l.b16 %v199
  %v235 = vunpack.c.h.b16 %v199
  %v236 = vunpack.c.l.b16 %v200
  %v237 = vunpack.c.h.b16 %v200
  %v238 = vunpack.c.l.b16 %v201
  %v239 = vunpack.c.h.b16 %v201
  %v240 = vunpack.c.l.b16 %v202
  %v241 = vunpack.c.h.b16 %v202
  %v242 = vunpack.c.l.b16 %v203
  %v243 = vunpack.c.h.b16 %v203
  %v244 = vunpack.c.l.b16 %v204
  %v245 = vunpack.c.h.b16 %v204
  %v246 = vunpack.c.l.b16 %v205
  %v247 = vunpack.c.h.b16 %v205
  %v248 = vunpack.c.l.b16 %v206
  %v249 = vunpack.c.h.b16 %v206
  %v250 = vunpack.c.l.b16 %v207
  %v251 = vunpack.c.h.b16 %v207
  %v252 = vunpack.c.l.b16 %v208
  %v253 = vunpack.c.h.b16 %v208
  %v254 = vunpack.c.l.b16 %v209
  %v255 = vunpack.c.h.b16 %v209
  %v256 = vunpack.c.l.b16 %v210
  %v257 = vunpack.c.h.b16 %v210
  %v258 = vunpack.c.l.b16 %v211
  %v259 = vunpack.c.h.b16 %v211
  %v260 = vpack.c.b16 %v230, %v228
  %v261 = vpack.c.b16 %v231, %v229
  %v262 = vpack.c.b16 %v234, %v232
  %v263 = vpack.c.b16 %v235, %v233
  %v264 = vpack.c.b16 %v238, %v236
  %v265 = vpack.c.b16 %v239, %v237
  %v266 = vpack.c.b16 %v242, %v240
  %v267 = vpack.c.b16 %v243, %v241
  %v268 = vpack.c.b16 %v246, %v244
  %v269 = vpack.c.b16 %v247, %v245
  %v270 = vpack.c.b16 %v250, %v248
  %v271 = vpack.c.b16 %v251, %v249
  %v272 = vpack.c.b16 %v254, %v252
  %v273 = vpack.c.b16 %v255, %v253
  %v274 = vpack.c.b16 %v258, %v256
  %v275 = vpack.c.b16 %v259, %v257
  %292 = vmatprep.subr.bf16.mxu0 %v275
  %293 = vmatpush1.bf16.msra.mxu0 %v274
  %294 = vmatprep.subr.bf16.mxu0 %v273
  %295 = vmatpush1.bf16.msra.mxu0 %v272
  %296 = vmatprep.subr.bf16.mxu0 %v271
  %297 = vmatpush1.bf16.msra.mxu0 %v270
  %298 = vmatprep.subr.bf16.mxu0 %v269
  %299 = vmatpush1.bf16.msra.mxu0 %v268
  %300 = vmatprep.subr.bf16.mxu0 %v267
  %301 = vmatpush1.bf16.msra.mxu0 %v266
  %302 = vmatprep.subr.bf16.mxu0 %v265
  %303 = vmatpush1.bf16.msra.mxu0 %v264
  %304 = vmatprep.subr.bf16.mxu0 %v263
  %305 = vmatpush1.bf16.msra.mxu0 %v262
  %306 = vmatprep.subr.bf16.mxu0 %v261
  %307 = vmatpush1.bf16.msra.mxu0 %v260
  %308 = vmatprep.subr.bf16.mxu0 0
  %309 = vmatpush2.bf16.msra.mxu0 0
  %310 = vmatprep.subr.bf16.mxu0 0
  %311 = vmatpush2.bf16.msra.mxu0 0
  %312 = vmatprep.subr.bf16.mxu0 0
  %313 = vmatpush2.bf16.msra.mxu0 0
  %314 = vmatprep.subr.bf16.mxu0 0
  %315 = vmatpush2.bf16.msra.mxu0 0
  %316 = vmatprep.subr.bf16.mxu0 0
  %317 = vmatpush2.bf16.msra.mxu0 0
  %318 = vmatprep.subr.bf16.mxu0 0
  %319 = vmatpush2.bf16.msra.mxu0 0
  %320 = vmatprep.subr.bf16.mxu0 0
  %321 = vmatpush2.bf16.msra.mxu0 0
  %322 = vmatprep.subr.bf16.mxu0 0
  %323 = vmatpush2.bf16.msra.mxu0 0
  %324 = vmatprep.mubr.bf16.mxu0 0
  %325 = vmatmul.mubr.bf16.gmra.mxu0 %v56
  %v326 = vpop.f32.mrf.mxu0
  %v327 = vadd.f32 0.0, %v326
  %v328 = vpop.f32.mrf.mxu0
  %v329 = vadd.f32 0.0, %v328
  %v330 = vpop.f32.mrf.mxu0
  %v331 = vadd.f32 0.0, %v330
  %v332 = vpop.f32.mrf.mxu0
  %v333 = vadd.f32 0.0, %v332
  %334 = vdwg.mxu0
  %v335 = vmul.f32 %v188, %v188
  %v336 = vmul.f32 %v190, %v190
  %v337 = vmul.f32 %v192, %v192
  %v338 = vmul.f32 %v194, %v194
  %v339 = vmul.f32 %v188, %v335
  %v340 = vmul.f32 %v190, %v336
  %v341 = vmul.f32 %v192, %v337
  %v342 = vmul.f32 %v194, %v338
  %v343 = vmul.f32 %v339, 0.044715
  %v344 = vmul.f32 %v340, 0.044715
  %v345 = vmul.f32 %v341, 0.044715
  %v346 = vmul.f32 %v342, 0.044715
  %v347 = vadd.f32 %v188, %v343
  %v348 = vadd.f32 %v190, %v344
  %v349 = vadd.f32 %v192, %v345
  %v350 = vadd.f32 %v194, %v346
  %v351 = vmul.f32 %v347, 0.7978846
  %v352 = vmul.f32 %v348, 0.7978846
  %v353 = vmul.f32 %v349, 0.7978846
  %v354 = vmul.f32 %v350, 0.7978846
  %v355 = vtanh.pop %v351
  %v356 = vtanh.pop %v352
  %v357 = vtanh.pop %v353
  %v358 = vtanh.pop %v354
  %v359 = vadd.f32 %v355, 1.0
  %v360 = vadd.f32 %v356, 1.0
  %v361 = vadd.f32 %v357, 1.0
  %v362 = vadd.f32 %v358, 1.0
  %v363 = vmul.f32 %v359, 0.5
  %v364 = vmul.f32 %v360, 0.5
  %v365 = vmul.f32 %v361, 0.5
  %v366 = vmul.f32 %v362, 0.5
  %v367 = vmul.f32 %v188, %v363
  %v368 = vmul.f32 %v190, %v364
  %v369 = vmul.f32 %v192, %v365
  %v370 = vmul.f32 %v194, %v366
  %v371 = vmul.f32 %v367, %v327
  %v372 = vmul.f32 %v368, %v329
  %v373 = vmul.f32 %v369, %v331
  %v374 = vmul.f32 %v370, %v333
  %v375 = vld [vmem:[#allocation2] sm:$0xff]
  %v376 = vld [vmem:[#allocation2 + $0x8] sm:$0xff]
  %v377 = vpack.c.bf16 %v373, %v371
  %v378 = vpack.c.bf16 %v374, %v372
  %v379 = vld [vmem:[%s4] sm:$0xf]
  %v380 = vld [vmem:[%s4 + $0x4] sm:$0xf]
  %v381 = vld [vmem:[%s4 + $0x8] sm:$0xf]
  %v382 = vld [vmem:[%s4 + $0xc] sm:$0xf]
  %v383 = vld [vmem:[%s4 + $0x10] sm:$0xf]
  %v384 = vld [vmem:[%s4 + $0x14] sm:$0xf]
  %v385 = vld [vmem:[%s4 + $0x18] sm:$0xf]
  %v386 = vld [vmem:[%s4 + $0x1c] sm:$0xf]
  %v387 = vld [vmem:[%s4 + $0x20] sm:$0xf]
  %v388 = vld [vmem:[%s4 + $0x24] sm:$0xf]
  %v389 = vld [vmem:[%s4 + $0x28] sm:$0xf]
  %v390 = vld [vmem:[%s4 + $0x2c] sm:$0xf]
  %v391 = vld [vmem:[%s4 + $0x30] sm:$0xf]
  %v392 = vld [vmem:[%s4 + $0x34] sm:$0xf]
  %v393 = vld [vmem:[%s4 + $0x38] sm:$0xf]
  %v394 = vld [vmem:[%s4 + $0x3c] sm:$0xf]
  %v395 = vld [vmem:[%s4 + $0x40] sm:$0xf]
  %v396 = vld [vmem:[%s4 + $0x44] sm:$0xf]
  %v397 = vld [vmem:[%s4 + $0x48] sm:$0xf]
  %v398 = vld [vmem:[%s4 + $0x4c] sm:$0xf]
  %v399 = vld [vmem:[%s4 + $0x50] sm:$0xf]
  %v400 = vld [vmem:[%s4 + $0x54] sm:$0xf]
  %v401 = vld [vmem:[%s4 + $0x58] sm:$0xf]
  %v402 = vld [vmem:[%s4 + $0x5c] sm:$0xf]
  %v403 = vld [vmem:[%s4 + $0x60] sm:$0xf]
  %v404 = vld [vmem:[%s4 + $0x64] sm:$0xf]
  %v405 = vld [vmem:[%s4 + $0x68] sm:$0xf]
  %v406 = vld [vmem:[%s4 + $0x6c] sm:$0xf]
  %v407 = vld [vmem:[%s4 + $0x70] sm:$0xf]
  %v408 = vld [vmem:[%s4 + $0x74] sm:$0xf]
  %v409 = vld [vmem:[%s4 + $0x78] sm:$0xf]
  %v410 = vld [vmem:[%s4 + $0x7c] sm:$0xf]
  %v443 = vunpack.c.l.b16 %v379
  %v444 = vunpack.c.l.b16 %v380
  %v445 = vunpack.c.l.b16 %v381
  %v446 = vunpack.c.l.b16 %v382
  %v447 = vunpack.c.l.b16 %v383
  %v448 = vunpack.c.l.b16 %v384
  %v449 = vunpack.c.l.b16 %v385
  %v450 = vunpack.c.l.b16 %v386
  %v451 = vunpack.c.l.b16 %v387
  %v452 = vunpack.c.l.b16 %v388
  %v453 = vunpack.c.l.b16 %v389
  %v454 = vunpack.c.l.b16 %v390
  %v455 = vunpack.c.l.b16 %v391
  %v456 = vunpack.c.l.b16 %v392
  %v457 = vunpack.c.l.b16 %v393
  %v458 = vunpack.c.l.b16 %v394
  %v459 = vunpack.c.l.b16 %v395
  %v460 = vunpack.c.l.b16 %v396
  %v461 = vunpack.c.l.b16 %v397
  %v462 = vunpack.c.l.b16 %v398
  %v463 = vunpack.c.l.b16 %v399
  %v464 = vunpack.c.l.b16 %v400
  %v465 = vunpack.c.l.b16 %v401
  %v466 = vunpack.c.l.b16 %v402
  %v467 = vunpack.c.l.b16 %v403
  %v468 = vunpack.c.l.b16 %v404
  %v469 = vunpack.c.l.b16 %v405
  %v470 = vunpack.c.l.b16 %v406
  %v471 = vunpack.c.l.b16 %v407
  %v472 = vunpack.c.l.b16 %v408
  %v473 = vunpack.c.l.b16 %v409
  %v474 = vunpack.c.l.b16 %v410
  %v475 = vpack.c.b16 %v444, %v443
  %v476 = vpack.c.b16 %v446, %v445
  %v477 = vpack.c.b16 %v448, %v447
  %v478 = vpack.c.b16 %v450, %v449
  %v479 = vpack.c.b16 %v452, %v451
  %v480 = vpack.c.b16 %v454, %v453
  %v481 = vpack.c.b16 %v456, %v455
  %v482 = vpack.c.b16 %v458, %v457
  %v483 = vpack.c.b16 %v460, %v459
  %v484 = vpack.c.b16 %v462, %v461
  %v485 = vpack.c.b16 %v464, %v463
  %v486 = vpack.c.b16 %v466, %v465
  %v487 = vpack.c.b16 %v468, %v467
  %v488 = vpack.c.b16 %v470, %v469
  %v489 = vpack.c.b16 %v472, %v471
  %v490 = vpack.c.b16 %v474, %v473
  %507 = vmatprep.subr.bf16.mxu0 0
  %508 = vmatpush1.bf16.msra.mxu0 %v482
  %509 = vmatprep.subr.bf16.mxu0 0
  %510 = vmatpush1.bf16.msra.mxu0 %v481
  %511 = vmatprep.subr.bf16.mxu0 0
  %512 = vmatpush1.bf16.msra.mxu0 %v480
  %513 = vmatprep.subr.bf16.mxu0 0
  %514 = vmatpush1.bf16.msra.mxu0 %v479
  %515 = vmatprep.subr.bf16.mxu0 0
  %516 = vmatpush1.bf16.msra.mxu0 %v478
  %517 = vmatprep.subr.bf16.mxu0 0
  %518 = vmatpush1.bf16.msra.mxu0 %v477
  %519 = vmatprep.subr.bf16.mxu0 0
  %520 = vmatpush1.bf16.msra.mxu0 %v476
  %521 = vmatprep.subr.bf16.mxu0 0
  %522 = vmatpush1.bf16.msra.mxu0 %v475
  %523 = vmatprep.subr.bf16.mxu0 0
  %524 = vmatpush2.bf16.msra.mxu0 %v490
  %525 = vmatprep.subr.bf16.mxu0 0
  %526 = vmatpush2.bf16.msra.mxu0 %v489
  %527 = vmatprep.subr.bf16.mxu0 0
  %528 = vmatpush2.bf16.msra.mxu0 %v488
  %529 = vmatprep.subr.bf16.mxu0 0
  %530 = vmatpush2.bf16.msra.mxu0 %v487
  %531 = vmatprep.subr.bf16.mxu0 0
  %532 = vmatpush2.bf16.msra.mxu0 %v486
  %533 = vmatprep.subr.bf16.mxu0 0
  %534 = vmatpush2.bf16.msra.mxu0 %v485
  %535 = vmatprep.subr.bf16.mxu0 0
  %536 = vmatpush2.bf16.msra.mxu0 %v484
  %537 = vmatprep.subr.bf16.mxu0 0
  %538 = vmatpush2.bf16.msra.mxu0 %v483
  %539 = vmatprep.mubr.bf16.mxu0 %v378
  %540 = vmatmul.mubr.bf16.gmra.mxu0 %v377
  %v541 = vpop.f32.mrf.mxu0
  %v542 = vadd.f32 0.0, %v541
  %v543 = vpop.f32.mrf.mxu0
  %v544 = vpop.f32.mrf.mxu0
  %v545 = vadd.f32 0.0, %v544
  %v546 = vpop.f32.mrf.mxu0
  %547 = vdwg.mxu0
  %v548 = vadd.f32 %v375, %v542
  %v549 = vadd.f32 %v376, %v545
  %550 = vst [vmem:[#allocation2] sm:$0xff] %v548
  %551 = vst [vmem:[#allocation2 + $0x8] sm:$0xff] %v549
  // Predicated region
  $region26: #{paligemma_forward.34} parent=0 // pred_check
    %p552 = pneg %p21
  $region27: #{paligemma_forward.34} parent=0 // pred_check_branch
    %554 = sbr.rel (%p552) target = $region29
  $region28: #{paligemma_forward.34} parent=0 // pred_region
    %v555 = vld [vmem:[#allocation2] sm:$0xff]
    %v556 = vld [vmem:[#allocation2 + $0x8] sm:$0xff]
    %v557 = vadd.f32 %v555, %v29
    %v558 = vadd.f32 %v556, %v30
    %v559 = vpack.c.bf16 %v558, %v557
    %v561 = vunpack.c.l.b16 %v559
    %v562 = vunpack.c.h.b16 %v559
    %v563 = vpack.c.b16 %v561, %v561
    %v564 = vpack.c.b16 %v562, %v562
    %567 = vst [vmem:[%s5] sm:$0xf] %v563
    %568 = vst [vmem:[%s5 + $0x4] sm:$0xf] %v564
  $region29: #{paligemma_forward.34} parent=0 // pred_fallthru
    _
  // Predicated region
  $region30: #{paligemma_forward.34} parent=0 // pred_check
    _
  $region31: #{paligemma_forward.34} parent=0 // pred_check_branch
    %570 = sbr.rel (0) target = $region33
  $region32: #{paligemma_forward.34} parent=0 // pred_region
    _
  $region33: #{paligemma_forward.34} parent=0 // pred_fallthru
    _
  // Predicated region
  $region34: #{paligemma_forward.34} parent=0 // pred_check
    _
  $region35: #{paligemma_forward.34} parent=0 // pred_check_branch
    %572 = sbr.rel (0) target = $region37
  $region36: #{paligemma_forward.34} parent=0 // pred_region
    _
  $region37: #{paligemma_forward.34} parent=0 // pred_fallthru
    _

// kernel: paligemma_forward.39
$region0: #{paligemma_forward.39}
  #allocation0 [shape = 'u32[]', space=smem, size = 0x4, offset = 0x4, fixed_abs, tag = 'smem constant byte address 0x4 - core index']
  #allocation1 [shape = 'u32[144,128]{1,0:T(1,128)}', space=vmem, size = 0x12000, scoped, tag = 'internal scratch']
  %s0 = inlined_call_operand.vmem [shape: bf16[16,128], index: 0, kind: input, shape index: {}]
  %s1 = inlined_call_operand.vmem [shape: f32[1,128], index: 1, kind: input, shape index: {}]
  %s2 = inlined_call_operand.vmem [shape: bf16[128,272], index: 2, kind: input, shape index: {}]
  %s3 = inlined_call_operand.hbm [shape: f32[16,272], index: 3, kind: output, shape index: {}]
  %s4 = sld [smem:[#allocation0]]
  $region22: #{paligemma_forward.39} parent=0
    _
  %s6 = ssub.s32 1, %s4
  %s7 = scalar_select 0, %s6, %s4
  $region1: #{paligemma_forward.39} parent=0
    #allocation2 [shape = 'u8[24576]{0}', space=vmem, size = 0x6000, scoped, tag = 'output window, operand 0, single buffered']
    #allocation3 [shape = 's32[1]{0}', space=sflag, size = 0x4, scoped, tag = 'scoped memory for paligemma_forward.39']
    %8 = vsyncpa [#allocation3], 0
    // Predicated region
    $region2: #{paligemma_forward.39} parent=1 // pred_check
      _
    $region3: #{paligemma_forward.39} parent=1 // pred_check_branch
      %10 = sbr.rel (0) target = $region5
    $region4: #{paligemma_forward.39} parent=1 // pred_region
      _
    $region5: #{paligemma_forward.39} parent=1 // pred_fallthru
      _
    // Predicated region
    $region6: #{paligemma_forward.39} parent=1 // pred_check
      _
    $region7: #{paligemma_forward.39} parent=1 // pred_check_branch
      %12 = sbr.rel (0) target = $region9
    $region8: #{paligemma_forward.39} parent=1 // pred_region
      _
    $region9: #{paligemma_forward.39} parent=1 // pred_fallthru
      _
    // Predicated region
    $region10: #{paligemma_forward.39} parent=1 // pred_check
      _
    $region11: #{paligemma_forward.39} parent=1 // pred_check_branch
      %14 = sbr.rel (0) target = $region13
    $region12: #{paligemma_forward.39} parent=1 // pred_region
      _
    $region13: #{paligemma_forward.39} parent=1 // pred_fallthru
      _
    %v16 = vld [vmem:[%s0] sm:$0xf]
    %v17 = vld [vmem:[%s0 + $0x4] sm:$0xf]
    %v18 = vunpack.c.l.bf16 %v16
    %v19 = vunpack.c.l.bf16 %v17
    %v20 = vmul.f32 %v18, %v18
    %v21 = vmul.f32 %v19, %v19
    %22 = vadd.xlane.f32.xlu0 %v20
    %v23 = vpop.xlane.xlu0 %22
    %24 = vadd.xlane.f32.xlu0 %v21
    %v25 = vpop.xlane.xlu0 %24
    %v26 = vrcp.pop 128.0
    %v27 = vmul.f32 %v23, %v26
    %v28 = vmul.f32 %v25, %v26
    %v29 = vadd.f32 %v27, 1e-06
    %v30 = vadd.f32 %v28, 1e-06
    %v31 = vrsqrt.pop %v29
    %v32 = vrsqrt.pop %v30
    %v33 = vmul.f32 %v18, %v31
    %v34 = vmul.f32 %v19, %v32
    %v35 = vld [vmem:[%s1] sm:$0x1]
    %v36 = vadd.f32 %v35, 1.0
    %v38 = vlaneseq
    %v39 = vshrl.u32 %v38, 7
    %v40 = vsub.s32 0, %v39
    %v41 = vrot.slane %v36, %v40
    %v43 = vmul.f32 %v33, %v41
    %v44 = vmul.f32 %v34, %v41
    %v45 = vpack.c.bf16 %v44, %v43
    %v46 = vld [vmem:[%s2] sm:$0xff]
    %v47 = vld [vmem:[%s2 + $0x8] sm:$0xf]
    %v48 = vld [vmem:[%s2 + $0xc] sm:$0xff]
    %v49 = vld [vmem:[%s2 + $0x14] sm:$0xf]
    %v50 = vld [vmem:[%s2 + $0x18] sm:$0xff]
    %v51 = vld [vmem:[%s2 + $0x20] sm:$0xf]
    %v52 = vld [vmem:[%s2 + $0x24] sm:$0xff]
    %v53 = vld [vmem:[%s2 + $0x2c] sm:$0xf]
    %v54 = vld [vmem:[%s2 + $0x30] sm:$0xff]
    %v55 = vld [vmem:[%s2 + $0x38] sm:$0xf]
    %v56 = vld [vmem:[%s2 + $0x3c] sm:$0xff]
    %v57 = vld [vmem:[%s2 + $0x44] sm:$0xf]
    %v58 = vld [vmem:[%s2 + $0x48] sm:$0xff]
    %v59 = vld [vmem:[%s2 + $0x50] sm:$0xf]
    %v60 = vld [vmem:[%s2 + $0x54] sm:$0xff]
    %v61 = vld [vmem:[%s2 + $0x5c] sm:$0xf]
    %v62 = vld [vmem:[%s2 + $0x60] sm:$0xff]
    %v63 = vld [vmem:[%s2 + $0x68] sm:$0xf]
    %v64 = vld [vmem:[%s2 + $0x6c] sm:$0xff]
    %v65 = vld [vmem:[%s2 + $0x74] sm:$0xf]
    %v66 = vld [vmem:[%s2 + $0x78] sm:$0xff]
    %v67 = vld [vmem:[%s2 + $0x80] sm:$0xf]
    %v68 = vld [vmem:[%s2 + $0x84] sm:$0xff]
    %v69 = vld [vmem:[%s2 + $0x8c] sm:$0xf]
    %v70 = vld [vmem:[%s2 + $0x90] sm:$0xff]
    %v71 = vld [vmem:[%s2 + $0x98] sm:$0xf]
    %v72 = vld [vmem:[%s2 + $0x9c] sm:$0xff]
    %v73 = vld [vmem:[%s2 + $0xa4] sm:$0xf]
    %v74 = vld [vmem:[%s2 + $0xa8] sm:$0xff]
    %v75 = vld [vmem:[%s2 + $0xb0] sm:$0xf]
    %v76 = vld [vmem:[%s2 + $0xb4] sm:$0xff]
    %v77 = vld [vmem:[%s2 + $0xbc] sm:$0xf]
    %v110 = vunpack.c.l.b16 %v46
    %v111 = vunpack.c.h.b16 %v46
    %v112 = vunpack.c.l.b16 %v47
    %v113 = vunpack.c.l.b16 %v48
    %v114 = vunpack.c.h.b16 %v48
    %v115 = vunpack.c.l.b16 %v49
    %v116 = vunpack.c.l.b16 %v50
    %v117 = vunpack.c.h.b16 %v50
    %v118 = vunpack.c.l.b16 %v51
    %v119 = vunpack.c.l.b16 %v52
    %v120 = vunpack.c.h.b16 %v52
    %v121 = vunpack.c.l.b16 %v53
    %v122 = vunpack.c.l.b16 %v54
    %v123 = vunpack.c.h.b16 %v54
    %v124 = vunpack.c.l.b16 %v55
    %v125 = vunpack.c.l.b16 %v56
    %v126 = vunpack.c.h.b16 %v56
    %v127 = vunpack.c.l.b16 %v57
    %v128 = vunpack.c.l.b16 %v58
    %v129 = vunpack.c.h.b16 %v58
    %v130 = vunpack.c.l.b16 %v59
    %v131 = vunpack.c.l.b16 %v60
    %v132 = vunpack.c.h.b16 %v60
    %v133 = vunpack.c.l.b16 %v61
    %v134 = vunpack.c.l.b16 %v62
    %v135 = vunpack.c.h.b16 %v62
    %v136 = vunpack.c.l.b16 %v63
    %v137 = vunpack.c.l.b16 %v64
    %v138 = vunpack.c.h.b16 %v64
    %v139 = vunpack.c.l.b16 %v65
    %v140 = vunpack.c.l.b16 %v66
    %v141 = vunpack.c.h.b16 %v66
    %v142 = vunpack.c.l.b16 %v67
    %v143 = vunpack.c.l.b16 %v68
    %v144 = vunpack.c.h.b16 %v68
    %v145 = vunpack.c.l.b16 %v69
    %v146 = vunpack.c.l.b16 %v70
    %v147 = vunpack.c.h.b16 %v70
    %v148 = vunpack.c.l.b16 %v71
    %v149 = vunpack.c.l.b16 %v72
    %v150 = vunpack.c.h.b16 %v72
    %v151 = vunpack.c.l.b16 %v73
    %v152 = vunpack.c.l.b16 %v74
    %v153 = vunpack.c.h.b16 %v74
    %v154 = vunpack.c.l.b16 %v75
    %v155 = vunpack.c.l.b16 %v76
    %v156 = vunpack.c.h.b16 %v76
    %v157 = vunpack.c.l.b16 %v77
    %v158 = vpack.c.b16 %v113, %v110
    %v159 = vpack.c.b16 %v114, %v111
    %v160 = vpack.c.b16 %v115, %v112
    %v161 = vpack.c.b16 %v119, %v116
    %v162 = vpack.c.b16 %v120, %v117
    %v163 = vpack.c.b16 %v121, %v118
    %v164 = vpack.c.b16 %v125, %v122
    %v165 = vpack.c.b16 %v126, %v123
    %v166 = vpack.c.b16 %v127, %v124
    %v167 = vpack.c.b16 %v131, %v128
    %v168 = vpack.c.b16 %v132, %v129
    %v169 = vpack.c.b16 %v133, %v130
    %v170 = vpack.c.b16 %v137, %v134
    %v171 = vpack.c.b16 %v138, %v135
    %v172 = vpack.c.b16 %v139, %v136
    %v173 = vpack.c.b16 %v143, %v140
    %v174 = vpack.c.b16 %v144, %v141
    %v175 = vpack.c.b16 %v145, %v142
    %v176 = vpack.c.b16 %v149, %v146
    %v177 = vpack.c.b16 %v150, %v147
    %v178 = vpack.c.b16 %v151, %v148
    %v179 = vpack.c.b16 %v155, %v152
    %v180 = vpack.c.b16 %v156, %v153
    %v181 = vpack.c.b16 %v157, %v154
    %206 = vmatprep.subr.bf16.mxu0 %v180
    %207 = vmatpush1.bf16.msra.mxu0 %v179
    %208 = vmatprep.subr.bf16.mxu0 %v177
    %209 = vmatpush1.bf16.msra.mxu0 %v176
    %210 = vmatprep.subr.bf16.mxu0 %v174
    %211 = vmatpush1.bf16.msra.mxu0 %v173
    %212 = vmatprep.subr.bf16.mxu0 %v171
    %213 = vmatpush1.bf16.msra.mxu0 %v170
    %214 = vmatprep.subr.bf16.mxu0 %v168
    %215 = vmatpush1.bf16.msra.mxu0 %v167
    %216 = vmatprep.subr.bf16.mxu0 %v165
    %217 = vmatpush1.bf16.msra.mxu0 %v164
    %218 = vmatprep.subr.bf16.mxu0 %v162
    %219 = vmatpush1.bf16.msra.mxu0 %v161
    %220 = vmatprep.subr.bf16.mxu0 %v159
    %221 = vmatpush1.bf16.msra.mxu0 %v158
    %222 = vmatprep.subr.bf16.mxu0 0
    %223 = vmatpush2.bf16.msra.mxu0 0
    %224 = vmatprep.subr.bf16.mxu0 0
    %225 = vmatpush2.bf16.msra.mxu0 0
    %226 = vmatprep.subr.bf16.mxu0 0
    %227 = vmatpush2.bf16.msra.mxu0 0
    %228 = vmatprep.subr.bf16.mxu0 0
    %229 = vmatpush2.bf16.msra.mxu0 0
    %230 = vmatprep.subr.bf16.mxu0 0
    %231 = vmatpush2.bf16.msra.mxu0 0
    %232 = vmatprep.subr.bf16.mxu0 0
    %233 = vmatpush2.bf16.msra.mxu0 0
    %234 = vmatprep.subr.bf16.mxu0 0
    %235 = vmatpush2.bf16.msra.mxu0 0
    %236 = vmatprep.subr.bf16.mxu0 0
    %237 = vmatpush2.bf16.msra.mxu0 0
    %238 = vmatprep.mubr.bf16.mxu0 0
    %239 = vmatmul.mubr.bf16.gmra.mxu0 %v45
    %v240 = vpop.f32.mrf.mxu0
    %v241 = vadd.f32 0.0, %v240
    %v242 = vpop.f32.mrf.mxu0
    %v243 = vadd.f32 0.0, %v242
    %v244 = vpop.f32.mrf.mxu0
    %v245 = vadd.f32 0.0, %v244
    %v246 = vpop.f32.mrf.mxu0
    %v247 = vadd.f32 0.0, %v246
    %248 = vdwg.mxu0
    %249 = vmatprep.subr.bf16.mxu0 0
    %250 = vmatpush1.bf16.msra.mxu0 %v181
    %251 = vmatprep.subr.bf16.mxu0 0
    %252 = vmatpush1.bf16.msra.mxu0 %v178
    %253 = vmatprep.subr.bf16.mxu0 0
    %254 = vmatpush1.bf16.msra.mxu0 %v175
    %255 = vmatprep.subr.bf16.mxu0 0
    %256 = vmatpush1.bf16.msra.mxu0 %v172
    %257 = vmatprep.subr.bf16.mxu0 0
    %258 = vmatpush1.bf16.msra.mxu0 %v169
    %259 = vmatprep.subr.bf16.mxu0 0
    %260 = vmatpush1.bf16.msra.mxu0 %v166
    %261 = vmatprep.subr.bf16.mxu0 0
    %262 = vmatpush1.bf16.msra.mxu0 %v163
    %263 = vmatprep.subr.bf16.mxu0 0
    %264 = vmatpush1.bf16.msra.mxu0 %v160
    %265 = vmatprep.subr.bf16.mxu0 0
    %266 = vmatpush2.bf16.msra.mxu0 0
    %267 = vmatprep.subr.bf16.mxu0 0
    %268 = vmatpush2.bf16.msra.mxu0 0
    %269 = vmatprep.subr.bf16.mxu0 0
    %270 = vmatpush2.bf16.msra.mxu0 0
    %271 = vmatprep.subr.bf16.mxu0 0
    %272 = vmatpush2.bf16.msra.mxu0 0
    %273 = vmatprep.subr.bf16.mxu0 0
    %274 = vmatpush2.bf16.msra.mxu0 0
    %275 = vmatprep.subr.bf16.mxu0 0
    %276 = vmatpush2.bf16.msra.mxu0 0
    %277 = vmatprep.subr.bf16.mxu0 0
    %278 = vmatpush2.bf16.msra.mxu0 0
    %279 = vmatprep.subr.bf16.mxu0 0
    %280 = vmatpush2.bf16.msra.mxu0 0
    %281 = vmatprep.mubr.bf16.mxu0 0
    %282 = vmatmul.mubr.bf16.gmra.mxu0 %v45
    %v283 = vpop.f32.mrf.mxu0
    %v284 = vadd.f32 0.0, %v283
    %v285 = vpop.f32.mrf.mxu0
    %v286 = vpop.f32.mrf.mxu0
    %v287 = vadd.f32 0.0, %v286
    %v288 = vpop.f32.mrf.mxu0
    %289 = vdwg.mxu0
    %290 = vst [vmem:[#allocation2] sm:$0xff] %v241
    %291 = vst [vmem:[#allocation2 + $0x8] sm:$0xff] %v243
    %vm292 = vcmask 130048
    %293 = vst.msk [vmem:[#allocation2 + $0x10] sm:$0xff] %vm292, %v284
    %294 = vst [vmem:[#allocation2 + $0x18] sm:$0xff] %v245
    %295 = vst [vmem:[#allocation2 + $0x20] sm:$0xff] %v247
    %296 = vst.msk [vmem:[#allocation2 + $0x28] sm:$0xff] %vm292, %v287
    // Predicated region
    $region14: #{paligemma_forward.39} parent=1 // pred_check
      _
    $region15: #{paligemma_forward.39} parent=1 // pred_check_branch
      %298 = sbr.rel (0) target = $region17
    $region16: #{paligemma_forward.39} parent=1 // pred_region
      %s300 = ssub.s32 768, 768
      %301 = vsyncadd [#allocation3], %s300
      %s302 = sshll.u32 [#allocation2], 4
      %s303 = int_to_ptr.vmem [resolvable:$true] %s302
      %308 = dma.vmem_to_hbm [thread:$0]  %s303, 768, %s3, [#allocation3], 384, 384, 24
    $region17: #{paligemma_forward.39} parent=1 // pred_fallthru
      _
    // Predicated region
    $region18: #{paligemma_forward.39} parent=1 // pred_check
      _
    $region19: #{paligemma_forward.39} parent=1 // pred_check_branch
      %310 = sbr.rel (0) target = $region21
    $region20: #{paligemma_forward.39} parent=1 // pred_region
      %311 = dma.done [#allocation3], 768
    $region21: #{paligemma_forward.39} parent=1 // pred_fallthru
      _
    %312 = vsyncpa [#allocation3], 1

// kernel: paligemma_forward.32
$region0: #{paligemma_forward.32}
  #allocation0 [shape = 'u32[]', space=smem, size = 0x4, offset = 0x4, fixed_abs, tag = 'smem constant byte address 0x4 - core index']
  #allocation1 [shape = 'u32[144,128]{1,0:T(1,128)}', space=vmem, size = 0x12000, scoped, tag = 'internal scratch']
  #allocation2 [shape = 'f32[8,4]{1,0:T(8,128)}', space=vmem, size = 0x1000, scoped, tag = 'scratch operand']
  #allocation3 [shape = 'f32[8,4]{1,0:T(8,128)}', space=vmem, size = 0x1000, scoped, tag = 'scratch operand']
  #allocation4 [shape = 'f32[8,128]{1,0:T(8,128)}', space=vmem, size = 0x1000, scoped, tag = 'scratch operand']
  %s0 = inlined_call_operand.vmem [shape: bf16[2,8,128], index: 0, kind: input, shape index: {}]
  %s1 = inlined_call_operand.vmem [shape: bf16[2,8,64], index: 1, kind: input, shape index: {}]
  %s2 = inlined_call_operand.vmem [shape: bf16[2,8,64], index: 2, kind: input, shape index: {}]
  %s3 = inlined_call_operand.vmem [shape: bf16[2,8,128], index: 3, kind: output, shape index: {}]
  %s4 = sld [smem:[#allocation0]]
  $region53: #{paligemma_forward.32} parent=0
    _
  %s6 = ssub.s32 1, %s4
  %s7 = scalar_select 0, %s6, %s4
  loop: start=0, step=1, limit=4
  $region2: #{paligemma_forward.32} parent=0 // loop_pre_header
    _
  $region3: #{paligemma_forward.32} parent=0 // loop_header
    %s9 = sphi 0, %s13
    %p10 = scmp.ge.s32.totalorder %s9, 4
    %s16 = sphi 0, %s35
    %s17 = sphi 0, %s31
    %s18 = sphi 0, %s27
    %s19 = sphi 0, %s16
    %s20 = sphi 0, %s17
    %s21 = sphi 0, %s18
    %s22 = sphi 0, %s19
    %s23 = sphi 0, %s20
    %s24 = sphi 0, %s21
    %s40 = sphi 0, %s42
    %s43 = sphi 0, %s40
    %s44 = sphi 0, %s43
    %s60 = sphi 0, %s44
    %s68 = sphi 0, %s70
    %s71 = sphi 0, %s68
    %s72 = sphi 0, %s71
    %s88 = sphi 0, %s72
    %s96 = sphi 0, %s98
    %s99 = sphi 0, %s96
    %s100 = sphi 0, %s99
    %s116 = sphi 0, %s100
    %s124 = sphi 0, %s126
    %s127 = sphi 0, %s124
    %s128 = sphi 0, %s127
    %s144 = sphi 0, %s128
  $region4: #{paligemma_forward.32} parent=0 // loop_header_branch
    %12 = sbr.rel (%p10) target = $region8
  $region5: #{paligemma_forward.32} parent=0 // loop_body
    %s14 = ssub.s32 %s9, 1
    %s15 = ssub.s32 %s9, 2
    %s25 = sadd.s32 1, %s18
    %p26 = scmp.ge.s32.totalorder %s25, 1
    %s27 = scalar_select %p26, 0, %s25
    %s28 = sadd.s32 1, %s17
    %s29 = scalar_select %p26, %s28, %s17
    %p30 = scmp.ge.s32.totalorder %s29, 1
    %s31 = scalar_select %p30, 0, %s29
    %s32 = sadd.s32 1, %s16
    %s33 = scalar_select %p30, %s32, %s16
    %p34 = scmp.ge.s32.totalorder %s33, 2
    %s35 = scalar_select %p34, 0, %s33
    %s36 = ssub.s32 %s16, %s35
    %s37 = ssub.s32 %s17, %s31
    %s38 = sor.u32 %s36, %s37
    %p39 = scmp.eq.s32.totalorder %s38, 0
    %s41 = sadd.s32 %s40, 1
    %s42 = scalar_select %p39, %s40, %s41
    %p45 = pneg %p39
    %p46 = scmp.eq.s32.totalorder %s9, 1
    %p47 = por %p45, %p46
    %p48 = scmp.ne.s32.totalorder %s40, %s43
    %p49 = scmp.eq.s32.totalorder %s9, 0
    %p50 = por %p48, %p49
    %p51 = scmp.ne.s32.totalorder %s40, %s43
    %p52 = scmp.eq.s32.totalorder %s14, 1
    %p53 = por %p51, %p52
    %p54 = scmp.ne.s32.totalorder %s43, %s44
    %p55 = scmp.eq.s32.totalorder %s14, 0
    %p56 = por %p54, %p55
    %p57 = scmp.ne.s32.totalorder %s43, %s44
    %p58 = scmp.eq.s32.totalorder %s15, 1
    %p59 = por %p57, %p58
    %p61 = scmp.ne.s32.totalorder %s44, %s60
    %p62 = scmp.eq.s32.totalorder %s15, 0
    %p63 = por %p61, %p62
    %s64 = ssub.s32 %s16, %s35
    %s65 = ssub.s32 %s18, %s27
    %s66 = sor.u32 %s64, %s65
    %p67 = scmp.eq.s32.totalorder %s66, 0
    %s69 = sadd.s32 %s68, 1
    %s70 = scalar_select %p67, %s68, %s69
    %p73 = pneg %p67
    %p74 = scmp.eq.s32.totalorder %s9, 1
    %p75 = por %p73, %p74
    %p76 = scmp.ne.s32.totalorder %s68, %s71
    %p77 = scmp.eq.s32.totalorder %s9, 0
    %p78 = por %p76, %p77
    %p79 = scmp.ne.s32.totalorder %s68, %s71
    %p80 = scmp.eq.s32.totalorder %s14, 1
    %p81 = por %p79, %p80
    %p82 = scmp.ne.s32.totalorder %s71, %s72
    %p83 = scmp.eq.s32.totalorder %s14, 0
    %p84 = por %p82, %p83
    %p85 = scmp.ne.s32.totalorder %s71, %s72
    %p86 = scmp.eq.s32.totalorder %s15, 1
    %p87 = por %p85, %p86
    %p89 = scmp.ne.s32.totalorder %s72, %s88
    %p90 = scmp.eq.s32.totalorder %s15, 0
    %p91 = por %p89, %p90
    %s92 = ssub.s32 %s16, %s35
    %s93 = ssub.s32 %s18, %s27
    %s94 = sor.u32 %s92, %s93
    %p95 = scmp.eq.s32.totalorder %s94, 0
    %s97 = sadd.s32 %s96, 1
    %s98 = scalar_select %p95, %s96, %s97
    %p101 = pneg %p95
    %p102 = scmp.eq.s32.totalorder %s9, 1
    %p103 = por %p101, %p102
    %p104 = scmp.ne.s32.totalorder %s96, %s99
    %p105 = scmp.eq.s32.totalorder %s9, 0
    %p106 = por %p104, %p105
    %p107 = scmp.ne.s32.totalorder %s96, %s99
    %p108 = scmp.eq.s32.totalorder %s14, 1
    %p109 = por %p107, %p108
    %p110 = scmp.ne.s32.totalorder %s99, %s100
    %p111 = scmp.eq.s32.totalorder %s14, 0
    %p112 = por %p110, %p111
    %p113 = scmp.ne.s32.totalorder %s99, %s100
    %p114 = scmp.eq.s32.totalorder %s15, 1
    %p115 = por %p113, %p114
    %p117 = scmp.ne.s32.totalorder %s100, %s116
    %p118 = scmp.eq.s32.totalorder %s15, 0
    %p119 = por %p117, %p118
    %s120 = ssub.s32 %s16, %s35
    %s121 = ssub.s32 %s17, %s31
    %s122 = sor.u32 %s120, %s121
    %p123 = scmp.eq.s32.totalorder %s122, 0
    %s125 = sadd.s32 %s124, 1
    %s126 = scalar_select %p123, %s124, %s125
    %p129 = pneg %p123
    %p130 = scmp.eq.s32.totalorder %s9, 1
    %p131 = por %p129, %p130
    %p132 = scmp.ne.s32.totalorder %s124, %s127
    %p133 = scmp.eq.s32.totalorder %s9, 0
    %p134 = por %p132, %p133
    %p135 = scmp.ne.s32.totalorder %s124, %s127
    %p136 = scmp.eq.s32.totalorder %s14, 1
    %p137 = por %p135, %p136
    %p138 = scmp.ne.s32.totalorder %s127, %s128
    %p139 = scmp.eq.s32.totalorder %s14, 0
    %p140 = por %p138, %p139
    %p141 = scmp.ne.s32.totalorder %s127, %s128
    %p142 = scmp.eq.s32.totalorder %s15, 1
    %p143 = por %p141, %p142
    %p145 = scmp.ne.s32.totalorder %s128, %s144
    %p146 = scmp.eq.s32.totalorder %s15, 0
    %p147 = por %p145, %p146
    %p148 = scmp.le.s32.totalorder 1, %s9
    %p149 = scmp.lt.s32.totalorder %s9, 3
    %p150 = pnand %p148, %p149
    %p151 = pneg %p150
    // Predicated region
    $region9: #{paligemma_forward.32} parent=5 // pred_check
      _
    $region10: #{paligemma_forward.32} parent=5 // pred_check_branch
      %153 = sbr.rel (%p150) target = $region12
    $region11: #{paligemma_forward.32} parent=5 // pred_region
      %s154 = ssub.s32 %s9, 1
    $region12: #{paligemma_forward.32} parent=5 // pred_fallthru
      _
    %p155 = scmp.lt.s32.totalorder %s9, 2
    // Predicated region
    $region13: #{paligemma_forward.32} parent=5 // pred_check
      %p156 = pneg %p155
    $region14: #{paligemma_forward.32} parent=5 // pred_check_branch
      %158 = sbr.rel (%p156) target = $region16
    $region15: #{paligemma_forward.32} parent=5 // pred_region
      // Predicated region
      $region17: #{paligemma_forward.32} parent=15 // pred_check
        %p159 = pneg %p50
      $region18: #{paligemma_forward.32} parent=15 // pred_check_branch
        %161 = sbr.rel (%p159) target = $region20
      $region19: #{paligemma_forward.32} parent=15 // pred_region
        %p162 = scmp.lt.s32.totalorder %s16, 1
        %s163 = scalar_select %p162, %s16, 1
        %p164 = scmp.lt.s32.totalorder %s17, 0
        %s165 = scalar_select %p164, %s17, 0
        %s166 = sadd.s32 %s165, %s163
        %s167 = smul.addr %s166, 4
        %s168 = scalar_lea.vmem %s0, %s167
      $region20: #{paligemma_forward.32} parent=15 // pred_fallthru
        _
      // Predicated region
      $region21: #{paligemma_forward.32} parent=15 // pred_check
        %p169 = pneg %p78
      $region22: #{paligemma_forward.32} parent=15 // pred_check_branch
        %171 = sbr.rel (%p169) target = $region24
      $region23: #{paligemma_forward.32} parent=15 // pred_region
        %p172 = scmp.lt.s32.totalorder %s16, 1
        %s173 = scalar_select %p172, %s16, 1
        %p174 = scmp.lt.s32.totalorder %s18, 0
        %s175 = scalar_select %p174, %s18, 0
        %s176 = sadd.s32 %s175, %s173
        %s177 = smul.addr %s176, 4
        %s178 = scalar_lea.vmem %s1, %s177
      $region24: #{paligemma_forward.32} parent=15 // pred_fallthru
        _
      // Predicated region
      $region25: #{paligemma_forward.32} parent=15 // pred_check
        %p179 = pneg %p106
      $region26: #{paligemma_forward.32} parent=15 // pred_check_branch
        %181 = sbr.rel (%p179) target = $region28
      $region27: #{paligemma_forward.32} parent=15 // pred_region
        %p182 = scmp.lt.s32.totalorder %s16, 1
        %s183 = scalar_select %p182, %s16, 1
        %p184 = scmp.lt.s32.totalorder %s18, 0
        %s185 = scalar_select %p184, %s18, 0
        %s186 = sadd.s32 %s185, %s183
        %s187 = smul.addr %s186, 4
        %s188 = scalar_lea.vmem %s2, %s187
      $region28: #{paligemma_forward.32} parent=15 // pred_fallthru
        _
    $region16: #{paligemma_forward.32} parent=5 // pred_fallthru
      _
    %p189 = scmp.le.s32.totalorder 1, %s9
    %p190 = scmp.lt.s32.totalorder %s9, 3
    %p191 = pnand %p189, %p190
    %p192 = pneg %p191
    // Predicated region
    $region29: #{paligemma_forward.32} parent=5 // pred_check
      _
    $region30: #{paligemma_forward.32} parent=5 // pred_check_branch
      %194 = sbr.rel (%p191) target = $region32
    $region31: #{paligemma_forward.32} parent=5 // pred_region
      %s195 = ssub.s32 %s9, 1
      %p196 = scmp.lt.s32.totalorder %s19, 1
      %s197 = scalar_select %p196, %s19, 1
      %p198 = scmp.lt.s32.totalorder %s20, 0
      %s199 = scalar_select %p198, %s20, 0
      %s200 = sadd.s32 %s199, %s197
      %s201 = smul.addr %s200, 4
      %s202 = scalar_lea.vmem %s0, %s201
      %p203 = pneg %p56
      %p204 = pneg %p53
      %p205 = scmp.lt.s32.totalorder %s19, 1
      %s206 = scalar_select %p205, %s19, 1
      %p207 = scmp.lt.s32.totalorder %s21, 0
      %s208 = scalar_select %p207, %s21, 0
      %s209 = sadd.s32 %s208, %s206
      %s210 = smul.addr %s209, 4
      %s211 = scalar_lea.vmem %s1, %s210
      %p212 = pneg %p84
      %p213 = pneg %p81
      %p214 = scmp.lt.s32.totalorder %s19, 1
      %s215 = scalar_select %p214, %s19, 1
      %p216 = scmp.lt.s32.totalorder %s21, 0
      %s217 = scalar_select %p216, %s21, 0
      %s218 = sadd.s32 %s217, %s215
      %s219 = smul.addr %s218, 4
      %s220 = scalar_lea.vmem %s2, %s219
      %p221 = pneg %p112
      %p222 = pneg %p109
      %p223 = pneg %p140
      %p224 = pneg %p137
      %p225 = scmp.lt.s32.totalorder %s19, 1
      %s226 = scalar_select %p225, %s19, 1
      %p227 = scmp.lt.s32.totalorder %s20, 0
      %s228 = scalar_select %p227, %s20, 0
      %s229 = sadd.s32 %s228, %s226
      %s230 = smul.addr %s229, 4
      %s231 = scalar_lea.vmem %s3, %s230
      %p232 = scmp.lt.s32.totalorder %s19, 1
      %s233 = scalar_select %p232, %s19, 1
      %p234 = scmp.lt.s32.totalorder %s20, 0
      %s235 = scalar_select %p234, %s20, 0
      %s236 = sadd.s32 %s235, %s233
      %s237 = smul.addr %s236, 4
      %s238 = scalar_lea.vmem %s0, %s237
      %p239 = scmp.lt.s32.totalorder %s19, 1
      %s240 = scalar_select %p239, %s19, 1
      %p241 = scmp.lt.s32.totalorder %s21, 0
      %s242 = scalar_select %p241, %s21, 0
      %s243 = sadd.s32 %s242, %s240
      %s244 = smul.addr %s243, 4
      %s245 = scalar_lea.vmem %s1, %s244
      %p246 = scmp.lt.s32.totalorder %s19, 1
      %s247 = scalar_select %p246, %s19, 1
      %p248 = scmp.lt.s32.totalorder %s21, 0
      %s249 = scalar_select %p248, %s21, 0
      %s250 = sadd.s32 %s249, %s247
      %s251 = smul.addr %s250, 4
      %s252 = scalar_lea.vmem %s2, %s251
      %p253 = scmp.lt.s32.totalorder %s19, 1
      %s254 = scalar_select %p253, %s19, 1
      %p255 = scmp.lt.s32.totalorder %s20, 0
      %s256 = scalar_select %p255, %s20, 0
      %s257 = sadd.s32 %s256, %s254
      %s258 = smul.addr %s257, 4
      %s259 = scalar_lea.vmem %s3, %s258
      %p261 = scmp.eq.s32.totalorder %s21, 0
      // Predicated region
      $region33: #{paligemma_forward.32} parent=31 // pred_check
        %p262 = pneg %p261
      $region34: #{paligemma_forward.32} parent=31 // pred_check_branch
        %264 = sbr.rel (%p262) target = $region36
      $region35: #{paligemma_forward.32} parent=31 // pred_region
        %vm265 = vcmask 31744
        %266 = vst.msk [vmem:[#allocation2] sm:$0xff] %vm265, -inf
        %267 = vst.msk [vmem:[#allocation3] sm:$0xff] %vm265, 0.0
        %268 = vst [vmem:[#allocation4] sm:$0xff] 0.0
      $region36: #{paligemma_forward.32} parent=31 // pred_fallthru
        _
      %v269 = vld [vmem:[%s238] sm:$0xf]
      %v270 = vunpack.c.l.bf16 %v269
      %v271 = vmul.f32 %v270, 0.17677669
      %v272 = vpack.c.bf16 %v271, %v271
      %v273 = vld [vmem:[%s245] sm:$0xf]
      %v274 = vld [vmem:[%s252] sm:$0xf]
      %vm275 = vcmask 261120
      %v277 = vsel %vm275, %v272, 0
      %v280 = vsel %vm275, %v273, 0
      %282 = vmatprep.subr.bf16.mxu0 0
      %283 = vmatpush1.bf16.xpose.msra.mxu0 0
      %284 = vmatprep.subr.bf16.mxu0 0
      %285 = vmatpush1.bf16.xpose.msra.mxu0 0
      %286 = vmatprep.subr.bf16.mxu0 0
      %287 = vmatpush1.bf16.xpose.msra.mxu0 0
      %288 = vmatprep.subr.bf16.mxu0 0
      %289 = vmatpush1.bf16.xpose.msra.mxu0 0
      %290 = vmatprep.subr.bf16.mxu0 0
      %291 = vmatpush1.bf16.xpose.msra.mxu0 0
      %292 = vmatprep.subr.bf16.mxu0 0
      %293 = vmatpush1.bf16.xpose.msra.mxu0 0
      %294 = vmatprep.subr.bf16.mxu0 0
      %295 = vmatpush1.bf16.xpose.msra.mxu0 0
      %296 = vmatprep.subr.bf16.mxu0 0
      %297 = vmatpush1.bf16.xpose.msra.mxu0 %v280
      %298 = vmatprep.subr.bf16.mxu0 0
      %299 = vmatpush2.bf16.xpose.msra.mxu0 0
      %300 = vmatprep.subr.bf16.mxu0 0
      %301 = vmatpush2.bf16.xpose.msra.mxu0 0
      %302 = vmatprep.subr.bf16.mxu0 0
      %303 = vmatpush2.bf16.xpose.msra.mxu0 0
      %304 = vmatprep.subr.bf16.mxu0 0
      %305 = vmatpush2.bf16.xpose.msra.mxu0 0
      %306 = vmatprep.subr.bf16.mxu0 0
      %307 = vmatpush2.bf16.xpose.msra.mxu0 0
      %308 = vmatprep.subr.bf16.mxu0 0
      %309 = vmatpush2.bf16.xpose.msra.mxu0 0
      %310 = vmatprep.subr.bf16.mxu0 0
      %311 = vmatpush2.bf16.xpose.msra.mxu0 0
      %312 = vmatprep.subr.bf16.mxu0 0
      %313 = vmatpush2.bf16.xpose.msra.mxu0 0
      %314 = vmatprep.mubr.bf16.mxu0 0
      %315 = vmatmul.mubr.bf16.gmra.mxu0 %v277
      %v316 = vpop.f32.mrf.mxu0
      %v317 = vadd.f32 0.0, %v316
      %v318 = vpop.f32.mrf.mxu0
      %v319 = vpop.f32.mrf.mxu0
      %v320 = vpop.f32.mrf.mxu0
      %321 = vdwg.mxu0
      %v322 = vld [vmem:[#allocation2] sm:$0xff]
      %v323 = vld [vmem:[#allocation3] sm:$0xff]
      %vm324 = vcmask 64512
      %v325 = vsel %vm324, %v317, -inf
      %326 = vmax.xlane.f32.xlu0 %v325
      %v327 = vpop.xlane.xlu0 %326
      %v328 = vmax.f32 %v322, %v327
      %v329 = vsub.f32 %v322, %v328
      %v330 = vmul.f32 %v329, 1.442695
      %v331 = vpow.pop %v330
      %333 = vset.pattern.permute.xlu0 0
      %334 = vperm.xlu0 %333, %v328
      %v335 = vpop.permute.xlu0 %334
      %v337 = vsub.f32 %v317, %v335
      %v338 = vmul.f32 %v337, 1.442695
      %v339 = vpow.pop %v338
      %v340 = vmul.f32 %v331, %v323
      %v341 = vsel %vm324, %v339, 0.0
      %342 = vadd.xlane.f32.xlu0 %v341
      %v343 = vpop.xlane.xlu0 %342
      %v344 = vadd.f32 %v340, %v343
      %vm345 = vcmask 7168
      %346 = vst.msk [vmem:[#allocation3] sm:$0xff] %vm345, %v344
      %v347 = vpack.c.bf16 %v339, %v339
      %v349 = vsel %vm324, %v347, 0
      %vm351 = vcmask 1043456
      %v353 = vsel %vm351, %v274, 0
      %355 = vmatprep.subr.bf16.mxu0 0
      %356 = vmatpush1.bf16.msra.mxu0 0
      %357 = vmatprep.subr.bf16.mxu0 0
      %358 = vmatpush1.bf16.msra.mxu0 0
      %359 = vmatprep.subr.bf16.mxu0 0
      %360 = vmatpush1.bf16.msra.mxu0 0
      %361 = vmatprep.subr.bf16.mxu0 0
      %362 = vmatpush1.bf16.msra.mxu0 0
      %363 = vmatprep.subr.bf16.mxu0 0
      %364 = vmatpush1.bf16.msra.mxu0 0
      %365 = vmatprep.subr.bf16.mxu0 0
      %366 = vmatpush1.bf16.msra.mxu0 0
      %367 = vmatprep.subr.bf16.mxu0 0
      %368 = vmatpush1.bf16.msra.mxu0 0
      %369 = vmatprep.subr.bf16.mxu0 0
      %370 = vmatpush1.bf16.msra.mxu0 %v353
      %371 = vmatprep.subr.bf16.mxu0 0
      %372 = vmatpush2.bf16.msra.mxu0 0
      %373 = vmatprep.subr.bf16.mxu0 0
      %374 = vmatpush2.bf16.msra.mxu0 0
      %375 = vmatprep.subr.bf16.mxu0 0
      %376 = vmatpush2.bf16.msra.mxu0 0
      %377 = vmatprep.subr.bf16.mxu0 0
      %378 = vmatpush2.bf16.msra.mxu0 0
      %379 = vmatprep.subr.bf16.mxu0 0
      %380 = vmatpush2.bf16.msra.mxu0 0
      %381 = vmatprep.subr.bf16.mxu0 0
      %382 = vmatpush2.bf16.msra.mxu0 0
      %383 = vmatprep.subr.bf16.mxu0 0
      %384 = vmatpush2.bf16.msra.mxu0 0
      %385 = vmatprep.subr.bf16.mxu0 0
      %386 = vmatpush2.bf16.msra.mxu0 0
      %387 = vmatprep.mubr.bf16.mxu0 0
      %388 = vmatmul.mubr.bf16.gmra.mxu0 %v349
      %v389 = vpop.f32.mrf.mxu0
      %v390 = vadd.f32 0.0, %v389
      %v391 = vpop.f32.mrf.mxu0
      %v392 = vpop.f32.mrf.mxu0
      %v393 = vpop.f32.mrf.mxu0
      %394 = vdwg.mxu0
      %v395 = vld [vmem:[#allocation4] sm:$0xff]
      %397 = vset.pattern.permute.xlu0 0
      %398 = vperm.xlu0 %397, %v331
      %v399 = vpop.permute.xlu0 %398
      %v401 = vmul.f32 %v399, %v395
      %v402 = vadd.f32 %v401, %v390
      %403 = vst.msk [vmem:[#allocation4] sm:$0xff] %vm275, %v402
      %404 = vst.msk [vmem:[#allocation2] sm:$0xff] %vm345, %v328
      %406 = vrot.lane.b32.xlu0 %v272, 96
      %v407 = vpop.permute.xlu0 %406
      %v409 = vsel %vm275, %v407, 0
      %411 = vmatprep.subr.bf16.mxu0 0
      %412 = vmatpush1.bf16.xpose.msra.mxu0 0
      %413 = vmatprep.subr.bf16.mxu0 0
      %414 = vmatpush1.bf16.xpose.msra.mxu0 0
      %415 = vmatprep.subr.bf16.mxu0 0
      %416 = vmatpush1.bf16.xpose.msra.mxu0 0
      %417 = vmatprep.subr.bf16.mxu0 0
      %418 = vmatpush1.bf16.xpose.msra.mxu0 0
      %419 = vmatprep.subr.bf16.mxu0 0
      %420 = vmatpush1.bf16.xpose.msra.mxu0 0
      %421 = vmatprep.subr.bf16.mxu0 0
      %422 = vmatpush1.bf16.xpose.msra.mxu0 0
      %423 = vmatprep.subr.bf16.mxu0 0
      %424 = vmatpush1.bf16.xpose.msra.mxu0 0
      %425 = vmatprep.subr.bf16.mxu0 0
      %426 = vmatpush1.bf16.xpose.msra.mxu0 %v280
      %427 = vmatprep.subr.bf16.mxu0 0
      %428 = vmatpush2.bf16.xpose.msra.mxu0 0
      %429 = vmatprep.subr.bf16.mxu0 0
      %430 = vmatpush2.bf16.xpose.msra.mxu0 0
      %431 = vmatprep.subr.bf16.mxu0 0
      %432 = vmatpush2.bf16.xpose.msra.mxu0 0
      %433 = vmatprep.subr.bf16.mxu0 0
      %434 = vmatpush2.bf16.xpose.msra.mxu0 0
      %435 = vmatprep.subr.bf16.mxu0 0
      %436 = vmatpush2.bf16.xpose.msra.mxu0 0
      %437 = vmatprep.subr.bf16.mxu0 0
      %438 = vmatpush2.bf16.xpose.msra.mxu0 0
      %439 = vmatprep.subr.bf16.mxu0 0
      %440 = vmatpush2.bf16.xpose.msra.mxu0 0
      %441 = vmatprep.subr.bf16.mxu0 0
      %442 = vmatpush2.bf16.xpose.msra.mxu0 0
      %443 = vmatprep.mubr.bf16.mxu0 0
      %444 = vmatmul.mubr.bf16.gmra.mxu0 %v409
      %v445 = vpop.f32.mrf.mxu0
      %v446 = vadd.f32 0.0, %v445
      %v447 = vpop.f32.mrf.mxu0
      %v448 = vpop.f32.mrf.mxu0
      %v449 = vpop.f32.mrf.mxu0
      %450 = vdwg.mxu0
      %v451 = vld [vmem:[#allocation2] sm:$0xff]
      %v452 = vld [vmem:[#allocation3] sm:$0xff]
      %v453 = vsel %vm324, %v446, -inf
      %454 = vmax.xlane.f32.xlu0 %v453
      %v455 = vpop.xlane.xlu0 %454
      %v456 = vmax.f32 %v451, %v455
      %v457 = vsub.f32 %v451, %v456
      %v458 = vmul.f32 %v457, 1.442695
      %v459 = vpow.pop %v458
      %461 = vset.pattern.permute.xlu0 1
      %462 = vperm.xlu0 %461, %v456
      %v463 = vpop.permute.xlu0 %462
      %v465 = vsub.f32 %v446, %v463
      %v466 = vmul.f32 %v465, 1.442695
      %v467 = vpow.pop %v466
      %v468 = vmul.f32 %v459, %v452
      %v469 = vsel %vm324, %v467, 0.0
      %470 = vadd.xlane.f32.xlu0 %v469
      %v471 = vpop.xlane.xlu0 %470
      %v472 = vadd.f32 %v468, %v471
      %vm473 = vcmask 15368
      %474 = vst.msk [vmem:[#allocation3] sm:$0xff] %vm473, %v472
      %v475 = vpack.c.bf16 %v467, %v467
      %v477 = vsel %vm324, %v475, 0
      %479 = vmatprep.subr.bf16.mxu0 0
      %480 = vmatpush1.bf16.msra.mxu0 0
      %481 = vmatprep.subr.bf16.mxu0 0
      %482 = vmatpush1.bf16.msra.mxu0 0
      %483 = vmatprep.subr.bf16.mxu0 0
      %484 = vmatpush1.bf16.msra.mxu0 0
      %485 = vmatprep.subr.bf16.mxu0 0
      %486 = vmatpush1.bf16.msra.mxu0 0
      %487 = vmatprep.subr.bf16.mxu0 0
      %488 = vmatpush1.bf16.msra.mxu0 0
      %489 = vmatprep.subr.bf16.mxu0 0
      %490 = vmatpush1.bf16.msra.mxu0 0
      %491 = vmatprep.subr.bf16.mxu0 0
      %492 = vmatpush1.bf16.msra.mxu0 0
      %493 = vmatprep.subr.bf16.mxu0 0
      %494 = vmatpush1.bf16.msra.mxu0 %v353
      %495 = vmatprep.subr.bf16.mxu0 0
      %496 = vmatpush2.bf16.msra.mxu0 0
      %497 = vmatprep.subr.bf16.mxu0 0
      %498 = vmatpush2.bf16.msra.mxu0 0
      %499 = vmatprep.subr.bf16.mxu0 0
      %500 = vmatpush2.bf16.msra.mxu0 0
      %501 = vmatprep.subr.bf16.mxu0 0
      %502 = vmatpush2.bf16.msra.mxu0 0
      %503 = vmatprep.subr.bf16.mxu0 0
      %504 = vmatpush2.bf16.msra.mxu0 0
      %505 = vmatprep.subr.bf16.mxu0 0
      %506 = vmatpush2.bf16.msra.mxu0 0
      %507 = vmatprep.subr.bf16.mxu0 0
      %508 = vmatpush2.bf16.msra.mxu0 0
      %509 = vmatprep.subr.bf16.mxu0 0
      %510 = vmatpush2.bf16.msra.mxu0 0
      %511 = vmatprep.mubr.bf16.mxu0 0
      %512 = vmatmul.mubr.bf16.gmra.mxu0 %v477
      %v513 = vpop.f32.mrf.mxu0
      %v514 = vadd.f32 0.0, %v513
      %v515 = vpop.f32.mrf.mxu0
      %v516 = vpop.f32.mrf.mxu0
      %v517 = vpop.f32.mrf.mxu0
      %518 = vdwg.mxu0
      %v519 = vld [vmem:[#allocation4] sm:$0xff]
      %521 = vset.pattern.permute.xlu0 1
      %522 = vperm.xlu0 %521, %v459
      %v523 = vpop.permute.xlu0 %522
      %v525 = vmul.f32 %v523, %v519
      %527 = vrot.lane.b32.xlu0 %v514, 32
      %v528 = vpop.permute.xlu0 %527
      %v530 = vadd.f32 %v525, %v528
      %vm531 = vcmask 523520
      %532 = vst.msk [vmem:[#allocation4] sm:$0xff] %vm531, %v530
      %533 = vst.msk [vmem:[#allocation2] sm:$0xff] %vm473, %v456
      %534 = vrot.lane.b32.xlu0 %v272, 64
      %v535 = vpop.permute.xlu0 %534
      %v537 = vunpack.c.l.b16 %v273
      %v538 = vpack.c.b16 %v537, %v537
      %539 = vrot.lane.b32.xlu0 %v538, 96
      %v540 = vpop.permute.xlu0 %539
      %v542 = vsel %vm275, %v535, 0
      %v545 = vsel %vm275, %v540, 0
      %547 = vmatprep.subr.bf16.mxu0 0
      %548 = vmatpush1.bf16.xpose.msra.mxu0 0
      %549 = vmatprep.subr.bf16.mxu0 0
      %550 = vmatpush1.bf16.xpose.msra.mxu0 0
      %551 = vmatprep.subr.bf16.mxu0 0
      %552 = vmatpush1.bf16.xpose.msra.mxu0 0
      %553 = vmatprep.subr.bf16.mxu0 0
      %554 = vmatpush1.bf16.xpose.msra.mxu0 0
      %555 = vmatprep.subr.bf16.mxu0 0
      %556 = vmatpush1.bf16.xpose.msra.mxu0 0
      %557 = vmatprep.subr.bf16.mxu0 0
      %558 = vmatpush1.bf16.xpose.msra.mxu0 0
      %559 = vmatprep.subr.bf16.mxu0 0
      %560 = vmatpush1.bf16.xpose.msra.mxu0 0
      %561 = vmatprep.subr.bf16.mxu0 0
      %562 = vmatpush1.bf16.xpose.msra.mxu0 %v545
      %563 = vmatprep.subr.bf16.mxu0 0
      %564 = vmatpush2.bf16.xpose.msra.mxu0 0
      %565 = vmatprep.subr.bf16.mxu0 0
      %566 = vmatpush2.bf16.xpose.msra.mxu0 0
      %567 = vmatprep.subr.bf16.mxu0 0
      %568 = vmatpush2.bf16.xpose.msra.mxu0 0
      %569 = vmatprep.subr.bf16.mxu0 0
      %570 = vmatpush2.bf16.xpose.msra.mxu0 0
      %571 = vmatprep.subr.bf16.mxu0 0
      %572 = vmatpush2.bf16.xpose.msra.mxu0 0
      %573 = vmatprep.subr.bf16.mxu0 0
      %574 = vmatpush2.bf16.xpose.msra.mxu0 0
      %575 = vmatprep.subr.bf16.mxu0 0
      %576 = vmatpush2.bf16.xpose.msra.mxu0 0
      %577 = vmatprep.subr.bf16.mxu0 0
      %578 = vmatpush2.bf16.xpose.msra.mxu0 0
      %579 = vmatprep.mubr.bf16.mxu0 0
      %580 = vmatmul.mubr.bf16.gmra.mxu0 %v542
      %v581 = vpop.f32.mrf.mxu0
      %v582 = vadd.f32 0.0, %v581
      %v583 = vpop.f32.mrf.mxu0
      %v584 = vpop.f32.mrf.mxu0
      %v585 = vpop.f32.mrf.mxu0
      %586 = vdwg.mxu0
      %v587 = vld [vmem:[#allocation2] sm:$0xff]
      %v588 = vld [vmem:[#allocation3] sm:$0xff]
      %v589 = vsel %vm324, %v582, -inf
      %590 = vmax.xlane.f32.xlu0 %v589
      %v591 = vpop.xlane.xlu0 %590
      %v592 = vmax.f32 %v587, %v591
      %v593 = vsub.f32 %v587, %v592
      %v594 = vmul.f32 %v593, 1.442695
      %v595 = vpow.pop %v594
      %597 = vset.pattern.permute.xlu0 2
      %598 = vperm.xlu0 %597, %v592
      %v599 = vpop.permute.xlu0 %598
      %v601 = vsub.f32 %v582, %v599
      %v602 = vmul.f32 %v601, 1.442695
      %v603 = vpow.pop %v602
      %v604 = vmul.f32 %v595, %v588
      %v605 = vsel %vm324, %v603, 0.0
      %606 = vadd.xlane.f32.xlu0 %v605
      %v607 = vpop.xlane.xlu0 %606
      %v608 = vadd.f32 %v604, %v607
      %vm609 = vcmask 23568
      %610 = vst.msk [vmem:[#allocation3] sm:$0xff] %vm609, %v608
      %v611 = vpack.c.bf16 %v603, %v603
      %v613 = vunpack.c.l.b16 %v274
      %v614 = vpack.c.b16 %v613, %v613
      %615 = vrot.lane.b32.xlu0 %v614, 96
      %v616 = vpop.permute.xlu0 %615
      %v618 = vsel %vm324, %v611, 0
      %v621 = vsel %vm351, %v616, 0
      %623 = vmatprep.subr.bf16.mxu0 0
      %624 = vmatpush1.bf16.msra.mxu0 0
      %625 = vmatprep.subr.bf16.mxu0 0
      %626 = vmatpush1.bf16.msra.mxu0 0
      %627 = vmatprep.subr.bf16.mxu0 0
      %628 = vmatpush1.bf16.msra.mxu0 0
      %629 = vmatprep.subr.bf16.mxu0 0
      %630 = vmatpush1.bf16.msra.mxu0 0
      %631 = vmatprep.subr.bf16.mxu0 0
      %632 = vmatpush1.bf16.msra.mxu0 0
      %633 = vmatprep.subr.bf16.mxu0 0
      %634 = vmatpush1.bf16.msra.mxu0 0
      %635 = vmatprep.subr.bf16.mxu0 0
      %636 = vmatpush1.bf16.msra.mxu0 0
      %637 = vmatprep.subr.bf16.mxu0 0
      %638 = vmatpush1.bf16.msra.mxu0 %v621
      %639 = vmatprep.subr.bf16.mxu0 0
      %640 = vmatpush2.bf16.msra.mxu0 0
      %641 = vmatprep.subr.bf16.mxu0 0
      %642 = vmatpush2.bf16.msra.mxu0 0
      %643 = vmatprep.subr.bf16.mxu0 0
      %644 = vmatpush2.bf16.msra.mxu0 0
      %645 = vmatprep.subr.bf16.mxu0 0
      %646 = vmatpush2.bf16.msra.mxu0 0
      %647 = vmatprep.subr.bf16.mxu0 0
      %648 = vmatpush2.bf16.msra.mxu0 0
      %649 = vmatprep.subr.bf16.mxu0 0
      %650 = vmatpush2.bf16.msra.mxu0 0
      %651 = vmatprep.subr.bf16.mxu0 0
      %652 = vmatpush2.bf16.msra.mxu0 0
      %653 = vmatprep.subr.bf16.mxu0 0
      %654 = vmatpush2.bf16.msra.mxu0 0
      %655 = vmatprep.mubr.bf16.mxu0 0
      %656 = vmatmul.mubr.bf16.gmra.mxu0 %v618
      %v657 = vpop.f32.mrf.mxu0
      %v658 = vadd.f32 0.0, %v657
      %v659 = vpop.f32.mrf.mxu0
      %v660 = vpop.f32.mrf.mxu0
      %v661 = vpop.f32.mrf.mxu0
      %662 = vdwg.mxu0
      %v663 = vld [vmem:[#allocation4] sm:$0xff]
      %665 = vset.pattern.permute.xlu0 2
      %666 = vperm.xlu0 %665, %v595
      %v667 = vpop.permute.xlu0 %666
      %v669 = vmul.f32 %v667, %v663
      %671 = vrot.lane.b32.xlu0 %v658, 64
      %v672 = vpop.permute.xlu0 %671
      %v674 = vadd.f32 %v669, %v672
      %vm675 = vcmask 785920
      %676 = vst.msk [vmem:[#allocation4] sm:$0xff] %vm675, %v674
      %677 = vst.msk [vmem:[#allocation2] sm:$0xff] %vm609, %v592
      %678 = vrot.lane.b32.xlu0 %v272, 32
      %v679 = vpop.permute.xlu0 %678
      %v681 = vsel %vm275, %v679, 0
      %683 = vmatprep.subr.bf16.mxu0 0
      %684 = vmatpush1.bf16.xpose.msra.mxu0 0
      %685 = vmatprep.subr.bf16.mxu0 0
      %686 = vmatpush1.bf16.xpose.msra.mxu0 0
      %687 = vmatprep.subr.bf16.mxu0 0
      %688 = vmatpush1.bf16.xpose.msra.mxu0 0
      %689 = vmatprep.subr.bf16.mxu0 0
      %690 = vmatpush1.bf16.xpose.msra.mxu0 0
      %691 = vmatprep.subr.bf16.mxu0 0
      %692 = vmatpush1.bf16.xpose.msra.mxu0 0
      %693 = vmatprep.subr.bf16.mxu0 0
      %694 = vmatpush1.bf16.xpose.msra.mxu0 0
      %695 = vmatprep.subr.bf16.mxu0 0
      %696 = vmatpush1.bf16.xpose.msra.mxu0 0
      %697 = vmatprep.subr.bf16.mxu0 0
      %698 = vmatpush1.bf16.xpose.msra.mxu0 %v545
      %699 = vmatprep.subr.bf16.mxu0 0
      %700 = vmatpush2.bf16.xpose.msra.mxu0 0
      %701 = vmatprep.subr.bf16.mxu0 0
      %702 = vmatpush2.bf16.xpose.msra.mxu0 0
      %703 = vmatprep.subr.bf16.mxu0 0
      %704 = vmatpush2.bf16.xpose.msra.mxu0 0
      %705 = vmatprep.subr.bf16.mxu0 0
      %706 = vmatpush2.bf16.xpose.msra.mxu0 0
      %707 = vmatprep.subr.bf16.mxu0 0
      %708 = vmatpush2.bf16.xpose.msra.mxu0 0
      %709 = vmatprep.subr.bf16.mxu0 0
      %710 = vmatpush2.bf16.xpose.msra.mxu0 0
      %711 = vmatprep.subr.bf16.mxu0 0
      %712 = vmatpush2.bf16.xpose.msra.mxu0 0
      %713 = vmatprep.subr.bf16.mxu0 0
      %714 = vmatpush2.bf16.xpose.msra.mxu0 0
      %715 = vmatprep.mubr.bf16.mxu0 0
      %716 = vmatmul.mubr.bf16.gmra.mxu0 %v681
      %v717 = vpop.f32.mrf.mxu0
      %v718 = vadd.f32 0.0, %v717
      %v719 = vpop.f32.mrf.mxu0
      %v720 = vpop.f32.mrf.mxu0
      %v721 = vpop.f32.mrf.mxu0
      %722 = vdwg.mxu0
      %v723 = vld [vmem:[#allocation2] sm:$0xff]
      %v724 = vld [vmem:[#allocation3] sm:$0xff]
      %v725 = vsel %vm324, %v718, -inf
      %726 = vmax.xlane.f32.xlu0 %v725
      %v727 = vpop.xlane.xlu0 %726
      %v728 = vmax.f32 %v723, %v727
      %v729 = vsub.f32 %v723, %v728
      %v730 = vmul.f32 %v729, 1.442695
      %v731 = vpow.pop %v730
      %733 = vset.pattern.permute.xlu0 3
      %734 = vperm.xlu0 %733, %v728
      %v735 = vpop.permute.xlu0 %734
      %v737 = vsub.f32 %v718, %v735
      %v738 = vmul.f32 %v737, 1.442695
      %v739 = vpow.pop %v738
      %v740 = vmul.f32 %v731, %v724
      %v741 = vsel %vm324, %v739, 0.0
      %742 = vadd.xlane.f32.xlu0 %v741
      %v743 = vpop.xlane.xlu0 %742
      %v744 = vadd.f32 %v740, %v743
      %vm745 = vcmask 31768
      %746 = vst.msk [vmem:[#allocation3] sm:$0xff] %vm745, %v744
      %v747 = vpack.c.bf16 %v739, %v739
      %v749 = vsel %vm324, %v747, 0
      %751 = vmatprep.subr.bf16.mxu0 0
      %752 = vmatpush1.bf16.msra.mxu0 0
      %753 = vmatprep.subr.bf16.mxu0 0
      %754 = vmatpush1.bf16.msra.mxu0 0
      %755 = vmatprep.subr.bf16.mxu0 0
      %756 = vmatpush1.bf16.msra.mxu0 0
      %757 = vmatprep.subr.bf16.mxu0 0
      %758 = vmatpush1.bf16.msra.mxu0 0
      %759 = vmatprep.subr.bf16.mxu0 0
      %760 = vmatpush1.bf16.msra.mxu0 0
      %761 = vmatprep.subr.bf16.mxu0 0
      %762 = vmatpush1.bf16.msra.mxu0 0
      %763 = vmatprep.subr.bf16.mxu0 0
      %764 = vmatpush1.bf16.msra.mxu0 0
      %765 = vmatprep.subr.bf16.mxu0 0
      %766 = vmatpush1.bf16.msra.mxu0 %v621
      %767 = vmatprep.subr.bf16.mxu0 0
      %768 = vmatpush2.bf16.msra.mxu0 0
      %769 = vmatprep.subr.bf16.mxu0 0
      %770 = vmatpush2.bf16.msra.mxu0 0
      %771 = vmatprep.subr.bf16.mxu0 0
      %772 = vmatpush2.bf16.msra.mxu0 0
      %773 = vmatprep.subr.bf16.mxu0 0
      %774 = vmatpush2.bf16.msra.mxu0 0
      %775 = vmatprep.subr.bf16.mxu0 0
      %776 = vmatpush2.bf16.msra.mxu0 0
      %777 = vmatprep.subr.bf16.mxu0 0
      %778 = vmatpush2.bf16.msra.mxu0 0
      %779 = vmatprep.subr.bf16.mxu0 0
      %780 = vmatpush2.bf16.msra.mxu0 0
      %781 = vmatprep.subr.bf16.mxu0 0
      %782 = vmatpush2.bf16.msra.mxu0 0
      %783 = vmatprep.mubr.bf16.mxu0 0
      %784 = vmatmul.mubr.bf16.gmra.mxu0 %v749
      %v785 = vpop.f32.mrf.mxu0
      %v786 = vadd.f32 0.0, %v785
      %v787 = vpop.f32.mrf.mxu0
      %v788 = vpop.f32.mrf.mxu0
      %v789 = vpop.f32.mrf.mxu0
      %790 = vdwg.mxu0
      %v791 = vld [vmem:[#allocation4] sm:$0xff]
      %793 = vset.pattern.permute.xlu0 3
      %794 = vperm.xlu0 %793, %v731
      %v795 = vpop.permute.xlu0 %794
      %v797 = vmul.f32 %v795, %v791
      %799 = vrot.lane.b32.xlu0 %v786, 96
      %v800 = vpop.permute.xlu0 %799
      %v802 = vadd.f32 %v797, %v800
      %vm803 = vcmask 1048320
      %804 = vst.msk [vmem:[#allocation4] sm:$0xff] %vm803, %v802
      %805 = vst.msk [vmem:[#allocation2] sm:$0xff] %vm745, %v728
      // Predicated region
      $region37: #{paligemma_forward.32} parent=31 // pred_check
        %p806 = pneg %p261
      $region38: #{paligemma_forward.32} parent=31 // pred_check_branch
        %808 = sbr.rel (%p806) target = $region40
      $region39: #{paligemma_forward.32} parent=31 // pred_region
        %v809 = vld [vmem:[#allocation3] sm:$0xff]
        %v810 = vrcp.pop %v809
        %v811 = vld [vmem:[#allocation4] sm:$0xff]
        %813 = vset.pattern.permute.xlu0 0
        %814 = vperm.xlu0 %813, %v810
        %v815 = vpop.permute.xlu0 %814
        %v817 = vmul.f32 %v811, %v815
        %v818 = vpack.c.bf16 %v817, %v817
        %vm819 = vcmask 257024
        %820 = vst.msk [vmem:[%s259] sm:$0xf] %vm819, %v818
        %v821 = vld [vmem:[#allocation3] sm:$0xff]
        %v822 = vrcp.pop %v821
        %v823 = vld [vmem:[#allocation4] sm:$0xff]
        %825 = vset.pattern.permute.xlu0 1
        %826 = vperm.xlu0 %825, %v822
        %v827 = vpop.permute.xlu0 %826
        %v829 = vmul.f32 %v823, %v827
        %v830 = vpack.c.bf16 %v829, %v829
        %vm831 = vcmask 519424
        %832 = vst.msk [vmem:[%s259] sm:$0xf] %vm831, %v830
        %v833 = vld [vmem:[#allocation3] sm:$0xff]
        %v834 = vrcp.pop %v833
        %v835 = vld [vmem:[#allocation4] sm:$0xff]
        %837 = vset.pattern.permute.xlu0 2
        %838 = vperm.xlu0 %837, %v834
        %v839 = vpop.permute.xlu0 %838
        %v841 = vmul.f32 %v835, %v839
        %v842 = vpack.c.bf16 %v841, %v841
        %vm843 = vcmask 781824
        %844 = vst.msk [vmem:[%s259] sm:$0xf] %vm843, %v842
        %v845 = vld [vmem:[#allocation3] sm:$0xff]
        %v846 = vrcp.pop %v845
        %v847 = vld [vmem:[#allocation4] sm:$0xff]
        %849 = vset.pattern.permute.xlu0 3
        %850 = vperm.xlu0 %849, %v846
        %v851 = vpop.permute.xlu0 %850
        %v853 = vmul.f32 %v847, %v851
        %v854 = vpack.c.bf16 %v853, %v853
        %vm855 = vcmask 1044224
        %856 = vst.msk [vmem:[%s259] sm:$0xf] %vm855, %v854
      $region40: #{paligemma_forward.32} parent=31 // pred_fallthru
        _
      %p857 = scmp.lt.s32.totalorder %s19, 1
      %s858 = scalar_select %p857, %s19, 1
      %p859 = scmp.lt.s32.totalorder %s20, 0
      %s860 = scalar_select %p859, %s20, 0
      %s861 = sadd.s32 %s860, %s858
      %s862 = smul.addr %s861, 4
      %s863 = scalar_lea.vmem %s3, %s862
      // Predicated region
      $region41: #{paligemma_forward.32} parent=31 // pred_check
        %p864 = pneg %p137
      $region42: #{paligemma_forward.32} parent=31 // pred_check_branch
        %866 = sbr.rel (%p864) target = $region44
      $region43: #{paligemma_forward.32} parent=31 // pred_region
        _
      $region44: #{paligemma_forward.32} parent=31 // pred_fallthru
        _
    $region32: #{paligemma_forward.32} parent=5 // pred_fallthru
      _
    %p867 = scmp.le.s32.totalorder 2, %s9
    // Predicated region
    $region45: #{paligemma_forward.32} parent=5 // pred_check
      %p868 = pneg %p867
    $region46: #{paligemma_forward.32} parent=5 // pred_check_branch
      %870 = sbr.rel (%p868) target = $region48
    $region47: #{paligemma_forward.32} parent=5 // pred_region
      %s871 = ssub.s32 %s9, 2
      // Predicated region
      $region49: #{paligemma_forward.32} parent=47 // pred_check
        %p872 = pneg %p143
      $region50: #{paligemma_forward.32} parent=47 // pred_check_branch
        %874 = sbr.rel (%p872) target = $region52
      $region51: #{paligemma_forward.32} parent=47 // pred_region
        %p875 = scmp.lt.s32.totalorder %s22, 1
        %s876 = scalar_select %p875, %s22, 1
        %p877 = scmp.lt.s32.totalorder %s23, 0
        %s878 = scalar_select %p877, %s23, 0
        %s879 = sadd.s32 %s878, %s876
        %s880 = smul.addr %s879, 4
        %s881 = scalar_lea.vmem %s3, %s880
      $region52: #{paligemma_forward.32} parent=47 // pred_fallthru
        _
    $region48: #{paligemma_forward.32} parent=5 // pred_fallthru
      _
  $region6: #{paligemma_forward.32} parent=0 // loop_footer
    %s13 = sadd.s32 1, %s9
  $region7: #{paligemma_forward.32} parent=0 // loop_footer_branch
    %8 = sbr.rel target = $region3
  $region8: #{paligemma_forward.32} parent=0 // loop_exit
    _

</llo_original>
